<compile_context>
chip_gen: v7x
topology: tpu7x:2x2x1
jax: 0.10.0
libtpu: 0.0.40
codegen_flags: <defaults>
</compile_context>

<pallas_src>
import numpy as np
import jax
import jax.numpy as jnp
from jax.experimental import pallas as pl
from jax.experimental.pallas import tpu as pltpu

# ----------------------------------------------------------------------------
# Static model configuration / packed-buffer layouts
# ----------------------------------------------------------------------------
ENC_CFG = [(1, 32), (64, 16), (32, 8)]     # LadderBlock (Ci, Co); block output = 2*Co
DEC_CFG = [(16, 32), (32, 64), (64, 1)]    # ConvTranspose1d (Ci, Co)
LAT_SIZES = (8, 16, 32)                    # reversed latent order, as PyTorch returns
LAT_TOTAL = 3 * sum(LAT_SIZES)             # mu | logvar | z  -> 168 lanes


def _ceil8(n):
    return (n + 7) // 8 * 8


def _fc_specs(L):
    # fc_mu / fc_logvar: (C, Lp, D) per encoder level
    return [(64, L, 32), (32, L // 2, 16), (16, L // 4, 8)]


def _dec_specs(L):
    # fc_decode: (D, C, Lp) per decoder level
    return [(8, 16, L // 4), (16, 32, L // 2), (32, 64, L)]


def _build_layouts():
    """Row layouts of the two packed parameter buffers (L-independent)."""
    vec = {}
    r = 0

    def addv(name, width):
        nonlocal r
        vec[name] = (r, width)
        r += 1

    for i, (ci, co) in enumerate(ENC_CFG):
        addv(f'e{i}_b1', co)
        addv(f'e{i}_g', co)
        addv(f'e{i}_be', co)
        addv(f'e{i}_b2', 2 * co)
        addv(f'e{i}_bs', 2 * co)
    for i, d in enumerate((32, 16, 8)):          # fused mu|logvar bias per level
        addv(f'mulv{i}_b', 2 * d)
    for i, (ci, co) in enumerate(DEC_CFG):
        addv(f'd{i}_b', co)
        if i < 2:
            addv(f'd{i}_g', co)
            addv(f'd{i}_be', co)
    n_vec = _ceil8(r)

    wc = {}
    s = 0

    def addw(name, rows, cols):
        nonlocal s
        wc[name] = (s, rows, cols)
        s += _ceil8(rows)                        # keep every segment sublane-aligned

    for i, (ci, co) in enumerate(ENC_CFG):
        addw(f'e{i}_w1', 3 * ci, co)             # fused 3-tap conv weight
        addw(f'e{i}_w2', 3 * co, 2 * co)
        addw(f'e{i}_ws', ci, 2 * co)             # k=1 skip conv
    for i, (ci, co) in enumerate(DEC_CFG[:2]):
        addw(f'd{i}_w', 3 * ci, co)              # fused 3-tap ConvTranspose weight
    return vec, n_vec, wc, s


VEC_LAYOUT, N_VEC, WCONV_LAYOUT, N_WCONV = _build_layouts()

KERNEL_PARAM_ORDER = ('vecs', 'wconv',
                      'mulv0_w', 'mulv1_w', 'mulv2_w',
                      'dec0_w', 'dec1_w', 'dec2_w', 'd2_w')


# ----------------------------------------------------------------------------
# Kernel
# ----------------------------------------------------------------------------
def ladder_vae_kernel(x_ref, eps_ref, vecs_ref, wconv_ref,
                      mulv0_ref, mulv1_ref, mulv2_ref,
                      dec0_ref, dec1_ref, dec2_ref, d2w_ref,
                      out_ref):
    f32 = jnp.float32
    B, L, _ = x_ref.shape

    # ---- packed-parameter accessors (static slices of the packed buffers) ----
    def vec(name):
        row, width = VEC_LAYOUT[name]
        return vecs_ref[row:row + 1, 0:width]            # (1, width)

    def wmat(name):
        start, rows, cols = WCONV_LAYOUT[name]
        return wconv_ref[start:start + rows, 0:cols]     # (rows, cols)

    def cmm(x, w):
        # (B, L, Ci) x (Ci, Co) -> (B, L, Co) on the MXU.
        return jax.lax.dot_general(x, w, (((2,), (0,)), ((), ())),
                                   preferred_element_type=f32)

    def tap_cat(x):
        # im2col for k=3, pad=1:  (B, L, C) -> (B, L, 3C) = [x[t-1] | x[t] | x[t+1]]
        # with zeroed boundary rows.  Shifts go through the (otherwise idle) XLU
        # via pltpu.roll + one VPU select each, instead of concatenate-with-zeros
        # (which would materialize two full activation copies per conv).
        Bx, Lx, Cx = x.shape
        t = jax.lax.broadcasted_iota(jnp.int32, (Bx, Lx, Cx), 1)
        xm = jnp.where(t == 0, 0.0, pltpu.roll(x, 1, axis=1))            # x[t-1]
        xp = jnp.where(t == Lx - 1, 0.0, pltpu.roll(x, Lx - 1, axis=1))  # x[t+1]
        return jnp.concatenate([xm, x, xp], axis=-1)

    def bn_relu(x, g, be):
        # BatchNorm1d, training mode: per-channel stats over (N, L), biased
        # variance, eps=1e-5, then ReLU.  The stats reshape merges B into the
        # sublane axis; with L, L/2, L/4 multiples of 8 every sublane tile is
        # full, so the merge is layout-preserving.  The (1, C) scale is hoisted
        # so the full-size tensor sees one mul+add; rsqrt goes to the EUP slot.
        Bx, Lx, Cx = x.shape
        xf = x.reshape(Bx * Lx, Cx)
        m = jnp.mean(xf, axis=0, keepdims=True)                          # (1, C)
        v = jnp.mean((xf - m) * (xf - m), axis=0, keepdims=True)         # biased
        scale = jax.lax.rsqrt(v + 1e-5) * g                              # (1, C)
        return jnp.maximum((x - m) * scale + be, 0.0)

    def maxpool2(x):
        Bx, Lx, Cx = x.shape
        xr = x.reshape(Bx, Lx // 2, 2, Cx)
        return jnp.maximum(xr[:, :, 0, :], xr[:, :, 1, :])

    def upsample2(x):
        # F.interpolate(scale_factor=2, mode='nearest')
        Bx, Lx, Cx = x.shape
        return jnp.broadcast_to(x[:, :, None, :], (Bx, Lx, 2, Cx)).reshape(Bx, 2 * Lx, Cx)

    def ladder_block(x, i):
        h = cmm(tap_cat(x), wmat(f'e{i}_w1')) + vec(f'e{i}_b1')
        h = bn_relu(h, vec(f'e{i}_g'), vec(f'e{i}_be'))
        h = cmm(tap_cat(h), wmat(f'e{i}_w2')) + vec(f'e{i}_b2')
        s = cmm(x, wmat(f'e{i}_ws')) + vec(f'e{i}_bs')
        return h + s

    def fc_mulv(h, w_ref, bias_name, D):
        # Fused fc_mu / fc_logvar: one (B, Lp*C) x (Lp*C, 2D) matmul, split after.
        # (the single L-major flatten is reused for both heads; Lp*C is a
        #  multiple of 8 so the reshape keeps full sublane tiles.)
        hf = h.reshape(B, h.shape[1] * h.shape[2])
        out = jnp.dot(hf, w_ref[...], preferred_element_type=f32) + vec(bias_name)
        return out[:, :D], out[:, D:]

    def fc_decode(z, w_ref, D):
        # fc_decode with the bias folded in as weight row D.
        return (jnp.dot(z, w_ref[0:D, :], preferred_element_type=f32)
                + w_ref[D:D + 1, :])

    # ------------------------------- encoder -------------------------------
    x = x_ref[...]                                    # (B, L, 1)
    h0 = ladder_block(x, 0)                           # (B, L,   64)
    mu0, lv0 = fc_mulv(h0, mulv0_ref, 'mulv0_b', 32)
    h1 = ladder_block(maxpool2(h0), 1)                # (B, L/2, 32)
    mu1, lv1 = fc_mulv(h1, mulv1_ref, 'mulv1_b', 16)
    h2 = ladder_block(maxpool2(h1), 2)                # (B, L/4, 16)
    mu2, lv2 = fc_mulv(h2, mulv2_ref, 'mulv2_b', 8)

    # --------------------------- reparameterize ----------------------------
    eps = eps_ref[...]                                # (B, 56) = [8 | 16 | 32]
    z_a = mu2 + eps[:, 0:8] * jnp.exp(0.5 * lv2)      # latent 8
    z_b = mu1 + eps[:, 8:24] * jnp.exp(0.5 * lv1)     # latent 16
    z_c = mu0 + eps[:, 24:56] * jnp.exp(0.5 * lv0)    # latent 32

    # ------------------------------- decoder -------------------------------
    d = fc_decode(z_a, dec0_ref, 8).reshape(B, L // 4, 16)
    d = cmm(tap_cat(d), wmat('d0_w')) + vec('d0_b')
    d = upsample2(bn_relu(d, vec('d0_g'), vec('d0_be')))        # (B, L/2, 32)

    d = d + fc_decode(z_b, dec1_ref, 16).reshape(B, L // 2, 32)
    d = cmm(tap_cat(d), wmat('d1_w')) + vec('d1_b')
    d = upsample2(bn_relu(d, vec('d1_g'), vec('d1_be')))        # (B, L,   64)

    d = d + fc_decode(z_c, dec2_ref, 32).reshape(B, L, 64)
    # Final ConvTranspose1d(64 -> 1): lane multiply + lane reduce produces a
    # lane-dense (B, L) reconstruction directly (no width-1 tensor).
    recon = jnp.sum(tap_cat(d) * d2w_ref[0:1, :], axis=-1) + vec('d2_b')

    # Single lane-dense output slab (one output DMA, no masked width-32 stores):
    # [recon_L | mu_8 mu_16 mu_32 | lv_8 lv_16 lv_32 | z_8 z_16 z_32]
    out_ref[...] = jnp.concatenate(
        [recon, mu2, mu1, mu0, lv2, lv1, lv0, z_a, z_b, z_c], axis=-1)


# ----------------------------------------------------------------------------
# Parameter init (PyTorch layouts) and packing (kernel layouts)
# ----------------------------------------------------------------------------
def _pack_conv_w(w):
    # Conv1d weight (Co, Ci, 3) -> (3*Ci, Co); rows [0:Ci) multiply x[t-1],
    # [Ci:2Ci) multiply x[t], [2Ci:3Ci) multiply x[t+1]  (pad=1 convention).
    wt = jnp.transpose(w, (2, 1, 0))                  # (K, Ci, Co)
    return jnp.concatenate([wt[0], wt[1], wt[2]], axis=0)


def _pack_convT_w(w):
    # ConvTranspose1d weight (Ci, Co, 3) -> (3*Ci, Co) with flipped taps:
    # rows for x[t-1] use tap 2, x[t] tap 1, x[t+1] tap 0.
    wt = jnp.transpose(w, (2, 0, 1))                  # (K, Ci, Co)
    return jnp.concatenate([wt[2], wt[1], wt[0]], axis=0)


def init_torch_params(key, L):
    """Random parameters in the original PyTorch layouts."""
    keys = iter(jax.random.split(key, 64))

    def nrm(shape, scale=0.05):
        return scale * jax.random.normal(next(keys), shape, dtype=jnp.float32)

    tp = {}
    for i, (ci, co) in enumerate(ENC_CFG):
        tp[f'e{i}_w1'] = nrm((co, ci, 3));       tp[f'e{i}_b1'] = nrm((co,))
        tp[f'e{i}_w2'] = nrm((2 * co, co, 3));   tp[f'e{i}_b2'] = nrm((2 * co,))
        tp[f'e{i}_ws'] = nrm((2 * co, ci, 1));   tp[f'e{i}_bs'] = nrm((2 * co,))
    for i, (C, Lp, D) in enumerate(_fc_specs(L)):
        tp[f'mu{i}_w'] = nrm((D, C * Lp));       tp[f'mu{i}_b'] = nrm((D,))
        tp[f'lv{i}_w'] = nrm((D, C * Lp));       tp[f'lv{i}_b'] = nrm((D,))
    for i, (D, C, Lp) in enumerate(_dec_specs(L)):
        tp[f'dec{i}_w'] = nrm((C * Lp, D));      tp[f'dec{i}_b'] = nrm((C * Lp,))
    for i, (ci, co) in enumerate(DEC_CFG):
        tp[f'd{i}_w'] = nrm((ci, co, 3));        tp[f'd{i}_b'] = nrm((co,))
    return tp


def pack_params(tp, L):
    """Pack PyTorch-layout params into the kernel's few lane-dense buffers."""
    vecs = jnp.zeros((N_VEC, 128), jnp.float32)
    wconv = jnp.zeros((N_WCONV, 128), jnp.float32)

    def put_vec(buf, name, v):
        row, width = VEC_LAYOUT[name]
        assert v.shape == (width,), (name, v.shape, width)
        return buf.at[row, :width].set(v)

    def put_w(buf, name, w):
        s, rows, cols = WCONV_LAYOUT[name]
        assert w.shape == (rows, cols), (name, w.shape, (rows, cols))
        return buf.at[s:s + rows, :cols].set(w)

    for i, (ci, co) in enumerate(ENC_CFG):
        wconv = put_w(wconv, f'e{i}_w1', _pack_conv_w(tp[f'e{i}_w1']))
        wconv = put_w(wconv, f'e{i}_w2', _pack_conv_w(tp[f'e{i}_w2']))
        wconv = put_w(wconv, f'e{i}_ws', tp[f'e{i}_ws'][:, :, 0].T)
        vecs = put_vec(vecs, f'e{i}_b1', tp[f'e{i}_b1'])
        vecs = put_vec(vecs, f'e{i}_b2', tp[f'e{i}_b2'])
        vecs = put_vec(vecs, f'e{i}_bs', tp[f'e{i}_bs'])
        vecs = put_vec(vecs, f'e{i}_g', jnp.ones((co,), jnp.float32))   # BN gamma
        vecs = put_vec(vecs, f'e{i}_be', jnp.zeros((co,), jnp.float32))  # BN beta

    packed = {}
    # fc_mu / fc_logvar: torch columns are C-major (c*Lp + l); kernel flatten is
    # L-major (l*C + c).  Re-index, then fuse the two heads along the output dim.
    for i, (C, Lp, D) in enumerate(_fc_specs(L)):
        def reindex(W):
            return W.reshape(D, C, Lp).transpose(2, 1, 0).reshape(Lp * C, D)
        packed[f'mulv{i}_w'] = jnp.concatenate(
            [reindex(tp[f'mu{i}_w']), reindex(tp[f'lv{i}_w'])], axis=1)
        vecs = put_vec(vecs, f'mulv{i}_b',
                       jnp.concatenate([tp[f'mu{i}_b'], tp[f'lv{i}_b']]))

    # fc_decode: torch output is viewed C-major as (C, Lp); kernel reshapes
    # L-major to (Lp, C).  Bias is folded in as the last weight row.
    for i, (D, C, Lp) in enumerate(_dec_specs(L)):
        W, b = tp[f'dec{i}_w'], tp[f'dec{i}_b']
        Wk = W.reshape(C, Lp, D).transpose(1, 0, 2).reshape(Lp * C, D).T  # (D, Lp*C)
        bk = b.reshape(C, Lp).T.reshape(1, Lp * C)
        packed[f'dec{i}_w'] = jnp.concatenate([Wk, bk], axis=0)           # (D+1, Lp*C)

    for i, (ci, co) in enumerate(DEC_CFG):
        vecs = put_vec(vecs, f'd{i}_b', tp[f'd{i}_b'])
        if i < 2:
            wconv = put_w(wconv, f'd{i}_w', _pack_convT_w(tp[f'd{i}_w']))
            vecs = put_vec(vecs, f'd{i}_g', jnp.ones((co,), jnp.float32))
            vecs = put_vec(vecs, f'd{i}_be', jnp.zeros((co,), jnp.float32))
        else:
            packed['d2_w'] = _pack_convT_w(tp[f'd{i}_w']).T               # (1, 192)

    packed['vecs'] = vecs
    packed['wconv'] = wconv
    return packed


# ----------------------------------------------------------------------------
# Wrapper
# ----------------------------------------------------------------------------
def ladder_vae_forward(params, x_ncl, eps_list):
    """x_ncl: (B, 1, L) like the PyTorch module.  eps_list: [(B,8), (B,16), (B,32)]."""
    B, _, L = x_ncl.shape
    assert L % 4 == 0
    x_blc = jnp.transpose(x_ncl, (0, 2, 1)).astype(jnp.float32)            # (B, L, 1)
    eps_packed = jnp.concatenate([e.astype(jnp.float32) for e in eps_list], axis=-1)
    assert eps_packed.shape == (B, sum(LAT_SIZES))

    inputs = [x_blc, eps_packed] + [params[n] for n in KERNEL_PARAM_ORDER]
    out_shape = jax.ShapeDtypeStruct((B, L + LAT_TOTAL), jnp.float32)  # recon | latents
    vmem = pl.BlockSpec(memory_space=pltpu.MemorySpace.VMEM)
    out = pl.pallas_call(
        ladder_vae_kernel,
        out_shape=out_shape,
        in_specs=[vmem] * len(inputs),
        out_specs=vmem,
        # VMEM budget: packed params + activations ~2 MiB at this size.
        # 32 MiB is above v5e's 16 MiB scoped default; v7x (64 MiB physical)
        # still has ample headroom.  Re-derive and tile over L if B/L scale.
        compiler_params=pltpu.CompilerParams(vmem_limit_bytes=32 * 1024 * 1024),
    )(*inputs)

    recon = out[:, :L].reshape(B, 1, L)                      # back to NCL
    lat = out[:, L:]                                         # (B, 168)
    means, logvars, zs = [], [], []
    off = 0
    for group in (means, logvars, zs):
        for s in LAT_SIZES:
            group.append(lat[:, off:off + s])
            off += s
    return recon, means, logvars, zs


# ----------------------------------------------------------------------------
# Pure-JAX reference (PyTorch semantics, torch-layout weights) for validation
# ----------------------------------------------------------------------------
def reference_forward(tp, x_ncl, eps_list):
    B, _, L = x_ncl.shape
    hp = jax.lax.Precision.HIGHEST
    x = jnp.transpose(x_ncl, (0, 2, 1)).astype(jnp.float32)   # channels-last

    def conv1d(h, w, b):        # w: (Co, Ci, 3), pad=1
        hpd = jnp.pad(h, ((0, 0), (1, 1), (0, 0)))
        return (jnp.einsum('blc,oc->blo', hpd[:, :-2], w[:, :, 0], precision=hp)
                + jnp.einsum('blc,oc->blo', hpd[:, 1:-1], w[:, :, 1], precision=hp)
                + jnp.einsum('blc,oc->blo', hpd[:, 2:], w[:, :, 2], precision=hp)
                + b)

    def convT1d(h, w, b):       # w: (Ci, Co, 3), stride=1, pad=1
        hpd = jnp.pad(h, ((0, 0), (1, 1), (0, 0)))
        return (jnp.einsum('blc,co->blo', hpd[:, 2:], w[:, :, 0], precision=hp)
                + jnp.einsum('blc,co->blo', hpd[:, 1:-1], w[:, :, 1], precision=hp)
                + jnp.einsum('blc,co->blo', hpd[:, :-2], w[:, :, 2], precision=hp)
                + b)

    def bn(h):                  # training mode, gamma=1, beta=0
        m = h.mean(axis=(0, 1), keepdims=True)
        v = ((h - m) ** 2).mean(axis=(0, 1), keepdims=True)
        return (h - m) / jnp.sqrt(v + 1e-5)

    def maxpool2(h):
        Bx, Lx, Cx = h.shape
        return h.reshape(Bx, Lx // 2, 2, Cx).max(axis=2)

    def flat_cmajor(h):         # == torch x.flatten(1) on NCL
        return jnp.transpose(h, (0, 2, 1)).reshape(h.shape[0], -1)

    mus, lvs = [], []
    h = x
    for i in range(3):
        c = jax.nn.relu(bn(conv1d(h, tp[f'e{i}_w1'], tp[f'e{i}_b1'])))
        c = conv1d(c, tp[f'e{i}_w2'], tp[f'e{i}_b2'])
        s = jnp.einsum('blc,oc->blo', h, tp[f'e{i}_ws'][:, :, 0], precision=hp) + tp[f'e{i}_bs']
        h = c + s
        f = flat_cmajor(h)
        mus.append(jnp.einsum('bi,oi->bo', f, tp[f'mu{i}_w'], precision=hp) + tp[f'mu{i}_b'])
        lvs.append(jnp.einsum('bi,oi->bo', f, tp[f'lv{i}_w'], precision=hp) + tp[f'lv{i}_b'])
        h = maxpool2(h)
    mus, lvs = mus[::-1], lvs[::-1]
    zs = [m + e * jnp.exp(0.5 * lv) for m, lv, e in zip(mus, lvs, eps_list)]

    d = None
    for i, (C, Lp) in enumerate([(16, L // 4), (32, L // 2), (64, L)]):
        proj = (jnp.einsum('bd,od->bo', zs[i], tp[f'dec{i}_w'], precision=hp)
                + tp[f'dec{i}_b']).reshape(B, C, Lp)
        proj = jnp.transpose(proj, (0, 2, 1))
        d = proj if d is None else d + proj
        d = convT1d(d, tp[f'd{i}_w'], tp[f'd{i}_b'])
        if i < 2:
            d = jnp.repeat(jax.nn.relu(bn(d)), 2, axis=1)
    recon = jnp.transpose(d, (0, 2, 1))
    return recon, mus, lvs, zs


# ----------------------------------------------------------------------------
if __name__ == "__main__":
    # L divisible by 4; L, L/2, L/4 multiples of 8 keep every sublane tile full.
    B, L = 2, 32
    key = jax.random.PRNGKey(0)
    kx, ke1, ke2, ke3, kp = jax.random.split(key, 5)

    x = jax.random.normal(kx, (B, 1, L), dtype=jnp.float32)
    eps = [jax.random.normal(ke1, (B, 8), dtype=jnp.float32),
           jax.random.normal(ke2, (B, 16), dtype=jnp.float32),
           jax.random.normal(ke3, (B, 32), dtype=jnp.float32)]

    torch_params = init_torch_params(kp, L)
    params = pack_params(torch_params, L)

    fwd = jax.jit(ladder_vae_forward)
    recon, means, logvars, zs = fwd(params, x, eps)
    jax.block_until_ready(recon)

    # shape checks
    assert recon.shape == (B, 1, L)
    assert [m.shape[-1] for m in means] == [8, 16, 32]
    assert [v.shape[-1] for v in logvars] == [8, 16, 32]
    assert [z.shape[-1] for z in zs] == [8, 16, 32]

    # numerical check against the pure-JAX reference (same torch-layout params)
    r_recon, r_means, r_logvars, r_zs = reference_forward(torch_params, x, eps)

    def check(a, b, name):
        np.testing.assert_allclose(np.asarray(a), np.asarray(b),
                                   rtol=2e-2, atol=2e-2, err_msg=name)

    check(recon, r_recon, 'recon')
    for i in range(3):
        check(means[i], r_means[i], f'mu[{i}]')
        check(logvars[i], r_logvars[i], f'logvar[{i}]')
        check(zs[i], r_zs[i], f'z[{i}]')
    assert all(bool(jnp.isfinite(a).all()) for a in [recon] + means + logvars + zs)

    print("KERNEL_OK")
</pallas_src>

<mosaic_0001>
module attributes {stable_mosaic.version = 11 : i64} {
  func.func @ladder_vae_kernel(%arg0: memref<2x32x1xf32, #tpu.memory_space<vmem>>, %arg1: memref<2x56xf32, #tpu.memory_space<vmem>>, %arg2: memref<32x128xf32, #tpu.memory_space<vmem>>, %arg3: memref<712x128xf32, #tpu.memory_space<vmem>>, %arg4: memref<2048x64xf32, #tpu.memory_space<vmem>>, %arg5: memref<512x32xf32, #tpu.memory_space<vmem>>, %arg6: memref<128x16xf32, #tpu.memory_space<vmem>>, %arg7: memref<9x128xf32, #tpu.memory_space<vmem>>, %arg8: memref<17x512xf32, #tpu.memory_space<vmem>>, %arg9: memref<33x2048xf32, #tpu.memory_space<vmem>>, %arg10: memref<1x192xf32, #tpu.memory_space<vmem>>, %arg11: memref<2x200xf32, #tpu.memory_space<vmem>>) attributes {dimension_semantics = [], scalar_prefetch = 0 : i64, scratch_operands = 0 : i64, tpu.core_type = #tpu.core_type<tc>} {
    %c0 = arith.constant 0 : index
    %c0_0 = arith.constant 0 : index
    %c0_1 = arith.constant 0 : index
    %0 = vector.load %arg0[%c0, %c0_0, %c0_1] : memref<2x32x1xf32, #tpu.memory_space<vmem>>, vector<2x32x1xf32>
    %1 = tpu.iota {dimensions = array<i32: 1>} : vector<2x32x1xi32>
    %c0_i32 = arith.constant 0 : i32
    %2 = vector.broadcast %c0_i32 : i32 to vector<2x32x1xi32>
    %3 = arith.cmpi eq, %1, %2 : vector<2x32x1xi32>
    %c1_i32 = arith.constant 1 : i32
    %4 = tpu.dynamic_rotate %0 by %c1_i32 dim 1 : vector<2x32x1xf32>, i32 -> vector<2x32x1xf32>
    %cst = arith.constant 0.000000e+00 : f32
    %5 = vector.broadcast %cst : f32 to vector<2x32x1xf32>
    %6 = arith.select %3, %5, %4 : vector<2x32x1xi1>, vector<2x32x1xf32>
    %c31_i32 = arith.constant 31 : i32
    %7 = vector.broadcast %c31_i32 : i32 to vector<2x32x1xi32>
    %8 = arith.cmpi eq, %1, %7 : vector<2x32x1xi32>
    %c31_i32_2 = arith.constant 31 : i32
    %9 = tpu.dynamic_rotate %0 by %c31_i32_2 dim 1 : vector<2x32x1xf32>, i32 -> vector<2x32x1xf32>
    %cst_3 = arith.constant 0.000000e+00 : f32
    %10 = vector.broadcast %cst_3 : f32 to vector<2x32x1xf32>
    %11 = arith.select %8, %10, %9 : vector<2x32x1xi1>, vector<2x32x1xf32>
    %12 = tpu.concatenate %6, %0, %11 in 2 : vector<2x32x1xf32>, vector<2x32x1xf32>, vector<2x32x1xf32> -> vector<2x32x3xf32>
    %c0_4 = arith.constant 0 : index
    %c0_5 = arith.constant 0 : index
    %13 = vector.load %arg3[%c0_4, %c0_5] : memref<712x128xf32, #tpu.memory_space<vmem>>, vector<3x32xf32>
    %cst_6 = arith.constant dense<0.000000e+00> : vector<2x32x32xf32>
    %14 = tpu.matmul %12, %13, %cst_6 {dimension_numbers = #tpu.dot_dimension_numbers<[2], [0], [0, 1], [1], [0, 0, 0, 1, 1, 1], [], []>} : vector<2x32x3xf32>, vector<3x32xf32>, vector<2x32x32xf32> -> vector<2x32x32xf32>
    %c0_7 = arith.constant 0 : index
    %c0_8 = arith.constant 0 : index
    %15 = vector.load %arg2[%c0_7, %c0_8] : memref<32x128xf32, #tpu.memory_space<vmem>>, vector<1x32xf32>
    %16 = vector.shape_cast %15 : vector<1x32xf32> to vector<1x1x32xf32>
    %17 = vector.broadcast %16 : vector<1x1x32xf32> to vector<2x32x32xf32>
    %18 = arith.addf %14, %17 : vector<2x32x32xf32>
    %c1 = arith.constant 1 : index
    %c0_9 = arith.constant 0 : index
    %19 = vector.load %arg2[%c1, %c0_9] : memref<32x128xf32, #tpu.memory_space<vmem>>, vector<1x32xf32>
    %c2 = arith.constant 2 : index
    %c0_10 = arith.constant 0 : index
    %20 = vector.load %arg2[%c2, %c0_10] : memref<32x128xf32, #tpu.memory_space<vmem>>, vector<1x32xf32>
    %21 = vector.shape_cast %18 : vector<2x32x32xf32> to vector<64x32xf32>
    %cst_11 = arith.constant dense<0.000000e+00> : vector<32xf32>
    %22 = vector.multi_reduction <add>, %21, %cst_11 [0] : vector<64x32xf32> to vector<32xf32>
    %23 = vector.shape_cast %22 : vector<32xf32> to vector<1x32xf32>
    %cst_12 = arith.constant 6.400000e+01 : f32
    %24 = vector.broadcast %cst_12 : f32 to vector<1x32xf32>
    %25 = arith.divf %23, %24 : vector<1x32xf32>
    %26 = vector.broadcast %25 : vector<1x32xf32> to vector<64x32xf32>
    %27 = arith.subf %21, %26 : vector<64x32xf32>
    %28 = vector.broadcast %25 : vector<1x32xf32> to vector<64x32xf32>
    %29 = arith.subf %21, %28 : vector<64x32xf32>
    %30 = arith.mulf %27, %29 : vector<64x32xf32>
    %cst_13 = arith.constant dense<0.000000e+00> : vector<32xf32>
    %31 = vector.multi_reduction <add>, %30, %cst_13 [0] : vector<64x32xf32> to vector<32xf32>
    %32 = vector.shape_cast %31 : vector<32xf32> to vector<1x32xf32>
    %cst_14 = arith.constant 6.400000e+01 : f32
    %33 = vector.broadcast %cst_14 : f32 to vector<1x32xf32>
    %34 = arith.divf %32, %33 : vector<1x32xf32>
    %cst_15 = arith.constant 9.99999974E-6 : f32
    %35 = vector.broadcast %cst_15 : f32 to vector<1x32xf32>
    %36 = arith.addf %34, %35 : vector<1x32xf32>
    %37 = math.rsqrt %36 : vector<1x32xf32>
    %38 = arith.mulf %37, %19 : vector<1x32xf32>
    %39 = vector.shape_cast %25 : vector<1x32xf32> to vector<1x1x32xf32>
    %40 = vector.broadcast %39 : vector<1x1x32xf32> to vector<2x32x32xf32>
    %41 = arith.subf %18, %40 : vector<2x32x32xf32>
    %42 = vector.shape_cast %38 : vector<1x32xf32> to vector<1x1x32xf32>
    %43 = vector.broadcast %42 : vector<1x1x32xf32> to vector<2x32x32xf32>
    %44 = arith.mulf %41, %43 : vector<2x32x32xf32>
    %45 = vector.shape_cast %20 : vector<1x32xf32> to vector<1x1x32xf32>
    %46 = vector.broadcast %45 : vector<1x1x32xf32> to vector<2x32x32xf32>
    %47 = arith.addf %44, %46 : vector<2x32x32xf32>
    %cst_16 = arith.constant 0.000000e+00 : f32
    %48 = vector.broadcast %cst_16 : f32 to vector<2x32x32xf32>
    %49 = arith.maximumf %47, %48 : vector<2x32x32xf32>
    %50 = tpu.iota {dimensions = array<i32: 1>} : vector<2x32x32xi32>
    %c0_i32_17 = arith.constant 0 : i32
    %51 = vector.broadcast %c0_i32_17 : i32 to vector<2x32x32xi32>
    %52 = arith.cmpi eq, %50, %51 : vector<2x32x32xi32>
    %c1_i32_18 = arith.constant 1 : i32
    %53 = tpu.dynamic_rotate %49 by %c1_i32_18 dim 1 : vector<2x32x32xf32>, i32 -> vector<2x32x32xf32>
    %cst_19 = arith.constant 0.000000e+00 : f32
    %54 = vector.broadcast %cst_19 : f32 to vector<2x32x32xf32>
    %55 = arith.select %52, %54, %53 : vector<2x32x32xi1>, vector<2x32x32xf32>
    %c31_i32_20 = arith.constant 31 : i32
    %56 = vector.broadcast %c31_i32_20 : i32 to vector<2x32x32xi32>
    %57 = arith.cmpi eq, %50, %56 : vector<2x32x32xi32>
    %c31_i32_21 = arith.constant 31 : i32
    %58 = tpu.dynamic_rotate %49 by %c31_i32_21 dim 1 : vector<2x32x32xf32>, i32 -> vector<2x32x32xf32>
    %cst_22 = arith.constant 0.000000e+00 : f32
    %59 = vector.broadcast %cst_22 : f32 to vector<2x32x32xf32>
    %60 = arith.select %57, %59, %58 : vector<2x32x32xi1>, vector<2x32x32xf32>
    %61 = tpu.concatenate %55, %49, %60 in 2 : vector<2x32x32xf32>, vector<2x32x32xf32>, vector<2x32x32xf32> -> vector<2x32x96xf32>
    %c8 = arith.constant 8 : index
    %c0_23 = arith.constant 0 : index
    %62 = vector.load %arg3[%c8, %c0_23] : memref<712x128xf32, #tpu.memory_space<vmem>>, vector<96x64xf32>
    %cst_24 = arith.constant dense<0.000000e+00> : vector<2x32x64xf32>
    %63 = tpu.matmul %61, %62, %cst_24 {dimension_numbers = #tpu.dot_dimension_numbers<[2], [0], [0, 1], [1], [0, 0, 0, 1, 1, 1], [], []>} : vector<2x32x96xf32>, vector<96x64xf32>, vector<2x32x64xf32> -> vector<2x32x64xf32>
    %c3 = arith.constant 3 : index
    %c0_25 = arith.constant 0 : index
    %64 = vector.load %arg2[%c3, %c0_25] : memref<32x128xf32, #tpu.memory_space<vmem>>, vector<1x64xf32>
    %65 = vector.shape_cast %64 : vector<1x64xf32> to vector<1x1x64xf32>
    %66 = vector.broadcast %65 : vector<1x1x64xf32> to vector<2x32x64xf32>
    %67 = arith.addf %63, %66 : vector<2x32x64xf32>
    %c104 = arith.constant 104 : index
    %c0_26 = arith.constant 0 : index
    %68 = vector.load %arg3[%c104, %c0_26] : memref<712x128xf32, #tpu.memory_space<vmem>>, vector<1x64xf32>
    %cst_27 = arith.constant dense<0.000000e+00> : vector<2x32x64xf32>
    %69 = tpu.matmul %0, %68, %cst_27 {dimension_numbers = #tpu.dot_dimension_numbers<[2], [0], [0, 1], [1], [0, 0, 0, 1, 1, 1], [], []>} : vector<2x32x1xf32>, vector<1x64xf32>, vector<2x32x64xf32> -> vector<2x32x64xf32>
    %c4 = arith.constant 4 : index
    %c0_28 = arith.constant 0 : index
    %70 = vector.load %arg2[%c4, %c0_28] : memref<32x128xf32, #tpu.memory_space<vmem>>, vector<1x64xf32>
    %71 = vector.shape_cast %70 : vector<1x64xf32> to vector<1x1x64xf32>
    %72 = vector.broadcast %71 : vector<1x1x64xf32> to vector<2x32x64xf32>
    %73 = arith.addf %69, %72 : vector<2x32x64xf32>
    %74 = arith.addf %67, %73 : vector<2x32x64xf32>
    %75 = vector.shape_cast %74 : vector<2x32x64xf32> to vector<2x2048xf32>
    %c0_29 = arith.constant 0 : index
    %c0_30 = arith.constant 0 : index
    %76 = vector.load %arg4[%c0_29, %c0_30] : memref<2048x64xf32, #tpu.memory_space<vmem>>, vector<2048x64xf32>
    %cst_31 = arith.constant dense<0.000000e+00> : vector<2x64xf32>
    %77 = tpu.matmul %75, %76, %cst_31 {dimension_numbers = #tpu.dot_dimension_numbers<[1], [0], [0], [1], [0, 0, 1, 1], [], []>} : vector<2x2048xf32>, vector<2048x64xf32>, vector<2x64xf32> -> vector<2x64xf32>
    %c15 = arith.constant 15 : index
    %c0_32 = arith.constant 0 : index
    %78 = vector.load %arg2[%c15, %c0_32] : memref<32x128xf32, #tpu.memory_space<vmem>>, vector<1x64xf32>
    %79 = vector.broadcast %78 : vector<1x64xf32> to vector<2x64xf32>
    %80 = arith.addf %77, %79 : vector<2x64xf32>
    %81 = vector.extract_strided_slice %80 {offsets = [0, 0], sizes = [2, 32], strides = [1, 1]} : vector<2x64xf32> to vector<2x32xf32>
    %82 = vector.extract_strided_slice %80 {offsets = [0, 32], sizes = [2, 32], strides = [1, 1]} : vector<2x64xf32> to vector<2x32xf32>
    %83 = vector.shape_cast %74 : vector<2x32x64xf32> to vector<2x16x2x64xf32>
    %84 = vector.extract_strided_slice %83 {offsets = [0, 0, 0, 0], sizes = [2, 16, 1, 64], strides = [1, 1, 1, 1]} : vector<2x16x2x64xf32> to vector<2x16x1x64xf32>
    %85 = vector.shape_cast %84 : vector<2x16x1x64xf32> to vector<2x16x64xf32>
    %86 = vector.extract_strided_slice %83 {offsets = [0, 0, 1, 0], sizes = [2, 16, 1, 64], strides = [1, 1, 1, 1]} : vector<2x16x2x64xf32> to vector<2x16x1x64xf32>
    %87 = vector.shape_cast %86 : vector<2x16x1x64xf32> to vector<2x16x64xf32>
    %88 = arith.maximumf %85, %87 : vector<2x16x64xf32>
    %89 = tpu.iota {dimensions = array<i32: 1>} : vector<2x16x64xi32>
    %c0_i32_33 = arith.constant 0 : i32
    %90 = vector.broadcast %c0_i32_33 : i32 to vector<2x16x64xi32>
    %91 = arith.cmpi eq, %89, %90 : vector<2x16x64xi32>
    %c1_i32_34 = arith.constant 1 : i32
    %92 = tpu.dynamic_rotate %88 by %c1_i32_34 dim 1 : vector<2x16x64xf32>, i32 -> vector<2x16x64xf32>
    %cst_35 = arith.constant 0.000000e+00 : f32
    %93 = vector.broadcast %cst_35 : f32 to vector<2x16x64xf32>
    %94 = arith.select %91, %93, %92 : vector<2x16x64xi1>, vector<2x16x64xf32>
    %c15_i32 = arith.constant 15 : i32
    %95 = vector.broadcast %c15_i32 : i32 to vector<2x16x64xi32>
    %96 = arith.cmpi eq, %89, %95 : vector<2x16x64xi32>
    %c15_i32_36 = arith.constant 15 : i32
    %97 = tpu.dynamic_rotate %88 by %c15_i32_36 dim 1 : vector<2x16x64xf32>, i32 -> vector<2x16x64xf32>
    %cst_37 = arith.constant 0.000000e+00 : f32
    %98 = vector.broadcast %cst_37 : f32 to vector<2x16x64xf32>
    %99 = arith.select %96, %98, %97 : vector<2x16x64xi1>, vector<2x16x64xf32>
    %100 = tpu.concatenate %94, %88, %99 in 2 : vector<2x16x64xf32>, vector<2x16x64xf32>, vector<2x16x64xf32> -> vector<2x16x192xf32>
    %c112 = arith.constant 112 : index
    %c0_38 = arith.constant 0 : index
    %101 = vector.load %arg3[%c112, %c0_38] : memref<712x128xf32, #tpu.memory_space<vmem>>, vector<192x16xf32>
    %cst_39 = arith.constant dense<0.000000e+00> : vector<2x16x16xf32>
    %102 = tpu.matmul %100, %101, %cst_39 {dimension_numbers = #tpu.dot_dimension_numbers<[2], [0], [0, 1], [1], [0, 0, 0, 1, 1, 1], [], []>} : vector<2x16x192xf32>, vector<192x16xf32>, vector<2x16x16xf32> -> vector<2x16x16xf32>
    %c5 = arith.constant 5 : index
    %c0_40 = arith.constant 0 : index
    %103 = vector.load %arg2[%c5, %c0_40] : memref<32x128xf32, #tpu.memory_space<vmem>>, vector<1x16xf32>
    %104 = vector.shape_cast %103 : vector<1x16xf32> to vector<1x1x16xf32>
    %105 = vector.broadcast %104 : vector<1x1x16xf32> to vector<2x16x16xf32>
    %106 = arith.addf %102, %105 : vector<2x16x16xf32>
    %c6 = arith.constant 6 : index
    %c0_41 = arith.constant 0 : index
    %107 = vector.load %arg2[%c6, %c0_41] : memref<32x128xf32, #tpu.memory_space<vmem>>, vector<1x16xf32>
    %c7 = arith.constant 7 : index
    %c0_42 = arith.constant 0 : index
    %108 = vector.load %arg2[%c7, %c0_42] : memref<32x128xf32, #tpu.memory_space<vmem>>, vector<1x16xf32>
    %109 = vector.shape_cast %106 : vector<2x16x16xf32> to vector<32x16xf32>
    %cst_43 = arith.constant dense<0.000000e+00> : vector<16xf32>
    %110 = vector.multi_reduction <add>, %109, %cst_43 [0] : vector<32x16xf32> to vector<16xf32>
    %111 = vector.shape_cast %110 : vector<16xf32> to vector<1x16xf32>
    %cst_44 = arith.constant 3.200000e+01 : f32
    %112 = vector.broadcast %cst_44 : f32 to vector<1x16xf32>
    %113 = arith.divf %111, %112 : vector<1x16xf32>
    %114 = vector.broadcast %113 : vector<1x16xf32> to vector<32x16xf32>
    %115 = arith.subf %109, %114 : vector<32x16xf32>
    %116 = vector.broadcast %113 : vector<1x16xf32> to vector<32x16xf32>
    %117 = arith.subf %109, %116 : vector<32x16xf32>
    %118 = arith.mulf %115, %117 : vector<32x16xf32>
    %cst_45 = arith.constant dense<0.000000e+00> : vector<16xf32>
    %119 = vector.multi_reduction <add>, %118, %cst_45 [0] : vector<32x16xf32> to vector<16xf32>
    %120 = vector.shape_cast %119 : vector<16xf32> to vector<1x16xf32>
    %cst_46 = arith.constant 3.200000e+01 : f32
    %121 = vector.broadcast %cst_46 : f32 to vector<1x16xf32>
    %122 = arith.divf %120, %121 : vector<1x16xf32>
    %cst_47 = arith.constant 9.99999974E-6 : f32
    %123 = vector.broadcast %cst_47 : f32 to vector<1x16xf32>
    %124 = arith.addf %122, %123 : vector<1x16xf32>
    %125 = math.rsqrt %124 : vector<1x16xf32>
    %126 = arith.mulf %125, %107 : vector<1x16xf32>
    %127 = vector.shape_cast %113 : vector<1x16xf32> to vector<1x1x16xf32>
    %128 = vector.broadcast %127 : vector<1x1x16xf32> to vector<2x16x16xf32>
    %129 = arith.subf %106, %128 : vector<2x16x16xf32>
    %130 = vector.shape_cast %126 : vector<1x16xf32> to vector<1x1x16xf32>
    %131 = vector.broadcast %130 : vector<1x1x16xf32> to vector<2x16x16xf32>
    %132 = arith.mulf %129, %131 : vector<2x16x16xf32>
    %133 = vector.shape_cast %108 : vector<1x16xf32> to vector<1x1x16xf32>
    %134 = vector.broadcast %133 : vector<1x1x16xf32> to vector<2x16x16xf32>
    %135 = arith.addf %132, %134 : vector<2x16x16xf32>
    %cst_48 = arith.constant 0.000000e+00 : f32
    %136 = vector.broadcast %cst_48 : f32 to vector<2x16x16xf32>
    %137 = arith.maximumf %135, %136 : vector<2x16x16xf32>
    %138 = tpu.iota {dimensions = array<i32: 1>} : vector<2x16x16xi32>
    %c0_i32_49 = arith.constant 0 : i32
    %139 = vector.broadcast %c0_i32_49 : i32 to vector<2x16x16xi32>
    %140 = arith.cmpi eq, %138, %139 : vector<2x16x16xi32>
    %c1_i32_50 = arith.constant 1 : i32
    %141 = tpu.dynamic_rotate %137 by %c1_i32_50 dim 1 : vector<2x16x16xf32>, i32 -> vector<2x16x16xf32>
    %cst_51 = arith.constant 0.000000e+00 : f32
    %142 = vector.broadcast %cst_51 : f32 to vector<2x16x16xf32>
    %143 = arith.select %140, %142, %141 : vector<2x16x16xi1>, vector<2x16x16xf32>
    %c15_i32_52 = arith.constant 15 : i32
    %144 = vector.broadcast %c15_i32_52 : i32 to vector<2x16x16xi32>
    %145 = arith.cmpi eq, %138, %144 : vector<2x16x16xi32>
    %c15_i32_53 = arith.constant 15 : i32
    %146 = tpu.dynamic_rotate %137 by %c15_i32_53 dim 1 : vector<2x16x16xf32>, i32 -> vector<2x16x16xf32>
    %cst_54 = arith.constant 0.000000e+00 : f32
    %147 = vector.broadcast %cst_54 : f32 to vector<2x16x16xf32>
    %148 = arith.select %145, %147, %146 : vector<2x16x16xi1>, vector<2x16x16xf32>
    %149 = tpu.concatenate %143, %137, %148 in 2 : vector<2x16x16xf32>, vector<2x16x16xf32>, vector<2x16x16xf32> -> vector<2x16x48xf32>
    %c304 = arith.constant 304 : index
    %c0_55 = arith.constant 0 : index
    %150 = vector.load %arg3[%c304, %c0_55] : memref<712x128xf32, #tpu.memory_space<vmem>>, vector<48x32xf32>
    %cst_56 = arith.constant dense<0.000000e+00> : vector<2x16x32xf32>
    %151 = tpu.matmul %149, %150, %cst_56 {dimension_numbers = #tpu.dot_dimension_numbers<[2], [0], [0, 1], [1], [0, 0, 0, 1, 1, 1], [], []>} : vector<2x16x48xf32>, vector<48x32xf32>, vector<2x16x32xf32> -> vector<2x16x32xf32>
    %c8_57 = arith.constant 8 : index
    %c0_58 = arith.constant 0 : index
    %152 = vector.load %arg2[%c8_57, %c0_58] : memref<32x128xf32, #tpu.memory_space<vmem>>, vector<1x32xf32>
    %153 = vector.shape_cast %152 : vector<1x32xf32> to vector<1x1x32xf32>
    %154 = vector.broadcast %153 : vector<1x1x32xf32> to vector<2x16x32xf32>
    %155 = arith.addf %151, %154 : vector<2x16x32xf32>
    %c352 = arith.constant 352 : index
    %c0_59 = arith.constant 0 : index
    %156 = vector.load %arg3[%c352, %c0_59] : memref<712x128xf32, #tpu.memory_space<vmem>>, vector<64x32xf32>
    %cst_60 = arith.constant dense<0.000000e+00> : vector<2x16x32xf32>
    %157 = tpu.matmul %88, %156, %cst_60 {dimension_numbers = #tpu.dot_dimension_numbers<[2], [0], [0, 1], [1], [0, 0, 0, 1, 1, 1], [], []>} : vector<2x16x64xf32>, vector<64x32xf32>, vector<2x16x32xf32> -> vector<2x16x32xf32>
    %c9 = arith.constant 9 : index
    %c0_61 = arith.constant 0 : index
    %158 = vector.load %arg2[%c9, %c0_61] : memref<32x128xf32, #tpu.memory_space<vmem>>, vector<1x32xf32>
    %159 = vector.shape_cast %158 : vector<1x32xf32> to vector<1x1x32xf32>
    %160 = vector.broadcast %159 : vector<1x1x32xf32> to vector<2x16x32xf32>
    %161 = arith.addf %157, %160 : vector<2x16x32xf32>
    %162 = arith.addf %155, %161 : vector<2x16x32xf32>
    %163 = vector.shape_cast %162 : vector<2x16x32xf32> to vector<2x512xf32>
    %c0_62 = arith.constant 0 : index
    %c0_63 = arith.constant 0 : index
    %164 = vector.load %arg5[%c0_62, %c0_63] : memref<512x32xf32, #tpu.memory_space<vmem>>, vector<512x32xf32>
    %cst_64 = arith.constant dense<0.000000e+00> : vector<2x32xf32>
    %165 = tpu.matmul %163, %164, %cst_64 {dimension_numbers = #tpu.dot_dimension_numbers<[1], [0], [0], [1], [0, 0, 1, 1], [], []>} : vector<2x512xf32>, vector<512x32xf32>, vector<2x32xf32> -> vector<2x32xf32>
    %c16 = arith.constant 16 : index
    %c0_65 = arith.constant 0 : index
    %166 = vector.load %arg2[%c16, %c0_65] : memref<32x128xf32, #tpu.memory_space<vmem>>, vector<1x32xf32>
    %167 = vector.broadcast %166 : vector<1x32xf32> to vector<2x32xf32>
    %168 = arith.addf %165, %167 : vector<2x32xf32>
    %169 = vector.extract_strided_slice %168 {offsets = [0, 0], sizes = [2, 16], strides = [1, 1]} : vector<2x32xf32> to vector<2x16xf32>
    %170 = vector.extract_strided_slice %168 {offsets = [0, 16], sizes = [2, 16], strides = [1, 1]} : vector<2x32xf32> to vector<2x16xf32>
    %171 = vector.shape_cast %162 : vector<2x16x32xf32> to vector<2x8x2x32xf32>
    %172 = vector.extract_strided_slice %171 {offsets = [0, 0, 0, 0], sizes = [2, 8, 1, 32], strides = [1, 1, 1, 1]} : vector<2x8x2x32xf32> to vector<2x8x1x32xf32>
    %173 = vector.shape_cast %172 : vector<2x8x1x32xf32> to vector<2x8x32xf32>
    %174 = vector.extract_strided_slice %171 {offsets = [0, 0, 1, 0], sizes = [2, 8, 1, 32], strides = [1, 1, 1, 1]} : vector<2x8x2x32xf32> to vector<2x8x1x32xf32>
    %175 = vector.shape_cast %174 : vector<2x8x1x32xf32> to vector<2x8x32xf32>
    %176 = arith.maximumf %173, %175 : vector<2x8x32xf32>
    %177 = tpu.iota {dimensions = array<i32: 1>} : vector<2x8x32xi32>
    %c0_i32_66 = arith.constant 0 : i32
    %178 = vector.broadcast %c0_i32_66 : i32 to vector<2x8x32xi32>
    %179 = arith.cmpi eq, %177, %178 : vector<2x8x32xi32>
    %c1_i32_67 = arith.constant 1 : i32
    %180 = tpu.dynamic_rotate %176 by %c1_i32_67 dim 1 : vector<2x8x32xf32>, i32 -> vector<2x8x32xf32>
    %cst_68 = arith.constant 0.000000e+00 : f32
    %181 = vector.broadcast %cst_68 : f32 to vector<2x8x32xf32>
    %182 = arith.select %179, %181, %180 : vector<2x8x32xi1>, vector<2x8x32xf32>
    %c7_i32 = arith.constant 7 : i32
    %183 = vector.broadcast %c7_i32 : i32 to vector<2x8x32xi32>
    %184 = arith.cmpi eq, %177, %183 : vector<2x8x32xi32>
    %c7_i32_69 = arith.constant 7 : i32
    %185 = tpu.dynamic_rotate %176 by %c7_i32_69 dim 1 : vector<2x8x32xf32>, i32 -> vector<2x8x32xf32>
    %cst_70 = arith.constant 0.000000e+00 : f32
    %186 = vector.broadcast %cst_70 : f32 to vector<2x8x32xf32>
    %187 = arith.select %184, %186, %185 : vector<2x8x32xi1>, vector<2x8x32xf32>
    %188 = tpu.concatenate %182, %176, %187 in 2 : vector<2x8x32xf32>, vector<2x8x32xf32>, vector<2x8x32xf32> -> vector<2x8x96xf32>
    %c416 = arith.constant 416 : index
    %c0_71 = arith.constant 0 : index
    %189 = vector.load %arg3[%c416, %c0_71] : memref<712x128xf32, #tpu.memory_space<vmem>>, vector<96x8xf32>
    %cst_72 = arith.constant dense<0.000000e+00> : vector<2x8x8xf32>
    %190 = tpu.matmul %188, %189, %cst_72 {dimension_numbers = #tpu.dot_dimension_numbers<[2], [0], [0, 1], [1], [0, 0, 0, 1, 1, 1], [], []>} : vector<2x8x96xf32>, vector<96x8xf32>, vector<2x8x8xf32> -> vector<2x8x8xf32>
    %c10 = arith.constant 10 : index
    %c0_73 = arith.constant 0 : index
    %191 = vector.load %arg2[%c10, %c0_73] : memref<32x128xf32, #tpu.memory_space<vmem>>, vector<1x8xf32>
    %192 = vector.shape_cast %191 : vector<1x8xf32> to vector<1x1x8xf32>
    %193 = vector.broadcast %192 : vector<1x1x8xf32> to vector<2x8x8xf32>
    %194 = arith.addf %190, %193 : vector<2x8x8xf32>
    %c11 = arith.constant 11 : index
    %c0_74 = arith.constant 0 : index
    %195 = vector.load %arg2[%c11, %c0_74] : memref<32x128xf32, #tpu.memory_space<vmem>>, vector<1x8xf32>
    %c12 = arith.constant 12 : index
    %c0_75 = arith.constant 0 : index
    %196 = vector.load %arg2[%c12, %c0_75] : memref<32x128xf32, #tpu.memory_space<vmem>>, vector<1x8xf32>
    %197 = vector.shape_cast %194 : vector<2x8x8xf32> to vector<16x8xf32>
    %cst_76 = arith.constant dense<0.000000e+00> : vector<8xf32>
    %198 = vector.multi_reduction <add>, %197, %cst_76 [0] : vector<16x8xf32> to vector<8xf32>
    %199 = vector.shape_cast %198 : vector<8xf32> to vector<1x8xf32>
    %cst_77 = arith.constant 1.600000e+01 : f32
    %200 = vector.broadcast %cst_77 : f32 to vector<1x8xf32>
    %201 = arith.divf %199, %200 : vector<1x8xf32>
    %202 = vector.broadcast %201 : vector<1x8xf32> to vector<16x8xf32>
    %203 = arith.subf %197, %202 : vector<16x8xf32>
    %204 = vector.broadcast %201 : vector<1x8xf32> to vector<16x8xf32>
    %205 = arith.subf %197, %204 : vector<16x8xf32>
    %206 = arith.mulf %203, %205 : vector<16x8xf32>
    %cst_78 = arith.constant dense<0.000000e+00> : vector<8xf32>
    %207 = vector.multi_reduction <add>, %206, %cst_78 [0] : vector<16x8xf32> to vector<8xf32>
    %208 = vector.shape_cast %207 : vector<8xf32> to vector<1x8xf32>
    %cst_79 = arith.constant 1.600000e+01 : f32
    %209 = vector.broadcast %cst_79 : f32 to vector<1x8xf32>
    %210 = arith.divf %208, %209 : vector<1x8xf32>
    %cst_80 = arith.constant 9.99999974E-6 : f32
    %211 = vector.broadcast %cst_80 : f32 to vector<1x8xf32>
    %212 = arith.addf %210, %211 : vector<1x8xf32>
    %213 = math.rsqrt %212 : vector<1x8xf32>
    %214 = arith.mulf %213, %195 : vector<1x8xf32>
    %215 = vector.shape_cast %201 : vector<1x8xf32> to vector<1x1x8xf32>
    %216 = vector.broadcast %215 : vector<1x1x8xf32> to vector<2x8x8xf32>
    %217 = arith.subf %194, %216 : vector<2x8x8xf32>
    %218 = vector.shape_cast %214 : vector<1x8xf32> to vector<1x1x8xf32>
    %219 = vector.broadcast %218 : vector<1x1x8xf32> to vector<2x8x8xf32>
    %220 = arith.mulf %217, %219 : vector<2x8x8xf32>
    %221 = vector.shape_cast %196 : vector<1x8xf32> to vector<1x1x8xf32>
    %222 = vector.broadcast %221 : vector<1x1x8xf32> to vector<2x8x8xf32>
    %223 = arith.addf %220, %222 : vector<2x8x8xf32>
    %cst_81 = arith.constant 0.000000e+00 : f32
    %224 = vector.broadcast %cst_81 : f32 to vector<2x8x8xf32>
    %225 = arith.maximumf %223, %224 : vector<2x8x8xf32>
    %226 = tpu.iota {dimensions = array<i32: 1>} : vector<2x8x8xi32>
    %c0_i32_82 = arith.constant 0 : i32
    %227 = vector.broadcast %c0_i32_82 : i32 to vector<2x8x8xi32>
    %228 = arith.cmpi eq, %226, %227 : vector<2x8x8xi32>
    %c1_i32_83 = arith.constant 1 : i32
    %229 = tpu.dynamic_rotate %225 by %c1_i32_83 dim 1 : vector<2x8x8xf32>, i32 -> vector<2x8x8xf32>
    %cst_84 = arith.constant 0.000000e+00 : f32
    %230 = vector.broadcast %cst_84 : f32 to vector<2x8x8xf32>
    %231 = arith.select %228, %230, %229 : vector<2x8x8xi1>, vector<2x8x8xf32>
    %c7_i32_85 = arith.constant 7 : i32
    %232 = vector.broadcast %c7_i32_85 : i32 to vector<2x8x8xi32>
    %233 = arith.cmpi eq, %226, %232 : vector<2x8x8xi32>
    %c7_i32_86 = arith.constant 7 : i32
    %234 = tpu.dynamic_rotate %225 by %c7_i32_86 dim 1 : vector<2x8x8xf32>, i32 -> vector<2x8x8xf32>
    %cst_87 = arith.constant 0.000000e+00 : f32
    %235 = vector.broadcast %cst_87 : f32 to vector<2x8x8xf32>
    %236 = arith.select %233, %235, %234 : vector<2x8x8xi1>, vector<2x8x8xf32>
    %237 = tpu.concatenate %231, %225, %236 in 2 : vector<2x8x8xf32>, vector<2x8x8xf32>, vector<2x8x8xf32> -> vector<2x8x24xf32>
    %c512 = arith.constant 512 : index
    %c0_88 = arith.constant 0 : index
    %238 = vector.load %arg3[%c512, %c0_88] : memref<712x128xf32, #tpu.memory_space<vmem>>, vector<24x16xf32>
    %cst_89 = arith.constant dense<0.000000e+00> : vector<2x8x16xf32>
    %239 = tpu.matmul %237, %238, %cst_89 {dimension_numbers = #tpu.dot_dimension_numbers<[2], [0], [0, 1], [1], [0, 0, 0, 1, 1, 1], [], []>} : vector<2x8x24xf32>, vector<24x16xf32>, vector<2x8x16xf32> -> vector<2x8x16xf32>
    %c13 = arith.constant 13 : index
    %c0_90 = arith.constant 0 : index
    %240 = vector.load %arg2[%c13, %c0_90] : memref<32x128xf32, #tpu.memory_space<vmem>>, vector<1x16xf32>
    %241 = vector.shape_cast %240 : vector<1x16xf32> to vector<1x1x16xf32>
    %242 = vector.broadcast %241 : vector<1x1x16xf32> to vector<2x8x16xf32>
    %243 = arith.addf %239, %242 : vector<2x8x16xf32>
    %c536 = arith.constant 536 : index
    %c0_91 = arith.constant 0 : index
    %244 = vector.load %arg3[%c536, %c0_91] : memref<712x128xf32, #tpu.memory_space<vmem>>, vector<32x16xf32>
    %cst_92 = arith.constant dense<0.000000e+00> : vector<2x8x16xf32>
    %245 = tpu.matmul %176, %244, %cst_92 {dimension_numbers = #tpu.dot_dimension_numbers<[2], [0], [0, 1], [1], [0, 0, 0, 1, 1, 1], [], []>} : vector<2x8x32xf32>, vector<32x16xf32>, vector<2x8x16xf32> -> vector<2x8x16xf32>
    %c14 = arith.constant 14 : index
    %c0_93 = arith.constant 0 : index
    %246 = vector.load %arg2[%c14, %c0_93] : memref<32x128xf32, #tpu.memory_space<vmem>>, vector<1x16xf32>
    %247 = vector.shape_cast %246 : vector<1x16xf32> to vector<1x1x16xf32>
    %248 = vector.broadcast %247 : vector<1x1x16xf32> to vector<2x8x16xf32>
    %249 = arith.addf %245, %248 : vector<2x8x16xf32>
    %250 = arith.addf %243, %249 : vector<2x8x16xf32>
    %251 = vector.shape_cast %250 : vector<2x8x16xf32> to vector<2x128xf32>
    %c0_94 = arith.constant 0 : index
    %c0_95 = arith.constant 0 : index
    %252 = vector.load %arg6[%c0_94, %c0_95] : memref<128x16xf32, #tpu.memory_space<vmem>>, vector<128x16xf32>
    %cst_96 = arith.constant dense<0.000000e+00> : vector<2x16xf32>
    %253 = tpu.matmul %251, %252, %cst_96 {dimension_numbers = #tpu.dot_dimension_numbers<[1], [0], [0], [1], [0, 0, 1, 1], [], []>} : vector<2x128xf32>, vector<128x16xf32>, vector<2x16xf32> -> vector<2x16xf32>
    %c17 = arith.constant 17 : index
    %c0_97 = arith.constant 0 : index
    %254 = vector.load %arg2[%c17, %c0_97] : memref<32x128xf32, #tpu.memory_space<vmem>>, vector<1x16xf32>
    %255 = vector.broadcast %254 : vector<1x16xf32> to vector<2x16xf32>
    %256 = arith.addf %253, %255 : vector<2x16xf32>
    %257 = vector.extract_strided_slice %256 {offsets = [0, 0], sizes = [2, 8], strides = [1, 1]} : vector<2x16xf32> to vector<2x8xf32>
    %258 = vector.extract_strided_slice %256 {offsets = [0, 8], sizes = [2, 8], strides = [1, 1]} : vector<2x16xf32> to vector<2x8xf32>
    %c0_98 = arith.constant 0 : index
    %c0_99 = arith.constant 0 : index
    %259 = vector.load %arg1[%c0_98, %c0_99] : memref<2x56xf32, #tpu.memory_space<vmem>>, vector<2x56xf32>
    %260 = vector.extract_strided_slice %259 {offsets = [0, 0], sizes = [2, 8], strides = [1, 1]} : vector<2x56xf32> to vector<2x8xf32>
    %cst_100 = arith.constant 5.000000e-01 : f32
    %261 = vector.broadcast %cst_100 : f32 to vector<2x8xf32>
    %262 = arith.mulf %261, %258 : vector<2x8xf32>
    %263 = math.exp %262 : vector<2x8xf32>
    %264 = arith.mulf %260, %263 : vector<2x8xf32>
    %265 = arith.addf %257, %264 : vector<2x8xf32>
    %266 = vector.extract_strided_slice %259 {offsets = [0, 8], sizes = [2, 16], strides = [1, 1]} : vector<2x56xf32> to vector<2x16xf32>
    %cst_101 = arith.constant 5.000000e-01 : f32
    %267 = vector.broadcast %cst_101 : f32 to vector<2x16xf32>
    %268 = arith.mulf %267, %170 : vector<2x16xf32>
    %269 = math.exp %268 : vector<2x16xf32>
    %270 = arith.mulf %266, %269 : vector<2x16xf32>
    %271 = arith.addf %169, %270 : vector<2x16xf32>
    %272 = vector.extract_strided_slice %259 {offsets = [0, 24], sizes = [2, 32], strides = [1, 1]} : vector<2x56xf32> to vector<2x32xf32>
    %cst_102 = arith.constant 5.000000e-01 : f32
    %273 = vector.broadcast %cst_102 : f32 to vector<2x32xf32>
    %274 = arith.mulf %273, %82 : vector<2x32xf32>
    %275 = math.exp %274 : vector<2x32xf32>
    %276 = arith.mulf %272, %275 : vector<2x32xf32>
    %277 = arith.addf %81, %276 : vector<2x32xf32>
    %c0_103 = arith.constant 0 : index
    %c0_104 = arith.constant 0 : index
    %278 = vector.load %arg7[%c0_103, %c0_104] : memref<9x128xf32, #tpu.memory_space<vmem>>, vector<8x128xf32>
    %cst_105 = arith.constant dense<0.000000e+00> : vector<2x128xf32>
    %279 = tpu.matmul %265, %278, %cst_105 {dimension_numbers = #tpu.dot_dimension_numbers<[1], [0], [0], [1], [0, 0, 1, 1], [], []>} : vector<2x8xf32>, vector<8x128xf32>, vector<2x128xf32> -> vector<2x128xf32>
    %c8_106 = arith.constant 8 : index
    %c0_107 = arith.constant 0 : index
    %280 = vector.load %arg7[%c8_106, %c0_107] : memref<9x128xf32, #tpu.memory_space<vmem>>, vector<1x128xf32>
    %281 = vector.broadcast %280 : vector<1x128xf32> to vector<2x128xf32>
    %282 = arith.addf %279, %281 : vector<2x128xf32>
    %283 = vector.shape_cast %282 : vector<2x128xf32> to vector<2x8x16xf32>
    %284 = tpu.iota {dimensions = array<i32: 1>} : vector<2x8x16xi32>
    %c0_i32_108 = arith.constant 0 : i32
    %285 = vector.broadcast %c0_i32_108 : i32 to vector<2x8x16xi32>
    %286 = arith.cmpi eq, %284, %285 : vector<2x8x16xi32>
    %c1_i32_109 = arith.constant 1 : i32
    %287 = tpu.dynamic_rotate %283 by %c1_i32_109 dim 1 : vector<2x8x16xf32>, i32 -> vector<2x8x16xf32>
    %cst_110 = arith.constant 0.000000e+00 : f32
    %288 = vector.broadcast %cst_110 : f32 to vector<2x8x16xf32>
    %289 = arith.select %286, %288, %287 : vector<2x8x16xi1>, vector<2x8x16xf32>
    %c7_i32_111 = arith.constant 7 : i32
    %290 = vector.broadcast %c7_i32_111 : i32 to vector<2x8x16xi32>
    %291 = arith.cmpi eq, %284, %290 : vector<2x8x16xi32>
    %c7_i32_112 = arith.constant 7 : i32
    %292 = tpu.dynamic_rotate %283 by %c7_i32_112 dim 1 : vector<2x8x16xf32>, i32 -> vector<2x8x16xf32>
    %cst_113 = arith.constant 0.000000e+00 : f32
    %293 = vector.broadcast %cst_113 : f32 to vector<2x8x16xf32>
    %294 = arith.select %291, %293, %292 : vector<2x8x16xi1>, vector<2x8x16xf32>
    %295 = tpu.concatenate %289, %283, %294 in 2 : vector<2x8x16xf32>, vector<2x8x16xf32>, vector<2x8x16xf32> -> vector<2x8x48xf32>
    %c568 = arith.constant 568 : index
    %c0_114 = arith.constant 0 : index
    %296 = vector.load %arg3[%c568, %c0_114] : memref<712x128xf32, #tpu.memory_space<vmem>>, vector<48x32xf32>
    %cst_115 = arith.constant dense<0.000000e+00> : vector<2x8x32xf32>
    %297 = tpu.matmul %295, %296, %cst_115 {dimension_numbers = #tpu.dot_dimension_numbers<[2], [0], [0, 1], [1], [0, 0, 0, 1, 1, 1], [], []>} : vector<2x8x48xf32>, vector<48x32xf32>, vector<2x8x32xf32> -> vector<2x8x32xf32>
    %c18 = arith.constant 18 : index
    %c0_116 = arith.constant 0 : index
    %298 = vector.load %arg2[%c18, %c0_116] : memref<32x128xf32, #tpu.memory_space<vmem>>, vector<1x32xf32>
    %299 = vector.shape_cast %298 : vector<1x32xf32> to vector<1x1x32xf32>
    %300 = vector.broadcast %299 : vector<1x1x32xf32> to vector<2x8x32xf32>
    %301 = arith.addf %297, %300 : vector<2x8x32xf32>
    %c19 = arith.constant 19 : index
    %c0_117 = arith.constant 0 : index
    %302 = vector.load %arg2[%c19, %c0_117] : memref<32x128xf32, #tpu.memory_space<vmem>>, vector<1x32xf32>
    %c20 = arith.constant 20 : index
    %c0_118 = arith.constant 0 : index
    %303 = vector.load %arg2[%c20, %c0_118] : memref<32x128xf32, #tpu.memory_space<vmem>>, vector<1x32xf32>
    %304 = vector.shape_cast %301 : vector<2x8x32xf32> to vector<16x32xf32>
    %cst_119 = arith.constant dense<0.000000e+00> : vector<32xf32>
    %305 = vector.multi_reduction <add>, %304, %cst_119 [0] : vector<16x32xf32> to vector<32xf32>
    %306 = vector.shape_cast %305 : vector<32xf32> to vector<1x32xf32>
    %cst_120 = arith.constant 1.600000e+01 : f32
    %307 = vector.broadcast %cst_120 : f32 to vector<1x32xf32>
    %308 = arith.divf %306, %307 : vector<1x32xf32>
    %309 = vector.broadcast %308 : vector<1x32xf32> to vector<16x32xf32>
    %310 = arith.subf %304, %309 : vector<16x32xf32>
    %311 = vector.broadcast %308 : vector<1x32xf32> to vector<16x32xf32>
    %312 = arith.subf %304, %311 : vector<16x32xf32>
    %313 = arith.mulf %310, %312 : vector<16x32xf32>
    %cst_121 = arith.constant dense<0.000000e+00> : vector<32xf32>
    %314 = vector.multi_reduction <add>, %313, %cst_121 [0] : vector<16x32xf32> to vector<32xf32>
    %315 = vector.shape_cast %314 : vector<32xf32> to vector<1x32xf32>
    %cst_122 = arith.constant 1.600000e+01 : f32
    %316 = vector.broadcast %cst_122 : f32 to vector<1x32xf32>
    %317 = arith.divf %315, %316 : vector<1x32xf32>
    %cst_123 = arith.constant 9.99999974E-6 : f32
    %318 = vector.broadcast %cst_123 : f32 to vector<1x32xf32>
    %319 = arith.addf %317, %318 : vector<1x32xf32>
    %320 = math.rsqrt %319 : vector<1x32xf32>
    %321 = arith.mulf %320, %302 : vector<1x32xf32>
    %322 = vector.shape_cast %308 : vector<1x32xf32> to vector<1x1x32xf32>
    %323 = vector.broadcast %322 : vector<1x1x32xf32> to vector<2x8x32xf32>
    %324 = arith.subf %301, %323 : vector<2x8x32xf32>
    %325 = vector.shape_cast %321 : vector<1x32xf32> to vector<1x1x32xf32>
    %326 = vector.broadcast %325 : vector<1x1x32xf32> to vector<2x8x32xf32>
    %327 = arith.mulf %324, %326 : vector<2x8x32xf32>
    %328 = vector.shape_cast %303 : vector<1x32xf32> to vector<1x1x32xf32>
    %329 = vector.broadcast %328 : vector<1x1x32xf32> to vector<2x8x32xf32>
    %330 = arith.addf %327, %329 : vector<2x8x32xf32>
    %cst_124 = arith.constant 0.000000e+00 : f32
    %331 = vector.broadcast %cst_124 : f32 to vector<2x8x32xf32>
    %332 = arith.maximumf %330, %331 : vector<2x8x32xf32>
    %333 = vector.shape_cast %332 : vector<2x8x32xf32> to vector<2x8x1x32xf32>
    %334 = vector.shape_cast %333 : vector<2x8x1x32xf32> to vector<2x8x1x32xf32>
    %335 = vector.broadcast %334 : vector<2x8x1x32xf32> to vector<2x8x2x32xf32>
    %336 = vector.shape_cast %335 : vector<2x8x2x32xf32> to vector<2x16x32xf32>
    %c0_125 = arith.constant 0 : index
    %c0_126 = arith.constant 0 : index
    %337 = vector.load %arg8[%c0_125, %c0_126] : memref<17x512xf32, #tpu.memory_space<vmem>>, vector<16x512xf32>
    %cst_127 = arith.constant dense<0.000000e+00> : vector<2x512xf32>
    %338 = tpu.matmul %271, %337, %cst_127 {dimension_numbers = #tpu.dot_dimension_numbers<[1], [0], [0], [1], [0, 0, 1, 1], [], []>} : vector<2x16xf32>, vector<16x512xf32>, vector<2x512xf32> -> vector<2x512xf32>
    %c16_128 = arith.constant 16 : index
    %c0_129 = arith.constant 0 : index
    %339 = vector.load %arg8[%c16_128, %c0_129] : memref<17x512xf32, #tpu.memory_space<vmem>>, vector<1x512xf32>
    %340 = vector.broadcast %339 : vector<1x512xf32> to vector<2x512xf32>
    %341 = arith.addf %338, %340 : vector<2x512xf32>
    %342 = vector.shape_cast %341 : vector<2x512xf32> to vector<2x16x32xf32>
    %343 = arith.addf %336, %342 : vector<2x16x32xf32>
    %344 = tpu.iota {dimensions = array<i32: 1>} : vector<2x16x32xi32>
    %c0_i32_130 = arith.constant 0 : i32
    %345 = vector.broadcast %c0_i32_130 : i32 to vector<2x16x32xi32>
    %346 = arith.cmpi eq, %344, %345 : vector<2x16x32xi32>
    %c1_i32_131 = arith.constant 1 : i32
    %347 = tpu.dynamic_rotate %343 by %c1_i32_131 dim 1 : vector<2x16x32xf32>, i32 -> vector<2x16x32xf32>
    %cst_132 = arith.constant 0.000000e+00 : f32
    %348 = vector.broadcast %cst_132 : f32 to vector<2x16x32xf32>
    %349 = arith.select %346, %348, %347 : vector<2x16x32xi1>, vector<2x16x32xf32>
    %c15_i32_133 = arith.constant 15 : i32
    %350 = vector.broadcast %c15_i32_133 : i32 to vector<2x16x32xi32>
    %351 = arith.cmpi eq, %344, %350 : vector<2x16x32xi32>
    %c15_i32_134 = arith.constant 15 : i32
    %352 = tpu.dynamic_rotate %343 by %c15_i32_134 dim 1 : vector<2x16x32xf32>, i32 -> vector<2x16x32xf32>
    %cst_135 = arith.constant 0.000000e+00 : f32
    %353 = vector.broadcast %cst_135 : f32 to vector<2x16x32xf32>
    %354 = arith.select %351, %353, %352 : vector<2x16x32xi1>, vector<2x16x32xf32>
    %355 = tpu.concatenate %349, %343, %354 in 2 : vector<2x16x32xf32>, vector<2x16x32xf32>, vector<2x16x32xf32> -> vector<2x16x96xf32>
    %c616 = arith.constant 616 : index
    %c0_136 = arith.constant 0 : index
    %356 = vector.load %arg3[%c616, %c0_136] : memref<712x128xf32, #tpu.memory_space<vmem>>, vector<96x64xf32>
    %cst_137 = arith.constant dense<0.000000e+00> : vector<2x16x64xf32>
    %357 = tpu.matmul %355, %356, %cst_137 {dimension_numbers = #tpu.dot_dimension_numbers<[2], [0], [0, 1], [1], [0, 0, 0, 1, 1, 1], [], []>} : vector<2x16x96xf32>, vector<96x64xf32>, vector<2x16x64xf32> -> vector<2x16x64xf32>
    %c21 = arith.constant 21 : index
    %c0_138 = arith.constant 0 : index
    %358 = vector.load %arg2[%c21, %c0_138] : memref<32x128xf32, #tpu.memory_space<vmem>>, vector<1x64xf32>
    %359 = vector.shape_cast %358 : vector<1x64xf32> to vector<1x1x64xf32>
    %360 = vector.broadcast %359 : vector<1x1x64xf32> to vector<2x16x64xf32>
    %361 = arith.addf %357, %360 : vector<2x16x64xf32>
    %c22 = arith.constant 22 : index
    %c0_139 = arith.constant 0 : index
    %362 = vector.load %arg2[%c22, %c0_139] : memref<32x128xf32, #tpu.memory_space<vmem>>, vector<1x64xf32>
    %c23 = arith.constant 23 : index
    %c0_140 = arith.constant 0 : index
    %363 = vector.load %arg2[%c23, %c0_140] : memref<32x128xf32, #tpu.memory_space<vmem>>, vector<1x64xf32>
    %364 = vector.shape_cast %361 : vector<2x16x64xf32> to vector<32x64xf32>
    %cst_141 = arith.constant dense<0.000000e+00> : vector<64xf32>
    %365 = vector.multi_reduction <add>, %364, %cst_141 [0] : vector<32x64xf32> to vector<64xf32>
    %366 = vector.shape_cast %365 : vector<64xf32> to vector<1x64xf32>
    %cst_142 = arith.constant 3.200000e+01 : f32
    %367 = vector.broadcast %cst_142 : f32 to vector<1x64xf32>
    %368 = arith.divf %366, %367 : vector<1x64xf32>
    %369 = vector.broadcast %368 : vector<1x64xf32> to vector<32x64xf32>
    %370 = arith.subf %364, %369 : vector<32x64xf32>
    %371 = vector.broadcast %368 : vector<1x64xf32> to vector<32x64xf32>
    %372 = arith.subf %364, %371 : vector<32x64xf32>
    %373 = arith.mulf %370, %372 : vector<32x64xf32>
    %cst_143 = arith.constant dense<0.000000e+00> : vector<64xf32>
    %374 = vector.multi_reduction <add>, %373, %cst_143 [0] : vector<32x64xf32> to vector<64xf32>
    %375 = vector.shape_cast %374 : vector<64xf32> to vector<1x64xf32>
    %cst_144 = arith.constant 3.200000e+01 : f32
    %376 = vector.broadcast %cst_144 : f32 to vector<1x64xf32>
    %377 = arith.divf %375, %376 : vector<1x64xf32>
    %cst_145 = arith.constant 9.99999974E-6 : f32
    %378 = vector.broadcast %cst_145 : f32 to vector<1x64xf32>
    %379 = arith.addf %377, %378 : vector<1x64xf32>
    %380 = math.rsqrt %379 : vector<1x64xf32>
    %381 = arith.mulf %380, %362 : vector<1x64xf32>
    %382 = vector.shape_cast %368 : vector<1x64xf32> to vector<1x1x64xf32>
    %383 = vector.broadcast %382 : vector<1x1x64xf32> to vector<2x16x64xf32>
    %384 = arith.subf %361, %383 : vector<2x16x64xf32>
    %385 = vector.shape_cast %381 : vector<1x64xf32> to vector<1x1x64xf32>
    %386 = vector.broadcast %385 : vector<1x1x64xf32> to vector<2x16x64xf32>
    %387 = arith.mulf %384, %386 : vector<2x16x64xf32>
    %388 = vector.shape_cast %363 : vector<1x64xf32> to vector<1x1x64xf32>
    %389 = vector.broadcast %388 : vector<1x1x64xf32> to vector<2x16x64xf32>
    %390 = arith.addf %387, %389 : vector<2x16x64xf32>
    %cst_146 = arith.constant 0.000000e+00 : f32
    %391 = vector.broadcast %cst_146 : f32 to vector<2x16x64xf32>
    %392 = arith.maximumf %390, %391 : vector<2x16x64xf32>
    %393 = vector.shape_cast %392 : vector<2x16x64xf32> to vector<2x16x1x64xf32>
    %394 = vector.shape_cast %393 : vector<2x16x1x64xf32> to vector<2x16x1x64xf32>
    %395 = vector.broadcast %394 : vector<2x16x1x64xf32> to vector<2x16x2x64xf32>
    %396 = vector.shape_cast %395 : vector<2x16x2x64xf32> to vector<2x32x64xf32>
    %c0_147 = arith.constant 0 : index
    %c0_148 = arith.constant 0 : index
    %397 = vector.load %arg9[%c0_147, %c0_148] : memref<33x2048xf32, #tpu.memory_space<vmem>>, vector<32x2048xf32>
    %cst_149 = arith.constant dense<0.000000e+00> : vector<2x2048xf32>
    %398 = tpu.matmul %277, %397, %cst_149 {dimension_numbers = #tpu.dot_dimension_numbers<[1], [0], [0], [1], [0, 0, 1, 1], [], []>} : vector<2x32xf32>, vector<32x2048xf32>, vector<2x2048xf32> -> vector<2x2048xf32>
    %c32 = arith.constant 32 : index
    %c0_150 = arith.constant 0 : index
    %399 = vector.load %arg9[%c32, %c0_150] : memref<33x2048xf32, #tpu.memory_space<vmem>>, vector<1x2048xf32>
    %400 = vector.broadcast %399 : vector<1x2048xf32> to vector<2x2048xf32>
    %401 = arith.addf %398, %400 : vector<2x2048xf32>
    %402 = vector.shape_cast %401 : vector<2x2048xf32> to vector<2x32x64xf32>
    %403 = arith.addf %396, %402 : vector<2x32x64xf32>
    %404 = tpu.iota {dimensions = array<i32: 1>} : vector<2x32x64xi32>
    %c0_i32_151 = arith.constant 0 : i32
    %405 = vector.broadcast %c0_i32_151 : i32 to vector<2x32x64xi32>
    %406 = arith.cmpi eq, %404, %405 : vector<2x32x64xi32>
    %c1_i32_152 = arith.constant 1 : i32
    %407 = tpu.dynamic_rotate %403 by %c1_i32_152 dim 1 : vector<2x32x64xf32>, i32 -> vector<2x32x64xf32>
    %cst_153 = arith.constant 0.000000e+00 : f32
    %408 = vector.broadcast %cst_153 : f32 to vector<2x32x64xf32>
    %409 = arith.select %406, %408, %407 : vector<2x32x64xi1>, vector<2x32x64xf32>
    %c31_i32_154 = arith.constant 31 : i32
    %410 = vector.broadcast %c31_i32_154 : i32 to vector<2x32x64xi32>
    %411 = arith.cmpi eq, %404, %410 : vector<2x32x64xi32>
    %c31_i32_155 = arith.constant 31 : i32
    %412 = tpu.dynamic_rotate %403 by %c31_i32_155 dim 1 : vector<2x32x64xf32>, i32 -> vector<2x32x64xf32>
    %cst_156 = arith.constant 0.000000e+00 : f32
    %413 = vector.broadcast %cst_156 : f32 to vector<2x32x64xf32>
    %414 = arith.select %411, %413, %412 : vector<2x32x64xi1>, vector<2x32x64xf32>
    %415 = tpu.concatenate %409, %403, %414 in 2 : vector<2x32x64xf32>, vector<2x32x64xf32>, vector<2x32x64xf32> -> vector<2x32x192xf32>
    %c0_157 = arith.constant 0 : index
    %c0_158 = arith.constant 0 : index
    %416 = vector.load %arg10[%c0_157, %c0_158] : memref<1x192xf32, #tpu.memory_space<vmem>>, vector<1x192xf32>
    %417 = vector.shape_cast %416 : vector<1x192xf32> to vector<1x1x192xf32>
    %418 = vector.broadcast %417 : vector<1x1x192xf32> to vector<2x32x192xf32>
    %419 = arith.mulf %415, %418 : vector<2x32x192xf32>
    %cst_159 = arith.constant dense<0.000000e+00> : vector<2x32xf32>
    %420 = vector.multi_reduction <add>, %419, %cst_159 [2] : vector<2x32x192xf32> to vector<2x32xf32>
    %c24 = arith.constant 24 : index
    %c0_160 = arith.constant 0 : index
    %421 = vector.load %arg2[%c24, %c0_160] : memref<32x128xf32, #tpu.memory_space<vmem>>, vector<1x1xf32>
    %422 = vector.broadcast %421 : vector<1x1xf32> to vector<2x32xf32>
    %423 = arith.addf %420, %422 : vector<2x32xf32>
    %424 = tpu.concatenate %423, %257, %169, %81, %258, %170, %82, %265, %271, %277 in 1 : vector<2x32xf32>, vector<2x8xf32>, vector<2x16xf32>, vector<2x32xf32>, vector<2x8xf32>, vector<2x16xf32>, vector<2x32xf32>, vector<2x8xf32>, vector<2x16xf32>, vector<2x32xf32> -> vector<2x200xf32>
    %c0_161 = arith.constant 0 : index
    %c0_162 = arith.constant 0 : index
    %425 = vector.load %arg11[%c0_161, %c0_162] : memref<2x200xf32, #tpu.memory_space<vmem>>, vector<2x200xf32>
    tpu.vector_store %arg11[%c0_161, %c0_162], %424 {strides = array<i32>} : memref<2x200xf32, #tpu.memory_space<vmem>>, vector<2x200xf32>,
    return
  }
}

</mosaic_0001>

<llo_original>
// kernel: ladder_vae_forward.1
$region0: #{ladder_vae_forward.1}
  #allocation0 [shape = 'u32[]', space=smem, size = 0x4, offset = 0x4, fixed_abs, tag = 'smem constant byte address 0x4 - core index']
  #allocation1 [shape = 'u32[144,128]{1,0:T(1,128)}', space=vmem, size = 0x12000, scoped, tag = 'internal scratch']
  %s0 = inlined_call_operand.vmem [shape: f32[2,32,1], index: 0, kind: input, shape index: {}]
  %s1 = inlined_call_operand.vmem [shape: f32[2,56], index: 1, kind: input, shape index: {}]
  %s2 = inlined_call_operand.vmem [shape: f32[32,128], index: 2, kind: input, shape index: {}]
  %s3 = inlined_call_operand.vmem [shape: f32[712,128], index: 3, kind: input, shape index: {}]
  %s4 = inlined_call_operand.vmem [shape: f32[2048,64], index: 4, kind: input, shape index: {}]
  %s5 = inlined_call_operand.vmem [shape: f32[512,32], index: 5, kind: input, shape index: {}]
  %s6 = inlined_call_operand.vmem [shape: f32[128,16], index: 6, kind: input, shape index: {}]
  %s7 = inlined_call_operand.vmem [shape: f32[9,128], index: 7, kind: input, shape index: {}]
  %s8 = inlined_call_operand.vmem [shape: f32[17,512], index: 8, kind: input, shape index: {}]
  %s9 = inlined_call_operand.vmem [shape: f32[33,2048], index: 9, kind: input, shape index: {}]
  %s10 = inlined_call_operand.vmem [shape: f32[1,192], index: 10, kind: input, shape index: {}]
  %s11 = inlined_call_operand.vmem [shape: f32[2,200], index: 11, kind: output, shape index: {}]
  %s12 = sld [smem:[#allocation0]]
  $region54: #{ladder_vae_forward.1} parent=0
    _
  %s14 = ssub.s32 1, %s12
  %s15 = scalar_select 0, %s14, %s12
  // Predicated region
  $region2: #{ladder_vae_forward.1} parent=0 // pred_check
    _
  $region3: #{ladder_vae_forward.1} parent=0 // pred_check_branch
    %17 = sbr.rel (0) target = $region5
  $region4: #{ladder_vae_forward.1} parent=0 // pred_region
    _
  $region5: #{ladder_vae_forward.1} parent=0 // pred_fallthru
    _
  // Predicated region
  $region6: #{ladder_vae_forward.1} parent=0 // pred_check
    _
  $region7: #{ladder_vae_forward.1} parent=0 // pred_check_branch
    %19 = sbr.rel (0) target = $region9
  $region8: #{ladder_vae_forward.1} parent=0 // pred_region
    _
  $region9: #{ladder_vae_forward.1} parent=0 // pred_fallthru
    _
  // Predicated region
  $region10: #{ladder_vae_forward.1} parent=0 // pred_check
    _
  $region11: #{ladder_vae_forward.1} parent=0 // pred_check_branch
    %21 = sbr.rel (0) target = $region13
  $region12: #{ladder_vae_forward.1} parent=0 // pred_region
    _
  $region13: #{ladder_vae_forward.1} parent=0 // pred_fallthru
    _
  // Predicated region
  $region14: #{ladder_vae_forward.1} parent=0 // pred_check
    _
  $region15: #{ladder_vae_forward.1} parent=0 // pred_check_branch
    %23 = sbr.rel (0) target = $region17
  $region16: #{ladder_vae_forward.1} parent=0 // pred_region
    _
  $region17: #{ladder_vae_forward.1} parent=0 // pred_fallthru
    _
  // Predicated region
  $region18: #{ladder_vae_forward.1} parent=0 // pred_check
    _
  $region19: #{ladder_vae_forward.1} parent=0 // pred_check_branch
    %25 = sbr.rel (0) target = $region21
  $region20: #{ladder_vae_forward.1} parent=0 // pred_region
    _
  $region21: #{ladder_vae_forward.1} parent=0 // pred_fallthru
    _
  // Predicated region
  $region22: #{ladder_vae_forward.1} parent=0 // pred_check
    _
  $region23: #{ladder_vae_forward.1} parent=0 // pred_check_branch
    %27 = sbr.rel (0) target = $region25
  $region24: #{ladder_vae_forward.1} parent=0 // pred_region
    _
  $region25: #{ladder_vae_forward.1} parent=0 // pred_fallthru
    _
  // Predicated region
  $region26: #{ladder_vae_forward.1} parent=0 // pred_check
    _
  $region27: #{ladder_vae_forward.1} parent=0 // pred_check_branch
    %29 = sbr.rel (0) target = $region29
  $region28: #{ladder_vae_forward.1} parent=0 // pred_region
    _
  $region29: #{ladder_vae_forward.1} parent=0 // pred_fallthru
    _
  // Predicated region
  $region30: #{ladder_vae_forward.1} parent=0 // pred_check
    _
  $region31: #{ladder_vae_forward.1} parent=0 // pred_check_branch
    %31 = sbr.rel (0) target = $region33
  $region32: #{ladder_vae_forward.1} parent=0 // pred_region
    _
  $region33: #{ladder_vae_forward.1} parent=0 // pred_fallthru
    _
  // Predicated region
  $region34: #{ladder_vae_forward.1} parent=0 // pred_check
    _
  $region35: #{ladder_vae_forward.1} parent=0 // pred_check_branch
    %33 = sbr.rel (0) target = $region37
  $region36: #{ladder_vae_forward.1} parent=0 // pred_region
    _
  $region37: #{ladder_vae_forward.1} parent=0 // pred_fallthru
    _
  // Predicated region
  $region38: #{ladder_vae_forward.1} parent=0 // pred_check
    _
  $region39: #{ladder_vae_forward.1} parent=0 // pred_check_branch
    %35 = sbr.rel (0) target = $region41
  $region40: #{ladder_vae_forward.1} parent=0 // pred_region
    _
  $region41: #{ladder_vae_forward.1} parent=0 // pred_fallthru
    _
  // Predicated region
  $region42: #{ladder_vae_forward.1} parent=0 // pred_check
    _
  $region43: #{ladder_vae_forward.1} parent=0 // pred_check_branch
    %37 = sbr.rel (0) target = $region45
  $region44: #{ladder_vae_forward.1} parent=0 // pred_region
    _
  $region45: #{ladder_vae_forward.1} parent=0 // pred_fallthru
    _
  %v38 = vld [vmem:[%s0] sm:$0xff]
  %v39 = vld [vmem:[%s0 + $0x8] sm:$0xff]
  %v40 = vld [vmem:[%s0 + $0x10] sm:$0xff]
  %v41 = vld [vmem:[%s0 + $0x18] sm:$0xff]
  %v42 = vld [vmem:[%s0 + $0x20] sm:$0xff]
  %v43 = vld [vmem:[%s0 + $0x28] sm:$0xff]
  %v44 = vld [vmem:[%s0 + $0x30] sm:$0xff]
  %v45 = vld [vmem:[%s0 + $0x38] sm:$0xff]
  %v46 = vlaneseq
  %v47 = vshrl.u32 %v46, 7
  %v48 = vadd.s32 %v47, 8
  %v49 = vadd.s32 %v47, 16
  %v50 = vadd.s32 %v47, 24
  %vm51 = vcmp.eq.s32.totalorder %v47, 0
  %vm52 = vcmp.eq.s32.totalorder %v48, 0
  %vm53 = vcmp.eq.s32.totalorder %v49, 0
  %vm54 = vcmp.eq.s32.totalorder %v50, 0
  %v55 = vrot.slane %v38, 7
  %v56 = vrot.slane %v42, 7
  %v57 = vrot.slane %v39, 7
  %v58 = vrot.slane %v43, 7
  %v59 = vrot.slane %v40, 7
  %v60 = vrot.slane %v44, 7
  %v61 = vrot.slane %v41, 7
  %v62 = vrot.slane %v45, 7
  %vm63 = vcmp.lt.s32.totalorder %v47, 1
  %v64 = vsel %vm63, %v59, %v61
  %v65 = vsel %vm63, %v60, %v62
  %v66 = vsel %vm63, %v57, %v59
  %v67 = vsel %vm63, %v58, %v60
  %v68 = vsel %vm63, %v55, %v57
  %v69 = vsel %vm63, %v56, %v58
  %v70 = vsel %vm63, %v61, %v55
  %v71 = vsel %vm63, %v62, %v56
  %v72 = vsel %vm51, 0.0, %v70
  %v73 = vsel %vm52, 0.0, %v68
  %v74 = vsel %vm53, 0.0, %v66
  %v75 = vsel %vm54, 0.0, %v64
  %v76 = vsel %vm51, 0.0, %v71
  %v77 = vsel %vm52, 0.0, %v69
  %v78 = vsel %vm53, 0.0, %v67
  %v79 = vsel %vm54, 0.0, %v65
  %vm80 = vcmp.eq.s32.totalorder %v47, 31
  %vm81 = vcmp.eq.s32.totalorder %v48, 31
  %vm82 = vcmp.eq.s32.totalorder %v49, 31
  %vm83 = vcmp.eq.s32.totalorder %v50, 31
  %v84 = vrot.slane %v38, 1
  %v85 = vrot.slane %v42, 1
  %v86 = vrot.slane %v39, 1
  %v87 = vrot.slane %v43, 1
  %v88 = vrot.slane %v40, 1
  %v89 = vrot.slane %v44, 1
  %v90 = vrot.slane %v41, 1
  %v91 = vrot.slane %v45, 1
  %vm92 = vcmp.lt.s32.totalorder %v47, 7
  %v93 = vsel %vm92, %v88, %v90
  %v94 = vsel %vm92, %v89, %v91
  %v95 = vsel %vm92, %v86, %v88
  %v96 = vsel %vm92, %v87, %v89
  %v97 = vsel %vm92, %v84, %v86
  %v98 = vsel %vm92, %v85, %v87
  %v99 = vsel %vm92, %v90, %v84
  %v100 = vsel %vm92, %v91, %v85
  %v101 = vsel %vm80, 0.0, %v97
  %v102 = vsel %vm81, 0.0, %v95
  %v103 = vsel %vm82, 0.0, %v93
  %v104 = vsel %vm83, 0.0, %v99
  %v105 = vsel %vm80, 0.0, %v98
  %v106 = vsel %vm81, 0.0, %v96
  %v107 = vsel %vm82, 0.0, %v94
  %v108 = vsel %vm83, 0.0, %v100
  %117 = vrot.lane.b32.xlu0 %v38, 1
  %v118 = vpop.permute.xlu0 %117
  %119 = vrot.lane.b32.xlu0 %v39, 1
  %v120 = vpop.permute.xlu0 %119
  %121 = vrot.lane.b32.xlu0 %v40, 1
  %v122 = vpop.permute.xlu0 %121
  %123 = vrot.lane.b32.xlu0 %v41, 1
  %v124 = vpop.permute.xlu0 %123
  %125 = vrot.lane.b32.xlu0 %v42, 1
  %v126 = vpop.permute.xlu0 %125
  %127 = vrot.lane.b32.xlu0 %v43, 1
  %v128 = vpop.permute.xlu0 %127
  %129 = vrot.lane.b32.xlu0 %v44, 1
  %v130 = vpop.permute.xlu0 %129
  %131 = vrot.lane.b32.xlu0 %v45, 1
  %v132 = vpop.permute.xlu0 %131
  %149 = vrot.lane.b32.xlu0 %v101, 2
  %v150 = vpop.permute.xlu0 %149
  %151 = vrot.lane.b32.xlu0 %v102, 2
  %v152 = vpop.permute.xlu0 %151
  %153 = vrot.lane.b32.xlu0 %v103, 2
  %v154 = vpop.permute.xlu0 %153
  %155 = vrot.lane.b32.xlu0 %v104, 2
  %v156 = vpop.permute.xlu0 %155
  %157 = vrot.lane.b32.xlu0 %v105, 2
  %v158 = vpop.permute.xlu0 %157
  %159 = vrot.lane.b32.xlu0 %v106, 2
  %v160 = vpop.permute.xlu0 %159
  %161 = vrot.lane.b32.xlu0 %v107, 2
  %v162 = vpop.permute.xlu0 %161
  %163 = vrot.lane.b32.xlu0 %v108, 2
  %v164 = vpop.permute.xlu0 %163
  %vm173 = vcmask 7168
  %v174 = vsel %vm173, %v72, %v118
  %v175 = vsel %vm173, %v73, %v120
  %v176 = vsel %vm173, %v74, %v122
  %v177 = vsel %vm173, %v75, %v124
  %v178 = vsel %vm173, %v76, %v126
  %v179 = vsel %vm173, %v77, %v128
  %v180 = vsel %vm173, %v78, %v130
  %v181 = vsel %vm173, %v79, %v132
  %vm182 = vcmask 15360
  %v183 = vsel %vm182, %v174, %v150
  %v184 = vsel %vm182, %v175, %v152
  %v185 = vsel %vm182, %v176, %v154
  %v186 = vsel %vm182, %v177, %v156
  %v187 = vsel %vm182, %v178, %v158
  %v188 = vsel %vm182, %v179, %v160
  %v189 = vsel %vm182, %v180, %v162
  %v190 = vsel %vm182, %v181, %v164
  %v191 = vld [vmem:[%s3] sm:$0x7]
  %v192 = vld [vmem:[%s2] sm:$0x1]
  %v193 = vlaneseq
  %v194 = vshrl.u32 %v193, 7
  %v195 = vsub.s32 0, %v194
  %v196 = vrot.slane %v192, %v195
  %vm197 = vcmask 23552
  %v199 = vsel %vm197, %v183, 0
  %v202 = vsel %vm197, %v184, 0
  %v205 = vsel %vm197, %v185, 0
  %v208 = vsel %vm197, %v186, 0
  %v211 = vsel %vm197, %v187, 0
  %v214 = vsel %vm197, %v188, 0
  %v217 = vsel %vm197, %v189, 0
  %v220 = vsel %vm197, %v190, 0
  %vm222 = vcmask 1042432
  %v224 = vsel %vm222, %v191, 0
  %226 = vmatprep.subr.mxu0 0.0
  %227 = vmatpush1.msra.mxu0 %v224
  %228 = vmatprep.subr.mxu0 0.0
  %229 = vmatpush1.msra.mxu0 0.0
  %230 = vmatprep.subr.mxu0 0.0
  %231 = vmatpush1.msra.mxu0 0.0
  %232 = vmatprep.subr.mxu0 0.0
  %233 = vmatpush1.msra.mxu0 0.0
  %234 = vmatprep.subr.mxu0 0.0
  %235 = vmatpush1.msra.mxu0 0.0
  %236 = vmatprep.subr.mxu0 0.0
  %237 = vmatpush1.msra.mxu0 0.0
  %238 = vmatprep.subr.mxu0 0.0
  %239 = vmatpush1.msra.mxu0 0.0
  %240 = vmatprep.subr.mxu0 0.0
  %241 = vmatpush1.msra.mxu0 0.0
  %242 = vmatprep.subr.mxu0 0.0
  %243 = vmatpush1.msra.mxu0 0.0
  %244 = vmatprep.subr.mxu0 0.0
  %245 = vmatpush1.msra.mxu0 0.0
  %246 = vmatprep.subr.mxu0 0.0
  %247 = vmatpush1.msra.mxu0 0.0
  %248 = vmatprep.subr.mxu0 0.0
  %249 = vmatpush1.msra.mxu0 0.0
  %250 = vmatprep.subr.mxu0 0.0
  %251 = vmatpush1.msra.mxu0 0.0
  %252 = vmatprep.subr.mxu0 0.0
  %253 = vmatpush1.msra.mxu0 0.0
  %254 = vmatprep.subr.mxu0 0.0
  %255 = vmatpush1.msra.mxu0 0.0
  %256 = vmatprep.subr.mxu0 0.0
  %257 = vmatpush1.msra.mxu0 0.0
  %258 = vmatprep.subr.mxu0 0.0
  %259 = vmatpush1.msra.mxu0 0.0
  %260 = vmatprep.subr.mxu0 0.0
  %261 = vmatpush1.msra.mxu0 0.0
  %262 = vmatprep.subr.mxu0 0.0
  %263 = vmatpush1.msra.mxu0 0.0
  %264 = vmatprep.subr.mxu0 0.0
  %265 = vmatpush1.msra.mxu0 0.0
  %266 = vmatprep.subr.mxu0 0.0
  %267 = vmatpush1.msra.mxu0 0.0
  %268 = vmatprep.subr.mxu0 0.0
  %269 = vmatpush1.msra.mxu0 0.0
  %270 = vmatprep.subr.mxu0 0.0
  %271 = vmatpush1.msra.mxu0 0.0
  %272 = vmatprep.subr.mxu0 0.0
  %273 = vmatpush1.msra.mxu0 0.0
  %274 = vmatprep.subr.mxu0 0.0
  %275 = vmatpush1.msra.mxu0 0.0
  %276 = vmatprep.subr.mxu0 0.0
  %277 = vmatpush1.msra.mxu0 0.0
  %278 = vmatprep.subr.mxu0 0.0
  %279 = vmatpush1.msra.mxu0 0.0
  %280 = vmatprep.subr.mxu0 0.0
  %281 = vmatpush1.msra.mxu0 0.0
  %282 = vmatprep.subr.mxu0 0.0
  %283 = vmatpush1.msra.mxu0 0.0
  %284 = vmatprep.subr.mxu0 0.0
  %285 = vmatpush1.msra.mxu0 0.0
  %286 = vmatprep.subr.mxu0 0.0
  %287 = vmatpush1.msra.mxu0 0.0
  %288 = vmatprep.subr.mxu0 0.0
  %289 = vmatpush1.msra.mxu0 0.0
  %290 = vmatprep.mubr.f32.mxu0 0.0
  %291 = vmatmul.mubr.f32.gmra.mrb[0].mxu0 %v199
  %v292 = vpop.f32.mrb[0].mxu0
  %v293 = vadd.f32 %v196, %v292
  %v294 = vpop.f32.mrb[0].mxu0
  %295 = vmatprep.mubr.f32.mxu0 0.0
  %296 = vmatmul.mubr.f32.gmra.mrb[0].mxu0 %v202
  %v297 = vpop.f32.mrb[0].mxu0
  %v298 = vadd.f32 %v196, %v297
  %v299 = vpop.f32.mrb[0].mxu0
  %300 = vmatprep.mubr.f32.mxu0 0.0
  %301 = vmatmul.mubr.f32.gmra.mrb[0].mxu0 %v205
  %v302 = vpop.f32.mrb[0].mxu0
  %v303 = vadd.f32 %v196, %v302
  %v304 = vpop.f32.mrb[0].mxu0
  %305 = vmatprep.mubr.f32.mxu0 0.0
  %306 = vmatmul.mubr.f32.gmra.mrb[0].mxu0 %v208
  %v307 = vpop.f32.mrb[0].mxu0
  %v308 = vadd.f32 %v196, %v307
  %v309 = vpop.f32.mrb[0].mxu0
  %310 = vmatprep.mubr.f32.mxu0 0.0
  %311 = vmatmul.mubr.f32.gmra.mrb[0].mxu0 %v211
  %v312 = vpop.f32.mrb[0].mxu0
  %v313 = vadd.f32 %v196, %v312
  %v314 = vpop.f32.mrb[0].mxu0
  %315 = vmatprep.mubr.f32.mxu0 0.0
  %316 = vmatmul.mubr.f32.gmra.mrb[0].mxu0 %v214
  %v317 = vpop.f32.mrb[0].mxu0
  %v318 = vadd.f32 %v196, %v317
  %v319 = vpop.f32.mrb[0].mxu0
  %320 = vmatprep.mubr.f32.mxu0 0.0
  %321 = vmatmul.mubr.f32.gmra.mrb[0].mxu0 %v217
  %v322 = vpop.f32.mrb[0].mxu0
  %v323 = vadd.f32 %v196, %v322
  %v324 = vpop.f32.mrb[0].mxu0
  %325 = vmatprep.mubr.f32.mxu0 0.0
  %326 = vmatmul.mubr.f32.gmra.mrb[0].mxu0 %v220
  %v327 = vpop.f32.mrb[0].mxu0
  %v328 = vadd.f32 %v196, %v327
  %v329 = vpop.f32.mrb[0].mxu0
  %330 = vdwg.mxu0
  %v331 = vld [vmem:[%s2 + $0x1] sm:$0x1]
  %v332 = vld [vmem:[%s2 + $0x2] sm:$0x1]
  %vm333 = vcmask 261120
  %v334 = vsel %vm333, %v293, 0.0
  %v335 = vsel %vm333, %v298, 0.0
  %v336 = vadd.f32 %v334, %v335
  %v337 = vsel %vm333, %v303, 0.0
  %v338 = vadd.f32 %v336, %v337
  %v339 = vsel %vm333, %v308, 0.0
  %v340 = vadd.f32 %v338, %v339
  %v341 = vsel %vm333, %v313, 0.0
  %v342 = vadd.f32 %v340, %v341
  %v343 = vsel %vm333, %v318, 0.0
  %v344 = vadd.f32 %v342, %v343
  %v345 = vsel %vm333, %v323, 0.0
  %v346 = vadd.f32 %v344, %v345
  %v347 = vsel %vm333, %v328, 0.0
  %v348 = vadd.f32 %v346, %v347
  %v349 = vrot.slane %v348, 4
  %v350 = vadd.f32 %v348, %v349
  %v351 = vrot.slane %v350, 2
  %v352 = vadd.f32 %v350, %v351
  %v353 = vrot.slane %v352, 1
  %v354 = vadd.f32 %v352, %v353
  %v355 = vrcp.pop 64.0
  %v356 = vmul.f32 %v354, %v355
  %v357 = vsub.f32 %v293, %v356
  %v358 = vsub.f32 %v298, %v356
  %v359 = vsub.f32 %v303, %v356
  %v360 = vsub.f32 %v308, %v356
  %v361 = vsub.f32 %v313, %v356
  %v362 = vsub.f32 %v318, %v356
  %v363 = vsub.f32 %v323, %v356
  %v364 = vsub.f32 %v328, %v356
  %v365 = vmul.f32 %v357, %v357
  %v366 = vmul.f32 %v358, %v358
  %v367 = vmul.f32 %v359, %v359
  %v368 = vmul.f32 %v360, %v360
  %v369 = vmul.f32 %v361, %v361
  %v370 = vmul.f32 %v362, %v362
  %v371 = vmul.f32 %v363, %v363
  %v372 = vmul.f32 %v364, %v364
  %v373 = vsel %vm333, %v365, 0.0
  %v374 = vsel %vm333, %v366, 0.0
  %v375 = vadd.f32 %v373, %v374
  %v376 = vsel %vm333, %v367, 0.0
  %v377 = vadd.f32 %v375, %v376
  %v378 = vsel %vm333, %v368, 0.0
  %v379 = vadd.f32 %v377, %v378
  %v380 = vsel %vm333, %v369, 0.0
  %v381 = vadd.f32 %v379, %v380
  %v382 = vsel %vm333, %v370, 0.0
  %v383 = vadd.f32 %v381, %v382
  %v384 = vsel %vm333, %v371, 0.0
  %v385 = vadd.f32 %v383, %v384
  %v386 = vsel %vm333, %v372, 0.0
  %v387 = vadd.f32 %v385, %v386
  %v388 = vrot.slane %v387, 4
  %v389 = vadd.f32 %v387, %v388
  %v390 = vrot.slane %v389, 2
  %v391 = vadd.f32 %v389, %v390
  %v392 = vrot.slane %v391, 1
  %v393 = vadd.f32 %v391, %v392
  %v394 = vmul.f32 %v393, %v355
  %v395 = vadd.f32 %v394, 1e-05
  %v396 = vrsqrt.pop %v395
  %v397 = vmul.f32 %v396, %v331
  %v398 = vlaneseq
  %v399 = vshrl.u32 %v398, 7
  %v400 = vsub.s32 0, %v399
  %v401 = vrot.slane %v397, %v400
  %v402 = vmul.f32 %v357, %v401
  %v403 = vmul.f32 %v358, %v401
  %v404 = vmul.f32 %v359, %v401
  %v405 = vmul.f32 %v360, %v401
  %v406 = vmul.f32 %v361, %v401
  %v407 = vmul.f32 %v362, %v401
  %v408 = vmul.f32 %v363, %v401
  %v409 = vmul.f32 %v364, %v401
  %v410 = vlaneseq
  %v411 = vshrl.u32 %v410, 7
  %v412 = vsub.s32 0, %v411
  %v413 = vrot.slane %v332, %v412
  %v414 = vadd.f32 %v402, %v413
  %v415 = vadd.f32 %v403, %v413
  %v416 = vadd.f32 %v404, %v413
  %v417 = vadd.f32 %v405, %v413
  %v418 = vadd.f32 %v406, %v413
  %v419 = vadd.f32 %v407, %v413
  %v420 = vadd.f32 %v408, %v413
  %v421 = vadd.f32 %v409, %v413
  %v422 = vmax.f32 %v414, 0.0
  %v423 = vmax.f32 %v415, 0.0
  %v424 = vmax.f32 %v416, 0.0
  %v425 = vmax.f32 %v417, 0.0
  %v426 = vmax.f32 %v418, 0.0
  %v427 = vmax.f32 %v419, 0.0
  %v428 = vmax.f32 %v420, 0.0
  %v429 = vmax.f32 %v421, 0.0
  %v430 = vrot.slane %v422, 7
  %v431 = vrot.slane %v426, 7
  %v432 = vrot.slane %v423, 7
  %v433 = vrot.slane %v427, 7
  %v434 = vrot.slane %v424, 7
  %v435 = vrot.slane %v428, 7
  %v436 = vrot.slane %v425, 7
  %v437 = vrot.slane %v429, 7
  %v438 = vsel %vm63, %v434, %v436
  %v439 = vsel %vm63, %v435, %v437
  %v440 = vsel %vm63, %v432, %v434
  %v441 = vsel %vm63, %v433, %v435
  %v442 = vsel %vm63, %v430, %v432
  %v443 = vsel %vm63, %v431, %v433
  %v444 = vsel %vm63, %v436, %v430
  %v445 = vsel %vm63, %v437, %v431
  %v446 = vsel %vm51, 0.0, %v444
  %v447 = vsel %vm52, 0.0, %v442
  %v448 = vsel %vm53, 0.0, %v440
  %v449 = vsel %vm54, 0.0, %v438
  %v450 = vsel %vm51, 0.0, %v445
  %v451 = vsel %vm52, 0.0, %v443
  %v452 = vsel %vm53, 0.0, %v441
  %v453 = vsel %vm54, 0.0, %v439
  %v454 = vrot.slane %v422, 1
  %v455 = vrot.slane %v426, 1
  %v456 = vrot.slane %v423, 1
  %v457 = vrot.slane %v427, 1
  %v458 = vrot.slane %v424, 1
  %v459 = vrot.slane %v428, 1
  %v460 = vrot.slane %v425, 1
  %v461 = vrot.slane %v429, 1
  %v462 = vsel %vm92, %v458, %v460
  %v463 = vsel %vm92, %v459, %v461
  %v464 = vsel %vm92, %v456, %v458
  %v465 = vsel %vm92, %v457, %v459
  %v466 = vsel %vm92, %v454, %v456
  %v467 = vsel %vm92, %v455, %v457
  %v468 = vsel %vm92, %v460, %v454
  %v469 = vsel %vm92, %v461, %v455
  %v470 = vsel %vm80, 0.0, %v466
  %v471 = vsel %vm81, 0.0, %v464
  %v472 = vsel %vm82, 0.0, %v462
  %v473 = vsel %vm83, 0.0, %v468
  %v474 = vsel %vm80, 0.0, %v467
  %v475 = vsel %vm81, 0.0, %v465
  %v476 = vsel %vm82, 0.0, %v463
  %v477 = vsel %vm83, 0.0, %v469
  %486 = vrot.lane.b32.xlu0 %v422, 32
  %v487 = vpop.permute.xlu0 %486
  %488 = vrot.lane.b32.xlu0 %v423, 32
  %v489 = vpop.permute.xlu0 %488
  %490 = vrot.lane.b32.xlu0 %v424, 32
  %v491 = vpop.permute.xlu0 %490
  %492 = vrot.lane.b32.xlu0 %v425, 32
  %v493 = vpop.permute.xlu0 %492
  %494 = vrot.lane.b32.xlu0 %v426, 32
  %v495 = vpop.permute.xlu0 %494
  %496 = vrot.lane.b32.xlu0 %v427, 32
  %v497 = vpop.permute.xlu0 %496
  %498 = vrot.lane.b32.xlu0 %v428, 32
  %v499 = vpop.permute.xlu0 %498
  %500 = vrot.lane.b32.xlu0 %v429, 32
  %v501 = vpop.permute.xlu0 %500
  %518 = vrot.lane.b32.xlu0 %v470, 64
  %v519 = vpop.permute.xlu0 %518
  %520 = vrot.lane.b32.xlu0 %v471, 64
  %v521 = vpop.permute.xlu0 %520
  %522 = vrot.lane.b32.xlu0 %v472, 64
  %v523 = vpop.permute.xlu0 %522
  %524 = vrot.lane.b32.xlu0 %v473, 64
  %v525 = vpop.permute.xlu0 %524
  %526 = vrot.lane.b32.xlu0 %v474, 64
  %v527 = vpop.permute.xlu0 %526
  %528 = vrot.lane.b32.xlu0 %v475, 64
  %v529 = vpop.permute.xlu0 %528
  %530 = vrot.lane.b32.xlu0 %v476, 64
  %v531 = vpop.permute.xlu0 %530
  %532 = vrot.lane.b32.xlu0 %v477, 64
  %v533 = vpop.permute.xlu0 %532
  %v542 = vsel %vm333, %v446, %v487
  %v543 = vsel %vm333, %v447, %v489
  %v544 = vsel %vm333, %v448, %v491
  %v545 = vsel %vm333, %v449, %v493
  %v546 = vsel %vm333, %v450, %v495
  %v547 = vsel %vm333, %v451, %v497
  %v548 = vsel %vm333, %v452, %v499
  %v549 = vsel %vm333, %v453, %v501
  %vm550 = vcmask 523264
  %v551 = vsel %vm550, %v542, %v519
  %v552 = vsel %vm550, %v543, %v521
  %v553 = vsel %vm550, %v544, %v523
  %v554 = vsel %vm550, %v545, %v525
  %v555 = vsel %vm550, %v546, %v527
  %v556 = vsel %vm550, %v547, %v529
  %v557 = vsel %vm550, %v548, %v531
  %v558 = vsel %vm550, %v549, %v533
  %v559 = vld [vmem:[%s3 + $0x8] sm:$0xff]
  %v560 = vld [vmem:[%s3 + $0x10] sm:$0xff]
  %v561 = vld [vmem:[%s3 + $0x18] sm:$0xff]
  %v562 = vld [vmem:[%s3 + $0x20] sm:$0xff]
  %v563 = vld [vmem:[%s3 + $0x28] sm:$0xff]
  %v564 = vld [vmem:[%s3 + $0x30] sm:$0xff]
  %v565 = vld [vmem:[%s3 + $0x38] sm:$0xff]
  %v566 = vld [vmem:[%s3 + $0x40] sm:$0xff]
  %v567 = vld [vmem:[%s3 + $0x48] sm:$0xff]
  %v568 = vld [vmem:[%s3 + $0x50] sm:$0xff]
  %v569 = vld [vmem:[%s3 + $0x58] sm:$0xff]
  %v570 = vld [vmem:[%s3 + $0x60] sm:$0xff]
  %v571 = vld [vmem:[%s2 + $0x3] sm:$0x1]
  %v572 = vlaneseq
  %v573 = vshrl.u32 %v572, 7
  %v574 = vsub.s32 0, %v573
  %v575 = vrot.slane %v571, %v574
  %vm576 = vcmask 785408
  %v578 = vsel %vm576, %v551, 0
  %v581 = vsel %vm576, %v552, 0
  %v584 = vsel %vm576, %v553, 0
  %v587 = vsel %vm576, %v554, 0
  %v590 = vsel %vm576, %v555, 0
  %v593 = vsel %vm576, %v556, 0
  %v596 = vsel %vm576, %v557, 0
  %v599 = vsel %vm576, %v558, 0
  %601 = vmatprep.subr.mxu0 0.0
  %602 = vmatpush1.msra.mxu0 %v559
  %603 = vmatprep.subr.mxu0 0.0
  %604 = vmatpush1.msra.mxu0 %v560
  %605 = vmatprep.subr.mxu0 0.0
  %606 = vmatpush1.msra.mxu0 %v561
  %607 = vmatprep.subr.mxu0 0.0
  %608 = vmatpush1.msra.mxu0 %v562
  %609 = vmatprep.subr.mxu0 0.0
  %610 = vmatpush1.msra.mxu0 %v563
  %611 = vmatprep.subr.mxu0 0.0
  %612 = vmatpush1.msra.mxu0 %v564
  %613 = vmatprep.subr.mxu0 0.0
  %614 = vmatpush1.msra.mxu0 %v565
  %615 = vmatprep.subr.mxu0 0.0
  %616 = vmatpush1.msra.mxu0 %v566
  %617 = vmatprep.subr.mxu0 0.0
  %618 = vmatpush1.msra.mxu0 %v567
  %619 = vmatprep.subr.mxu0 0.0
  %620 = vmatpush1.msra.mxu0 %v568
  %621 = vmatprep.subr.mxu0 0.0
  %622 = vmatpush1.msra.mxu0 %v569
  %623 = vmatprep.subr.mxu0 0.0
  %624 = vmatpush1.msra.mxu0 %v570
  %625 = vmatprep.subr.mxu0 0.0
  %626 = vmatpush1.msra.mxu0 0.0
  %627 = vmatprep.subr.mxu0 0.0
  %628 = vmatpush1.msra.mxu0 0.0
  %629 = vmatprep.subr.mxu0 0.0
  %630 = vmatpush1.msra.mxu0 0.0
  %631 = vmatprep.subr.mxu0 0.0
  %632 = vmatpush1.msra.mxu0 0.0
  %633 = vmatprep.subr.mxu0 0.0
  %634 = vmatpush1.msra.mxu0 0.0
  %635 = vmatprep.subr.mxu0 0.0
  %636 = vmatpush1.msra.mxu0 0.0
  %637 = vmatprep.subr.mxu0 0.0
  %638 = vmatpush1.msra.mxu0 0.0
  %639 = vmatprep.subr.mxu0 0.0
  %640 = vmatpush1.msra.mxu0 0.0
  %641 = vmatprep.subr.mxu0 0.0
  %642 = vmatpush1.msra.mxu0 0.0
  %643 = vmatprep.subr.mxu0 0.0
  %644 = vmatpush1.msra.mxu0 0.0
  %645 = vmatprep.subr.mxu0 0.0
  %646 = vmatpush1.msra.mxu0 0.0
  %647 = vmatprep.subr.mxu0 0.0
  %648 = vmatpush1.msra.mxu0 0.0
  %649 = vmatprep.subr.mxu0 0.0
  %650 = vmatpush1.msra.mxu0 0.0
  %651 = vmatprep.subr.mxu0 0.0
  %652 = vmatpush1.msra.mxu0 0.0
  %653 = vmatprep.subr.mxu0 0.0
  %654 = vmatpush1.msra.mxu0 0.0
  %655 = vmatprep.subr.mxu0 0.0
  %656 = vmatpush1.msra.mxu0 0.0
  %657 = vmatprep.subr.mxu0 0.0
  %658 = vmatpush1.msra.mxu0 0.0
  %659 = vmatprep.subr.mxu0 0.0
  %660 = vmatpush1.msra.mxu0 0.0
  %661 = vmatprep.subr.mxu0 0.0
  %662 = vmatpush1.msra.mxu0 0.0
  %663 = vmatprep.subr.mxu0 0.0
  %664 = vmatpush1.msra.mxu0 0.0
  %665 = vmatprep.mubr.f32.mxu0 0.0
  %666 = vmatmul.mubr.f32.gmra.mrb[0].mxu0 %v578
  %v667 = vpop.f32.mrb[0].mxu0
  %v668 = vadd.f32 %v575, %v667
  %v669 = vpop.f32.mrb[0].mxu0
  %670 = vmatprep.mubr.f32.mxu0 0.0
  %671 = vmatmul.mubr.f32.gmra.mrb[0].mxu0 %v581
  %v672 = vpop.f32.mrb[0].mxu0
  %v673 = vadd.f32 %v575, %v672
  %v674 = vpop.f32.mrb[0].mxu0
  %675 = vmatprep.mubr.f32.mxu0 0.0
  %676 = vmatmul.mubr.f32.gmra.mrb[0].mxu0 %v584
  %v677 = vpop.f32.mrb[0].mxu0
  %v678 = vadd.f32 %v575, %v677
  %v679 = vpop.f32.mrb[0].mxu0
  %680 = vmatprep.mubr.f32.mxu0 0.0
  %681 = vmatmul.mubr.f32.gmra.mrb[0].mxu0 %v587
  %v682 = vpop.f32.mrb[0].mxu0
  %v683 = vadd.f32 %v575, %v682
  %v684 = vpop.f32.mrb[0].mxu0
  %685 = vmatprep.mubr.f32.mxu0 0.0
  %686 = vmatmul.mubr.f32.gmra.mrb[0].mxu0 %v590
  %v687 = vpop.f32.mrb[0].mxu0
  %v688 = vadd.f32 %v575, %v687
  %v689 = vpop.f32.mrb[0].mxu0
  %690 = vmatprep.mubr.f32.mxu0 0.0
  %691 = vmatmul.mubr.f32.gmra.mrb[0].mxu0 %v593
  %v692 = vpop.f32.mrb[0].mxu0
  %v693 = vadd.f32 %v575, %v692
  %v694 = vpop.f32.mrb[0].mxu0
  %695 = vmatprep.mubr.f32.mxu0 0.0
  %696 = vmatmul.mubr.f32.gmra.mrb[0].mxu0 %v596
  %v697 = vpop.f32.mrb[0].mxu0
  %v698 = vadd.f32 %v575, %v697
  %v699 = vpop.f32.mrb[0].mxu0
  %700 = vmatprep.mubr.f32.mxu0 0.0
  %701 = vmatmul.mubr.f32.gmra.mrb[0].mxu0 %v599
  %v702 = vpop.f32.mrb[0].mxu0
  %v703 = vadd.f32 %v575, %v702
  %v704 = vpop.f32.mrb[0].mxu0
  %705 = vdwg.mxu0
  %v706 = vld [vmem:[%s3 + $0x68] sm:$0x1]
  %v707 = vld [vmem:[%s2 + $0x4] sm:$0x1]
  %v708 = vlaneseq
  %v709 = vshrl.u32 %v708, 7
  %v710 = vsub.s32 0, %v709
  %v711 = vrot.slane %v707, %v710
  %v712 = vsel %vm173, %v38, 0
  %v714 = vsel %vm173, %v39, 0
  %v716 = vsel %vm173, %v40, 0
  %v718 = vsel %vm173, %v41, 0
  %v720 = vsel %vm173, %v42, 0
  %v722 = vsel %vm173, %v43, 0
  %v724 = vsel %vm173, %v44, 0
  %v726 = vsel %vm173, %v45, 0
  %vm728 = vcmask 1040384
  %v730 = vsel %vm728, %v706, 0
  %732 = vmatprep.subr.mxu0 0.0
  %733 = vmatpush1.msra.mxu0 %v730
  %734 = vmatprep.subr.mxu0 0.0
  %735 = vmatpush1.msra.mxu0 0.0
  %736 = vmatprep.subr.mxu0 0.0
  %737 = vmatpush1.msra.mxu0 0.0
  %738 = vmatprep.subr.mxu0 0.0
  %739 = vmatpush1.msra.mxu0 0.0
  %740 = vmatprep.subr.mxu0 0.0
  %741 = vmatpush1.msra.mxu0 0.0
  %742 = vmatprep.subr.mxu0 0.0
  %743 = vmatpush1.msra.mxu0 0.0
  %744 = vmatprep.subr.mxu0 0.0
  %745 = vmatpush1.msra.mxu0 0.0
  %746 = vmatprep.subr.mxu0 0.0
  %747 = vmatpush1.msra.mxu0 0.0
  %748 = vmatprep.subr.mxu0 0.0
  %749 = vmatpush1.msra.mxu0 0.0
  %750 = vmatprep.subr.mxu0 0.0
  %751 = vmatpush1.msra.mxu0 0.0
  %752 = vmatprep.subr.mxu0 0.0
  %753 = vmatpush1.msra.mxu0 0.0
  %754 = vmatprep.subr.mxu0 0.0
  %755 = vmatpush1.msra.mxu0 0.0
  %756 = vmatprep.subr.mxu0 0.0
  %757 = vmatpush1.msra.mxu0 0.0
  %758 = vmatprep.subr.mxu0 0.0
  %759 = vmatpush1.msra.mxu0 0.0
  %760 = vmatprep.subr.mxu0 0.0
  %761 = vmatpush1.msra.mxu0 0.0
  %762 = vmatprep.subr.mxu0 0.0
  %763 = vmatpush1.msra.mxu0 0.0
  %764 = vmatprep.subr.mxu0 0.0
  %765 = vmatpush1.msra.mxu0 0.0
  %766 = vmatprep.subr.mxu0 0.0
  %767 = vmatpush1.msra.mxu0 0.0
  %768 = vmatprep.subr.mxu0 0.0
  %769 = vmatpush1.msra.mxu0 0.0
  %770 = vmatprep.subr.mxu0 0.0
  %771 = vmatpush1.msra.mxu0 0.0
  %772 = vmatprep.subr.mxu0 0.0
  %773 = vmatpush1.msra.mxu0 0.0
  %774 = vmatprep.subr.mxu0 0.0
  %775 = vmatpush1.msra.mxu0 0.0
  %776 = vmatprep.subr.mxu0 0.0
  %777 = vmatpush1.msra.mxu0 0.0
  %778 = vmatprep.subr.mxu0 0.0
  %779 = vmatpush1.msra.mxu0 0.0
  %780 = vmatprep.subr.mxu0 0.0
  %781 = vmatpush1.msra.mxu0 0.0
  %782 = vmatprep.subr.mxu0 0.0
  %783 = vmatpush1.msra.mxu0 0.0
  %784 = vmatprep.subr.mxu0 0.0
  %785 = vmatpush1.msra.mxu0 0.0
  %786 = vmatprep.subr.mxu0 0.0
  %787 = vmatpush1.msra.mxu0 0.0
  %788 = vmatprep.subr.mxu0 0.0
  %789 = vmatpush1.msra.mxu0 0.0
  %790 = vmatprep.subr.mxu0 0.0
  %791 = vmatpush1.msra.mxu0 0.0
  %792 = vmatprep.subr.mxu0 0.0
  %793 = vmatpush1.msra.mxu0 0.0
  %794 = vmatprep.subr.mxu0 0.0
  %795 = vmatpush1.msra.mxu0 0.0
  %796 = vmatprep.mubr.f32.mxu0 0.0
  %797 = vmatmul.mubr.f32.gmra.mrb[0].mxu0 %v712
  %v798 = vpop.f32.mrb[0].mxu0
  %v799 = vadd.f32 %v711, %v798
  %v800 = vpop.f32.mrb[0].mxu0
  %801 = vmatprep.mubr.f32.mxu0 0.0
  %802 = vmatmul.mubr.f32.gmra.mrb[0].mxu0 %v714
  %v803 = vpop.f32.mrb[0].mxu0
  %v804 = vadd.f32 %v711, %v803
  %v805 = vpop.f32.mrb[0].mxu0
  %806 = vmatprep.mubr.f32.mxu0 0.0
  %807 = vmatmul.mubr.f32.gmra.mrb[0].mxu0 %v716
  %v808 = vpop.f32.mrb[0].mxu0
  %v809 = vadd.f32 %v711, %v808
  %v810 = vpop.f32.mrb[0].mxu0
  %811 = vmatprep.mubr.f32.mxu0 0.0
  %812 = vmatmul.mubr.f32.gmra.mrb[0].mxu0 %v718
  %v813 = vpop.f32.mrb[0].mxu0
  %v814 = vadd.f32 %v711, %v813
  %v815 = vpop.f32.mrb[0].mxu0
  %816 = vmatprep.mubr.f32.mxu0 0.0
  %817 = vmatmul.mubr.f32.gmra.mrb[0].mxu0 %v720
  %v818 = vpop.f32.mrb[0].mxu0
  %v819 = vadd.f32 %v711, %v818
  %v820 = vpop.f32.mrb[0].mxu0
  %821 = vmatprep.mubr.f32.mxu0 0.0
  %822 = vmatmul.mubr.f32.gmra.mrb[0].mxu0 %v722
  %v823 = vpop.f32.mrb[0].mxu0
  %v824 = vadd.f32 %v711, %v823
  %v825 = vpop.f32.mrb[0].mxu0
  %826 = vmatprep.mubr.f32.mxu0 0.0
  %827 = vmatmul.mubr.f32.gmra.mrb[0].mxu0 %v724
  %v828 = vpop.f32.mrb[0].mxu0
  %v829 = vadd.f32 %v711, %v828
  %v830 = vpop.f32.mrb[0].mxu0
  %831 = vmatprep.mubr.f32.mxu0 0.0
  %832 = vmatmul.mubr.f32.gmra.mrb[0].mxu0 %v726
  %v833 = vpop.f32.mrb[0].mxu0
  %v834 = vadd.f32 %v711, %v833
  %v835 = vpop.f32.mrb[0].mxu0
  %836 = vdwg.mxu0
  %v837 = vadd.f32 %v668, %v799
  %v838 = vadd.f32 %v673, %v804
  %v839 = vadd.f32 %v678, %v809
  %v840 = vadd.f32 %v683, %v814
  %v841 = vadd.f32 %v688, %v819
  %v842 = vadd.f32 %v693, %v824
  %v843 = vadd.f32 %v698, %v829
  %v844 = vadd.f32 %v703, %v834
  %v845 = vcombine.high %v837, 0.0
  %v847 = vunpack.c.l.s4 1983009808
  %v848 = vunpack.c.0.s8 %v847
  %v849 = vlaneseq
  %v850 = vshrl.u32 %v849, 7
  %v851 = vsub.s32 %v848, %v850
  %v852 = vrot.slane %v837, %v851
  %v854 = vunpack.c.l.s4 1983009808
  %v855 = vunpack.c.0.s8 %v854
  %v856 = vlaneseq
  %v857 = vshrl.u32 %v856, 7
  %v858 = vsub.s32 %v855, %v857
  %v859 = vrot.slane %v845, %v858
  %v860 = vcombine.high %v841, 0.0
  %v862 = vunpack.c.l.s4 1983009808
  %v863 = vunpack.c.0.s8 %v862
  %v864 = vlaneseq
  %v865 = vshrl.u32 %v864, 7
  %v866 = vsub.s32 %v863, %v865
  %v867 = vrot.slane %v841, %v866
  %v869 = vunpack.c.l.s4 1983009808
  %v870 = vunpack.c.0.s8 %v869
  %v871 = vlaneseq
  %v872 = vshrl.u32 %v871, 7
  %v873 = vsub.s32 %v870, %v872
  %v874 = vrot.slane %v860, %v873
  %v875 = vcombine.low %v852, %v867
  %v876 = vcombine.high %v852, %v867
  %v878 = vunpack.c.l.s4 1934713408
  %v879 = vunpack.c.0.s8 %v878
  %v880 = vlaneseq
  %v881 = vshrl.u32 %v880, 7
  %v882 = vsub.s32 %v879, %v881
  %v883 = vrot.slane %v875, %v882
  %v885 = vunpack.c.l.s4 1934713408
  %v886 = vunpack.c.0.s8 %v885
  %v887 = vlaneseq
  %v888 = vshrl.u32 %v887, 7
  %v889 = vsub.s32 %v886, %v888
  %v890 = vrot.slane %v876, %v889
  %v891 = vcombine.low %v859, %v874
  %v892 = vcombine.high %v859, %v874
  %v894 = vunpack.c.l.s4 1934713408
  %v895 = vunpack.c.0.s8 %v894
  %v896 = vlaneseq
  %v897 = vshrl.u32 %v896, 7
  %v898 = vsub.s32 %v895, %v897
  %v899 = vrot.slane %v891, %v898
  %v901 = vunpack.c.l.s4 1934713408
  %v902 = vunpack.c.0.s8 %v901
  %v903 = vlaneseq
  %v904 = vshrl.u32 %v903, 7
  %v905 = vsub.s32 %v902, %v904
  %v906 = vrot.slane %v892, %v905
  %v907 = vcombine.high %v883, 0.0
  %v908 = vcombine.high %v890, 0.0
  %v909 = vcombine.high %v899, 0.0
  %v910 = vcombine.high %v906, 0.0
  %v911 = vcombine.high %v838, 0.0
  %v913 = vunpack.c.l.s4 1983009808
  %v914 = vunpack.c.0.s8 %v913
  %v915 = vlaneseq
  %v916 = vshrl.u32 %v915, 7
  %v917 = vsub.s32 %v914, %v916
  %v918 = vrot.slane %v838, %v917
  %v920 = vunpack.c.l.s4 1983009808
  %v921 = vunpack.c.0.s8 %v920
  %v922 = vlaneseq
  %v923 = vshrl.u32 %v922, 7
  %v924 = vsub.s32 %v921, %v923
  %v925 = vrot.slane %v911, %v924
  %v926 = vcombine.high %v842, 0.0
  %v928 = vunpack.c.l.s4 1983009808
  %v929 = vunpack.c.0.s8 %v928
  %v930 = vlaneseq
  %v931 = vshrl.u32 %v930, 7
  %v932 = vsub.s32 %v929, %v931
  %v933 = vrot.slane %v842, %v932
  %v935 = vunpack.c.l.s4 1983009808
  %v936 = vunpack.c.0.s8 %v935
  %v937 = vlaneseq
  %v938 = vshrl.u32 %v937, 7
  %v939 = vsub.s32 %v936, %v938
  %v940 = vrot.slane %v926, %v939
  %v941 = vcombine.low %v918, %v933
  %v942 = vcombine.high %v918, %v933
  %v944 = vunpack.c.l.s4 1934713408
  %v945 = vunpack.c.0.s8 %v944
  %v946 = vlaneseq
  %v947 = vshrl.u32 %v946, 7
  %v948 = vsub.s32 %v945, %v947
  %v949 = vrot.slane %v941, %v948
  %v951 = vunpack.c.l.s4 1934713408
  %v952 = vunpack.c.0.s8 %v951
  %v953 = vlaneseq
  %v954 = vshrl.u32 %v953, 7
  %v955 = vsub.s32 %v952, %v954
  %v956 = vrot.slane %v942, %v955
  %v957 = vcombine.low %v925, %v940
  %v958 = vcombine.high %v925, %v940
  %v960 = vunpack.c.l.s4 1934713408
  %v961 = vunpack.c.0.s8 %v960
  %v962 = vlaneseq
  %v963 = vshrl.u32 %v962, 7
  %v964 = vsub.s32 %v961, %v963
  %v965 = vrot.slane %v957, %v964
  %v967 = vunpack.c.l.s4 1934713408
  %v968 = vunpack.c.0.s8 %v967
  %v969 = vlaneseq
  %v970 = vshrl.u32 %v969, 7
  %v971 = vsub.s32 %v968, %v970
  %v972 = vrot.slane %v958, %v971
  %v973 = vcombine.high %v949, 0.0
  %v974 = vcombine.high %v956, 0.0
  %v975 = vcombine.high %v965, 0.0
  %v976 = vcombine.high %v972, 0.0
  %v977 = vcombine.high %v839, 0.0
  %v979 = vunpack.c.l.s4 1983009808
  %v980 = vunpack.c.0.s8 %v979
  %v981 = vlaneseq
  %v982 = vshrl.u32 %v981, 7
  %v983 = vsub.s32 %v980, %v982
  %v984 = vrot.slane %v839, %v983
  %v986 = vunpack.c.l.s4 1983009808
  %v987 = vunpack.c.0.s8 %v986
  %v988 = vlaneseq
  %v989 = vshrl.u32 %v988, 7
  %v990 = vsub.s32 %v987, %v989
  %v991 = vrot.slane %v977, %v990
  %v992 = vcombine.high %v843, 0.0
  %v994 = vunpack.c.l.s4 1983009808
  %v995 = vunpack.c.0.s8 %v994
  %v996 = vlaneseq
  %v997 = vshrl.u32 %v996, 7
  %v998 = vsub.s32 %v995, %v997
  %v999 = vrot.slane %v843, %v998
  %v1001 = vunpack.c.l.s4 1983009808
  %v1002 = vunpack.c.0.s8 %v1001
  %v1003 = vlaneseq
  %v1004 = vshrl.u32 %v1003, 7
  %v1005 = vsub.s32 %v1002, %v1004
  %v1006 = vrot.slane %v992, %v1005
  %v1007 = vcombine.low %v984, %v999
  %v1008 = vcombine.high %v984, %v999
  %v1010 = vunpack.c.l.s4 1934713408
  %v1011 = vunpack.c.0.s8 %v1010
  %v1012 = vlaneseq
  %v1013 = vshrl.u32 %v1012, 7
  %v1014 = vsub.s32 %v1011, %v1013
  %v1015 = vrot.slane %v1007, %v1014
  %v1017 = vunpack.c.l.s4 1934713408
  %v1018 = vunpack.c.0.s8 %v1017
  %v1019 = vlaneseq
  %v1020 = vshrl.u32 %v1019, 7
  %v1021 = vsub.s32 %v1018, %v1020
  %v1022 = vrot.slane %v1008, %v1021
  %v1023 = vcombine.low %v991, %v1006
  %v1024 = vcombine.high %v991, %v1006
  %v1026 = vunpack.c.l.s4 1934713408
  %v1027 = vunpack.c.0.s8 %v1026
  %v1028 = vlaneseq
  %v1029 = vshrl.u32 %v1028, 7
  %v1030 = vsub.s32 %v1027, %v1029
  %v1031 = vrot.slane %v1023, %v1030
  %v1033 = vunpack.c.l.s4 1934713408
  %v1034 = vunpack.c.0.s8 %v1033
  %v1035 = vlaneseq
  %v1036 = vshrl.u32 %v1035, 7
  %v1037 = vsub.s32 %v1034, %v1036
  %v1038 = vrot.slane %v1024, %v1037
  %v1039 = vcombine.high %v1015, 0.0
  %v1040 = vcombine.high %v1022, 0.0
  %v1041 = vcombine.high %v1031, 0.0
  %v1042 = vcombine.high %v1038, 0.0
  %v1043 = vcombine.high %v840, 0.0
  %v1045 = vunpack.c.l.s4 1983009808
  %v1046 = vunpack.c.0.s8 %v1045
  %v1047 = vlaneseq
  %v1048 = vshrl.u32 %v1047, 7
  %v1049 = vsub.s32 %v1046, %v1048
  %v1050 = vrot.slane %v840, %v1049
  %v1052 = vunpack.c.l.s4 1983009808
  %v1053 = vunpack.c.0.s8 %v1052
  %v1054 = vlaneseq
  %v1055 = vshrl.u32 %v1054, 7
  %v1056 = vsub.s32 %v1053, %v1055
  %v1057 = vrot.slane %v1043, %v1056
  %v1058 = vcombine.high %v844, 0.0
  %v1060 = vunpack.c.l.s4 1983009808
  %v1061 = vunpack.c.0.s8 %v1060
  %v1062 = vlaneseq
  %v1063 = vshrl.u32 %v1062, 7
  %v1064 = vsub.s32 %v1061, %v1063
  %v1065 = vrot.slane %v844, %v1064
  %v1067 = vunpack.c.l.s4 1983009808
  %v1068 = vunpack.c.0.s8 %v1067
  %v1069 = vlaneseq
  %v1070 = vshrl.u32 %v1069, 7
  %v1071 = vsub.s32 %v1068, %v1070
  %v1072 = vrot.slane %v1058, %v1071
  %v1073 = vcombine.low %v1050, %v1065
  %v1074 = vcombine.high %v1050, %v1065
  %v1076 = vunpack.c.l.s4 1934713408
  %v1077 = vunpack.c.0.s8 %v1076
  %v1078 = vlaneseq
  %v1079 = vshrl.u32 %v1078, 7
  %v1080 = vsub.s32 %v1077, %v1079
  %v1081 = vrot.slane %v1073, %v1080
  %v1083 = vunpack.c.l.s4 1934713408
  %v1084 = vunpack.c.0.s8 %v1083
  %v1085 = vlaneseq
  %v1086 = vshrl.u32 %v1085, 7
  %v1087 = vsub.s32 %v1084, %v1086
  %v1088 = vrot.slane %v1074, %v1087
  %v1089 = vcombine.low %v1057, %v1072
  %v1090 = vcombine.high %v1057, %v1072
  %v1092 = vunpack.c.l.s4 1934713408
  %v1093 = vunpack.c.0.s8 %v1092
  %v1094 = vlaneseq
  %v1095 = vshrl.u32 %v1094, 7
  %v1096 = vsub.s32 %v1093, %v1095
  %v1097 = vrot.slane %v1089, %v1096
  %v1099 = vunpack.c.l.s4 1934713408
  %v1100 = vunpack.c.0.s8 %v1099
  %v1101 = vlaneseq
  %v1102 = vshrl.u32 %v1101, 7
  %v1103 = vsub.s32 %v1100, %v1102
  %v1104 = vrot.slane %v1090, %v1103
  %v1105 = vcombine.high %v1081, 0.0
  %v1106 = vcombine.high %v1088, 0.0
  %v1107 = vcombine.high %v1097, 0.0
  %v1108 = vcombine.high %v1104, 0.0
  %1110 = vrot.lane.b32.xlu0 %v907, 64
  %v1111 = vpop.permute.xlu0 %1110
  %1114 = vrot.lane.b32.xlu0 %v908, 64
  %v1115 = vpop.permute.xlu0 %1114
  %1118 = vrot.lane.b32.xlu0 %v909, 64
  %v1119 = vpop.permute.xlu0 %1118
  %1122 = vrot.lane.b32.xlu0 %v910, 64
  %v1123 = vpop.permute.xlu0 %1122
  %1126 = vrot.lane.b32.xlu0 %v973, 64
  %v1127 = vpop.permute.xlu0 %1126
  %1130 = vrot.lane.b32.xlu0 %v974, 64
  %v1131 = vpop.permute.xlu0 %1130
  %1134 = vrot.lane.b32.xlu0 %v975, 64
  %v1135 = vpop.permute.xlu0 %1134
  %1138 = vrot.lane.b32.xlu0 %v976, 64
  %v1139 = vpop.permute.xlu0 %1138
  %1142 = vrot.lane.b32.xlu0 %v1039, 64
  %v1143 = vpop.permute.xlu0 %1142
  %1146 = vrot.lane.b32.xlu0 %v1040, 64
  %v1147 = vpop.permute.xlu0 %1146
  %1150 = vrot.lane.b32.xlu0 %v1041, 64
  %v1151 = vpop.permute.xlu0 %1150
  %1154 = vrot.lane.b32.xlu0 %v1042, 64
  %v1155 = vpop.permute.xlu0 %1154
  %1158 = vrot.lane.b32.xlu0 %v1105, 64
  %v1159 = vpop.permute.xlu0 %1158
  %1162 = vrot.lane.b32.xlu0 %v1106, 64
  %v1163 = vpop.permute.xlu0 %1162
  %1166 = vrot.lane.b32.xlu0 %v1107, 64
  %v1167 = vpop.permute.xlu0 %1166
  %1170 = vrot.lane.b32.xlu0 %v1108, 64
  %v1171 = vpop.permute.xlu0 %1170
  %v1173 = vsel %vm550, %v883, %v1111
  %v1174 = vsel %vm550, %v890, %v1115
  %v1175 = vsel %vm550, %v899, %v1119
  %v1176 = vsel %vm550, %v906, %v1123
  %v1177 = vsel %vm550, %v949, %v1127
  %v1178 = vsel %vm550, %v956, %v1131
  %v1179 = vsel %vm550, %v965, %v1135
  %v1180 = vsel %vm550, %v972, %v1139
  %v1181 = vsel %vm550, %v1015, %v1143
  %v1182 = vsel %vm550, %v1022, %v1147
  %v1183 = vsel %vm550, %v1031, %v1151
  %v1184 = vsel %vm550, %v1038, %v1155
  %v1185 = vsel %vm550, %v1081, %v1159
  %v1186 = vsel %vm550, %v1088, %v1163
  %v1187 = vsel %vm550, %v1097, %v1167
  %v1188 = vsel %vm550, %v1104, %v1171
  %v1189 = vld [vmem:[%s4] sm:$0xff]
  %v1190 = vld [vmem:[%s4 + $0x8] sm:$0xff]
  %v1191 = vld [vmem:[%s4 + $0x10] sm:$0xff]
  %v1192 = vld [vmem:[%s4 + $0x18] sm:$0xff]
  %v1193 = vld [vmem:[%s4 + $0x20] sm:$0xff]
  %v1194 = vld [vmem:[%s4 + $0x28] sm:$0xff]
  %v1195 = vld [vmem:[%s4 + $0x30] sm:$0xff]
  %v1196 = vld [vmem:[%s4 + $0x38] sm:$0xff]
  %v1197 = vld [vmem:[%s4 + $0x40] sm:$0xff]
  %v1198 = vld [vmem:[%s4 + $0x48] sm:$0xff]
  %v1199 = vld [vmem:[%s4 + $0x50] sm:$0xff]
  %v1200 = vld [vmem:[%s4 + $0x58] sm:$0xff]
  %v1201 = vld [vmem:[%s4 + $0x60] sm:$0xff]
  %v1202 = vld [vmem:[%s4 + $0x68] sm:$0xff]
  %v1203 = vld [vmem:[%s4 + $0x70] sm:$0xff]
  %v1204 = vld [vmem:[%s4 + $0x78] sm:$0xff]
  %v1205 = vld [vmem:[%s4 + $0x80] sm:$0xff]
  %v1206 = vld [vmem:[%s4 + $0x88] sm:$0xff]
  %v1207 = vld [vmem:[%s4 + $0x90] sm:$0xff]
  %v1208 = vld [vmem:[%s4 + $0x98] sm:$0xff]
  %v1209 = vld [vmem:[%s4 + $0xa0] sm:$0xff]
  %v1210 = vld [vmem:[%s4 + $0xa8] sm:$0xff]
  %v1211 = vld [vmem:[%s4 + $0xb0] sm:$0xff]
  %v1212 = vld [vmem:[%s4 + $0xb8] sm:$0xff]
  %v1213 = vld [vmem:[%s4 + $0xc0] sm:$0xff]
  %v1214 = vld [vmem:[%s4 + $0xc8] sm:$0xff]
  %v1215 = vld [vmem:[%s4 + $0xd0] sm:$0xff]
  %v1216 = vld [vmem:[%s4 + $0xd8] sm:$0xff]
  %v1217 = vld [vmem:[%s4 + $0xe0] sm:$0xff]
  %v1218 = vld [vmem:[%s4 + $0xe8] sm:$0xff]
  %v1219 = vld [vmem:[%s4 + $0xf0] sm:$0xff]
  %v1220 = vld [vmem:[%s4 + $0xf8] sm:$0xff]
  %v1221 = vld [vmem:[%s4 + $0x100] sm:$0xff]
  %v1222 = vld [vmem:[%s4 + $0x108] sm:$0xff]
  %v1223 = vld [vmem:[%s4 + $0x110] sm:$0xff]
  %v1224 = vld [vmem:[%s4 + $0x118] sm:$0xff]
  %v1225 = vld [vmem:[%s4 + $0x120] sm:$0xff]
  %v1226 = vld [vmem:[%s4 + $0x128] sm:$0xff]
  %v1227 = vld [vmem:[%s4 + $0x130] sm:$0xff]
  %v1228 = vld [vmem:[%s4 + $0x138] sm:$0xff]
  %v1229 = vld [vmem:[%s4 + $0x140] sm:$0xff]
  %v1230 = vld [vmem:[%s4 + $0x148] sm:$0xff]
  %v1231 = vld [vmem:[%s4 + $0x150] sm:$0xff]
  %v1232 = vld [vmem:[%s4 + $0x158] sm:$0xff]
  %v1233 = vld [vmem:[%s4 + $0x160] sm:$0xff]
  %v1234 = vld [vmem:[%s4 + $0x168] sm:$0xff]
  %v1235 = vld [vmem:[%s4 + $0x170] sm:$0xff]
  %v1236 = vld [vmem:[%s4 + $0x178] sm:$0xff]
  %v1237 = vld [vmem:[%s4 + $0x180] sm:$0xff]
  %v1238 = vld [vmem:[%s4 + $0x188] sm:$0xff]
  %v1239 = vld [vmem:[%s4 + $0x190] sm:$0xff]
  %v1240 = vld [vmem:[%s4 + $0x198] sm:$0xff]
  %v1241 = vld [vmem:[%s4 + $0x1a0] sm:$0xff]
  %v1242 = vld [vmem:[%s4 + $0x1a8] sm:$0xff]
  %v1243 = vld [vmem:[%s4 + $0x1b0] sm:$0xff]
  %v1244 = vld [vmem:[%s4 + $0x1b8] sm:$0xff]
  %v1245 = vld [vmem:[%s4 + $0x1c0] sm:$0xff]
  %v1246 = vld [vmem:[%s4 + $0x1c8] sm:$0xff]
  %v1247 = vld [vmem:[%s4 + $0x1d0] sm:$0xff]
  %v1248 = vld [vmem:[%s4 + $0x1d8] sm:$0xff]
  %v1249 = vld [vmem:[%s4 + $0x1e0] sm:$0xff]
  %v1250 = vld [vmem:[%s4 + $0x1e8] sm:$0xff]
  %v1251 = vld [vmem:[%s4 + $0x1f0] sm:$0xff]
  %v1252 = vld [vmem:[%s4 + $0x1f8] sm:$0xff]
  %v1253 = vld [vmem:[%s4 + $0x200] sm:$0xff]
  %v1254 = vld [vmem:[%s4 + $0x208] sm:$0xff]
  %v1255 = vld [vmem:[%s4 + $0x210] sm:$0xff]
  %v1256 = vld [vmem:[%s4 + $0x218] sm:$0xff]
  %v1257 = vld [vmem:[%s4 + $0x220] sm:$0xff]
  %v1258 = vld [vmem:[%s4 + $0x228] sm:$0xff]
  %v1259 = vld [vmem:[%s4 + $0x230] sm:$0xff]
  %v1260 = vld [vmem:[%s4 + $0x238] sm:$0xff]
  %v1261 = vld [vmem:[%s4 + $0x240] sm:$0xff]
  %v1262 = vld [vmem:[%s4 + $0x248] sm:$0xff]
  %v1263 = vld [vmem:[%s4 + $0x250] sm:$0xff]
  %v1264 = vld [vmem:[%s4 + $0x258] sm:$0xff]
  %v1265 = vld [vmem:[%s4 + $0x260] sm:$0xff]
  %v1266 = vld [vmem:[%s4 + $0x268] sm:$0xff]
  %v1267 = vld [vmem:[%s4 + $0x270] sm:$0xff]
  %v1268 = vld [vmem:[%s4 + $0x278] sm:$0xff]
  %v1269 = vld [vmem:[%s4 + $0x280] sm:$0xff]
  %v1270 = vld [vmem:[%s4 + $0x288] sm:$0xff]
  %v1271 = vld [vmem:[%s4 + $0x290] sm:$0xff]
  %v1272 = vld [vmem:[%s4 + $0x298] sm:$0xff]
  %v1273 = vld [vmem:[%s4 + $0x2a0] sm:$0xff]
  %v1274 = vld [vmem:[%s4 + $0x2a8] sm:$0xff]
  %v1275 = vld [vmem:[%s4 + $0x2b0] sm:$0xff]
  %v1276 = vld [vmem:[%s4 + $0x2b8] sm:$0xff]
  %v1277 = vld [vmem:[%s4 + $0x2c0] sm:$0xff]
  %v1278 = vld [vmem:[%s4 + $0x2c8] sm:$0xff]
  %v1279 = vld [vmem:[%s4 + $0x2d0] sm:$0xff]
  %v1280 = vld [vmem:[%s4 + $0x2d8] sm:$0xff]
  %v1281 = vld [vmem:[%s4 + $0x2e0] sm:$0xff]
  %v1282 = vld [vmem:[%s4 + $0x2e8] sm:$0xff]
  %v1283 = vld [vmem:[%s4 + $0x2f0] sm:$0xff]
  %v1284 = vld [vmem:[%s4 + $0x2f8] sm:$0xff]
  %v1285 = vld [vmem:[%s4 + $0x300] sm:$0xff]
  %v1286 = vld [vmem:[%s4 + $0x308] sm:$0xff]
  %v1287 = vld [vmem:[%s4 + $0x310] sm:$0xff]
  %v1288 = vld [vmem:[%s4 + $0x318] sm:$0xff]
  %v1289 = vld [vmem:[%s4 + $0x320] sm:$0xff]
  %v1290 = vld [vmem:[%s4 + $0x328] sm:$0xff]
  %v1291 = vld [vmem:[%s4 + $0x330] sm:$0xff]
  %v1292 = vld [vmem:[%s4 + $0x338] sm:$0xff]
  %v1293 = vld [vmem:[%s4 + $0x340] sm:$0xff]
  %v1294 = vld [vmem:[%s4 + $0x348] sm:$0xff]
  %v1295 = vld [vmem:[%s4 + $0x350] sm:$0xff]
  %v1296 = vld [vmem:[%s4 + $0x358] sm:$0xff]
  %v1297 = vld [vmem:[%s4 + $0x360] sm:$0xff]
  %v1298 = vld [vmem:[%s4 + $0x368] sm:$0xff]
  %v1299 = vld [vmem:[%s4 + $0x370] sm:$0xff]
  %v1300 = vld [vmem:[%s4 + $0x378] sm:$0xff]
  %v1301 = vld [vmem:[%s4 + $0x380] sm:$0xff]
  %v1302 = vld [vmem:[%s4 + $0x388] sm:$0xff]
  %v1303 = vld [vmem:[%s4 + $0x390] sm:$0xff]
  %v1304 = vld [vmem:[%s4 + $0x398] sm:$0xff]
  %v1305 = vld [vmem:[%s4 + $0x3a0] sm:$0xff]
  %v1306 = vld [vmem:[%s4 + $0x3a8] sm:$0xff]
  %v1307 = vld [vmem:[%s4 + $0x3b0] sm:$0xff]
  %v1308 = vld [vmem:[%s4 + $0x3b8] sm:$0xff]
  %v1309 = vld [vmem:[%s4 + $0x3c0] sm:$0xff]
  %v1310 = vld [vmem:[%s4 + $0x3c8] sm:$0xff]
  %v1311 = vld [vmem:[%s4 + $0x3d0] sm:$0xff]
  %v1312 = vld [vmem:[%s4 + $0x3d8] sm:$0xff]
  %v1313 = vld [vmem:[%s4 + $0x3e0] sm:$0xff]
  %v1314 = vld [vmem:[%s4 + $0x3e8] sm:$0xff]
  %v1315 = vld [vmem:[%s4 + $0x3f0] sm:$0xff]
  %v1316 = vld [vmem:[%s4 + $0x3f8] sm:$0xff]
  %v1317 = vld [vmem:[%s4 + $0x400] sm:$0xff]
  %v1318 = vld [vmem:[%s4 + $0x408] sm:$0xff]
  %v1319 = vld [vmem:[%s4 + $0x410] sm:$0xff]
  %v1320 = vld [vmem:[%s4 + $0x418] sm:$0xff]
  %v1321 = vld [vmem:[%s4 + $0x420] sm:$0xff]
  %v1322 = vld [vmem:[%s4 + $0x428] sm:$0xff]
  %v1323 = vld [vmem:[%s4 + $0x430] sm:$0xff]
  %v1324 = vld [vmem:[%s4 + $0x438] sm:$0xff]
  %v1325 = vld [vmem:[%s4 + $0x440] sm:$0xff]
  %v1326 = vld [vmem:[%s4 + $0x448] sm:$0xff]
  %v1327 = vld [vmem:[%s4 + $0x450] sm:$0xff]
  %v1328 = vld [vmem:[%s4 + $0x458] sm:$0xff]
  %v1329 = vld [vmem:[%s4 + $0x460] sm:$0xff]
  %v1330 = vld [vmem:[%s4 + $0x468] sm:$0xff]
  %v1331 = vld [vmem:[%s4 + $0x470] sm:$0xff]
  %v1332 = vld [vmem:[%s4 + $0x478] sm:$0xff]
  %v1333 = vld [vmem:[%s4 + $0x480] sm:$0xff]
  %v1334 = vld [vmem:[%s4 + $0x488] sm:$0xff]
  %v1335 = vld [vmem:[%s4 + $0x490] sm:$0xff]
  %v1336 = vld [vmem:[%s4 + $0x498] sm:$0xff]
  %v1337 = vld [vmem:[%s4 + $0x4a0] sm:$0xff]
  %v1338 = vld [vmem:[%s4 + $0x4a8] sm:$0xff]
  %v1339 = vld [vmem:[%s4 + $0x4b0] sm:$0xff]
  %v1340 = vld [vmem:[%s4 + $0x4b8] sm:$0xff]
  %v1341 = vld [vmem:[%s4 + $0x4c0] sm:$0xff]
  %v1342 = vld [vmem:[%s4 + $0x4c8] sm:$0xff]
  %v1343 = vld [vmem:[%s4 + $0x4d0] sm:$0xff]
  %v1344 = vld [vmem:[%s4 + $0x4d8] sm:$0xff]
  %v1345 = vld [vmem:[%s4 + $0x4e0] sm:$0xff]
  %v1346 = vld [vmem:[%s4 + $0x4e8] sm:$0xff]
  %v1347 = vld [vmem:[%s4 + $0x4f0] sm:$0xff]
  %v1348 = vld [vmem:[%s4 + $0x4f8] sm:$0xff]
  %v1349 = vld [vmem:[%s4 + $0x500] sm:$0xff]
  %v1350 = vld [vmem:[%s4 + $0x508] sm:$0xff]
  %v1351 = vld [vmem:[%s4 + $0x510] sm:$0xff]
  %v1352 = vld [vmem:[%s4 + $0x518] sm:$0xff]
  %v1353 = vld [vmem:[%s4 + $0x520] sm:$0xff]
  %v1354 = vld [vmem:[%s4 + $0x528] sm:$0xff]
  %v1355 = vld [vmem:[%s4 + $0x530] sm:$0xff]
  %v1356 = vld [vmem:[%s4 + $0x538] sm:$0xff]
  %v1357 = vld [vmem:[%s4 + $0x540] sm:$0xff]
  %v1358 = vld [vmem:[%s4 + $0x548] sm:$0xff]
  %v1359 = vld [vmem:[%s4 + $0x550] sm:$0xff]
  %v1360 = vld [vmem:[%s4 + $0x558] sm:$0xff]
  %v1361 = vld [vmem:[%s4 + $0x560] sm:$0xff]
  %v1362 = vld [vmem:[%s4 + $0x568] sm:$0xff]
  %v1363 = vld [vmem:[%s4 + $0x570] sm:$0xff]
  %v1364 = vld [vmem:[%s4 + $0x578] sm:$0xff]
  %v1365 = vld [vmem:[%s4 + $0x580] sm:$0xff]
  %v1366 = vld [vmem:[%s4 + $0x588] sm:$0xff]
  %v1367 = vld [vmem:[%s4 + $0x590] sm:$0xff]
  %v1368 = vld [vmem:[%s4 + $0x598] sm:$0xff]
  %v1369 = vld [vmem:[%s4 + $0x5a0] sm:$0xff]
  %v1370 = vld [vmem:[%s4 + $0x5a8] sm:$0xff]
  %v1371 = vld [vmem:[%s4 + $0x5b0] sm:$0xff]
  %v1372 = vld [vmem:[%s4 + $0x5b8] sm:$0xff]
  %v1373 = vld [vmem:[%s4 + $0x5c0] sm:$0xff]
  %v1374 = vld [vmem:[%s4 + $0x5c8] sm:$0xff]
  %v1375 = vld [vmem:[%s4 + $0x5d0] sm:$0xff]
  %v1376 = vld [vmem:[%s4 + $0x5d8] sm:$0xff]
  %v1377 = vld [vmem:[%s4 + $0x5e0] sm:$0xff]
  %v1378 = vld [vmem:[%s4 + $0x5e8] sm:$0xff]
  %v1379 = vld [vmem:[%s4 + $0x5f0] sm:$0xff]
  %v1380 = vld [vmem:[%s4 + $0x5f8] sm:$0xff]
  %v1381 = vld [vmem:[%s4 + $0x600] sm:$0xff]
  %v1382 = vld [vmem:[%s4 + $0x608] sm:$0xff]
  %v1383 = vld [vmem:[%s4 + $0x610] sm:$0xff]
  %v1384 = vld [vmem:[%s4 + $0x618] sm:$0xff]
  %v1385 = vld [vmem:[%s4 + $0x620] sm:$0xff]
  %v1386 = vld [vmem:[%s4 + $0x628] sm:$0xff]
  %v1387 = vld [vmem:[%s4 + $0x630] sm:$0xff]
  %v1388 = vld [vmem:[%s4 + $0x638] sm:$0xff]
  %v1389 = vld [vmem:[%s4 + $0x640] sm:$0xff]
  %v1390 = vld [vmem:[%s4 + $0x648] sm:$0xff]
  %v1391 = vld [vmem:[%s4 + $0x650] sm:$0xff]
  %v1392 = vld [vmem:[%s4 + $0x658] sm:$0xff]
  %v1393 = vld [vmem:[%s4 + $0x660] sm:$0xff]
  %v1394 = vld [vmem:[%s4 + $0x668] sm:$0xff]
  %v1395 = vld [vmem:[%s4 + $0x670] sm:$0xff]
  %v1396 = vld [vmem:[%s4 + $0x678] sm:$0xff]
  %v1397 = vld [vmem:[%s4 + $0x680] sm:$0xff]
  %v1398 = vld [vmem:[%s4 + $0x688] sm:$0xff]
  %v1399 = vld [vmem:[%s4 + $0x690] sm:$0xff]
  %v1400 = vld [vmem:[%s4 + $0x698] sm:$0xff]
  %v1401 = vld [vmem:[%s4 + $0x6a0] sm:$0xff]
  %v1402 = vld [vmem:[%s4 + $0x6a8] sm:$0xff]
  %v1403 = vld [vmem:[%s4 + $0x6b0] sm:$0xff]
  %v1404 = vld [vmem:[%s4 + $0x6b8] sm:$0xff]
  %v1405 = vld [vmem:[%s4 + $0x6c0] sm:$0xff]
  %v1406 = vld [vmem:[%s4 + $0x6c8] sm:$0xff]
  %v1407 = vld [vmem:[%s4 + $0x6d0] sm:$0xff]
  %v1408 = vld [vmem:[%s4 + $0x6d8] sm:$0xff]
  %v1409 = vld [vmem:[%s4 + $0x6e0] sm:$0xff]
  %v1410 = vld [vmem:[%s4 + $0x6e8] sm:$0xff]
  %v1411 = vld [vmem:[%s4 + $0x6f0] sm:$0xff]
  %v1412 = vld [vmem:[%s4 + $0x6f8] sm:$0xff]
  %v1413 = vld [vmem:[%s4 + $0x700] sm:$0xff]
  %v1414 = vld [vmem:[%s4 + $0x708] sm:$0xff]
  %v1415 = vld [vmem:[%s4 + $0x710] sm:$0xff]
  %v1416 = vld [vmem:[%s4 + $0x718] sm:$0xff]
  %v1417 = vld [vmem:[%s4 + $0x720] sm:$0xff]
  %v1418 = vld [vmem:[%s4 + $0x728] sm:$0xff]
  %v1419 = vld [vmem:[%s4 + $0x730] sm:$0xff]
  %v1420 = vld [vmem:[%s4 + $0x738] sm:$0xff]
  %v1421 = vld [vmem:[%s4 + $0x740] sm:$0xff]
  %v1422 = vld [vmem:[%s4 + $0x748] sm:$0xff]
  %v1423 = vld [vmem:[%s4 + $0x750] sm:$0xff]
  %v1424 = vld [vmem:[%s4 + $0x758] sm:$0xff]
  %v1425 = vld [vmem:[%s4 + $0x760] sm:$0xff]
  %v1426 = vld [vmem:[%s4 + $0x768] sm:$0xff]
  %v1427 = vld [vmem:[%s4 + $0x770] sm:$0xff]
  %v1428 = vld [vmem:[%s4 + $0x778] sm:$0xff]
  %v1429 = vld [vmem:[%s4 + $0x780] sm:$0xff]
  %v1430 = vld [vmem:[%s4 + $0x788] sm:$0xff]
  %v1431 = vld [vmem:[%s4 + $0x790] sm:$0xff]
  %v1432 = vld [vmem:[%s4 + $0x798] sm:$0xff]
  %v1433 = vld [vmem:[%s4 + $0x7a0] sm:$0xff]
  %v1434 = vld [vmem:[%s4 + $0x7a8] sm:$0xff]
  %v1435 = vld [vmem:[%s4 + $0x7b0] sm:$0xff]
  %v1436 = vld [vmem:[%s4 + $0x7b8] sm:$0xff]
  %v1437 = vld [vmem:[%s4 + $0x7c0] sm:$0xff]
  %v1438 = vld [vmem:[%s4 + $0x7c8] sm:$0xff]
  %v1439 = vld [vmem:[%s4 + $0x7d0] sm:$0xff]
  %v1440 = vld [vmem:[%s4 + $0x7d8] sm:$0xff]
  %v1441 = vld [vmem:[%s4 + $0x7e0] sm:$0xff]
  %v1442 = vld [vmem:[%s4 + $0x7e8] sm:$0xff]
  %v1443 = vld [vmem:[%s4 + $0x7f0] sm:$0xff]
  %v1444 = vld [vmem:[%s4 + $0x7f8] sm:$0xff]
  %v1445 = vld [vmem:[%s2 + $0xf] sm:$0x1]
  %v1446 = vlaneseq
  %v1447 = vshrl.u32 %v1446, 7
  %v1448 = vsub.s32 0, %v1447
  %v1449 = vrot.slane %v1445, %v1448
  %1450 = vmatprep.subr.mxu0 0.0
  %1451 = vmatpush1.msra.mxu0 %v1189
  %1452 = vmatprep.subr.mxu0 0.0
  %1453 = vmatpush1.msra.mxu0 %v1190
  %1454 = vmatprep.subr.mxu0 0.0
  %1455 = vmatpush1.msra.mxu0 %v1191
  %1456 = vmatprep.subr.mxu0 0.0
  %1457 = vmatpush1.msra.mxu0 %v1192
  %1458 = vmatprep.subr.mxu0 0.0
  %1459 = vmatpush1.msra.mxu0 %v1193
  %1460 = vmatprep.subr.mxu0 0.0
  %1461 = vmatpush1.msra.mxu0 %v1194
  %1462 = vmatprep.subr.mxu0 0.0
  %1463 = vmatpush1.msra.mxu0 %v1195
  %1464 = vmatprep.subr.mxu0 0.0
  %1465 = vmatpush1.msra.mxu0 %v1196
  %1466 = vmatprep.subr.mxu0 0.0
  %1467 = vmatpush1.msra.mxu0 %v1197
  %1468 = vmatprep.subr.mxu0 0.0
  %1469 = vmatpush1.msra.mxu0 %v1198
  %1470 = vmatprep.subr.mxu0 0.0
  %1471 = vmatpush1.msra.mxu0 %v1199
  %1472 = vmatprep.subr.mxu0 0.0
  %1473 = vmatpush1.msra.mxu0 %v1200
  %1474 = vmatprep.subr.mxu0 0.0
  %1475 = vmatpush1.msra.mxu0 %v1201
  %1476 = vmatprep.subr.mxu0 0.0
  %1477 = vmatpush1.msra.mxu0 %v1202
  %1478 = vmatprep.subr.mxu0 0.0
  %1479 = vmatpush1.msra.mxu0 %v1203
  %1480 = vmatprep.subr.mxu0 0.0
  %1481 = vmatpush1.msra.mxu0 %v1204
  %1482 = vmatprep.subr.mxu0 0.0
  %1483 = vmatpush1.msra.mxu0 %v1205
  %1484 = vmatprep.subr.mxu0 0.0
  %1485 = vmatpush1.msra.mxu0 %v1206
  %1486 = vmatprep.subr.mxu0 0.0
  %1487 = vmatpush1.msra.mxu0 %v1207
  %1488 = vmatprep.subr.mxu0 0.0
  %1489 = vmatpush1.msra.mxu0 %v1208
  %1490 = vmatprep.subr.mxu0 0.0
  %1491 = vmatpush1.msra.mxu0 %v1209
  %1492 = vmatprep.subr.mxu0 0.0
  %1493 = vmatpush1.msra.mxu0 %v1210
  %1494 = vmatprep.subr.mxu0 0.0
  %1495 = vmatpush1.msra.mxu0 %v1211
  %1496 = vmatprep.subr.mxu0 0.0
  %1497 = vmatpush1.msra.mxu0 %v1212
  %1498 = vmatprep.subr.mxu0 0.0
  %1499 = vmatpush1.msra.mxu0 %v1213
  %1500 = vmatprep.subr.mxu0 0.0
  %1501 = vmatpush1.msra.mxu0 %v1214
  %1502 = vmatprep.subr.mxu0 0.0
  %1503 = vmatpush1.msra.mxu0 %v1215
  %1504 = vmatprep.subr.mxu0 0.0
  %1505 = vmatpush1.msra.mxu0 %v1216
  %1506 = vmatprep.subr.mxu0 0.0
  %1507 = vmatpush1.msra.mxu0 %v1217
  %1508 = vmatprep.subr.mxu0 0.0
  %1509 = vmatpush1.msra.mxu0 %v1218
  %1510 = vmatprep.subr.mxu0 0.0
  %1511 = vmatpush1.msra.mxu0 %v1219
  %1512 = vmatprep.subr.mxu0 0.0
  %1513 = vmatpush1.msra.mxu0 %v1220
  %1514 = vmatprep.mubr.f32.mxu0 %v1174
  %1515 = vmatmul.mubr.f32.gmra.mrb[0].mxu0 %v1173
  %v1516 = vpop.f32.mrb[0].mxu0
  %v1517 = vadd.f32 %v1449, %v1516
  %v1518 = vpop.f32.mrb[0].mxu0
  %1519 = vdwg.mxu0
  %1520 = vmatprep.subr.mxu0 0.0
  %1521 = vmatpush1.msra.mxu0 %v1221
  %1522 = vmatprep.subr.mxu0 0.0
  %1523 = vmatpush1.msra.mxu0 %v1222
  %1524 = vmatprep.subr.mxu0 0.0
  %1525 = vmatpush1.msra.mxu0 %v1223
  %1526 = vmatprep.subr.mxu0 0.0
  %1527 = vmatpush1.msra.mxu0 %v1224
  %1528 = vmatprep.subr.mxu0 0.0
  %1529 = vmatpush1.msra.mxu0 %v1225
  %1530 = vmatprep.subr.mxu0 0.0
  %1531 = vmatpush1.msra.mxu0 %v1226
  %1532 = vmatprep.subr.mxu0 0.0
  %1533 = vmatpush1.msra.mxu0 %v1227
  %1534 = vmatprep.subr.mxu0 0.0
  %1535 = vmatpush1.msra.mxu0 %v1228
  %1536 = vmatprep.subr.mxu0 0.0
  %1537 = vmatpush1.msra.mxu0 %v1229
  %1538 = vmatprep.subr.mxu0 0.0
  %1539 = vmatpush1.msra.mxu0 %v1230
  %1540 = vmatprep.subr.mxu0 0.0
  %1541 = vmatpush1.msra.mxu0 %v1231
  %1542 = vmatprep.subr.mxu0 0.0
  %1543 = vmatpush1.msra.mxu0 %v1232
  %1544 = vmatprep.subr.mxu0 0.0
  %1545 = vmatpush1.msra.mxu0 %v1233
  %1546 = vmatprep.subr.mxu0 0.0
  %1547 = vmatpush1.msra.mxu0 %v1234
  %1548 = vmatprep.subr.mxu0 0.0
  %1549 = vmatpush1.msra.mxu0 %v1235
  %1550 = vmatprep.subr.mxu0 0.0
  %1551 = vmatpush1.msra.mxu0 %v1236
  %1552 = vmatprep.subr.mxu0 0.0
  %1553 = vmatpush1.msra.mxu0 %v1237
  %1554 = vmatprep.subr.mxu0 0.0
  %1555 = vmatpush1.msra.mxu0 %v1238
  %1556 = vmatprep.subr.mxu0 0.0
  %1557 = vmatpush1.msra.mxu0 %v1239
  %1558 = vmatprep.subr.mxu0 0.0
  %1559 = vmatpush1.msra.mxu0 %v1240
  %1560 = vmatprep.subr.mxu0 0.0
  %1561 = vmatpush1.msra.mxu0 %v1241
  %1562 = vmatprep.subr.mxu0 0.0
  %1563 = vmatpush1.msra.mxu0 %v1242
  %1564 = vmatprep.subr.mxu0 0.0
  %1565 = vmatpush1.msra.mxu0 %v1243
  %1566 = vmatprep.subr.mxu0 0.0
  %1567 = vmatpush1.msra.mxu0 %v1244
  %1568 = vmatprep.subr.mxu0 0.0
  %1569 = vmatpush1.msra.mxu0 %v1245
  %1570 = vmatprep.subr.mxu0 0.0
  %1571 = vmatpush1.msra.mxu0 %v1246
  %1572 = vmatprep.subr.mxu0 0.0
  %1573 = vmatpush1.msra.mxu0 %v1247
  %1574 = vmatprep.subr.mxu0 0.0
  %1575 = vmatpush1.msra.mxu0 %v1248
  %1576 = vmatprep.subr.mxu0 0.0
  %1577 = vmatpush1.msra.mxu0 %v1249
  %1578 = vmatprep.subr.mxu0 0.0
  %1579 = vmatpush1.msra.mxu0 %v1250
  %1580 = vmatprep.subr.mxu0 0.0
  %1581 = vmatpush1.msra.mxu0 %v1251
  %1582 = vmatprep.subr.mxu0 0.0
  %1583 = vmatpush1.msra.mxu0 %v1252
  %1584 = vmatprep.mubr.f32.mxu0 %v1176
  %1585 = vmatmul.mubr.f32.gmra.mrb[0].mxu0 %v1175
  %v1586 = vpop.f32.mrb[0].mxu0
  %v1587 = vadd.f32 %v1517, %v1586
  %v1588 = vpop.f32.mrb[0].mxu0
  %1589 = vdwg.mxu0
  %1590 = vmatprep.subr.mxu0 0.0
  %1591 = vmatpush1.msra.mxu0 %v1253
  %1592 = vmatprep.subr.mxu0 0.0
  %1593 = vmatpush1.msra.mxu0 %v1254
  %1594 = vmatprep.subr.mxu0 0.0
  %1595 = vmatpush1.msra.mxu0 %v1255
  %1596 = vmatprep.subr.mxu0 0.0
  %1597 = vmatpush1.msra.mxu0 %v1256
  %1598 = vmatprep.subr.mxu0 0.0
  %1599 = vmatpush1.msra.mxu0 %v1257
  %1600 = vmatprep.subr.mxu0 0.0
  %1601 = vmatpush1.msra.mxu0 %v1258
  %1602 = vmatprep.subr.mxu0 0.0
  %1603 = vmatpush1.msra.mxu0 %v1259
  %1604 = vmatprep.subr.mxu0 0.0
  %1605 = vmatpush1.msra.mxu0 %v1260
  %1606 = vmatprep.subr.mxu0 0.0
  %1607 = vmatpush1.msra.mxu0 %v1261
  %1608 = vmatprep.subr.mxu0 0.0
  %1609 = vmatpush1.msra.mxu0 %v1262
  %1610 = vmatprep.subr.mxu0 0.0
  %1611 = vmatpush1.msra.mxu0 %v1263
  %1612 = vmatprep.subr.mxu0 0.0
  %1613 = vmatpush1.msra.mxu0 %v1264
  %1614 = vmatprep.subr.mxu0 0.0
  %1615 = vmatpush1.msra.mxu0 %v1265
  %1616 = vmatprep.subr.mxu0 0.0
  %1617 = vmatpush1.msra.mxu0 %v1266
  %1618 = vmatprep.subr.mxu0 0.0
  %1619 = vmatpush1.msra.mxu0 %v1267
  %1620 = vmatprep.subr.mxu0 0.0
  %1621 = vmatpush1.msra.mxu0 %v1268
  %1622 = vmatprep.subr.mxu0 0.0
  %1623 = vmatpush1.msra.mxu0 %v1269
  %1624 = vmatprep.subr.mxu0 0.0
  %1625 = vmatpush1.msra.mxu0 %v1270
  %1626 = vmatprep.subr.mxu0 0.0
  %1627 = vmatpush1.msra.mxu0 %v1271
  %1628 = vmatprep.subr.mxu0 0.0
  %1629 = vmatpush1.msra.mxu0 %v1272
  %1630 = vmatprep.subr.mxu0 0.0
  %1631 = vmatpush1.msra.mxu0 %v1273
  %1632 = vmatprep.subr.mxu0 0.0
  %1633 = vmatpush1.msra.mxu0 %v1274
  %1634 = vmatprep.subr.mxu0 0.0
  %1635 = vmatpush1.msra.mxu0 %v1275
  %1636 = vmatprep.subr.mxu0 0.0
  %1637 = vmatpush1.msra.mxu0 %v1276
  %1638 = vmatprep.subr.mxu0 0.0
  %1639 = vmatpush1.msra.mxu0 %v1277
  %1640 = vmatprep.subr.mxu0 0.0
  %1641 = vmatpush1.msra.mxu0 %v1278
  %1642 = vmatprep.subr.mxu0 0.0
  %1643 = vmatpush1.msra.mxu0 %v1279
  %1644 = vmatprep.subr.mxu0 0.0
  %1645 = vmatpush1.msra.mxu0 %v1280
  %1646 = vmatprep.subr.mxu0 0.0
  %1647 = vmatpush1.msra.mxu0 %v1281
  %1648 = vmatprep.subr.mxu0 0.0
  %1649 = vmatpush1.msra.mxu0 %v1282
  %1650 = vmatprep.subr.mxu0 0.0
  %1651 = vmatpush1.msra.mxu0 %v1283
  %1652 = vmatprep.subr.mxu0 0.0
  %1653 = vmatpush1.msra.mxu0 %v1284
  %1654 = vmatprep.mubr.f32.mxu0 %v1178
  %1655 = vmatmul.mubr.f32.gmra.mrb[0].mxu0 %v1177
  %v1656 = vpop.f32.mrb[0].mxu0
  %v1657 = vadd.f32 %v1587, %v1656
  %v1658 = vpop.f32.mrb[0].mxu0
  %1659 = vdwg.mxu0
  %1660 = vmatprep.subr.mxu0 0.0
  %1661 = vmatpush1.msra.mxu0 %v1285
  %1662 = vmatprep.subr.mxu0 0.0
  %1663 = vmatpush1.msra.mxu0 %v1286
  %1664 = vmatprep.subr.mxu0 0.0
  %1665 = vmatpush1.msra.mxu0 %v1287
  %1666 = vmatprep.subr.mxu0 0.0
  %1667 = vmatpush1.msra.mxu0 %v1288
  %1668 = vmatprep.subr.mxu0 0.0
  %1669 = vmatpush1.msra.mxu0 %v1289
  %1670 = vmatprep.subr.mxu0 0.0
  %1671 = vmatpush1.msra.mxu0 %v1290
  %1672 = vmatprep.subr.mxu0 0.0
  %1673 = vmatpush1.msra.mxu0 %v1291
  %1674 = vmatprep.subr.mxu0 0.0
  %1675 = vmatpush1.msra.mxu0 %v1292
  %1676 = vmatprep.subr.mxu0 0.0
  %1677 = vmatpush1.msra.mxu0 %v1293
  %1678 = vmatprep.subr.mxu0 0.0
  %1679 = vmatpush1.msra.mxu0 %v1294
  %1680 = vmatprep.subr.mxu0 0.0
  %1681 = vmatpush1.msra.mxu0 %v1295
  %1682 = vmatprep.subr.mxu0 0.0
  %1683 = vmatpush1.msra.mxu0 %v1296
  %1684 = vmatprep.subr.mxu0 0.0
  %1685 = vmatpush1.msra.mxu0 %v1297
  %1686 = vmatprep.subr.mxu0 0.0
  %1687 = vmatpush1.msra.mxu0 %v1298
  %1688 = vmatprep.subr.mxu0 0.0
  %1689 = vmatpush1.msra.mxu0 %v1299
  %1690 = vmatprep.subr.mxu0 0.0
  %1691 = vmatpush1.msra.mxu0 %v1300
  %1692 = vmatprep.subr.mxu0 0.0
  %1693 = vmatpush1.msra.mxu0 %v1301
  %1694 = vmatprep.subr.mxu0 0.0
  %1695 = vmatpush1.msra.mxu0 %v1302
  %1696 = vmatprep.subr.mxu0 0.0
  %1697 = vmatpush1.msra.mxu0 %v1303
  %1698 = vmatprep.subr.mxu0 0.0
  %1699 = vmatpush1.msra.mxu0 %v1304
  %1700 = vmatprep.subr.mxu0 0.0
  %1701 = vmatpush1.msra.mxu0 %v1305
  %1702 = vmatprep.subr.mxu0 0.0
  %1703 = vmatpush1.msra.mxu0 %v1306
  %1704 = vmatprep.subr.mxu0 0.0
  %1705 = vmatpush1.msra.mxu0 %v1307
  %1706 = vmatprep.subr.mxu0 0.0
  %1707 = vmatpush1.msra.mxu0 %v1308
  %1708 = vmatprep.subr.mxu0 0.0
  %1709 = vmatpush1.msra.mxu0 %v1309
  %1710 = vmatprep.subr.mxu0 0.0
  %1711 = vmatpush1.msra.mxu0 %v1310
  %1712 = vmatprep.subr.mxu0 0.0
  %1713 = vmatpush1.msra.mxu0 %v1311
  %1714 = vmatprep.subr.mxu0 0.0
  %1715 = vmatpush1.msra.mxu0 %v1312
  %1716 = vmatprep.subr.mxu0 0.0
  %1717 = vmatpush1.msra.mxu0 %v1313
  %1718 = vmatprep.subr.mxu0 0.0
  %1719 = vmatpush1.msra.mxu0 %v1314
  %1720 = vmatprep.subr.mxu0 0.0
  %1721 = vmatpush1.msra.mxu0 %v1315
  %1722 = vmatprep.subr.mxu0 0.0
  %1723 = vmatpush1.msra.mxu0 %v1316
  %1724 = vmatprep.mubr.f32.mxu0 %v1180
  %1725 = vmatmul.mubr.f32.gmra.mrb[0].mxu0 %v1179
  %v1726 = vpop.f32.mrb[0].mxu0
  %v1727 = vadd.f32 %v1657, %v1726
  %v1728 = vpop.f32.mrb[0].mxu0
  %1729 = vdwg.mxu0
  %1730 = vmatprep.subr.mxu0 0.0
  %1731 = vmatpush1.msra.mxu0 %v1317
  %1732 = vmatprep.subr.mxu0 0.0
  %1733 = vmatpush1.msra.mxu0 %v1318
  %1734 = vmatprep.subr.mxu0 0.0
  %1735 = vmatpush1.msra.mxu0 %v1319
  %1736 = vmatprep.subr.mxu0 0.0
  %1737 = vmatpush1.msra.mxu0 %v1320
  %1738 = vmatprep.subr.mxu0 0.0
  %1739 = vmatpush1.msra.mxu0 %v1321
  %1740 = vmatprep.subr.mxu0 0.0
  %1741 = vmatpush1.msra.mxu0 %v1322
  %1742 = vmatprep.subr.mxu0 0.0
  %1743 = vmatpush1.msra.mxu0 %v1323
  %1744 = vmatprep.subr.mxu0 0.0
  %1745 = vmatpush1.msra.mxu0 %v1324
  %1746 = vmatprep.subr.mxu0 0.0
  %1747 = vmatpush1.msra.mxu0 %v1325
  %1748 = vmatprep.subr.mxu0 0.0
  %1749 = vmatpush1.msra.mxu0 %v1326
  %1750 = vmatprep.subr.mxu0 0.0
  %1751 = vmatpush1.msra.mxu0 %v1327
  %1752 = vmatprep.subr.mxu0 0.0
  %1753 = vmatpush1.msra.mxu0 %v1328
  %1754 = vmatprep.subr.mxu0 0.0
  %1755 = vmatpush1.msra.mxu0 %v1329
  %1756 = vmatprep.subr.mxu0 0.0
  %1757 = vmatpush1.msra.mxu0 %v1330
  %1758 = vmatprep.subr.mxu0 0.0
  %1759 = vmatpush1.msra.mxu0 %v1331
  %1760 = vmatprep.subr.mxu0 0.0
  %1761 = vmatpush1.msra.mxu0 %v1332
  %1762 = vmatprep.subr.mxu0 0.0
  %1763 = vmatpush1.msra.mxu0 %v1333
  %1764 = vmatprep.subr.mxu0 0.0
  %1765 = vmatpush1.msra.mxu0 %v1334
  %1766 = vmatprep.subr.mxu0 0.0
  %1767 = vmatpush1.msra.mxu0 %v1335
  %1768 = vmatprep.subr.mxu0 0.0
  %1769 = vmatpush1.msra.mxu0 %v1336
  %1770 = vmatprep.subr.mxu0 0.0
  %1771 = vmatpush1.msra.mxu0 %v1337
  %1772 = vmatprep.subr.mxu0 0.0
  %1773 = vmatpush1.msra.mxu0 %v1338
  %1774 = vmatprep.subr.mxu0 0.0
  %1775 = vmatpush1.msra.mxu0 %v1339
  %1776 = vmatprep.subr.mxu0 0.0
  %1777 = vmatpush1.msra.mxu0 %v1340
  %1778 = vmatprep.subr.mxu0 0.0
  %1779 = vmatpush1.msra.mxu0 %v1341
  %1780 = vmatprep.subr.mxu0 0.0
  %1781 = vmatpush1.msra.mxu0 %v1342
  %1782 = vmatprep.subr.mxu0 0.0
  %1783 = vmatpush1.msra.mxu0 %v1343
  %1784 = vmatprep.subr.mxu0 0.0
  %1785 = vmatpush1.msra.mxu0 %v1344
  %1786 = vmatprep.subr.mxu0 0.0
  %1787 = vmatpush1.msra.mxu0 %v1345
  %1788 = vmatprep.subr.mxu0 0.0
  %1789 = vmatpush1.msra.mxu0 %v1346
  %1790 = vmatprep.subr.mxu0 0.0
  %1791 = vmatpush1.msra.mxu0 %v1347
  %1792 = vmatprep.subr.mxu0 0.0
  %1793 = vmatpush1.msra.mxu0 %v1348
  %1794 = vmatprep.mubr.f32.mxu0 %v1182
  %1795 = vmatmul.mubr.f32.gmra.mrb[0].mxu0 %v1181
  %v1796 = vpop.f32.mrb[0].mxu0
  %v1797 = vadd.f32 %v1727, %v1796
  %v1798 = vpop.f32.mrb[0].mxu0
  %1799 = vdwg.mxu0
  %1800 = vmatprep.subr.mxu0 0.0
  %1801 = vmatpush1.msra.mxu0 %v1349
  %1802 = vmatprep.subr.mxu0 0.0
  %1803 = vmatpush1.msra.mxu0 %v1350
  %1804 = vmatprep.subr.mxu0 0.0
  %1805 = vmatpush1.msra.mxu0 %v1351
  %1806 = vmatprep.subr.mxu0 0.0
  %1807 = vmatpush1.msra.mxu0 %v1352
  %1808 = vmatprep.subr.mxu0 0.0
  %1809 = vmatpush1.msra.mxu0 %v1353
  %1810 = vmatprep.subr.mxu0 0.0
  %1811 = vmatpush1.msra.mxu0 %v1354
  %1812 = vmatprep.subr.mxu0 0.0
  %1813 = vmatpush1.msra.mxu0 %v1355
  %1814 = vmatprep.subr.mxu0 0.0
  %1815 = vmatpush1.msra.mxu0 %v1356
  %1816 = vmatprep.subr.mxu0 0.0
  %1817 = vmatpush1.msra.mxu0 %v1357
  %1818 = vmatprep.subr.mxu0 0.0
  %1819 = vmatpush1.msra.mxu0 %v1358
  %1820 = vmatprep.subr.mxu0 0.0
  %1821 = vmatpush1.msra.mxu0 %v1359
  %1822 = vmatprep.subr.mxu0 0.0
  %1823 = vmatpush1.msra.mxu0 %v1360
  %1824 = vmatprep.subr.mxu0 0.0
  %1825 = vmatpush1.msra.mxu0 %v1361
  %1826 = vmatprep.subr.mxu0 0.0
  %1827 = vmatpush1.msra.mxu0 %v1362
  %1828 = vmatprep.subr.mxu0 0.0
  %1829 = vmatpush1.msra.mxu0 %v1363
  %1830 = vmatprep.subr.mxu0 0.0
  %1831 = vmatpush1.msra.mxu0 %v1364
  %1832 = vmatprep.subr.mxu0 0.0
  %1833 = vmatpush1.msra.mxu0 %v1365
  %1834 = vmatprep.subr.mxu0 0.0
  %1835 = vmatpush1.msra.mxu0 %v1366
  %1836 = vmatprep.subr.mxu0 0.0
  %1837 = vmatpush1.msra.mxu0 %v1367
  %1838 = vmatprep.subr.mxu0 0.0
  %1839 = vmatpush1.msra.mxu0 %v1368
  %1840 = vmatprep.subr.mxu0 0.0
  %1841 = vmatpush1.msra.mxu0 %v1369
  %1842 = vmatprep.subr.mxu0 0.0
  %1843 = vmatpush1.msra.mxu0 %v1370
  %1844 = vmatprep.subr.mxu0 0.0
  %1845 = vmatpush1.msra.mxu0 %v1371
  %1846 = vmatprep.subr.mxu0 0.0
  %1847 = vmatpush1.msra.mxu0 %v1372
  %1848 = vmatprep.subr.mxu0 0.0
  %1849 = vmatpush1.msra.mxu0 %v1373
  %1850 = vmatprep.subr.mxu0 0.0
  %1851 = vmatpush1.msra.mxu0 %v1374
  %1852 = vmatprep.subr.mxu0 0.0
  %1853 = vmatpush1.msra.mxu0 %v1375
  %1854 = vmatprep.subr.mxu0 0.0
  %1855 = vmatpush1.msra.mxu0 %v1376
  %1856 = vmatprep.subr.mxu0 0.0
  %1857 = vmatpush1.msra.mxu0 %v1377
  %1858 = vmatprep.subr.mxu0 0.0
  %1859 = vmatpush1.msra.mxu0 %v1378
  %1860 = vmatprep.subr.mxu0 0.0
  %1861 = vmatpush1.msra.mxu0 %v1379
  %1862 = vmatprep.subr.mxu0 0.0
  %1863 = vmatpush1.msra.mxu0 %v1380
  %1864 = vmatprep.mubr.f32.mxu0 %v1184
  %1865 = vmatmul.mubr.f32.gmra.mrb[0].mxu0 %v1183
  %v1866 = vpop.f32.mrb[0].mxu0
  %v1867 = vadd.f32 %v1797, %v1866
  %v1868 = vpop.f32.mrb[0].mxu0
  %1869 = vdwg.mxu0
  %1870 = vmatprep.subr.mxu0 0.0
  %1871 = vmatpush1.msra.mxu0 %v1381
  %1872 = vmatprep.subr.mxu0 0.0
  %1873 = vmatpush1.msra.mxu0 %v1382
  %1874 = vmatprep.subr.mxu0 0.0
  %1875 = vmatpush1.msra.mxu0 %v1383
  %1876 = vmatprep.subr.mxu0 0.0
  %1877 = vmatpush1.msra.mxu0 %v1384
  %1878 = vmatprep.subr.mxu0 0.0
  %1879 = vmatpush1.msra.mxu0 %v1385
  %1880 = vmatprep.subr.mxu0 0.0
  %1881 = vmatpush1.msra.mxu0 %v1386
  %1882 = vmatprep.subr.mxu0 0.0
  %1883 = vmatpush1.msra.mxu0 %v1387
  %1884 = vmatprep.subr.mxu0 0.0
  %1885 = vmatpush1.msra.mxu0 %v1388
  %1886 = vmatprep.subr.mxu0 0.0
  %1887 = vmatpush1.msra.mxu0 %v1389
  %1888 = vmatprep.subr.mxu0 0.0
  %1889 = vmatpush1.msra.mxu0 %v1390
  %1890 = vmatprep.subr.mxu0 0.0
  %1891 = vmatpush1.msra.mxu0 %v1391
  %1892 = vmatprep.subr.mxu0 0.0
  %1893 = vmatpush1.msra.mxu0 %v1392
  %1894 = vmatprep.subr.mxu0 0.0
  %1895 = vmatpush1.msra.mxu0 %v1393
  %1896 = vmatprep.subr.mxu0 0.0
  %1897 = vmatpush1.msra.mxu0 %v1394
  %1898 = vmatprep.subr.mxu0 0.0
  %1899 = vmatpush1.msra.mxu0 %v1395
  %1900 = vmatprep.subr.mxu0 0.0
  %1901 = vmatpush1.msra.mxu0 %v1396
  %1902 = vmatprep.subr.mxu0 0.0
  %1903 = vmatpush1.msra.mxu0 %v1397
  %1904 = vmatprep.subr.mxu0 0.0
  %1905 = vmatpush1.msra.mxu0 %v1398
  %1906 = vmatprep.subr.mxu0 0.0
  %1907 = vmatpush1.msra.mxu0 %v1399
  %1908 = vmatprep.subr.mxu0 0.0
  %1909 = vmatpush1.msra.mxu0 %v1400
  %1910 = vmatprep.subr.mxu0 0.0
  %1911 = vmatpush1.msra.mxu0 %v1401
  %1912 = vmatprep.subr.mxu0 0.0
  %1913 = vmatpush1.msra.mxu0 %v1402
  %1914 = vmatprep.subr.mxu0 0.0
  %1915 = vmatpush1.msra.mxu0 %v1403
  %1916 = vmatprep.subr.mxu0 0.0
  %1917 = vmatpush1.msra.mxu0 %v1404
  %1918 = vmatprep.subr.mxu0 0.0
  %1919 = vmatpush1.msra.mxu0 %v1405
  %1920 = vmatprep.subr.mxu0 0.0
  %1921 = vmatpush1.msra.mxu0 %v1406
  %1922 = vmatprep.subr.mxu0 0.0
  %1923 = vmatpush1.msra.mxu0 %v1407
  %1924 = vmatprep.subr.mxu0 0.0
  %1925 = vmatpush1.msra.mxu0 %v1408
  %1926 = vmatprep.subr.mxu0 0.0
  %1927 = vmatpush1.msra.mxu0 %v1409
  %1928 = vmatprep.subr.mxu0 0.0
  %1929 = vmatpush1.msra.mxu0 %v1410
  %1930 = vmatprep.subr.mxu0 0.0
  %1931 = vmatpush1.msra.mxu0 %v1411
  %1932 = vmatprep.subr.mxu0 0.0
  %1933 = vmatpush1.msra.mxu0 %v1412
  %1934 = vmatprep.mubr.f32.mxu0 %v1186
  %1935 = vmatmul.mubr.f32.gmra.mrb[0].mxu0 %v1185
  %v1936 = vpop.f32.mrb[0].mxu0
  %v1937 = vadd.f32 %v1867, %v1936
  %v1938 = vpop.f32.mrb[0].mxu0
  %1939 = vdwg.mxu0
  %1940 = vmatprep.subr.mxu0 0.0
  %1941 = vmatpush1.msra.mxu0 %v1413
  %1942 = vmatprep.subr.mxu0 0.0
  %1943 = vmatpush1.msra.mxu0 %v1414
  %1944 = vmatprep.subr.mxu0 0.0
  %1945 = vmatpush1.msra.mxu0 %v1415
  %1946 = vmatprep.subr.mxu0 0.0
  %1947 = vmatpush1.msra.mxu0 %v1416
  %1948 = vmatprep.subr.mxu0 0.0
  %1949 = vmatpush1.msra.mxu0 %v1417
  %1950 = vmatprep.subr.mxu0 0.0
  %1951 = vmatpush1.msra.mxu0 %v1418
  %1952 = vmatprep.subr.mxu0 0.0
  %1953 = vmatpush1.msra.mxu0 %v1419
  %1954 = vmatprep.subr.mxu0 0.0
  %1955 = vmatpush1.msra.mxu0 %v1420
  %1956 = vmatprep.subr.mxu0 0.0
  %1957 = vmatpush1.msra.mxu0 %v1421
  %1958 = vmatprep.subr.mxu0 0.0
  %1959 = vmatpush1.msra.mxu0 %v1422
  %1960 = vmatprep.subr.mxu0 0.0
  %1961 = vmatpush1.msra.mxu0 %v1423
  %1962 = vmatprep.subr.mxu0 0.0
  %1963 = vmatpush1.msra.mxu0 %v1424
  %1964 = vmatprep.subr.mxu0 0.0
  %1965 = vmatpush1.msra.mxu0 %v1425
  %1966 = vmatprep.subr.mxu0 0.0
  %1967 = vmatpush1.msra.mxu0 %v1426
  %1968 = vmatprep.subr.mxu0 0.0
  %1969 = vmatpush1.msra.mxu0 %v1427
  %1970 = vmatprep.subr.mxu0 0.0
  %1971 = vmatpush1.msra.mxu0 %v1428
  %1972 = vmatprep.subr.mxu0 0.0
  %1973 = vmatpush1.msra.mxu0 %v1429
  %1974 = vmatprep.subr.mxu0 0.0
  %1975 = vmatpush1.msra.mxu0 %v1430
  %1976 = vmatprep.subr.mxu0 0.0
  %1977 = vmatpush1.msra.mxu0 %v1431
  %1978 = vmatprep.subr.mxu0 0.0
  %1979 = vmatpush1.msra.mxu0 %v1432
  %1980 = vmatprep.subr.mxu0 0.0
  %1981 = vmatpush1.msra.mxu0 %v1433
  %1982 = vmatprep.subr.mxu0 0.0
  %1983 = vmatpush1.msra.mxu0 %v1434
  %1984 = vmatprep.subr.mxu0 0.0
  %1985 = vmatpush1.msra.mxu0 %v1435
  %1986 = vmatprep.subr.mxu0 0.0
  %1987 = vmatpush1.msra.mxu0 %v1436
  %1988 = vmatprep.subr.mxu0 0.0
  %1989 = vmatpush1.msra.mxu0 %v1437
  %1990 = vmatprep.subr.mxu0 0.0
  %1991 = vmatpush1.msra.mxu0 %v1438
  %1992 = vmatprep.subr.mxu0 0.0
  %1993 = vmatpush1.msra.mxu0 %v1439
  %1994 = vmatprep.subr.mxu0 0.0
  %1995 = vmatpush1.msra.mxu0 %v1440
  %1996 = vmatprep.subr.mxu0 0.0
  %1997 = vmatpush1.msra.mxu0 %v1441
  %1998 = vmatprep.subr.mxu0 0.0
  %1999 = vmatpush1.msra.mxu0 %v1442
  %2000 = vmatprep.subr.mxu0 0.0
  %2001 = vmatpush1.msra.mxu0 %v1443
  %2002 = vmatprep.subr.mxu0 0.0
  %2003 = vmatpush1.msra.mxu0 %v1444
  %2004 = vmatprep.mubr.f32.mxu0 %v1188
  %2005 = vmatmul.mubr.f32.gmra.mrb[0].mxu0 %v1187
  %v2006 = vpop.f32.mrb[0].mxu0
  %v2007 = vadd.f32 %v1937, %v2006
  %v2008 = vpop.f32.mrb[0].mxu0
  %2009 = vdwg.mxu0
  %v2018 = vcombine.high %v837, %v837
  %v2020 = vunpack.c.l.s4 1983009808
  %v2021 = vunpack.c.0.s8 %v2020
  %v2022 = vlaneseq
  %v2023 = vshrl.u32 %v2022, 7
  %v2024 = vsub.s32 %v2021, %v2023
  %v2025 = vrot.slane %v837, %v2024
  %v2027 = vunpack.c.l.s4 1983009808
  %v2028 = vunpack.c.0.s8 %v2027
  %v2029 = vlaneseq
  %v2030 = vshrl.u32 %v2029, 7
  %v2031 = vsub.s32 %v2028, %v2030
  %v2032 = vrot.slane %v2018, %v2031
  %v2033 = vcombine.high %v2025, %v2025
  %v2034 = vcombine.high %v2032, %v2032
  %v2035 = vcombine.high %v838, %v838
  %v2037 = vunpack.c.l.s4 1983009808
  %v2038 = vunpack.c.0.s8 %v2037
  %v2039 = vlaneseq
  %v2040 = vshrl.u32 %v2039, 7
  %v2041 = vsub.s32 %v2038, %v2040
  %v2042 = vrot.slane %v838, %v2041
  %v2044 = vunpack.c.l.s4 1983009808
  %v2045 = vunpack.c.0.s8 %v2044
  %v2046 = vlaneseq
  %v2047 = vshrl.u32 %v2046, 7
  %v2048 = vsub.s32 %v2045, %v2047
  %v2049 = vrot.slane %v2035, %v2048
  %v2050 = vcombine.high %v2042, %v2042
  %v2051 = vcombine.high %v2049, %v2049
  %v2052 = vcombine.high %v839, %v839
  %v2054 = vunpack.c.l.s4 1983009808
  %v2055 = vunpack.c.0.s8 %v2054
  %v2056 = vlaneseq
  %v2057 = vshrl.u32 %v2056, 7
  %v2058 = vsub.s32 %v2055, %v2057
  %v2059 = vrot.slane %v839, %v2058
  %v2061 = vunpack.c.l.s4 1983009808
  %v2062 = vunpack.c.0.s8 %v2061
  %v2063 = vlaneseq
  %v2064 = vshrl.u32 %v2063, 7
  %v2065 = vsub.s32 %v2062, %v2064
  %v2066 = vrot.slane %v2052, %v2065
  %v2067 = vcombine.high %v2059, %v2059
  %v2068 = vcombine.high %v2066, %v2066
  %v2069 = vcombine.high %v840, %v840
  %v2071 = vunpack.c.l.s4 1983009808
  %v2072 = vunpack.c.0.s8 %v2071
  %v2073 = vlaneseq
  %v2074 = vshrl.u32 %v2073, 7
  %v2075 = vsub.s32 %v2072, %v2074
  %v2076 = vrot.slane %v840, %v2075
  %v2078 = vunpack.c.l.s4 1983009808
  %v2079 = vunpack.c.0.s8 %v2078
  %v2080 = vlaneseq
  %v2081 = vshrl.u32 %v2080, 7
  %v2082 = vsub.s32 %v2079, %v2081
  %v2083 = vrot.slane %v2069, %v2082
  %v2084 = vcombine.high %v2076, %v2076
  %v2085 = vcombine.high %v2083, %v2083
  %v2086 = vcombine.high %v841, %v841
  %v2088 = vunpack.c.l.s4 1983009808
  %v2089 = vunpack.c.0.s8 %v2088
  %v2090 = vlaneseq
  %v2091 = vshrl.u32 %v2090, 7
  %v2092 = vsub.s32 %v2089, %v2091
  %v2093 = vrot.slane %v841, %v2092
  %v2095 = vunpack.c.l.s4 1983009808
  %v2096 = vunpack.c.0.s8 %v2095
  %v2097 = vlaneseq
  %v2098 = vshrl.u32 %v2097, 7
  %v2099 = vsub.s32 %v2096, %v2098
  %v2100 = vrot.slane %v2086, %v2099
  %v2101 = vcombine.high %v2093, %v2093
  %v2102 = vcombine.high %v2100, %v2100
  %v2103 = vcombine.high %v842, %v842
  %v2105 = vunpack.c.l.s4 1983009808
  %v2106 = vunpack.c.0.s8 %v2105
  %v2107 = vlaneseq
  %v2108 = vshrl.u32 %v2107, 7
  %v2109 = vsub.s32 %v2106, %v2108
  %v2110 = vrot.slane %v842, %v2109
  %v2112 = vunpack.c.l.s4 1983009808
  %v2113 = vunpack.c.0.s8 %v2112
  %v2114 = vlaneseq
  %v2115 = vshrl.u32 %v2114, 7
  %v2116 = vsub.s32 %v2113, %v2115
  %v2117 = vrot.slane %v2103, %v2116
  %v2118 = vcombine.high %v2110, %v2110
  %v2119 = vcombine.high %v2117, %v2117
  %v2120 = vcombine.high %v843, %v843
  %v2122 = vunpack.c.l.s4 1983009808
  %v2123 = vunpack.c.0.s8 %v2122
  %v2124 = vlaneseq
  %v2125 = vshrl.u32 %v2124, 7
  %v2126 = vsub.s32 %v2123, %v2125
  %v2127 = vrot.slane %v843, %v2126
  %v2129 = vunpack.c.l.s4 1983009808
  %v2130 = vunpack.c.0.s8 %v2129
  %v2131 = vlaneseq
  %v2132 = vshrl.u32 %v2131, 7
  %v2133 = vsub.s32 %v2130, %v2132
  %v2134 = vrot.slane %v2120, %v2133
  %v2135 = vcombine.high %v2127, %v2127
  %v2136 = vcombine.high %v2134, %v2134
  %v2137 = vcombine.high %v844, %v844
  %v2139 = vunpack.c.l.s4 1983009808
  %v2140 = vunpack.c.0.s8 %v2139
  %v2141 = vlaneseq
  %v2142 = vshrl.u32 %v2141, 7
  %v2143 = vsub.s32 %v2140, %v2142
  %v2144 = vrot.slane %v844, %v2143
  %v2146 = vunpack.c.l.s4 1983009808
  %v2147 = vunpack.c.0.s8 %v2146
  %v2148 = vlaneseq
  %v2149 = vshrl.u32 %v2148, 7
  %v2150 = vsub.s32 %v2147, %v2149
  %v2151 = vrot.slane %v2137, %v2150
  %v2152 = vcombine.high %v2144, %v2144
  %v2153 = vcombine.high %v2151, %v2151
  %v2186 = vrot.slane %v2025, 7
  %v2187 = vrot.slane %v2186, 2
  %v2188 = vrot.slane %v2033, 7
  %v2189 = vrot.slane %v2188, 2
  %v2190 = vrot.slane %v2032, 7
  %v2191 = vrot.slane %v2190, 2
  %v2192 = vrot.slane %v2034, 7
  %v2193 = vrot.slane %v2192, 2
  %v2194 = vrot.slane %v2042, 7
  %v2195 = vrot.slane %v2194, 2
  %v2196 = vrot.slane %v2050, 7
  %v2197 = vrot.slane %v2196, 2
  %v2198 = vrot.slane %v2049, 7
  %v2199 = vrot.slane %v2198, 2
  %v2200 = vrot.slane %v2051, 7
  %v2201 = vrot.slane %v2200, 2
  %v2202 = vrot.slane %v2059, 7
  %v2203 = vrot.slane %v2202, 2
  %v2204 = vrot.slane %v2067, 7
  %v2205 = vrot.slane %v2204, 2
  %v2206 = vrot.slane %v2066, 7
  %v2207 = vrot.slane %v2206, 2
  %v2208 = vrot.slane %v2068, 7
  %v2209 = vrot.slane %v2208, 2
  %v2210 = vrot.slane %v2076, 7
  %v2211 = vrot.slane %v2210, 2
  %v2212 = vrot.slane %v2084, 7
  %v2213 = vrot.slane %v2212, 2
  %v2214 = vrot.slane %v2083, 7
  %v2215 = vrot.slane %v2214, 2
  %v2216 = vrot.slane %v2085, 7
  %v2217 = vrot.slane %v2216, 2
  %v2218 = vrot.slane %v2093, 7
  %v2219 = vrot.slane %v2218, 2
  %v2220 = vrot.slane %v2101, 7
  %v2221 = vrot.slane %v2220, 2
  %v2222 = vrot.slane %v2100, 7
  %v2223 = vrot.slane %v2222, 2
  %v2224 = vrot.slane %v2102, 7
  %v2225 = vrot.slane %v2224, 2
  %v2226 = vrot.slane %v2110, 7
  %v2227 = vrot.slane %v2226, 2
  %v2228 = vrot.slane %v2118, 7
  %v2229 = vrot.slane %v2228, 2
  %v2230 = vrot.slane %v2117, 7
  %v2231 = vrot.slane %v2230, 2
  %v2232 = vrot.slane %v2119, 7
  %v2233 = vrot.slane %v2232, 2
  %v2234 = vrot.slane %v2127, 7
  %v2235 = vrot.slane %v2234, 2
  %v2236 = vrot.slane %v2135, 7
  %v2237 = vrot.slane %v2236, 2
  %v2238 = vrot.slane %v2134, 7
  %v2239 = vrot.slane %v2238, 2
  %v2240 = vrot.slane %v2136, 7
  %v2241 = vrot.slane %v2240, 2
  %v2242 = vrot.slane %v2144, 7
  %v2243 = vrot.slane %v2242, 2
  %v2244 = vrot.slane %v2152, 7
  %v2245 = vrot.slane %v2244, 2
  %v2246 = vrot.slane %v2151, 7
  %v2247 = vrot.slane %v2246, 2
  %v2248 = vrot.slane %v2153, 7
  %v2249 = vrot.slane %v2248, 2
  %v2282 = vmax.f32 %v2025, %v2187
  %v2283 = vmax.f32 %v2033, %v2189
  %v2284 = vmax.f32 %v2032, %v2191
  %v2285 = vmax.f32 %v2034, %v2193
  %v2286 = vmax.f32 %v2042, %v2195
  %v2287 = vmax.f32 %v2050, %v2197
  %v2288 = vmax.f32 %v2049, %v2199
  %v2289 = vmax.f32 %v2051, %v2201
  %v2290 = vmax.f32 %v2059, %v2203
  %v2291 = vmax.f32 %v2067, %v2205
  %v2292 = vmax.f32 %v2066, %v2207
  %v2293 = vmax.f32 %v2068, %v2209
  %v2294 = vmax.f32 %v2076, %v2211
  %v2295 = vmax.f32 %v2084, %v2213
  %v2296 = vmax.f32 %v2083, %v2215
  %v2297 = vmax.f32 %v2085, %v2217
  %v2298 = vmax.f32 %v2093, %v2219
  %v2299 = vmax.f32 %v2101, %v2221
  %v2300 = vmax.f32 %v2100, %v2223
  %v2301 = vmax.f32 %v2102, %v2225
  %v2302 = vmax.f32 %v2110, %v2227
  %v2303 = vmax.f32 %v2118, %v2229
  %v2304 = vmax.f32 %v2117, %v2231
  %v2305 = vmax.f32 %v2119, %v2233
  %v2306 = vmax.f32 %v2127, %v2235
  %v2307 = vmax.f32 %v2135, %v2237
  %v2308 = vmax.f32 %v2134, %v2239
  %v2309 = vmax.f32 %v2136, %v2241
  %v2310 = vmax.f32 %v2144, %v2243
  %v2311 = vmax.f32 %v2152, %v2245
  %v2312 = vmax.f32 %v2151, %v2247
  %v2313 = vmax.f32 %v2153, %v2249
  %v2346 = vlaneseq
  %v2347 = vshrl.u32 %v2346, 7
  %v2348 = vsub.s32 0, %v2347
  %v2349 = vrot.slane %v2282, %v2348
  %v2350 = vlaneseq
  %v2351 = vshrl.u32 %v2350, 7
  %v2352 = vsub.s32 0, %v2351
  %v2353 = vrot.slane %v2283, %v2352
  %v2354 = vlaneseq
  %v2355 = vshrl.u32 %v2354, 7
  %v2356 = vsub.s32 0, %v2355
  %v2357 = vrot.slane %v2284, %v2356
  %v2358 = vlaneseq
  %v2359 = vshrl.u32 %v2358, 7
  %v2360 = vsub.s32 0, %v2359
  %v2361 = vrot.slane %v2285, %v2360
  %v2362 = vlaneseq
  %v2363 = vshrl.u32 %v2362, 7
  %v2364 = vsub.s32 0, %v2363
  %v2365 = vrot.slane %v2286, %v2364
  %v2366 = vlaneseq
  %v2367 = vshrl.u32 %v2366, 7
  %v2368 = vsub.s32 0, %v2367
  %v2369 = vrot.slane %v2287, %v2368
  %v2370 = vlaneseq
  %v2371 = vshrl.u32 %v2370, 7
  %v2372 = vsub.s32 0, %v2371
  %v2373 = vrot.slane %v2288, %v2372
  %v2374 = vlaneseq
  %v2375 = vshrl.u32 %v2374, 7
  %v2376 = vsub.s32 0, %v2375
  %v2377 = vrot.slane %v2289, %v2376
  %v2378 = vlaneseq
  %v2379 = vshrl.u32 %v2378, 7
  %v2380 = vsub.s32 0, %v2379
  %v2381 = vrot.slane %v2290, %v2380
  %v2382 = vlaneseq
  %v2383 = vshrl.u32 %v2382, 7
  %v2384 = vsub.s32 0, %v2383
  %v2385 = vrot.slane %v2291, %v2384
  %v2386 = vlaneseq
  %v2387 = vshrl.u32 %v2386, 7
  %v2388 = vsub.s32 0, %v2387
  %v2389 = vrot.slane %v2292, %v2388
  %v2390 = vlaneseq
  %v2391 = vshrl.u32 %v2390, 7
  %v2392 = vsub.s32 0, %v2391
  %v2393 = vrot.slane %v2293, %v2392
  %v2394 = vlaneseq
  %v2395 = vshrl.u32 %v2394, 7
  %v2396 = vsub.s32 0, %v2395
  %v2397 = vrot.slane %v2294, %v2396
  %v2398 = vlaneseq
  %v2399 = vshrl.u32 %v2398, 7
  %v2400 = vsub.s32 0, %v2399
  %v2401 = vrot.slane %v2295, %v2400
  %v2402 = vlaneseq
  %v2403 = vshrl.u32 %v2402, 7
  %v2404 = vsub.s32 0, %v2403
  %v2405 = vrot.slane %v2296, %v2404
  %v2406 = vlaneseq
  %v2407 = vshrl.u32 %v2406, 7
  %v2408 = vsub.s32 0, %v2407
  %v2409 = vrot.slane %v2297, %v2408
  %v2410 = vlaneseq
  %v2411 = vshrl.u32 %v2410, 7
  %v2412 = vsub.s32 0, %v2411
  %v2413 = vrot.slane %v2298, %v2412
  %v2414 = vlaneseq
  %v2415 = vshrl.u32 %v2414, 7
  %v2416 = vsub.s32 0, %v2415
  %v2417 = vrot.slane %v2299, %v2416
  %v2418 = vlaneseq
  %v2419 = vshrl.u32 %v2418, 7
  %v2420 = vsub.s32 0, %v2419
  %v2421 = vrot.slane %v2300, %v2420
  %v2422 = vlaneseq
  %v2423 = vshrl.u32 %v2422, 7
  %v2424 = vsub.s32 0, %v2423
  %v2425 = vrot.slane %v2301, %v2424
  %v2426 = vlaneseq
  %v2427 = vshrl.u32 %v2426, 7
  %v2428 = vsub.s32 0, %v2427
  %v2429 = vrot.slane %v2302, %v2428
  %v2430 = vlaneseq
  %v2431 = vshrl.u32 %v2430, 7
  %v2432 = vsub.s32 0, %v2431
  %v2433 = vrot.slane %v2303, %v2432
  %v2434 = vlaneseq
  %v2435 = vshrl.u32 %v2434, 7
  %v2436 = vsub.s32 0, %v2435
  %v2437 = vrot.slane %v2304, %v2436
  %v2438 = vlaneseq
  %v2439 = vshrl.u32 %v2438, 7
  %v2440 = vsub.s32 0, %v2439
  %v2441 = vrot.slane %v2305, %v2440
  %v2442 = vlaneseq
  %v2443 = vshrl.u32 %v2442, 7
  %v2444 = vsub.s32 0, %v2443
  %v2445 = vrot.slane %v2306, %v2444
  %v2446 = vlaneseq
  %v2447 = vshrl.u32 %v2446, 7
  %v2448 = vsub.s32 0, %v2447
  %v2449 = vrot.slane %v2307, %v2448
  %v2450 = vlaneseq
  %v2451 = vshrl.u32 %v2450, 7
  %v2452 = vsub.s32 0, %v2451
  %v2453 = vrot.slane %v2308, %v2452
  %v2454 = vlaneseq
  %v2455 = vshrl.u32 %v2454, 7
  %v2456 = vsub.s32 0, %v2455
  %v2457 = vrot.slane %v2309, %v2456
  %v2458 = vlaneseq
  %v2459 = vshrl.u32 %v2458, 7
  %v2460 = vsub.s32 0, %v2459
  %v2461 = vrot.slane %v2310, %v2460
  %v2462 = vlaneseq
  %v2463 = vshrl.u32 %v2462, 7
  %v2464 = vsub.s32 0, %v2463
  %v2465 = vrot.slane %v2311, %v2464
  %v2466 = vlaneseq
  %v2467 = vshrl.u32 %v2466, 7
  %v2468 = vsub.s32 0, %v2467
  %v2469 = vrot.slane %v2312, %v2468
  %v2470 = vlaneseq
  %v2471 = vshrl.u32 %v2470, 7
  %v2472 = vsub.s32 0, %v2471
  %v2473 = vrot.slane %v2313, %v2472
  %vm2474 = vcmask 1041409
  %v2475 = vsel %vm2474, %v2353, %v2349
  %vm2476 = vcmask 1042434
  %v2477 = vsel %vm2476, %v2357, %v2475
  %vm2478 = vcmask 1043459
  %v2479 = vsel %vm2478, %v2361, %v2477
  %vm2480 = vcmask 1044484
  %v2481 = vsel %vm2480, %v2365, %v2479
  %vm2482 = vcmask 1045509
  %v2483 = vsel %vm2482, %v2369, %v2481
  %vm2484 = vcmask 1046534
  %v2485 = vsel %vm2484, %v2373, %v2483
  %vm2486 = vcmask 1047559
  %v2487 = vsel %vm2486, %v2377, %v2485
  %v2488 = vsel %vm2474, %v2385, %v2381
  %v2489 = vsel %vm2476, %v2389, %v2488
  %v2490 = vsel %vm2478, %v2393, %v2489
  %v2491 = vsel %vm2480, %v2397, %v2490
  %v2492 = vsel %vm2482, %v2401, %v2491
  %v2493 = vsel %vm2484, %v2405, %v2492
  %v2494 = vsel %vm2486, %v2409, %v2493
  %v2495 = vsel %vm2474, %v2417, %v2413
  %v2496 = vsel %vm2476, %v2421, %v2495
  %v2497 = vsel %vm2478, %v2425, %v2496
  %v2498 = vsel %vm2480, %v2429, %v2497
  %v2499 = vsel %vm2482, %v2433, %v2498
  %v2500 = vsel %vm2484, %v2437, %v2499
  %v2501 = vsel %vm2486, %v2441, %v2500
  %v2502 = vsel %vm2474, %v2449, %v2445
  %v2503 = vsel %vm2476, %v2453, %v2502
  %v2504 = vsel %vm2478, %v2457, %v2503
  %v2505 = vsel %vm2480, %v2461, %v2504
  %v2506 = vsel %vm2482, %v2465, %v2505
  %v2507 = vsel %vm2484, %v2469, %v2506
  %v2508 = vsel %vm2486, %v2473, %v2507
  %v2513 = vrot.slane %v2487, 7
  %v2514 = vrot.slane %v2501, 7
  %v2515 = vrot.slane %v2494, 7
  %v2516 = vrot.slane %v2508, 7
  %v2517 = vsel %vm63, %v2513, %v2515
  %v2518 = vsel %vm63, %v2514, %v2516
  %v2519 = vsel %vm63, %v2515, %v2513
  %v2520 = vsel %vm63, %v2516, %v2514
  %v2521 = vsel %vm51, 0.0, %v2519
  %v2522 = vsel %vm52, 0.0, %v2517
  %v2523 = vsel %vm51, 0.0, %v2520
  %v2524 = vsel %vm52, 0.0, %v2518
  %vm2525 = vcmp.eq.s32.totalorder %v47, 15
  %vm2526 = vcmp.eq.s32.totalorder %v48, 15
  %v2527 = vrot.slane %v2487, 1
  %v2528 = vrot.slane %v2501, 1
  %v2529 = vrot.slane %v2494, 1
  %v2530 = vrot.slane %v2508, 1
  %v2531 = vsel %vm92, %v2527, %v2529
  %v2532 = vsel %vm92, %v2528, %v2530
  %v2533 = vsel %vm92, %v2529, %v2527
  %v2534 = vsel %vm92, %v2530, %v2528
  %v2535 = vsel %vm2525, 0.0, %v2531
  %v2536 = vsel %vm2526, 0.0, %v2533
  %v2537 = vsel %vm2525, 0.0, %v2532
  %v2538 = vsel %vm2526, 0.0, %v2534
  %2539 = vrot.lane.b32.xlu0 %v2487, 64
  %v2540 = vpop.permute.xlu0 %2539
  %2541 = vrot.lane.b32.xlu0 %v2494, 64
  %v2542 = vpop.permute.xlu0 %2541
  %2543 = vrot.lane.b32.xlu0 %v2501, 64
  %v2544 = vpop.permute.xlu0 %2543
  %2545 = vrot.lane.b32.xlu0 %v2508, 64
  %v2546 = vpop.permute.xlu0 %2545
  %v2551 = vsel %vm550, %v2521, %v2540
  %v2552 = vsel %vm550, %v2522, %v2542
  %v2553 = vsel %vm550, %v2523, %v2544
  %v2554 = vsel %vm550, %v2524, %v2546
  %v2555 = vld [vmem:[%s3 + $0x70] sm:$0xff]
  %v2556 = vld [vmem:[%s3 + $0x78] sm:$0xff]
  %v2557 = vld [vmem:[%s3 + $0x80] sm:$0xff]
  %v2558 = vld [vmem:[%s3 + $0x88] sm:$0xff]
  %v2559 = vld [vmem:[%s3 + $0x90] sm:$0xff]
  %v2560 = vld [vmem:[%s3 + $0x98] sm:$0xff]
  %v2561 = vld [vmem:[%s3 + $0xa0] sm:$0xff]
  %v2562 = vld [vmem:[%s3 + $0xa8] sm:$0xff]
  %v2563 = vld [vmem:[%s3 + $0xb0] sm:$0xff]
  %v2564 = vld [vmem:[%s3 + $0xb8] sm:$0xff]
  %v2565 = vld [vmem:[%s3 + $0xc0] sm:$0xff]
  %v2566 = vld [vmem:[%s3 + $0xc8] sm:$0xff]
  %v2567 = vld [vmem:[%s3 + $0xd0] sm:$0xff]
  %v2568 = vld [vmem:[%s3 + $0xd8] sm:$0xff]
  %v2569 = vld [vmem:[%s3 + $0xe0] sm:$0xff]
  %v2570 = vld [vmem:[%s3 + $0xe8] sm:$0xff]
  %v2571 = vld [vmem:[%s3 + $0xf0] sm:$0xff]
  %v2572 = vld [vmem:[%s3 + $0xf8] sm:$0xff]
  %v2573 = vld [vmem:[%s3 + $0x100] sm:$0xff]
  %v2574 = vld [vmem:[%s3 + $0x108] sm:$0xff]
  %v2575 = vld [vmem:[%s3 + $0x110] sm:$0xff]
  %v2576 = vld [vmem:[%s3 + $0x118] sm:$0xff]
  %v2577 = vld [vmem:[%s3 + $0x120] sm:$0xff]
  %v2578 = vld [vmem:[%s3 + $0x128] sm:$0xff]
  %v2579 = vld [vmem:[%s2 + $0x5] sm:$0x1]
  %v2580 = vlaneseq
  %v2581 = vshrl.u32 %v2580, 7
  %v2582 = vsub.s32 0, %v2581
  %v2583 = vrot.slane %v2579, %v2582
  %v2585 = vsel %vm550, %v2535, 0
  %v2588 = vsel %vm550, %v2536, 0
  %v2591 = vsel %vm550, %v2537, 0
  %v2594 = vsel %vm550, %v2538, 0
  %2596 = vmatprep.subr.mxu0 0.0
  %2597 = vmatpush1.msra.mxu0 %v2555
  %2598 = vmatprep.subr.mxu0 0.0
  %2599 = vmatpush1.msra.mxu0 %v2556
  %2600 = vmatprep.subr.mxu0 0.0
  %2601 = vmatpush1.msra.mxu0 %v2557
  %2602 = vmatprep.subr.mxu0 0.0
  %2603 = vmatpush1.msra.mxu0 %v2558
  %2604 = vmatprep.subr.mxu0 0.0
  %2605 = vmatpush1.msra.mxu0 %v2559
  %2606 = vmatprep.subr.mxu0 0.0
  %2607 = vmatpush1.msra.mxu0 %v2560
  %2608 = vmatprep.subr.mxu0 0.0
  %2609 = vmatpush1.msra.mxu0 %v2561
  %2610 = vmatprep.subr.mxu0 0.0
  %2611 = vmatpush1.msra.mxu0 %v2562
  %2612 = vmatprep.subr.mxu0 0.0
  %2613 = vmatpush1.msra.mxu0 %v2563
  %2614 = vmatprep.subr.mxu0 0.0
  %2615 = vmatpush1.msra.mxu0 %v2564
  %2616 = vmatprep.subr.mxu0 0.0
  %2617 = vmatpush1.msra.mxu0 %v2565
  %2618 = vmatprep.subr.mxu0 0.0
  %2619 = vmatpush1.msra.mxu0 %v2566
  %2620 = vmatprep.subr.mxu0 0.0
  %2621 = vmatpush1.msra.mxu0 %v2567
  %2622 = vmatprep.subr.mxu0 0.0
  %2623 = vmatpush1.msra.mxu0 %v2568
  %2624 = vmatprep.subr.mxu0 0.0
  %2625 = vmatpush1.msra.mxu0 %v2569
  %2626 = vmatprep.subr.mxu0 0.0
  %2627 = vmatpush1.msra.mxu0 %v2570
  %2628 = vmatprep.subr.mxu0 0.0
  %2629 = vmatpush1.msra.mxu0 %v2571
  %2630 = vmatprep.subr.mxu0 0.0
  %2631 = vmatpush1.msra.mxu0 %v2572
  %2632 = vmatprep.subr.mxu0 0.0
  %2633 = vmatpush1.msra.mxu0 %v2573
  %2634 = vmatprep.subr.mxu0 0.0
  %2635 = vmatpush1.msra.mxu0 %v2574
  %2636 = vmatprep.subr.mxu0 0.0
  %2637 = vmatpush1.msra.mxu0 %v2575
  %2638 = vmatprep.subr.mxu0 0.0
  %2639 = vmatpush1.msra.mxu0 %v2576
  %2640 = vmatprep.subr.mxu0 0.0
  %2641 = vmatpush1.msra.mxu0 %v2577
  %2642 = vmatprep.subr.mxu0 0.0
  %2643 = vmatpush1.msra.mxu0 %v2578
  %2644 = vmatprep.subr.mxu0 0.0
  %2645 = vmatpush1.msra.mxu0 0.0
  %2646 = vmatprep.subr.mxu0 0.0
  %2647 = vmatpush1.msra.mxu0 0.0
  %2648 = vmatprep.subr.mxu0 0.0
  %2649 = vmatpush1.msra.mxu0 0.0
  %2650 = vmatprep.subr.mxu0 0.0
  %2651 = vmatpush1.msra.mxu0 0.0
  %2652 = vmatprep.subr.mxu0 0.0
  %2653 = vmatpush1.msra.mxu0 0.0
  %2654 = vmatprep.subr.mxu0 0.0
  %2655 = vmatpush1.msra.mxu0 0.0
  %2656 = vmatprep.subr.mxu0 0.0
  %2657 = vmatpush1.msra.mxu0 0.0
  %2658 = vmatprep.subr.mxu0 0.0
  %2659 = vmatpush1.msra.mxu0 0.0
  %2660 = vmatprep.mubr.f32.mxu0 %v2585
  %2661 = vmatmul.mubr.f32.gmra.mrb[0].mxu0 %v2551
  %v2662 = vpop.f32.mrb[0].mxu0
  %v2663 = vadd.f32 %v2583, %v2662
  %v2664 = vpop.f32.mrb[0].mxu0
  %2665 = vmatprep.mubr.f32.mxu0 %v2588
  %2666 = vmatmul.mubr.f32.gmra.mrb[0].mxu0 %v2552
  %v2667 = vpop.f32.mrb[0].mxu0
  %v2668 = vadd.f32 %v2583, %v2667
  %v2669 = vpop.f32.mrb[0].mxu0
  %2670 = vmatprep.mubr.f32.mxu0 %v2591
  %2671 = vmatmul.mubr.f32.gmra.mrb[0].mxu0 %v2553
  %v2672 = vpop.f32.mrb[0].mxu0
  %v2673 = vadd.f32 %v2583, %v2672
  %v2674 = vpop.f32.mrb[0].mxu0
  %2675 = vmatprep.mubr.f32.mxu0 %v2594
  %2676 = vmatmul.mubr.f32.gmra.mrb[0].mxu0 %v2554
  %v2677 = vpop.f32.mrb[0].mxu0
  %v2678 = vadd.f32 %v2583, %v2677
  %v2679 = vpop.f32.mrb[0].mxu0
  %2680 = vdwg.mxu0
  %v2681 = vld [vmem:[%s2 + $0x6] sm:$0x1]
  %v2682 = vld [vmem:[%s2 + $0x7] sm:$0x1]
  %vm2683 = vcmask 130048
  %v2684 = vsel %vm2683, %v2663, 0.0
  %v2685 = vsel %vm2683, %v2668, 0.0
  %v2686 = vadd.f32 %v2684, %v2685
  %v2687 = vsel %vm2683, %v2673, 0.0
  %v2688 = vadd.f32 %v2686, %v2687
  %v2689 = vsel %vm2683, %v2678, 0.0
  %v2690 = vadd.f32 %v2688, %v2689
  %v2691 = vrot.slane %v2690, 4
  %v2692 = vadd.f32 %v2690, %v2691
  %v2693 = vrot.slane %v2692, 2
  %v2694 = vadd.f32 %v2692, %v2693
  %v2695 = vrot.slane %v2694, 1
  %v2696 = vadd.f32 %v2694, %v2695
  %v2697 = vrcp.pop 32.0
  %v2698 = vmul.f32 %v2696, %v2697
  %v2699 = vsub.f32 %v2663, %v2698
  %v2700 = vsub.f32 %v2668, %v2698
  %v2701 = vsub.f32 %v2673, %v2698
  %v2702 = vsub.f32 %v2678, %v2698
  %v2703 = vmul.f32 %v2699, %v2699
  %v2704 = vmul.f32 %v2700, %v2700
  %v2705 = vmul.f32 %v2701, %v2701
  %v2706 = vmul.f32 %v2702, %v2702
  %v2707 = vsel %vm2683, %v2703, 0.0
  %v2708 = vsel %vm2683, %v2704, 0.0
  %v2709 = vadd.f32 %v2707, %v2708
  %v2710 = vsel %vm2683, %v2705, 0.0
  %v2711 = vadd.f32 %v2709, %v2710
  %v2712 = vsel %vm2683, %v2706, 0.0
  %v2713 = vadd.f32 %v2711, %v2712
  %v2714 = vrot.slane %v2713, 4
  %v2715 = vadd.f32 %v2713, %v2714
  %v2716 = vrot.slane %v2715, 2
  %v2717 = vadd.f32 %v2715, %v2716
  %v2718 = vrot.slane %v2717, 1
  %v2719 = vadd.f32 %v2717, %v2718
  %v2720 = vmul.f32 %v2719, %v2697
  %v2721 = vadd.f32 %v2720, 1e-05
  %v2722 = vrsqrt.pop %v2721
  %v2723 = vmul.f32 %v2722, %v2681
  %v2724 = vlaneseq
  %v2725 = vshrl.u32 %v2724, 7
  %v2726 = vsub.s32 0, %v2725
  %v2727 = vrot.slane %v2723, %v2726
  %v2728 = vmul.f32 %v2699, %v2727
  %v2729 = vmul.f32 %v2700, %v2727
  %v2730 = vmul.f32 %v2701, %v2727
  %v2731 = vmul.f32 %v2702, %v2727
  %v2732 = vlaneseq
  %v2733 = vshrl.u32 %v2732, 7
  %v2734 = vsub.s32 0, %v2733
  %v2735 = vrot.slane %v2682, %v2734
  %v2736 = vadd.f32 %v2728, %v2735
  %v2737 = vadd.f32 %v2729, %v2735
  %v2738 = vadd.f32 %v2730, %v2735
  %v2739 = vadd.f32 %v2731, %v2735
  %v2740 = vmax.f32 %v2736, 0.0
  %v2741 = vmax.f32 %v2737, 0.0
  %v2742 = vmax.f32 %v2738, 0.0
  %v2743 = vmax.f32 %v2739, 0.0
  %v2744 = vrot.slane %v2740, 7
  %v2745 = vrot.slane %v2742, 7
  %v2746 = vrot.slane %v2741, 7
  %v2747 = vrot.slane %v2743, 7
  %v2748 = vsel %vm63, %v2744, %v2746
  %v2749 = vsel %vm63, %v2745, %v2747
  %v2750 = vsel %vm63, %v2746, %v2744
  %v2751 = vsel %vm63, %v2747, %v2745
  %v2752 = vsel %vm51, 0.0, %v2750
  %v2753 = vsel %vm52, 0.0, %v2748
  %v2754 = vsel %vm51, 0.0, %v2751
  %v2755 = vsel %vm52, 0.0, %v2749
  %v2756 = vrot.slane %v2740, 1
  %v2757 = vrot.slane %v2742, 1
  %v2758 = vrot.slane %v2741, 1
  %v2759 = vrot.slane %v2743, 1
  %v2760 = vsel %vm92, %v2756, %v2758
  %v2761 = vsel %vm92, %v2757, %v2759
  %v2762 = vsel %vm92, %v2758, %v2756
  %v2763 = vsel %vm92, %v2759, %v2757
  %v2764 = vsel %vm2525, 0.0, %v2760
  %v2765 = vsel %vm2526, 0.0, %v2762
  %v2766 = vsel %vm2525, 0.0, %v2761
  %v2767 = vsel %vm2526, 0.0, %v2763
  %2772 = vrot.lane.b32.xlu0 %v2740, 16
  %v2773 = vpop.permute.xlu0 %2772
  %2774 = vrot.lane.b32.xlu0 %v2741, 16
  %v2775 = vpop.permute.xlu0 %2774
  %2776 = vrot.lane.b32.xlu0 %v2742, 16
  %v2777 = vpop.permute.xlu0 %2776
  %2778 = vrot.lane.b32.xlu0 %v2743, 16
  %v2779 = vpop.permute.xlu0 %2778
  %2788 = vrot.lane.b32.xlu0 %v2764, 32
  %v2789 = vpop.permute.xlu0 %2788
  %2790 = vrot.lane.b32.xlu0 %v2765, 32
  %v2791 = vpop.permute.xlu0 %2790
  %2792 = vrot.lane.b32.xlu0 %v2766, 32
  %v2793 = vpop.permute.xlu0 %2792
  %2794 = vrot.lane.b32.xlu0 %v2767, 32
  %v2795 = vpop.permute.xlu0 %2794
  %v2800 = vsel %vm2683, %v2752, %v2773
  %v2801 = vsel %vm2683, %v2753, %v2775
  %v2802 = vsel %vm2683, %v2754, %v2777
  %v2803 = vsel %vm2683, %v2755, %v2779
  %v2804 = vsel %vm333, %v2800, %v2789
  %v2805 = vsel %vm333, %v2801, %v2791
  %v2806 = vsel %vm333, %v2802, %v2793
  %v2807 = vsel %vm333, %v2803, %v2795
  %v2808 = vld [vmem:[%s3 + $0x130] sm:$0xff]
  %v2809 = vld [vmem:[%s3 + $0x138] sm:$0xff]
  %v2810 = vld [vmem:[%s3 + $0x140] sm:$0xff]
  %v2811 = vld [vmem:[%s3 + $0x148] sm:$0xff]
  %v2812 = vld [vmem:[%s3 + $0x150] sm:$0xff]
  %v2813 = vld [vmem:[%s3 + $0x158] sm:$0xff]
  %v2814 = vld [vmem:[%s2 + $0x8] sm:$0x1]
  %v2815 = vlaneseq
  %v2816 = vshrl.u32 %v2815, 7
  %v2817 = vsub.s32 0, %v2816
  %v2818 = vrot.slane %v2814, %v2817
  %vm2819 = vcmask 392192
  %v2821 = vsel %vm2819, %v2804, 0
  %v2824 = vsel %vm2819, %v2805, 0
  %v2827 = vsel %vm2819, %v2806, 0
  %v2830 = vsel %vm2819, %v2807, 0
  %2832 = vmatprep.subr.mxu0 0.0
  %2833 = vmatpush1.msra.mxu0 %v2808
  %2834 = vmatprep.subr.mxu0 0.0
  %2835 = vmatpush1.msra.mxu0 %v2809
  %2836 = vmatprep.subr.mxu0 0.0
  %2837 = vmatpush1.msra.mxu0 %v2810
  %2838 = vmatprep.subr.mxu0 0.0
  %2839 = vmatpush1.msra.mxu0 %v2811
  %2840 = vmatprep.subr.mxu0 0.0
  %2841 = vmatpush1.msra.mxu0 %v2812
  %2842 = vmatprep.subr.mxu0 0.0
  %2843 = vmatpush1.msra.mxu0 %v2813
  %2844 = vmatprep.subr.mxu0 0.0
  %2845 = vmatpush1.msra.mxu0 0.0
  %2846 = vmatprep.subr.mxu0 0.0
  %2847 = vmatpush1.msra.mxu0 0.0
  %2848 = vmatprep.subr.mxu0 0.0
  %2849 = vmatpush1.msra.mxu0 0.0
  %2850 = vmatprep.subr.mxu0 0.0
  %2851 = vmatpush1.msra.mxu0 0.0
  %2852 = vmatprep.subr.mxu0 0.0
  %2853 = vmatpush1.msra.mxu0 0.0
  %2854 = vmatprep.subr.mxu0 0.0
  %2855 = vmatpush1.msra.mxu0 0.0
  %2856 = vmatprep.subr.mxu0 0.0
  %2857 = vmatpush1.msra.mxu0 0.0
  %2858 = vmatprep.subr.mxu0 0.0
  %2859 = vmatpush1.msra.mxu0 0.0
  %2860 = vmatprep.subr.mxu0 0.0
  %2861 = vmatpush1.msra.mxu0 0.0
  %2862 = vmatprep.subr.mxu0 0.0
  %2863 = vmatpush1.msra.mxu0 0.0
  %2864 = vmatprep.subr.mxu0 0.0
  %2865 = vmatpush1.msra.mxu0 0.0
  %2866 = vmatprep.subr.mxu0 0.0
  %2867 = vmatpush1.msra.mxu0 0.0
  %2868 = vmatprep.subr.mxu0 0.0
  %2869 = vmatpush1.msra.mxu0 0.0
  %2870 = vmatprep.subr.mxu0 0.0
  %2871 = vmatpush1.msra.mxu0 0.0
  %2872 = vmatprep.subr.mxu0 0.0
  %2873 = vmatpush1.msra.mxu0 0.0
  %2874 = vmatprep.subr.mxu0 0.0
  %2875 = vmatpush1.msra.mxu0 0.0
  %2876 = vmatprep.subr.mxu0 0.0
  %2877 = vmatpush1.msra.mxu0 0.0
  %2878 = vmatprep.subr.mxu0 0.0
  %2879 = vmatpush1.msra.mxu0 0.0
  %2880 = vmatprep.subr.mxu0 0.0
  %2881 = vmatpush1.msra.mxu0 0.0
  %2882 = vmatprep.subr.mxu0 0.0
  %2883 = vmatpush1.msra.mxu0 0.0
  %2884 = vmatprep.subr.mxu0 0.0
  %2885 = vmatpush1.msra.mxu0 0.0
  %2886 = vmatprep.subr.mxu0 0.0
  %2887 = vmatpush1.msra.mxu0 0.0
  %2888 = vmatprep.subr.mxu0 0.0
  %2889 = vmatpush1.msra.mxu0 0.0
  %2890 = vmatprep.subr.mxu0 0.0
  %2891 = vmatpush1.msra.mxu0 0.0
  %2892 = vmatprep.subr.mxu0 0.0
  %2893 = vmatpush1.msra.mxu0 0.0
  %2894 = vmatprep.subr.mxu0 0.0
  %2895 = vmatpush1.msra.mxu0 0.0
  %2896 = vmatprep.mubr.f32.mxu0 0.0
  %2897 = vmatmul.mubr.f32.gmra.mrb[0].mxu0 %v2821
  %v2898 = vpop.f32.mrb[0].mxu0
  %v2899 = vadd.f32 %v2818, %v2898
  %v2900 = vpop.f32.mrb[0].mxu0
  %2901 = vmatprep.mubr.f32.mxu0 0.0
  %2902 = vmatmul.mubr.f32.gmra.mrb[0].mxu0 %v2824
  %v2903 = vpop.f32.mrb[0].mxu0
  %v2904 = vadd.f32 %v2818, %v2903
  %v2905 = vpop.f32.mrb[0].mxu0
  %2906 = vmatprep.mubr.f32.mxu0 0.0
  %2907 = vmatmul.mubr.f32.gmra.mrb[0].mxu0 %v2827
  %v2908 = vpop.f32.mrb[0].mxu0
  %v2909 = vadd.f32 %v2818, %v2908
  %v2910 = vpop.f32.mrb[0].mxu0
  %2911 = vmatprep.mubr.f32.mxu0 0.0
  %2912 = vmatmul.mubr.f32.gmra.mrb[0].mxu0 %v2830
  %v2913 = vpop.f32.mrb[0].mxu0
  %v2914 = vadd.f32 %v2818, %v2913
  %v2915 = vpop.f32.mrb[0].mxu0
  %2916 = vdwg.mxu0
  %v2917 = vld [vmem:[%s3 + $0x160] sm:$0xff]
  %v2918 = vld [vmem:[%s3 + $0x168] sm:$0xff]
  %v2919 = vld [vmem:[%s3 + $0x170] sm:$0xff]
  %v2920 = vld [vmem:[%s3 + $0x178] sm:$0xff]
  %v2921 = vld [vmem:[%s3 + $0x180] sm:$0xff]
  %v2922 = vld [vmem:[%s3 + $0x188] sm:$0xff]
  %v2923 = vld [vmem:[%s3 + $0x190] sm:$0xff]
  %v2924 = vld [vmem:[%s3 + $0x198] sm:$0xff]
  %v2925 = vld [vmem:[%s2 + $0x9] sm:$0x1]
  %v2926 = vlaneseq
  %v2927 = vshrl.u32 %v2926, 7
  %v2928 = vsub.s32 0, %v2927
  %v2929 = vrot.slane %v2925, %v2928
  %v2930 = vsel %vm550, %v2487, 0
  %v2932 = vsel %vm550, %v2494, 0
  %v2934 = vsel %vm550, %v2501, 0
  %v2936 = vsel %vm550, %v2508, 0
  %2938 = vmatprep.subr.mxu0 0.0
  %2939 = vmatpush1.msra.mxu0 %v2917
  %2940 = vmatprep.subr.mxu0 0.0
  %2941 = vmatpush1.msra.mxu0 %v2918
  %2942 = vmatprep.subr.mxu0 0.0
  %2943 = vmatpush1.msra.mxu0 %v2919
  %2944 = vmatprep.subr.mxu0 0.0
  %2945 = vmatpush1.msra.mxu0 %v2920
  %2946 = vmatprep.subr.mxu0 0.0
  %2947 = vmatpush1.msra.mxu0 %v2921
  %2948 = vmatprep.subr.mxu0 0.0
  %2949 = vmatpush1.msra.mxu0 %v2922
  %2950 = vmatprep.subr.mxu0 0.0
  %2951 = vmatpush1.msra.mxu0 %v2923
  %2952 = vmatprep.subr.mxu0 0.0
  %2953 = vmatpush1.msra.mxu0 %v2924
  %2954 = vmatprep.subr.mxu0 0.0
  %2955 = vmatpush1.msra.mxu0 0.0
  %2956 = vmatprep.subr.mxu0 0.0
  %2957 = vmatpush1.msra.mxu0 0.0
  %2958 = vmatprep.subr.mxu0 0.0
  %2959 = vmatpush1.msra.mxu0 0.0
  %2960 = vmatprep.subr.mxu0 0.0
  %2961 = vmatpush1.msra.mxu0 0.0
  %2962 = vmatprep.subr.mxu0 0.0
  %2963 = vmatpush1.msra.mxu0 0.0
  %2964 = vmatprep.subr.mxu0 0.0
  %2965 = vmatpush1.msra.mxu0 0.0
  %2966 = vmatprep.subr.mxu0 0.0
  %2967 = vmatpush1.msra.mxu0 0.0
  %2968 = vmatprep.subr.mxu0 0.0
  %2969 = vmatpush1.msra.mxu0 0.0
  %2970 = vmatprep.subr.mxu0 0.0
  %2971 = vmatpush1.msra.mxu0 0.0
  %2972 = vmatprep.subr.mxu0 0.0
  %2973 = vmatpush1.msra.mxu0 0.0
  %2974 = vmatprep.subr.mxu0 0.0
  %2975 = vmatpush1.msra.mxu0 0.0
  %2976 = vmatprep.subr.mxu0 0.0
  %2977 = vmatpush1.msra.mxu0 0.0
  %2978 = vmatprep.subr.mxu0 0.0
  %2979 = vmatpush1.msra.mxu0 0.0
  %2980 = vmatprep.subr.mxu0 0.0
  %2981 = vmatpush1.msra.mxu0 0.0
  %2982 = vmatprep.subr.mxu0 0.0
  %2983 = vmatpush1.msra.mxu0 0.0
  %2984 = vmatprep.subr.mxu0 0.0
  %2985 = vmatpush1.msra.mxu0 0.0
  %2986 = vmatprep.subr.mxu0 0.0
  %2987 = vmatpush1.msra.mxu0 0.0
  %2988 = vmatprep.subr.mxu0 0.0
  %2989 = vmatpush1.msra.mxu0 0.0
  %2990 = vmatprep.subr.mxu0 0.0
  %2991 = vmatpush1.msra.mxu0 0.0
  %2992 = vmatprep.subr.mxu0 0.0
  %2993 = vmatpush1.msra.mxu0 0.0
  %2994 = vmatprep.subr.mxu0 0.0
  %2995 = vmatpush1.msra.mxu0 0.0
  %2996 = vmatprep.subr.mxu0 0.0
  %2997 = vmatpush1.msra.mxu0 0.0
  %2998 = vmatprep.subr.mxu0 0.0
  %2999 = vmatpush1.msra.mxu0 0.0
  %3000 = vmatprep.subr.mxu0 0.0
  %3001 = vmatpush1.msra.mxu0 0.0
  %3002 = vmatprep.mubr.f32.mxu0 0.0
  %3003 = vmatmul.mubr.f32.gmra.mrb[0].mxu0 %v2930
  %v3004 = vpop.f32.mrb[0].mxu0
  %v3005 = vadd.f32 %v2929, %v3004
  %v3006 = vpop.f32.mrb[0].mxu0
  %3007 = vmatprep.mubr.f32.mxu0 0.0
  %3008 = vmatmul.mubr.f32.gmra.mrb[0].mxu0 %v2932
  %v3009 = vpop.f32.mrb[0].mxu0
  %v3010 = vadd.f32 %v2929, %v3009
  %v3011 = vpop.f32.mrb[0].mxu0
  %3012 = vmatprep.mubr.f32.mxu0 0.0
  %3013 = vmatmul.mubr.f32.gmra.mrb[0].mxu0 %v2934
  %v3014 = vpop.f32.mrb[0].mxu0
  %v3015 = vadd.f32 %v2929, %v3014
  %v3016 = vpop.f32.mrb[0].mxu0
  %3017 = vmatprep.mubr.f32.mxu0 0.0
  %3018 = vmatmul.mubr.f32.gmra.mrb[0].mxu0 %v2936
  %v3019 = vpop.f32.mrb[0].mxu0
  %v3020 = vadd.f32 %v2929, %v3019
  %v3021 = vpop.f32.mrb[0].mxu0
  %3022 = vdwg.mxu0
  %v3023 = vadd.f32 %v2899, %v3005
  %v3024 = vadd.f32 %v2904, %v3010
  %v3025 = vadd.f32 %v2909, %v3015
  %v3026 = vadd.f32 %v2914, %v3020
  %v3027 = vcombine.high %v3023, 0.0
  %v3029 = vunpack.c.l.s4 1983009808
  %v3030 = vunpack.c.0.s8 %v3029
  %v3031 = vlaneseq
  %v3032 = vshrl.u32 %v3031, 7
  %v3033 = vsub.s32 %v3030, %v3032
  %v3034 = vrot.slane %v3023, %v3033
  %v3036 = vunpack.c.l.s4 1983009808
  %v3037 = vunpack.c.0.s8 %v3036
  %v3038 = vlaneseq
  %v3039 = vshrl.u32 %v3038, 7
  %v3040 = vsub.s32 %v3037, %v3039
  %v3041 = vrot.slane %v3027, %v3040
  %v3042 = vcombine.high %v3025, 0.0
  %v3044 = vunpack.c.l.s4 1983009808
  %v3045 = vunpack.c.0.s8 %v3044
  %v3046 = vlaneseq
  %v3047 = vshrl.u32 %v3046, 7
  %v3048 = vsub.s32 %v3045, %v3047
  %v3049 = vrot.slane %v3025, %v3048
  %v3051 = vunpack.c.l.s4 1983009808
  %v3052 = vunpack.c.0.s8 %v3051
  %v3053 = vlaneseq
  %v3054 = vshrl.u32 %v3053, 7
  %v3055 = vsub.s32 %v3052, %v3054
  %v3056 = vrot.slane %v3042, %v3055
  %v3057 = vcombine.low %v3034, %v3049
  %v3058 = vcombine.high %v3034, %v3049
  %v3060 = vunpack.c.l.s4 1934713408
  %v3061 = vunpack.c.0.s8 %v3060
  %v3062 = vlaneseq
  %v3063 = vshrl.u32 %v3062, 7
  %v3064 = vsub.s32 %v3061, %v3063
  %v3065 = vrot.slane %v3057, %v3064
  %v3067 = vunpack.c.l.s4 1934713408
  %v3068 = vunpack.c.0.s8 %v3067
  %v3069 = vlaneseq
  %v3070 = vshrl.u32 %v3069, 7
  %v3071 = vsub.s32 %v3068, %v3070
  %v3072 = vrot.slane %v3058, %v3071
  %v3073 = vcombine.low %v3041, %v3056
  %v3074 = vcombine.high %v3041, %v3056
  %v3076 = vunpack.c.l.s4 1934713408
  %v3077 = vunpack.c.0.s8 %v3076
  %v3078 = vlaneseq
  %v3079 = vshrl.u32 %v3078, 7
  %v3080 = vsub.s32 %v3077, %v3079
  %v3081 = vrot.slane %v3073, %v3080
  %v3083 = vunpack.c.l.s4 1934713408
  %v3084 = vunpack.c.0.s8 %v3083
  %v3085 = vlaneseq
  %v3086 = vshrl.u32 %v3085, 7
  %v3087 = vsub.s32 %v3084, %v3086
  %v3088 = vrot.slane %v3074, %v3087
  %v3089 = vcombine.high %v3065, 0.0
  %v3090 = vcombine.high %v3072, 0.0
  %v3091 = vcombine.high %v3081, 0.0
  %v3092 = vcombine.high %v3088, 0.0
  %v3093 = vcombine.high %v3024, 0.0
  %v3095 = vunpack.c.l.s4 1983009808
  %v3096 = vunpack.c.0.s8 %v3095
  %v3097 = vlaneseq
  %v3098 = vshrl.u32 %v3097, 7
  %v3099 = vsub.s32 %v3096, %v3098
  %v3100 = vrot.slane %v3024, %v3099
  %v3102 = vunpack.c.l.s4 1983009808
  %v3103 = vunpack.c.0.s8 %v3102
  %v3104 = vlaneseq
  %v3105 = vshrl.u32 %v3104, 7
  %v3106 = vsub.s32 %v3103, %v3105
  %v3107 = vrot.slane %v3093, %v3106
  %v3108 = vcombine.high %v3026, 0.0
  %v3110 = vunpack.c.l.s4 1983009808
  %v3111 = vunpack.c.0.s8 %v3110
  %v3112 = vlaneseq
  %v3113 = vshrl.u32 %v3112, 7
  %v3114 = vsub.s32 %v3111, %v3113
  %v3115 = vrot.slane %v3026, %v3114
  %v3117 = vunpack.c.l.s4 1983009808
  %v3118 = vunpack.c.0.s8 %v3117
  %v3119 = vlaneseq
  %v3120 = vshrl.u32 %v3119, 7
  %v3121 = vsub.s32 %v3118, %v3120
  %v3122 = vrot.slane %v3108, %v3121
  %v3123 = vcombine.low %v3100, %v3115
  %v3124 = vcombine.high %v3100, %v3115
  %v3126 = vunpack.c.l.s4 1934713408
  %v3127 = vunpack.c.0.s8 %v3126
  %v3128 = vlaneseq
  %v3129 = vshrl.u32 %v3128, 7
  %v3130 = vsub.s32 %v3127, %v3129
  %v3131 = vrot.slane %v3123, %v3130
  %v3133 = vunpack.c.l.s4 1934713408
  %v3134 = vunpack.c.0.s8 %v3133
  %v3135 = vlaneseq
  %v3136 = vshrl.u32 %v3135, 7
  %v3137 = vsub.s32 %v3134, %v3136
  %v3138 = vrot.slane %v3124, %v3137
  %v3139 = vcombine.low %v3107, %v3122
  %v3140 = vcombine.high %v3107, %v3122
  %v3142 = vunpack.c.l.s4 1934713408
  %v3143 = vunpack.c.0.s8 %v3142
  %v3144 = vlaneseq
  %v3145 = vshrl.u32 %v3144, 7
  %v3146 = vsub.s32 %v3143, %v3145
  %v3147 = vrot.slane %v3139, %v3146
  %v3149 = vunpack.c.l.s4 1934713408
  %v3150 = vunpack.c.0.s8 %v3149
  %v3151 = vlaneseq
  %v3152 = vshrl.u32 %v3151, 7
  %v3153 = vsub.s32 %v3150, %v3152
  %v3154 = vrot.slane %v3140, %v3153
  %v3155 = vcombine.high %v3131, 0.0
  %v3156 = vcombine.high %v3138, 0.0
  %v3157 = vcombine.high %v3147, 0.0
  %v3158 = vcombine.high %v3154, 0.0
  %3160 = vrot.lane.b32.xlu0 %v3089, 32
  %v3161 = vpop.permute.xlu0 %3160
  %3164 = vrot.lane.b32.xlu0 %v3072, 64
  %v3165 = vpop.permute.xlu0 %3164
  %3168 = vrot.lane.b32.xlu0 %v3090, 96
  %v3169 = vpop.permute.xlu0 %3168
  %3172 = vrot.lane.b32.xlu0 %v3091, 32
  %v3173 = vpop.permute.xlu0 %3172
  %3176 = vrot.lane.b32.xlu0 %v3088, 64
  %v3177 = vpop.permute.xlu0 %3176
  %3180 = vrot.lane.b32.xlu0 %v3092, 96
  %v3181 = vpop.permute.xlu0 %3180
  %3184 = vrot.lane.b32.xlu0 %v3155, 32
  %v3185 = vpop.permute.xlu0 %3184
  %3188 = vrot.lane.b32.xlu0 %v3138, 64
  %v3189 = vpop.permute.xlu0 %3188
  %3192 = vrot.lane.b32.xlu0 %v3156, 96
  %v3193 = vpop.permute.xlu0 %3192
  %3196 = vrot.lane.b32.xlu0 %v3157, 32
  %v3197 = vpop.permute.xlu0 %3196
  %3200 = vrot.lane.b32.xlu0 %v3154, 64
  %v3201 = vpop.permute.xlu0 %3200
  %3204 = vrot.lane.b32.xlu0 %v3158, 96
  %v3205 = vpop.permute.xlu0 %3204
  %v3207 = vsel %vm333, %v3065, %v3161
  %v3208 = vsel %vm550, %v3207, %v3165
  %v3209 = vsel %vm576, %v3208, %v3169
  %v3210 = vsel %vm333, %v3081, %v3173
  %v3211 = vsel %vm550, %v3210, %v3177
  %v3212 = vsel %vm576, %v3211, %v3181
  %v3213 = vsel %vm333, %v3131, %v3185
  %v3214 = vsel %vm550, %v3213, %v3189
  %v3215 = vsel %vm576, %v3214, %v3193
  %v3216 = vsel %vm333, %v3147, %v3197
  %v3217 = vsel %vm550, %v3216, %v3201
  %v3218 = vsel %vm576, %v3217, %v3205
  %v3219 = vld [vmem:[%s5] sm:$0xff]
  %v3220 = vld [vmem:[%s5 + $0x8] sm:$0xff]
  %v3221 = vld [vmem:[%s5 + $0x10] sm:$0xff]
  %v3222 = vld [vmem:[%s5 + $0x18] sm:$0xff]
  %v3223 = vld [vmem:[%s5 + $0x20] sm:$0xff]
  %v3224 = vld [vmem:[%s5 + $0x28] sm:$0xff]
  %v3225 = vld [vmem:[%s5 + $0x30] sm:$0xff]
  %v3226 = vld [vmem:[%s5 + $0x38] sm:$0xff]
  %v3227 = vld [vmem:[%s5 + $0x40] sm:$0xff]
  %v3228 = vld [vmem:[%s5 + $0x48] sm:$0xff]
  %v3229 = vld [vmem:[%s5 + $0x50] sm:$0xff]
  %v3230 = vld [vmem:[%s5 + $0x58] sm:$0xff]
  %v3231 = vld [vmem:[%s5 + $0x60] sm:$0xff]
  %v3232 = vld [vmem:[%s5 + $0x68] sm:$0xff]
  %v3233 = vld [vmem:[%s5 + $0x70] sm:$0xff]
  %v3234 = vld [vmem:[%s5 + $0x78] sm:$0xff]
  %v3235 = vld [vmem:[%s5 + $0x80] sm:$0xff]
  %v3236 = vld [vmem:[%s5 + $0x88] sm:$0xff]
  %v3237 = vld [vmem:[%s5 + $0x90] sm:$0xff]
  %v3238 = vld [vmem:[%s5 + $0x98] sm:$0xff]
  %v3239 = vld [vmem:[%s5 + $0xa0] sm:$0xff]
  %v3240 = vld [vmem:[%s5 + $0xa8] sm:$0xff]
  %v3241 = vld [vmem:[%s5 + $0xb0] sm:$0xff]
  %v3242 = vld [vmem:[%s5 + $0xb8] sm:$0xff]
  %v3243 = vld [vmem:[%s5 + $0xc0] sm:$0xff]
  %v3244 = vld [vmem:[%s5 + $0xc8] sm:$0xff]
  %v3245 = vld [vmem:[%s5 + $0xd0] sm:$0xff]
  %v3246 = vld [vmem:[%s5 + $0xd8] sm:$0xff]
  %v3247 = vld [vmem:[%s5 + $0xe0] sm:$0xff]
  %v3248 = vld [vmem:[%s5 + $0xe8] sm:$0xff]
  %v3249 = vld [vmem:[%s5 + $0xf0] sm:$0xff]
  %v3250 = vld [vmem:[%s5 + $0xf8] sm:$0xff]
  %v3251 = vld [vmem:[%s5 + $0x100] sm:$0xff]
  %v3252 = vld [vmem:[%s5 + $0x108] sm:$0xff]
  %v3253 = vld [vmem:[%s5 + $0x110] sm:$0xff]
  %v3254 = vld [vmem:[%s5 + $0x118] sm:$0xff]
  %v3255 = vld [vmem:[%s5 + $0x120] sm:$0xff]
  %v3256 = vld [vmem:[%s5 + $0x128] sm:$0xff]
  %v3257 = vld [vmem:[%s5 + $0x130] sm:$0xff]
  %v3258 = vld [vmem:[%s5 + $0x138] sm:$0xff]
  %v3259 = vld [vmem:[%s5 + $0x140] sm:$0xff]
  %v3260 = vld [vmem:[%s5 + $0x148] sm:$0xff]
  %v3261 = vld [vmem:[%s5 + $0x150] sm:$0xff]
  %v3262 = vld [vmem:[%s5 + $0x158] sm:$0xff]
  %v3263 = vld [vmem:[%s5 + $0x160] sm:$0xff]
  %v3264 = vld [vmem:[%s5 + $0x168] sm:$0xff]
  %v3265 = vld [vmem:[%s5 + $0x170] sm:$0xff]
  %v3266 = vld [vmem:[%s5 + $0x178] sm:$0xff]
  %v3267 = vld [vmem:[%s5 + $0x180] sm:$0xff]
  %v3268 = vld [vmem:[%s5 + $0x188] sm:$0xff]
  %v3269 = vld [vmem:[%s5 + $0x190] sm:$0xff]
  %v3270 = vld [vmem:[%s5 + $0x198] sm:$0xff]
  %v3271 = vld [vmem:[%s5 + $0x1a0] sm:$0xff]
  %v3272 = vld [vmem:[%s5 + $0x1a8] sm:$0xff]
  %v3273 = vld [vmem:[%s5 + $0x1b0] sm:$0xff]
  %v3274 = vld [vmem:[%s5 + $0x1b8] sm:$0xff]
  %v3275 = vld [vmem:[%s5 + $0x1c0] sm:$0xff]
  %v3276 = vld [vmem:[%s5 + $0x1c8] sm:$0xff]
  %v3277 = vld [vmem:[%s5 + $0x1d0] sm:$0xff]
  %v3278 = vld [vmem:[%s5 + $0x1d8] sm:$0xff]
  %v3279 = vld [vmem:[%s5 + $0x1e0] sm:$0xff]
  %v3280 = vld [vmem:[%s5 + $0x1e8] sm:$0xff]
  %v3281 = vld [vmem:[%s5 + $0x1f0] sm:$0xff]
  %v3282 = vld [vmem:[%s5 + $0x1f8] sm:$0xff]
  %v3283 = vld [vmem:[%s2 + $0x10] sm:$0x1]
  %v3284 = vlaneseq
  %v3285 = vshrl.u32 %v3284, 7
  %v3286 = vsub.s32 0, %v3285
  %v3287 = vrot.slane %v3283, %v3286
  %3288 = vmatprep.subr.mxu0 0.0
  %3289 = vmatpush1.msra.mxu0 %v3219
  %3290 = vmatprep.subr.mxu0 0.0
  %3291 = vmatpush1.msra.mxu0 %v3220
  %3292 = vmatprep.subr.mxu0 0.0
  %3293 = vmatpush1.msra.mxu0 %v3221
  %3294 = vmatprep.subr.mxu0 0.0
  %3295 = vmatpush1.msra.mxu0 %v3222
  %3296 = vmatprep.subr.mxu0 0.0
  %3297 = vmatpush1.msra.mxu0 %v3223
  %3298 = vmatprep.subr.mxu0 0.0
  %3299 = vmatpush1.msra.mxu0 %v3224
  %3300 = vmatprep.subr.mxu0 0.0
  %3301 = vmatpush1.msra.mxu0 %v3225
  %3302 = vmatprep.subr.mxu0 0.0
  %3303 = vmatpush1.msra.mxu0 %v3226
  %3304 = vmatprep.subr.mxu0 0.0
  %3305 = vmatpush1.msra.mxu0 %v3227
  %3306 = vmatprep.subr.mxu0 0.0
  %3307 = vmatpush1.msra.mxu0 %v3228
  %3308 = vmatprep.subr.mxu0 0.0
  %3309 = vmatpush1.msra.mxu0 %v3229
  %3310 = vmatprep.subr.mxu0 0.0
  %3311 = vmatpush1.msra.mxu0 %v3230
  %3312 = vmatprep.subr.mxu0 0.0
  %3313 = vmatpush1.msra.mxu0 %v3231
  %3314 = vmatprep.subr.mxu0 0.0
  %3315 = vmatpush1.msra.mxu0 %v3232
  %3316 = vmatprep.subr.mxu0 0.0
  %3317 = vmatpush1.msra.mxu0 %v3233
  %3318 = vmatprep.subr.mxu0 0.0
  %3319 = vmatpush1.msra.mxu0 %v3234
  %3320 = vmatprep.subr.mxu0 0.0
  %3321 = vmatpush1.msra.mxu0 %v3235
  %3322 = vmatprep.subr.mxu0 0.0
  %3323 = vmatpush1.msra.mxu0 %v3236
  %3324 = vmatprep.subr.mxu0 0.0
  %3325 = vmatpush1.msra.mxu0 %v3237
  %3326 = vmatprep.subr.mxu0 0.0
  %3327 = vmatpush1.msra.mxu0 %v3238
  %3328 = vmatprep.subr.mxu0 0.0
  %3329 = vmatpush1.msra.mxu0 %v3239
  %3330 = vmatprep.subr.mxu0 0.0
  %3331 = vmatpush1.msra.mxu0 %v3240
  %3332 = vmatprep.subr.mxu0 0.0
  %3333 = vmatpush1.msra.mxu0 %v3241
  %3334 = vmatprep.subr.mxu0 0.0
  %3335 = vmatpush1.msra.mxu0 %v3242
  %3336 = vmatprep.subr.mxu0 0.0
  %3337 = vmatpush1.msra.mxu0 %v3243
  %3338 = vmatprep.subr.mxu0 0.0
  %3339 = vmatpush1.msra.mxu0 %v3244
  %3340 = vmatprep.subr.mxu0 0.0
  %3341 = vmatpush1.msra.mxu0 %v3245
  %3342 = vmatprep.subr.mxu0 0.0
  %3343 = vmatpush1.msra.mxu0 %v3246
  %3344 = vmatprep.subr.mxu0 0.0
  %3345 = vmatpush1.msra.mxu0 %v3247
  %3346 = vmatprep.subr.mxu0 0.0
  %3347 = vmatpush1.msra.mxu0 %v3248
  %3348 = vmatprep.subr.mxu0 0.0
  %3349 = vmatpush1.msra.mxu0 %v3249
  %3350 = vmatprep.subr.mxu0 0.0
  %3351 = vmatpush1.msra.mxu0 %v3250
  %3352 = vmatprep.mubr.f32.mxu0 %v3212
  %3353 = vmatmul.mubr.f32.gmra.mrb[0].mxu0 %v3209
  %v3354 = vpop.f32.mrb[0].mxu0
  %v3355 = vadd.f32 %v3287, %v3354
  %v3356 = vpop.f32.mrb[0].mxu0
  %3357 = vdwg.mxu0
  %3358 = vmatprep.subr.mxu0 0.0
  %3359 = vmatpush1.msra.mxu0 %v3251
  %3360 = vmatprep.subr.mxu0 0.0
  %3361 = vmatpush1.msra.mxu0 %v3252
  %3362 = vmatprep.subr.mxu0 0.0
  %3363 = vmatpush1.msra.mxu0 %v3253
  %3364 = vmatprep.subr.mxu0 0.0
  %3365 = vmatpush1.msra.mxu0 %v3254
  %3366 = vmatprep.subr.mxu0 0.0
  %3367 = vmatpush1.msra.mxu0 %v3255
  %3368 = vmatprep.subr.mxu0 0.0
  %3369 = vmatpush1.msra.mxu0 %v3256
  %3370 = vmatprep.subr.mxu0 0.0
  %3371 = vmatpush1.msra.mxu0 %v3257
  %3372 = vmatprep.subr.mxu0 0.0
  %3373 = vmatpush1.msra.mxu0 %v3258
  %3374 = vmatprep.subr.mxu0 0.0
  %3375 = vmatpush1.msra.mxu0 %v3259
  %3376 = vmatprep.subr.mxu0 0.0
  %3377 = vmatpush1.msra.mxu0 %v3260
  %3378 = vmatprep.subr.mxu0 0.0
  %3379 = vmatpush1.msra.mxu0 %v3261
  %3380 = vmatprep.subr.mxu0 0.0
  %3381 = vmatpush1.msra.mxu0 %v3262
  %3382 = vmatprep.subr.mxu0 0.0
  %3383 = vmatpush1.msra.mxu0 %v3263
  %3384 = vmatprep.subr.mxu0 0.0
  %3385 = vmatpush1.msra.mxu0 %v3264
  %3386 = vmatprep.subr.mxu0 0.0
  %3387 = vmatpush1.msra.mxu0 %v3265
  %3388 = vmatprep.subr.mxu0 0.0
  %3389 = vmatpush1.msra.mxu0 %v3266
  %3390 = vmatprep.subr.mxu0 0.0
  %3391 = vmatpush1.msra.mxu0 %v3267
  %3392 = vmatprep.subr.mxu0 0.0
  %3393 = vmatpush1.msra.mxu0 %v3268
  %3394 = vmatprep.subr.mxu0 0.0
  %3395 = vmatpush1.msra.mxu0 %v3269
  %3396 = vmatprep.subr.mxu0 0.0
  %3397 = vmatpush1.msra.mxu0 %v3270
  %3398 = vmatprep.subr.mxu0 0.0
  %3399 = vmatpush1.msra.mxu0 %v3271
  %3400 = vmatprep.subr.mxu0 0.0
  %3401 = vmatpush1.msra.mxu0 %v3272
  %3402 = vmatprep.subr.mxu0 0.0
  %3403 = vmatpush1.msra.mxu0 %v3273
  %3404 = vmatprep.subr.mxu0 0.0
  %3405 = vmatpush1.msra.mxu0 %v3274
  %3406 = vmatprep.subr.mxu0 0.0
  %3407 = vmatpush1.msra.mxu0 %v3275
  %3408 = vmatprep.subr.mxu0 0.0
  %3409 = vmatpush1.msra.mxu0 %v3276
  %3410 = vmatprep.subr.mxu0 0.0
  %3411 = vmatpush1.msra.mxu0 %v3277
  %3412 = vmatprep.subr.mxu0 0.0
  %3413 = vmatpush1.msra.mxu0 %v3278
  %3414 = vmatprep.subr.mxu0 0.0
  %3415 = vmatpush1.msra.mxu0 %v3279
  %3416 = vmatprep.subr.mxu0 0.0
  %3417 = vmatpush1.msra.mxu0 %v3280
  %3418 = vmatprep.subr.mxu0 0.0
  %3419 = vmatpush1.msra.mxu0 %v3281
  %3420 = vmatprep.subr.mxu0 0.0
  %3421 = vmatpush1.msra.mxu0 %v3282
  %3422 = vmatprep.mubr.f32.mxu0 %v3218
  %3423 = vmatmul.mubr.f32.gmra.mrb[0].mxu0 %v3215
  %v3424 = vpop.f32.mrb[0].mxu0
  %v3425 = vadd.f32 %v3355, %v3424
  %v3426 = vpop.f32.mrb[0].mxu0
  %3427 = vdwg.mxu0
  %v3432 = vcombine.high %v3023, %v3023
  %v3434 = vunpack.c.l.s4 1983009808
  %v3435 = vunpack.c.0.s8 %v3434
  %v3436 = vlaneseq
  %v3437 = vshrl.u32 %v3436, 7
  %v3438 = vsub.s32 %v3435, %v3437
  %v3439 = vrot.slane %v3023, %v3438
  %v3441 = vunpack.c.l.s4 1983009808
  %v3442 = vunpack.c.0.s8 %v3441
  %v3443 = vlaneseq
  %v3444 = vshrl.u32 %v3443, 7
  %v3445 = vsub.s32 %v3442, %v3444
  %v3446 = vrot.slane %v3432, %v3445
  %v3447 = vcombine.high %v3439, %v3439
  %v3448 = vcombine.high %v3446, %v3446
  %v3449 = vcombine.high %v3024, %v3024
  %v3451 = vunpack.c.l.s4 1983009808
  %v3452 = vunpack.c.0.s8 %v3451
  %v3453 = vlaneseq
  %v3454 = vshrl.u32 %v3453, 7
  %v3455 = vsub.s32 %v3452, %v3454
  %v3456 = vrot.slane %v3024, %v3455
  %v3458 = vunpack.c.l.s4 1983009808
  %v3459 = vunpack.c.0.s8 %v3458
  %v3460 = vlaneseq
  %v3461 = vshrl.u32 %v3460, 7
  %v3462 = vsub.s32 %v3459, %v3461
  %v3463 = vrot.slane %v3449, %v3462
  %v3464 = vcombine.high %v3456, %v3456
  %v3465 = vcombine.high %v3463, %v3463
  %v3466 = vcombine.high %v3025, %v3025
  %v3468 = vunpack.c.l.s4 1983009808
  %v3469 = vunpack.c.0.s8 %v3468
  %v3470 = vlaneseq
  %v3471 = vshrl.u32 %v3470, 7
  %v3472 = vsub.s32 %v3469, %v3471
  %v3473 = vrot.slane %v3025, %v3472
  %v3475 = vunpack.c.l.s4 1983009808
  %v3476 = vunpack.c.0.s8 %v3475
  %v3477 = vlaneseq
  %v3478 = vshrl.u32 %v3477, 7
  %v3479 = vsub.s32 %v3476, %v3478
  %v3480 = vrot.slane %v3466, %v3479
  %v3481 = vcombine.high %v3473, %v3473
  %v3482 = vcombine.high %v3480, %v3480
  %v3483 = vcombine.high %v3026, %v3026
  %v3485 = vunpack.c.l.s4 1983009808
  %v3486 = vunpack.c.0.s8 %v3485
  %v3487 = vlaneseq
  %v3488 = vshrl.u32 %v3487, 7
  %v3489 = vsub.s32 %v3486, %v3488
  %v3490 = vrot.slane %v3026, %v3489
  %v3492 = vunpack.c.l.s4 1983009808
  %v3493 = vunpack.c.0.s8 %v3492
  %v3494 = vlaneseq
  %v3495 = vshrl.u32 %v3494, 7
  %v3496 = vsub.s32 %v3493, %v3495
  %v3497 = vrot.slane %v3483, %v3496
  %v3498 = vcombine.high %v3490, %v3490
  %v3499 = vcombine.high %v3497, %v3497
  %v3516 = vrot.slane %v3439, 7
  %v3517 = vrot.slane %v3516, 2
  %v3518 = vrot.slane %v3447, 7
  %v3519 = vrot.slane %v3518, 2
  %v3520 = vrot.slane %v3446, 7
  %v3521 = vrot.slane %v3520, 2
  %v3522 = vrot.slane %v3448, 7
  %v3523 = vrot.slane %v3522, 2
  %v3524 = vrot.slane %v3456, 7
  %v3525 = vrot.slane %v3524, 2
  %v3526 = vrot.slane %v3464, 7
  %v3527 = vrot.slane %v3526, 2
  %v3528 = vrot.slane %v3463, 7
  %v3529 = vrot.slane %v3528, 2
  %v3530 = vrot.slane %v3465, 7
  %v3531 = vrot.slane %v3530, 2
  %v3532 = vrot.slane %v3473, 7
  %v3533 = vrot.slane %v3532, 2
  %v3534 = vrot.slane %v3481, 7
  %v3535 = vrot.slane %v3534, 2
  %v3536 = vrot.slane %v3480, 7
  %v3537 = vrot.slane %v3536, 2
  %v3538 = vrot.slane %v3482, 7
  %v3539 = vrot.slane %v3538, 2
  %v3540 = vrot.slane %v3490, 7
  %v3541 = vrot.slane %v3540, 2
  %v3542 = vrot.slane %v3498, 7
  %v3543 = vrot.slane %v3542, 2
  %v3544 = vrot.slane %v3497, 7
  %v3545 = vrot.slane %v3544, 2
  %v3546 = vrot.slane %v3499, 7
  %v3547 = vrot.slane %v3546, 2
  %v3564 = vmax.f32 %v3439, %v3517
  %v3565 = vmax.f32 %v3447, %v3519
  %v3566 = vmax.f32 %v3446, %v3521
  %v3567 = vmax.f32 %v3448, %v3523
  %v3568 = vmax.f32 %v3456, %v3525
  %v3569 = vmax.f32 %v3464, %v3527
  %v3570 = vmax.f32 %v3463, %v3529
  %v3571 = vmax.f32 %v3465, %v3531
  %v3572 = vmax.f32 %v3473, %v3533
  %v3573 = vmax.f32 %v3481, %v3535
  %v3574 = vmax.f32 %v3480, %v3537
  %v3575 = vmax.f32 %v3482, %v3539
  %v3576 = vmax.f32 %v3490, %v3541
  %v3577 = vmax.f32 %v3498, %v3543
  %v3578 = vmax.f32 %v3497, %v3545
  %v3579 = vmax.f32 %v3499, %v3547
  %v3596 = vlaneseq
  %v3597 = vshrl.u32 %v3596, 7
  %v3598 = vsub.s32 0, %v3597
  %v3599 = vrot.slane %v3564, %v3598
  %v3600 = vlaneseq
  %v3601 = vshrl.u32 %v3600, 7
  %v3602 = vsub.s32 0, %v3601
  %v3603 = vrot.slane %v3565, %v3602
  %v3604 = vlaneseq
  %v3605 = vshrl.u32 %v3604, 7
  %v3606 = vsub.s32 0, %v3605
  %v3607 = vrot.slane %v3566, %v3606
  %v3608 = vlaneseq
  %v3609 = vshrl.u32 %v3608, 7
  %v3610 = vsub.s32 0, %v3609
  %v3611 = vrot.slane %v3567, %v3610
  %v3612 = vlaneseq
  %v3613 = vshrl.u32 %v3612, 7
  %v3614 = vsub.s32 0, %v3613
  %v3615 = vrot.slane %v3568, %v3614
  %v3616 = vlaneseq
  %v3617 = vshrl.u32 %v3616, 7
  %v3618 = vsub.s32 0, %v3617
  %v3619 = vrot.slane %v3569, %v3618
  %v3620 = vlaneseq
  %v3621 = vshrl.u32 %v3620, 7
  %v3622 = vsub.s32 0, %v3621
  %v3623 = vrot.slane %v3570, %v3622
  %v3624 = vlaneseq
  %v3625 = vshrl.u32 %v3624, 7
  %v3626 = vsub.s32 0, %v3625
  %v3627 = vrot.slane %v3571, %v3626
  %v3628 = vlaneseq
  %v3629 = vshrl.u32 %v3628, 7
  %v3630 = vsub.s32 0, %v3629
  %v3631 = vrot.slane %v3572, %v3630
  %v3632 = vlaneseq
  %v3633 = vshrl.u32 %v3632, 7
  %v3634 = vsub.s32 0, %v3633
  %v3635 = vrot.slane %v3573, %v3634
  %v3636 = vlaneseq
  %v3637 = vshrl.u32 %v3636, 7
  %v3638 = vsub.s32 0, %v3637
  %v3639 = vrot.slane %v3574, %v3638
  %v3640 = vlaneseq
  %v3641 = vshrl.u32 %v3640, 7
  %v3642 = vsub.s32 0, %v3641
  %v3643 = vrot.slane %v3575, %v3642
  %v3644 = vlaneseq
  %v3645 = vshrl.u32 %v3644, 7
  %v3646 = vsub.s32 0, %v3645
  %v3647 = vrot.slane %v3576, %v3646
  %v3648 = vlaneseq
  %v3649 = vshrl.u32 %v3648, 7
  %v3650 = vsub.s32 0, %v3649
  %v3651 = vrot.slane %v3577, %v3650
  %v3652 = vlaneseq
  %v3653 = vshrl.u32 %v3652, 7
  %v3654 = vsub.s32 0, %v3653
  %v3655 = vrot.slane %v3578, %v3654
  %v3656 = vlaneseq
  %v3657 = vshrl.u32 %v3656, 7
  %v3658 = vsub.s32 0, %v3657
  %v3659 = vrot.slane %v3579, %v3658
  %v3660 = vsel %vm2474, %v3603, %v3599
  %v3661 = vsel %vm2476, %v3607, %v3660
  %v3662 = vsel %vm2478, %v3611, %v3661
  %v3663 = vsel %vm2480, %v3615, %v3662
  %v3664 = vsel %vm2482, %v3619, %v3663
  %v3665 = vsel %vm2484, %v3623, %v3664
  %v3666 = vsel %vm2486, %v3627, %v3665
  %v3667 = vsel %vm2474, %v3635, %v3631
  %v3668 = vsel %vm2476, %v3639, %v3667
  %v3669 = vsel %vm2478, %v3643, %v3668
  %v3670 = vsel %vm2480, %v3647, %v3669
  %v3671 = vsel %vm2482, %v3651, %v3670
  %v3672 = vsel %vm2484, %v3655, %v3671
  %v3673 = vsel %vm2486, %v3659, %v3672
  %v3676 = vrot.slane %v3666, 7
  %v3677 = vrot.slane %v3673, 7
  %v3678 = vsel %vm51, 0.0, %v3676
  %v3679 = vsel %vm51, 0.0, %v3677
  %vm3680 = vcmp.eq.s32.totalorder %v47, 7
  %v3681 = vrot.slane %v3666, 1
  %v3682 = vrot.slane %v3673, 1
  %v3683 = vsel %vm3680, 0.0, %v3681
  %v3684 = vsel %vm3680, 0.0, %v3682
  %3685 = vrot.lane.b32.xlu0 %v3666, 32
  %v3686 = vpop.permute.xlu0 %3685
  %3687 = vrot.lane.b32.xlu0 %v3673, 32
  %v3688 = vpop.permute.xlu0 %3687
  %3693 = vrot.lane.b32.xlu0 %v3683, 64
  %v3694 = vpop.permute.xlu0 %3693
  %3695 = vrot.lane.b32.xlu0 %v3684, 64
  %v3696 = vpop.permute.xlu0 %3695
  %v3699 = vsel %vm333, %v3678, %v3686
  %v3700 = vsel %vm333, %v3679, %v3688
  %v3701 = vsel %vm550, %v3699, %v3694
  %v3702 = vsel %vm550, %v3700, %v3696
  %v3703 = vld [vmem:[%s3 + $0x1a0] sm:$0xff]
  %v3704 = vld [vmem:[%s3 + $0x1a8] sm:$0xff]
  %v3705 = vld [vmem:[%s3 + $0x1b0] sm:$0xff]
  %v3706 = vld [vmem:[%s3 + $0x1b8] sm:$0xff]
  %v3707 = vld [vmem:[%s3 + $0x1c0] sm:$0xff]
  %v3708 = vld [vmem:[%s3 + $0x1c8] sm:$0xff]
  %v3709 = vld [vmem:[%s3 + $0x1d0] sm:$0xff]
  %v3710 = vld [vmem:[%s3 + $0x1d8] sm:$0xff]
  %v3711 = vld [vmem:[%s3 + $0x1e0] sm:$0xff]
  %v3712 = vld [vmem:[%s3 + $0x1e8] sm:$0xff]
  %v3713 = vld [vmem:[%s3 + $0x1f0] sm:$0xff]
  %v3714 = vld [vmem:[%s3 + $0x1f8] sm:$0xff]
  %v3715 = vld [vmem:[%s2 + $0xa] sm:$0x1]
  %v3716 = vlaneseq
  %v3717 = vshrl.u32 %v3716, 7
  %v3718 = vsub.s32 0, %v3717
  %v3719 = vrot.slane %v3715, %v3718
  %v3721 = vsel %vm576, %v3701, 0
  %v3724 = vsel %vm576, %v3702, 0
  %3726 = vmatprep.subr.mxu0 0.0
  %3727 = vmatpush1.msra.mxu0 %v3703
  %3728 = vmatprep.subr.mxu0 0.0
  %3729 = vmatpush1.msra.mxu0 %v3704
  %3730 = vmatprep.subr.mxu0 0.0
  %3731 = vmatpush1.msra.mxu0 %v3705
  %3732 = vmatprep.subr.mxu0 0.0
  %3733 = vmatpush1.msra.mxu0 %v3706
  %3734 = vmatprep.subr.mxu0 0.0
  %3735 = vmatpush1.msra.mxu0 %v3707
  %3736 = vmatprep.subr.mxu0 0.0
  %3737 = vmatpush1.msra.mxu0 %v3708
  %3738 = vmatprep.subr.mxu0 0.0
  %3739 = vmatpush1.msra.mxu0 %v3709
  %3740 = vmatprep.subr.mxu0 0.0
  %3741 = vmatpush1.msra.mxu0 %v3710
  %3742 = vmatprep.subr.mxu0 0.0
  %3743 = vmatpush1.msra.mxu0 %v3711
  %3744 = vmatprep.subr.mxu0 0.0
  %3745 = vmatpush1.msra.mxu0 %v3712
  %3746 = vmatprep.subr.mxu0 0.0
  %3747 = vmatpush1.msra.mxu0 %v3713
  %3748 = vmatprep.subr.mxu0 0.0
  %3749 = vmatpush1.msra.mxu0 %v3714
  %3750 = vmatprep.subr.mxu0 0.0
  %3751 = vmatpush1.msra.mxu0 0.0
  %3752 = vmatprep.subr.mxu0 0.0
  %3753 = vmatpush1.msra.mxu0 0.0
  %3754 = vmatprep.subr.mxu0 0.0
  %3755 = vmatpush1.msra.mxu0 0.0
  %3756 = vmatprep.subr.mxu0 0.0
  %3757 = vmatpush1.msra.mxu0 0.0
  %3758 = vmatprep.subr.mxu0 0.0
  %3759 = vmatpush1.msra.mxu0 0.0
  %3760 = vmatprep.subr.mxu0 0.0
  %3761 = vmatpush1.msra.mxu0 0.0
  %3762 = vmatprep.subr.mxu0 0.0
  %3763 = vmatpush1.msra.mxu0 0.0
  %3764 = vmatprep.subr.mxu0 0.0
  %3765 = vmatpush1.msra.mxu0 0.0
  %3766 = vmatprep.subr.mxu0 0.0
  %3767 = vmatpush1.msra.mxu0 0.0
  %3768 = vmatprep.subr.mxu0 0.0
  %3769 = vmatpush1.msra.mxu0 0.0
  %3770 = vmatprep.subr.mxu0 0.0
  %3771 = vmatpush1.msra.mxu0 0.0
  %3772 = vmatprep.subr.mxu0 0.0
  %3773 = vmatpush1.msra.mxu0 0.0
  %3774 = vmatprep.subr.mxu0 0.0
  %3775 = vmatpush1.msra.mxu0 0.0
  %3776 = vmatprep.subr.mxu0 0.0
  %3777 = vmatpush1.msra.mxu0 0.0
  %3778 = vmatprep.subr.mxu0 0.0
  %3779 = vmatpush1.msra.mxu0 0.0
  %3780 = vmatprep.subr.mxu0 0.0
  %3781 = vmatpush1.msra.mxu0 0.0
  %3782 = vmatprep.subr.mxu0 0.0
  %3783 = vmatpush1.msra.mxu0 0.0
  %3784 = vmatprep.subr.mxu0 0.0
  %3785 = vmatpush1.msra.mxu0 0.0
  %3786 = vmatprep.subr.mxu0 0.0
  %3787 = vmatpush1.msra.mxu0 0.0
  %3788 = vmatprep.subr.mxu0 0.0
  %3789 = vmatpush1.msra.mxu0 0.0
  %3790 = vmatprep.mubr.f32.mxu0 0.0
  %3791 = vmatmul.mubr.f32.gmra.mrb[0].mxu0 %v3721
  %v3792 = vpop.f32.mrb[0].mxu0
  %v3793 = vadd.f32 %v3719, %v3792
  %v3794 = vpop.f32.mrb[0].mxu0
  %3795 = vmatprep.mubr.f32.mxu0 0.0
  %3796 = vmatmul.mubr.f32.gmra.mrb[0].mxu0 %v3724
  %v3797 = vpop.f32.mrb[0].mxu0
  %v3798 = vadd.f32 %v3719, %v3797
  %v3799 = vpop.f32.mrb[0].mxu0
  %3800 = vdwg.mxu0
  %v3801 = vld [vmem:[%s2 + $0xb] sm:$0x1]
  %v3802 = vld [vmem:[%s2 + $0xc] sm:$0x1]
  %vm3803 = vcmask 64512
  %v3804 = vsel %vm3803, %v3793, 0.0
  %v3805 = vsel %vm3803, %v3798, 0.0
  %v3806 = vadd.f32 %v3804, %v3805
  %v3807 = vrot.slane %v3806, 4
  %v3808 = vadd.f32 %v3806, %v3807
  %v3809 = vrot.slane %v3808, 2
  %v3810 = vadd.f32 %v3808, %v3809
  %v3811 = vrot.slane %v3810, 1
  %v3812 = vadd.f32 %v3810, %v3811
  %v3813 = vrcp.pop 16.0
  %v3814 = vmul.f32 %v3812, %v3813
  %v3815 = vsub.f32 %v3793, %v3814
  %v3816 = vsub.f32 %v3798, %v3814
  %v3817 = vmul.f32 %v3815, %v3815
  %v3818 = vmul.f32 %v3816, %v3816
  %v3819 = vsel %vm3803, %v3817, 0.0
  %v3820 = vsel %vm3803, %v3818, 0.0
  %v3821 = vadd.f32 %v3819, %v3820
  %v3822 = vrot.slane %v3821, 4
  %v3823 = vadd.f32 %v3821, %v3822
  %v3824 = vrot.slane %v3823, 2
  %v3825 = vadd.f32 %v3823, %v3824
  %v3826 = vrot.slane %v3825, 1
  %v3827 = vadd.f32 %v3825, %v3826
  %v3828 = vmul.f32 %v3827, %v3813
  %v3829 = vadd.f32 %v3828, 1e-05
  %v3830 = vrsqrt.pop %v3829
  %v3831 = vmul.f32 %v3830, %v3801
  %v3832 = vlaneseq
  %v3833 = vshrl.u32 %v3832, 7
  %v3834 = vsub.s32 0, %v3833
  %v3835 = vrot.slane %v3831, %v3834
  %v3836 = vmul.f32 %v3815, %v3835
  %v3837 = vmul.f32 %v3816, %v3835
  %v3838 = vlaneseq
  %v3839 = vshrl.u32 %v3838, 7
  %v3840 = vsub.s32 0, %v3839
  %v3841 = vrot.slane %v3802, %v3840
  %v3842 = vadd.f32 %v3836, %v3841
  %v3843 = vadd.f32 %v3837, %v3841
  %v3844 = vmax.f32 %v3842, 0.0
  %v3845 = vmax.f32 %v3843, 0.0
  %v3846 = vrot.slane %v3844, 7
  %v3847 = vrot.slane %v3845, 7
  %v3848 = vsel %vm51, 0.0, %v3846
  %v3849 = vsel %vm51, 0.0, %v3847
  %v3850 = vrot.slane %v3844, 1
  %v3851 = vrot.slane %v3845, 1
  %v3852 = vsel %vm3680, 0.0, %v3850
  %v3853 = vsel %vm3680, 0.0, %v3851
  %3856 = vrot.lane.b32.xlu0 %v3844, 8
  %v3857 = vpop.permute.xlu0 %3856
  %3858 = vrot.lane.b32.xlu0 %v3845, 8
  %v3859 = vpop.permute.xlu0 %3858
  %3864 = vrot.lane.b32.xlu0 %v3852, 16
  %v3865 = vpop.permute.xlu0 %3864
  %3866 = vrot.lane.b32.xlu0 %v3853, 16
  %v3867 = vpop.permute.xlu0 %3866
  %v3870 = vsel %vm3803, %v3848, %v3857
  %v3871 = vsel %vm3803, %v3849, %v3859
  %v3872 = vsel %vm2683, %v3870, %v3865
  %v3873 = vsel %vm2683, %v3871, %v3867
  %v3874 = vld [vmem:[%s3 + $0x200] sm:$0xff]
  %v3875 = vld [vmem:[%s3 + $0x208] sm:$0xff]
  %v3876 = vld [vmem:[%s3 + $0x210] sm:$0xff]
  %v3877 = vld [vmem:[%s2 + $0xd] sm:$0x1]
  %v3878 = vlaneseq
  %v3879 = vshrl.u32 %v3878, 7
  %v3880 = vsub.s32 0, %v3879
  %v3881 = vrot.slane %v3877, %v3880
  %vm3882 = vcmask 195584
  %v3884 = vsel %vm3882, %v3872, 0
  %v3887 = vsel %vm3882, %v3873, 0
  %3889 = vmatprep.subr.mxu0 0.0
  %3890 = vmatpush1.msra.mxu0 %v3874
  %3891 = vmatprep.subr.mxu0 0.0
  %3892 = vmatpush1.msra.mxu0 %v3875
  %3893 = vmatprep.subr.mxu0 0.0
  %3894 = vmatpush1.msra.mxu0 %v3876
  %3895 = vmatprep.subr.mxu0 0.0
  %3896 = vmatpush1.msra.mxu0 0.0
  %3897 = vmatprep.subr.mxu0 0.0
  %3898 = vmatpush1.msra.mxu0 0.0
  %3899 = vmatprep.subr.mxu0 0.0
  %3900 = vmatpush1.msra.mxu0 0.0
  %3901 = vmatprep.subr.mxu0 0.0
  %3902 = vmatpush1.msra.mxu0 0.0
  %3903 = vmatprep.subr.mxu0 0.0
  %3904 = vmatpush1.msra.mxu0 0.0
  %3905 = vmatprep.subr.mxu0 0.0
  %3906 = vmatpush1.msra.mxu0 0.0
  %3907 = vmatprep.subr.mxu0 0.0
  %3908 = vmatpush1.msra.mxu0 0.0
  %3909 = vmatprep.subr.mxu0 0.0
  %3910 = vmatpush1.msra.mxu0 0.0
  %3911 = vmatprep.subr.mxu0 0.0
  %3912 = vmatpush1.msra.mxu0 0.0
  %3913 = vmatprep.subr.mxu0 0.0
  %3914 = vmatpush1.msra.mxu0 0.0
  %3915 = vmatprep.subr.mxu0 0.0
  %3916 = vmatpush1.msra.mxu0 0.0
  %3917 = vmatprep.subr.mxu0 0.0
  %3918 = vmatpush1.msra.mxu0 0.0
  %3919 = vmatprep.subr.mxu0 0.0
  %3920 = vmatpush1.msra.mxu0 0.0
  %3921 = vmatprep.subr.mxu0 0.0
  %3922 = vmatpush1.msra.mxu0 0.0
  %3923 = vmatprep.subr.mxu0 0.0
  %3924 = vmatpush1.msra.mxu0 0.0
  %3925 = vmatprep.subr.mxu0 0.0
  %3926 = vmatpush1.msra.mxu0 0.0
  %3927 = vmatprep.subr.mxu0 0.0
  %3928 = vmatpush1.msra.mxu0 0.0
  %3929 = vmatprep.subr.mxu0 0.0
  %3930 = vmatpush1.msra.mxu0 0.0
  %3931 = vmatprep.subr.mxu0 0.0
  %3932 = vmatpush1.msra.mxu0 0.0
  %3933 = vmatprep.subr.mxu0 0.0
  %3934 = vmatpush1.msra.mxu0 0.0
  %3935 = vmatprep.subr.mxu0 0.0
  %3936 = vmatpush1.msra.mxu0 0.0
  %3937 = vmatprep.subr.mxu0 0.0
  %3938 = vmatpush1.msra.mxu0 0.0
  %3939 = vmatprep.subr.mxu0 0.0
  %3940 = vmatpush1.msra.mxu0 0.0
  %3941 = vmatprep.subr.mxu0 0.0
  %3942 = vmatpush1.msra.mxu0 0.0
  %3943 = vmatprep.subr.mxu0 0.0
  %3944 = vmatpush1.msra.mxu0 0.0
  %3945 = vmatprep.subr.mxu0 0.0
  %3946 = vmatpush1.msra.mxu0 0.0
  %3947 = vmatprep.subr.mxu0 0.0
  %3948 = vmatpush1.msra.mxu0 0.0
  %3949 = vmatprep.subr.mxu0 0.0
  %3950 = vmatpush1.msra.mxu0 0.0
  %3951 = vmatprep.subr.mxu0 0.0
  %3952 = vmatpush1.msra.mxu0 0.0
  %3953 = vmatprep.mubr.f32.mxu0 0.0
  %3954 = vmatmul.mubr.f32.gmra.mrb[0].mxu0 %v3884
  %v3955 = vpop.f32.mrb[0].mxu0
  %v3956 = vadd.f32 %v3881, %v3955
  %v3957 = vpop.f32.mrb[0].mxu0
  %3958 = vmatprep.mubr.f32.mxu0 0.0
  %3959 = vmatmul.mubr.f32.gmra.mrb[0].mxu0 %v3887
  %v3960 = vpop.f32.mrb[0].mxu0
  %v3961 = vadd.f32 %v3881, %v3960
  %v3962 = vpop.f32.mrb[0].mxu0
  %3963 = vdwg.mxu0
  %v3964 = vld [vmem:[%s3 + $0x218] sm:$0xff]
  %v3965 = vld [vmem:[%s3 + $0x220] sm:$0xff]
  %v3966 = vld [vmem:[%s3 + $0x228] sm:$0xff]
  %v3967 = vld [vmem:[%s3 + $0x230] sm:$0xff]
  %v3968 = vld [vmem:[%s2 + $0xe] sm:$0x1]
  %v3969 = vlaneseq
  %v3970 = vshrl.u32 %v3969, 7
  %v3971 = vsub.s32 0, %v3970
  %v3972 = vrot.slane %v3968, %v3971
  %v3973 = vsel %vm333, %v3666, 0
  %v3975 = vsel %vm333, %v3673, 0
  %3977 = vmatprep.subr.mxu0 0.0
  %3978 = vmatpush1.msra.mxu0 %v3964
  %3979 = vmatprep.subr.mxu0 0.0
  %3980 = vmatpush1.msra.mxu0 %v3965
  %3981 = vmatprep.subr.mxu0 0.0
  %3982 = vmatpush1.msra.mxu0 %v3966
  %3983 = vmatprep.subr.mxu0 0.0
  %3984 = vmatpush1.msra.mxu0 %v3967
  %3985 = vmatprep.subr.mxu0 0.0
  %3986 = vmatpush1.msra.mxu0 0.0
  %3987 = vmatprep.subr.mxu0 0.0
  %3988 = vmatpush1.msra.mxu0 0.0
  %3989 = vmatprep.subr.mxu0 0.0
  %3990 = vmatpush1.msra.mxu0 0.0
  %3991 = vmatprep.subr.mxu0 0.0
  %3992 = vmatpush1.msra.mxu0 0.0
  %3993 = vmatprep.subr.mxu0 0.0
  %3994 = vmatpush1.msra.mxu0 0.0
  %3995 = vmatprep.subr.mxu0 0.0
  %3996 = vmatpush1.msra.mxu0 0.0
  %3997 = vmatprep.subr.mxu0 0.0
  %3998 = vmatpush1.msra.mxu0 0.0
  %3999 = vmatprep.subr.mxu0 0.0
  %4000 = vmatpush1.msra.mxu0 0.0
  %4001 = vmatprep.subr.mxu0 0.0
  %4002 = vmatpush1.msra.mxu0 0.0
  %4003 = vmatprep.subr.mxu0 0.0
  %4004 = vmatpush1.msra.mxu0 0.0
  %4005 = vmatprep.subr.mxu0 0.0
  %4006 = vmatpush1.msra.mxu0 0.0
  %4007 = vmatprep.subr.mxu0 0.0
  %4008 = vmatpush1.msra.mxu0 0.0
  %4009 = vmatprep.subr.mxu0 0.0
  %4010 = vmatpush1.msra.mxu0 0.0
  %4011 = vmatprep.subr.mxu0 0.0
  %4012 = vmatpush1.msra.mxu0 0.0
  %4013 = vmatprep.subr.mxu0 0.0
  %4014 = vmatpush1.msra.mxu0 0.0
  %4015 = vmatprep.subr.mxu0 0.0
  %4016 = vmatpush1.msra.mxu0 0.0
  %4017 = vmatprep.subr.mxu0 0.0
  %4018 = vmatpush1.msra.mxu0 0.0
  %4019 = vmatprep.subr.mxu0 0.0
  %4020 = vmatpush1.msra.mxu0 0.0
  %4021 = vmatprep.subr.mxu0 0.0
  %4022 = vmatpush1.msra.mxu0 0.0
  %4023 = vmatprep.subr.mxu0 0.0
  %4024 = vmatpush1.msra.mxu0 0.0
  %4025 = vmatprep.subr.mxu0 0.0
  %4026 = vmatpush1.msra.mxu0 0.0
  %4027 = vmatprep.subr.mxu0 0.0
  %4028 = vmatpush1.msra.mxu0 0.0
  %4029 = vmatprep.subr.mxu0 0.0
  %4030 = vmatpush1.msra.mxu0 0.0
  %4031 = vmatprep.subr.mxu0 0.0
  %4032 = vmatpush1.msra.mxu0 0.0
  %4033 = vmatprep.subr.mxu0 0.0
  %4034 = vmatpush1.msra.mxu0 0.0
  %4035 = vmatprep.subr.mxu0 0.0
  %4036 = vmatpush1.msra.mxu0 0.0
  %4037 = vmatprep.subr.mxu0 0.0
  %4038 = vmatpush1.msra.mxu0 0.0
  %4039 = vmatprep.subr.mxu0 0.0
  %4040 = vmatpush1.msra.mxu0 0.0
  %4041 = vmatprep.mubr.f32.mxu0 0.0
  %4042 = vmatmul.mubr.f32.gmra.mrb[0].mxu0 %v3973
  %v4043 = vpop.f32.mrb[0].mxu0
  %v4044 = vadd.f32 %v3972, %v4043
  %v4045 = vpop.f32.mrb[0].mxu0
  %4046 = vmatprep.mubr.f32.mxu0 0.0
  %4047 = vmatmul.mubr.f32.gmra.mrb[0].mxu0 %v3975
  %v4048 = vpop.f32.mrb[0].mxu0
  %v4049 = vadd.f32 %v3972, %v4048
  %v4050 = vpop.f32.mrb[0].mxu0
  %4051 = vdwg.mxu0
  %v4052 = vadd.f32 %v3956, %v4044
  %v4053 = vadd.f32 %v3961, %v4049
  %v4054 = vcombine.high %v4052, 0.0
  %v4056 = vunpack.c.l.s4 1983009808
  %v4057 = vunpack.c.0.s8 %v4056
  %v4058 = vlaneseq
  %v4059 = vshrl.u32 %v4058, 7
  %v4060 = vsub.s32 %v4057, %v4059
  %v4061 = vrot.slane %v4052, %v4060
  %v4063 = vunpack.c.l.s4 1983009808
  %v4064 = vunpack.c.0.s8 %v4063
  %v4065 = vlaneseq
  %v4066 = vshrl.u32 %v4065, 7
  %v4067 = vsub.s32 %v4064, %v4066
  %v4068 = vrot.slane %v4054, %v4067
  %v4069 = vcombine.high %v4053, 0.0
  %v4071 = vunpack.c.l.s4 1983009808
  %v4072 = vunpack.c.0.s8 %v4071
  %v4073 = vlaneseq
  %v4074 = vshrl.u32 %v4073, 7
  %v4075 = vsub.s32 %v4072, %v4074
  %v4076 = vrot.slane %v4053, %v4075
  %v4078 = vunpack.c.l.s4 1983009808
  %v4079 = vunpack.c.0.s8 %v4078
  %v4080 = vlaneseq
  %v4081 = vshrl.u32 %v4080, 7
  %v4082 = vsub.s32 %v4079, %v4081
  %v4083 = vrot.slane %v4069, %v4082
  %v4084 = vcombine.low %v4061, %v4076
  %v4085 = vcombine.high %v4061, %v4076
  %v4087 = vunpack.c.l.s4 1934713408
  %v4088 = vunpack.c.0.s8 %v4087
  %v4089 = vlaneseq
  %v4090 = vshrl.u32 %v4089, 7
  %v4091 = vsub.s32 %v4088, %v4090
  %v4092 = vrot.slane %v4084, %v4091
  %v4094 = vunpack.c.l.s4 1934713408
  %v4095 = vunpack.c.0.s8 %v4094
  %v4096 = vlaneseq
  %v4097 = vshrl.u32 %v4096, 7
  %v4098 = vsub.s32 %v4095, %v4097
  %v4099 = vrot.slane %v4085, %v4098
  %v4100 = vcombine.low %v4068, %v4083
  %v4101 = vcombine.high %v4068, %v4083
  %v4103 = vunpack.c.l.s4 1934713408
  %v4104 = vunpack.c.0.s8 %v4103
  %v4105 = vlaneseq
  %v4106 = vshrl.u32 %v4105, 7
  %v4107 = vsub.s32 %v4104, %v4106
  %v4108 = vrot.slane %v4100, %v4107
  %v4110 = vunpack.c.l.s4 1934713408
  %v4111 = vunpack.c.0.s8 %v4110
  %v4112 = vlaneseq
  %v4113 = vshrl.u32 %v4112, 7
  %v4114 = vsub.s32 %v4111, %v4113
  %v4115 = vrot.slane %v4101, %v4114
  %v4116 = vcombine.high %v4092, 0.0
  %v4117 = vcombine.high %v4099, 0.0
  %v4118 = vcombine.high %v4108, 0.0
  %v4119 = vcombine.high %v4115, 0.0
  %4121 = vrot.lane.b32.xlu0 %v4116, 16
  %v4122 = vpop.permute.xlu0 %4121
  %4125 = vrot.lane.b32.xlu0 %v4099, 32
  %v4126 = vpop.permute.xlu0 %4125
  %4129 = vrot.lane.b32.xlu0 %v4117, 48
  %v4130 = vpop.permute.xlu0 %4129
  %4133 = vrot.lane.b32.xlu0 %v4108, 64
  %v4134 = vpop.permute.xlu0 %4133
  %4137 = vrot.lane.b32.xlu0 %v4118, 80
  %v4138 = vpop.permute.xlu0 %4137
  %4141 = vrot.lane.b32.xlu0 %v4115, 96
  %v4142 = vpop.permute.xlu0 %4141
  %4145 = vrot.lane.b32.xlu0 %v4119, 112
  %v4146 = vpop.permute.xlu0 %4145
  %v4148 = vsel %vm2683, %v4092, %v4122
  %v4149 = vsel %vm333, %v4148, %v4126
  %v4150 = vsel %vm2819, %v4149, %v4130
  %v4151 = vsel %vm550, %v4150, %v4134
  %vm4152 = vcmask 654336
  %v4153 = vsel %vm4152, %v4151, %v4138
  %v4154 = vsel %vm576, %v4153, %v4142
  %vm4155 = vcmask 916480
  %v4156 = vsel %vm4155, %v4154, %v4146
  %v4157 = vld [vmem:[%s6] sm:$0xff]
  %v4158 = vld [vmem:[%s6 + $0x8] sm:$0xff]
  %v4159 = vld [vmem:[%s6 + $0x10] sm:$0xff]
  %v4160 = vld [vmem:[%s6 + $0x18] sm:$0xff]
  %v4161 = vld [vmem:[%s6 + $0x20] sm:$0xff]
  %v4162 = vld [vmem:[%s6 + $0x28] sm:$0xff]
  %v4163 = vld [vmem:[%s6 + $0x30] sm:$0xff]
  %v4164 = vld [vmem:[%s6 + $0x38] sm:$0xff]
  %v4165 = vld [vmem:[%s6 + $0x40] sm:$0xff]
  %v4166 = vld [vmem:[%s6 + $0x48] sm:$0xff]
  %v4167 = vld [vmem:[%s6 + $0x50] sm:$0xff]
  %v4168 = vld [vmem:[%s6 + $0x58] sm:$0xff]
  %v4169 = vld [vmem:[%s6 + $0x60] sm:$0xff]
  %v4170 = vld [vmem:[%s6 + $0x68] sm:$0xff]
  %v4171 = vld [vmem:[%s6 + $0x70] sm:$0xff]
  %v4172 = vld [vmem:[%s6 + $0x78] sm:$0xff]
  %v4173 = vld [vmem:[%s2 + $0x11] sm:$0x1]
  %v4174 = vlaneseq
  %v4175 = vshrl.u32 %v4174, 7
  %v4176 = vsub.s32 0, %v4175
  %v4177 = vrot.slane %v4173, %v4176
  %4178 = vmatprep.subr.mxu0 0.0
  %4179 = vmatpush1.msra.mxu0 %v4157
  %4180 = vmatprep.subr.mxu0 0.0
  %4181 = vmatpush1.msra.mxu0 %v4158
  %4182 = vmatprep.subr.mxu0 0.0
  %4183 = vmatpush1.msra.mxu0 %v4159
  %4184 = vmatprep.subr.mxu0 0.0
  %4185 = vmatpush1.msra.mxu0 %v4160
  %4186 = vmatprep.subr.mxu0 0.0
  %4187 = vmatpush1.msra.mxu0 %v4161
  %4188 = vmatprep.subr.mxu0 0.0
  %4189 = vmatpush1.msra.mxu0 %v4162
  %4190 = vmatprep.subr.mxu0 0.0
  %4191 = vmatpush1.msra.mxu0 %v4163
  %4192 = vmatprep.subr.mxu0 0.0
  %4193 = vmatpush1.msra.mxu0 %v4164
  %4194 = vmatprep.subr.mxu0 0.0
  %4195 = vmatpush1.msra.mxu0 %v4165
  %4196 = vmatprep.subr.mxu0 0.0
  %4197 = vmatpush1.msra.mxu0 %v4166
  %4198 = vmatprep.subr.mxu0 0.0
  %4199 = vmatpush1.msra.mxu0 %v4167
  %4200 = vmatprep.subr.mxu0 0.0
  %4201 = vmatpush1.msra.mxu0 %v4168
  %4202 = vmatprep.subr.mxu0 0.0
  %4203 = vmatpush1.msra.mxu0 %v4169
  %4204 = vmatprep.subr.mxu0 0.0
  %4205 = vmatpush1.msra.mxu0 %v4170
  %4206 = vmatprep.subr.mxu0 0.0
  %4207 = vmatpush1.msra.mxu0 %v4171
  %4208 = vmatprep.subr.mxu0 0.0
  %4209 = vmatpush1.msra.mxu0 %v4172
  %4210 = vmatprep.subr.mxu0 0.0
  %4211 = vmatpush1.msra.mxu0 0.0
  %4212 = vmatprep.subr.mxu0 0.0
  %4213 = vmatpush1.msra.mxu0 0.0
  %4214 = vmatprep.subr.mxu0 0.0
  %4215 = vmatpush1.msra.mxu0 0.0
  %4216 = vmatprep.subr.mxu0 0.0
  %4217 = vmatpush1.msra.mxu0 0.0
  %4218 = vmatprep.subr.mxu0 0.0
  %4219 = vmatpush1.msra.mxu0 0.0
  %4220 = vmatprep.subr.mxu0 0.0
  %4221 = vmatpush1.msra.mxu0 0.0
  %4222 = vmatprep.subr.mxu0 0.0
  %4223 = vmatpush1.msra.mxu0 0.0
  %4224 = vmatprep.subr.mxu0 0.0
  %4225 = vmatpush1.msra.mxu0 0.0
  %4226 = vmatprep.subr.mxu0 0.0
  %4227 = vmatpush1.msra.mxu0 0.0
  %4228 = vmatprep.subr.mxu0 0.0
  %4229 = vmatpush1.msra.mxu0 0.0
  %4230 = vmatprep.subr.mxu0 0.0
  %4231 = vmatpush1.msra.mxu0 0.0
  %4232 = vmatprep.subr.mxu0 0.0
  %4233 = vmatpush1.msra.mxu0 0.0
  %4234 = vmatprep.subr.mxu0 0.0
  %4235 = vmatpush1.msra.mxu0 0.0
  %4236 = vmatprep.subr.mxu0 0.0
  %4237 = vmatpush1.msra.mxu0 0.0
  %4238 = vmatprep.subr.mxu0 0.0
  %4239 = vmatpush1.msra.mxu0 0.0
  %4240 = vmatprep.subr.mxu0 0.0
  %4241 = vmatpush1.msra.mxu0 0.0
  %4242 = vmatprep.mubr.f32.mxu0 0.0
  %4243 = vmatmul.mubr.f32.gmra.mrb[0].mxu0 %v4156
  %v4244 = vpop.f32.mrb[0].mxu0
  %v4245 = vadd.f32 %v4177, %v4244
  %v4246 = vpop.f32.mrb[0].mxu0
  %4247 = vdwg.mxu0
  %v4248 = vld [vmem:[%s1] sm:$0x3]
  %v4249 = vmul.f32 %v4245, 0.5
  %v4250 = vmul.f32 %v4249, 1.442695
  %v4251 = vpow.pop %v4250
  %4253 = vrot.lane.b32.xlu0 %v4251, 120
  %v4254 = vpop.permute.xlu0 %4253
  %v4256 = vmul.f32 %v4248, %v4254
  %v4257 = vadd.f32 %v4245, %v4256
  %v4258 = vmul.f32 %v3425, 0.5
  %v4259 = vmul.f32 %v4258, 1.442695
  %v4260 = vpow.pop %v4259
  %4262 = vrot.lane.b32.xlu0 %v4260, 120
  %v4263 = vpop.permute.xlu0 %4262
  %v4265 = vmul.f32 %v4248, %v4263
  %4267 = vrot.lane.b32.xlu0 %v4265, 120
  %v4268 = vpop.permute.xlu0 %4267
  %v4270 = vadd.f32 %v3425, %v4268
  %v4271 = vmul.f32 %v2007, 0.5
  %v4272 = vmul.f32 %v4271, 1.442695
  %v4273 = vpow.pop %v4272
  %4275 = vrot.lane.b32.xlu0 %v4273, 120
  %v4276 = vpop.permute.xlu0 %4275
  %v4278 = vmul.f32 %v4248, %v4276
  %4280 = vrot.lane.b32.xlu0 %v4278, 104
  %v4281 = vpop.permute.xlu0 %4280
  %v4283 = vadd.f32 %v2007, %v4281
  %v4284 = vld [vmem:[%s7] sm:$0xff]
  %v4285 = vld [vmem:[%s7 + $0x8] sm:$0x1]
  %v4286 = vlaneseq
  %v4287 = vshrl.u32 %v4286, 7
  %v4288 = vsub.s32 0, %v4287
  %v4289 = vrot.slane %v4285, %v4288
  %v4291 = vsel %vm3803, %v4257, 0
  %4293 = vmatprep.subr.mxu0 0.0
  %4294 = vmatpush1.msra.mxu0 %v4284
  %4295 = vmatprep.subr.mxu0 0.0
  %4296 = vmatpush1.msra.mxu0 0.0
  %4297 = vmatprep.subr.mxu0 0.0
  %4298 = vmatpush1.msra.mxu0 0.0
  %4299 = vmatprep.subr.mxu0 0.0
  %4300 = vmatpush1.msra.mxu0 0.0
  %4301 = vmatprep.subr.mxu0 0.0
  %4302 = vmatpush1.msra.mxu0 0.0
  %4303 = vmatprep.subr.mxu0 0.0
  %4304 = vmatpush1.msra.mxu0 0.0
  %4305 = vmatprep.subr.mxu0 0.0
  %4306 = vmatpush1.msra.mxu0 0.0
  %4307 = vmatprep.subr.mxu0 0.0
  %4308 = vmatpush1.msra.mxu0 0.0
  %4309 = vmatprep.subr.mxu0 0.0
  %4310 = vmatpush1.msra.mxu0 0.0
  %4311 = vmatprep.subr.mxu0 0.0
  %4312 = vmatpush1.msra.mxu0 0.0
  %4313 = vmatprep.subr.mxu0 0.0
  %4314 = vmatpush1.msra.mxu0 0.0
  %4315 = vmatprep.subr.mxu0 0.0
  %4316 = vmatpush1.msra.mxu0 0.0
  %4317 = vmatprep.subr.mxu0 0.0
  %4318 = vmatpush1.msra.mxu0 0.0
  %4319 = vmatprep.subr.mxu0 0.0
  %4320 = vmatpush1.msra.mxu0 0.0
  %4321 = vmatprep.subr.mxu0 0.0
  %4322 = vmatpush1.msra.mxu0 0.0
  %4323 = vmatprep.subr.mxu0 0.0
  %4324 = vmatpush1.msra.mxu0 0.0
  %4325 = vmatprep.subr.mxu0 0.0
  %4326 = vmatpush1.msra.mxu0 0.0
  %4327 = vmatprep.subr.mxu0 0.0
  %4328 = vmatpush1.msra.mxu0 0.0
  %4329 = vmatprep.subr.mxu0 0.0
  %4330 = vmatpush1.msra.mxu0 0.0
  %4331 = vmatprep.subr.mxu0 0.0
  %4332 = vmatpush1.msra.mxu0 0.0
  %4333 = vmatprep.subr.mxu0 0.0
  %4334 = vmatpush1.msra.mxu0 0.0
  %4335 = vmatprep.subr.mxu0 0.0
  %4336 = vmatpush1.msra.mxu0 0.0
  %4337 = vmatprep.subr.mxu0 0.0
  %4338 = vmatpush1.msra.mxu0 0.0
  %4339 = vmatprep.subr.mxu0 0.0
  %4340 = vmatpush1.msra.mxu0 0.0
  %4341 = vmatprep.subr.mxu0 0.0
  %4342 = vmatpush1.msra.mxu0 0.0
  %4343 = vmatprep.subr.mxu0 0.0
  %4344 = vmatpush1.msra.mxu0 0.0
  %4345 = vmatprep.subr.mxu0 0.0
  %4346 = vmatpush1.msra.mxu0 0.0
  %4347 = vmatprep.subr.mxu0 0.0
  %4348 = vmatpush1.msra.mxu0 0.0
  %4349 = vmatprep.subr.mxu0 0.0
  %4350 = vmatpush1.msra.mxu0 0.0
  %4351 = vmatprep.subr.mxu0 0.0
  %4352 = vmatpush1.msra.mxu0 0.0
  %4353 = vmatprep.subr.mxu0 0.0
  %4354 = vmatpush1.msra.mxu0 0.0
  %4355 = vmatprep.subr.mxu0 0.0
  %4356 = vmatpush1.msra.mxu0 0.0
  %4357 = vmatprep.mubr.f32.mxu0 0.0
  %4358 = vmatmul.mubr.f32.gmra.mrb[0].mxu0 %v4291
  %v4359 = vpop.f32.mrb[0].mxu0
  %v4360 = vadd.f32 %v4289, %v4359
  %v4361 = vpop.f32.mrb[0].mxu0
  %4362 = vdwg.mxu0
  %4364 = vrot.lane.b32.xlu0 %v4360, 112
  %v4365 = vpop.permute.xlu0 %4364
  %4367 = vrot.lane.b32.xlu0 %v4360, 96
  %v4368 = vpop.permute.xlu0 %4367
  %4370 = vrot.lane.b32.xlu0 %v4360, 80
  %v4371 = vpop.permute.xlu0 %4370
  %4373 = vrot.lane.b32.xlu0 %v4360, 64
  %v4374 = vpop.permute.xlu0 %4373
  %4376 = vrot.lane.b32.xlu0 %v4360, 48
  %v4377 = vpop.permute.xlu0 %4376
  %4379 = vrot.lane.b32.xlu0 %v4360, 32
  %v4380 = vpop.permute.xlu0 %4379
  %4382 = vrot.lane.b32.xlu0 %v4360, 16
  %v4383 = vpop.permute.xlu0 %4382
  %v4385 = vcombine.low %v4360, %v4368
  %v4387 = vunpack.c.l.s4 1983009808
  %v4388 = vunpack.c.0.s8 %v4387
  %v4389 = vlaneseq
  %v4390 = vshrl.u32 %v4389, 7
  %v4391 = vsub.s32 %v4388, %v4390
  %v4392 = vrot.slane %v4385, %v4391
  %v4393 = vcombine.low %v4365, %v4371
  %v4395 = vunpack.c.l.s4 1983009808
  %v4396 = vunpack.c.0.s8 %v4395
  %v4397 = vlaneseq
  %v4398 = vshrl.u32 %v4397, 7
  %v4399 = vsub.s32 %v4396, %v4398
  %v4400 = vrot.slane %v4393, %v4399
  %v4401 = vcombine.low %v4374, %v4380
  %v4403 = vunpack.c.l.s4 1983009808
  %v4404 = vunpack.c.0.s8 %v4403
  %v4405 = vlaneseq
  %v4406 = vshrl.u32 %v4405, 7
  %v4407 = vsub.s32 %v4404, %v4406
  %v4408 = vrot.slane %v4401, %v4407
  %v4409 = vcombine.low %v4377, %v4383
  %v4411 = vunpack.c.l.s4 1983009808
  %v4412 = vunpack.c.0.s8 %v4411
  %v4413 = vlaneseq
  %v4414 = vshrl.u32 %v4413, 7
  %v4415 = vsub.s32 %v4412, %v4414
  %v4416 = vrot.slane %v4409, %v4415
  %v4417 = vcombine.low %v4392, %v4400
  %v4419 = vunpack.c.l.s4 1934713408
  %v4420 = vunpack.c.0.s8 %v4419
  %v4421 = vlaneseq
  %v4422 = vshrl.u32 %v4421, 7
  %v4423 = vsub.s32 %v4420, %v4422
  %v4424 = vrot.slane %v4417, %v4423
  %v4425 = vcombine.low %v4408, %v4416
  %v4427 = vunpack.c.l.s4 1934713408
  %v4428 = vunpack.c.0.s8 %v4427
  %v4429 = vlaneseq
  %v4430 = vshrl.u32 %v4429, 7
  %v4431 = vsub.s32 %v4428, %v4430
  %v4432 = vrot.slane %v4425, %v4431
  %v4433 = vcombine.low %v4424, %v4432
  %v4434 = vcombine.high %v4424, %v4432
  %v4435 = vrot.slane %v4433, 7
  %v4436 = vrot.slane %v4434, 7
  %v4437 = vsel %vm51, 0.0, %v4435
  %v4438 = vsel %vm51, 0.0, %v4436
  %v4439 = vrot.slane %v4433, 1
  %v4440 = vrot.slane %v4434, 1
  %v4441 = vsel %vm3680, 0.0, %v4439
  %v4442 = vsel %vm3680, 0.0, %v4440
  %4445 = vrot.lane.b32.xlu0 %v4433, 16
  %v4446 = vpop.permute.xlu0 %4445
  %4447 = vrot.lane.b32.xlu0 %v4434, 16
  %v4448 = vpop.permute.xlu0 %4447
  %4453 = vrot.lane.b32.xlu0 %v4441, 32
  %v4454 = vpop.permute.xlu0 %4453
  %4455 = vrot.lane.b32.xlu0 %v4442, 32
  %v4456 = vpop.permute.xlu0 %4455
  %v4459 = vsel %vm2683, %v4437, %v4446
  %v4460 = vsel %vm2683, %v4438, %v4448
  %v4461 = vsel %vm333, %v4459, %v4454
  %v4462 = vsel %vm333, %v4460, %v4456
  %v4463 = vld [vmem:[%s3 + $0x238] sm:$0xff]
  %v4464 = vld [vmem:[%s3 + $0x240] sm:$0xff]
  %v4465 = vld [vmem:[%s3 + $0x248] sm:$0xff]
  %v4466 = vld [vmem:[%s3 + $0x250] sm:$0xff]
  %v4467 = vld [vmem:[%s3 + $0x258] sm:$0xff]
  %v4468 = vld [vmem:[%s3 + $0x260] sm:$0xff]
  %v4469 = vld [vmem:[%s2 + $0x12] sm:$0x1]
  %v4470 = vlaneseq
  %v4471 = vshrl.u32 %v4470, 7
  %v4472 = vsub.s32 0, %v4471
  %v4473 = vrot.slane %v4469, %v4472
  %v4475 = vsel %vm2819, %v4461, 0
  %v4478 = vsel %vm2819, %v4462, 0
  %4480 = vmatprep.subr.mxu0 0.0
  %4481 = vmatpush1.msra.mxu0 %v4463
  %4482 = vmatprep.subr.mxu0 0.0
  %4483 = vmatpush1.msra.mxu0 %v4464
  %4484 = vmatprep.subr.mxu0 0.0
  %4485 = vmatpush1.msra.mxu0 %v4465
  %4486 = vmatprep.subr.mxu0 0.0
  %4487 = vmatpush1.msra.mxu0 %v4466
  %4488 = vmatprep.subr.mxu0 0.0
  %4489 = vmatpush1.msra.mxu0 %v4467
  %4490 = vmatprep.subr.mxu0 0.0
  %4491 = vmatpush1.msra.mxu0 %v4468
  %4492 = vmatprep.subr.mxu0 0.0
  %4493 = vmatpush1.msra.mxu0 0.0
  %4494 = vmatprep.subr.mxu0 0.0
  %4495 = vmatpush1.msra.mxu0 0.0
  %4496 = vmatprep.subr.mxu0 0.0
  %4497 = vmatpush1.msra.mxu0 0.0
  %4498 = vmatprep.subr.mxu0 0.0
  %4499 = vmatpush1.msra.mxu0 0.0
  %4500 = vmatprep.subr.mxu0 0.0
  %4501 = vmatpush1.msra.mxu0 0.0
  %4502 = vmatprep.subr.mxu0 0.0
  %4503 = vmatpush1.msra.mxu0 0.0
  %4504 = vmatprep.subr.mxu0 0.0
  %4505 = vmatpush1.msra.mxu0 0.0
  %4506 = vmatprep.subr.mxu0 0.0
  %4507 = vmatpush1.msra.mxu0 0.0
  %4508 = vmatprep.subr.mxu0 0.0
  %4509 = vmatpush1.msra.mxu0 0.0
  %4510 = vmatprep.subr.mxu0 0.0
  %4511 = vmatpush1.msra.mxu0 0.0
  %4512 = vmatprep.subr.mxu0 0.0
  %4513 = vmatpush1.msra.mxu0 0.0
  %4514 = vmatprep.subr.mxu0 0.0
  %4515 = vmatpush1.msra.mxu0 0.0
  %4516 = vmatprep.subr.mxu0 0.0
  %4517 = vmatpush1.msra.mxu0 0.0
  %4518 = vmatprep.subr.mxu0 0.0
  %4519 = vmatpush1.msra.mxu0 0.0
  %4520 = vmatprep.subr.mxu0 0.0
  %4521 = vmatpush1.msra.mxu0 0.0
  %4522 = vmatprep.subr.mxu0 0.0
  %4523 = vmatpush1.msra.mxu0 0.0
  %4524 = vmatprep.subr.mxu0 0.0
  %4525 = vmatpush1.msra.mxu0 0.0
  %4526 = vmatprep.subr.mxu0 0.0
  %4527 = vmatpush1.msra.mxu0 0.0
  %4528 = vmatprep.subr.mxu0 0.0
  %4529 = vmatpush1.msra.mxu0 0.0
  %4530 = vmatprep.subr.mxu0 0.0
  %4531 = vmatpush1.msra.mxu0 0.0
  %4532 = vmatprep.subr.mxu0 0.0
  %4533 = vmatpush1.msra.mxu0 0.0
  %4534 = vmatprep.subr.mxu0 0.0
  %4535 = vmatpush1.msra.mxu0 0.0
  %4536 = vmatprep.subr.mxu0 0.0
  %4537 = vmatpush1.msra.mxu0 0.0
  %4538 = vmatprep.subr.mxu0 0.0
  %4539 = vmatpush1.msra.mxu0 0.0
  %4540 = vmatprep.subr.mxu0 0.0
  %4541 = vmatpush1.msra.mxu0 0.0
  %4542 = vmatprep.subr.mxu0 0.0
  %4543 = vmatpush1.msra.mxu0 0.0
  %4544 = vmatprep.mubr.f32.mxu0 0.0
  %4545 = vmatmul.mubr.f32.gmra.mrb[0].mxu0 %v4475
  %v4546 = vpop.f32.mrb[0].mxu0
  %v4547 = vadd.f32 %v4473, %v4546
  %v4548 = vpop.f32.mrb[0].mxu0
  %4549 = vmatprep.mubr.f32.mxu0 0.0
  %4550 = vmatmul.mubr.f32.gmra.mrb[0].mxu0 %v4478
  %v4551 = vpop.f32.mrb[0].mxu0
  %v4552 = vadd.f32 %v4473, %v4551
  %v4553 = vpop.f32.mrb[0].mxu0
  %4554 = vdwg.mxu0
  %v4555 = vld [vmem:[%s2 + $0x13] sm:$0x1]
  %v4556 = vld [vmem:[%s2 + $0x14] sm:$0x1]
  %v4557 = vsel %vm333, %v4547, 0.0
  %v4558 = vsel %vm333, %v4552, 0.0
  %v4559 = vadd.f32 %v4557, %v4558
  %v4560 = vrot.slane %v4559, 4
  %v4561 = vadd.f32 %v4559, %v4560
  %v4562 = vrot.slane %v4561, 2
  %v4563 = vadd.f32 %v4561, %v4562
  %v4564 = vrot.slane %v4563, 1
  %v4565 = vadd.f32 %v4563, %v4564
  %v4566 = vmul.f32 %v4565, %v3813
  %v4567 = vsub.f32 %v4547, %v4566
  %v4568 = vsub.f32 %v4552, %v4566
  %v4569 = vmul.f32 %v4567, %v4567
  %v4570 = vmul.f32 %v4568, %v4568
  %v4571 = vsel %vm333, %v4569, 0.0
  %v4572 = vsel %vm333, %v4570, 0.0
  %v4573 = vadd.f32 %v4571, %v4572
  %v4574 = vrot.slane %v4573, 4
  %v4575 = vadd.f32 %v4573, %v4574
  %v4576 = vrot.slane %v4575, 2
  %v4577 = vadd.f32 %v4575, %v4576
  %v4578 = vrot.slane %v4577, 1
  %v4579 = vadd.f32 %v4577, %v4578
  %v4580 = vmul.f32 %v4579, %v3813
  %v4581 = vadd.f32 %v4580, 1e-05
  %v4582 = vrsqrt.pop %v4581
  %v4583 = vmul.f32 %v4582, %v4555
  %v4584 = vlaneseq
  %v4585 = vshrl.u32 %v4584, 7
  %v4586 = vsub.s32 0, %v4585
  %v4587 = vrot.slane %v4583, %v4586
  %v4588 = vmul.f32 %v4567, %v4587
  %v4589 = vmul.f32 %v4568, %v4587
  %v4590 = vlaneseq
  %v4591 = vshrl.u32 %v4590, 7
  %v4592 = vsub.s32 0, %v4591
  %v4593 = vrot.slane %v4556, %v4592
  %v4594 = vadd.f32 %v4588, %v4593
  %v4595 = vadd.f32 %v4589, %v4593
  %v4596 = vmax.f32 %v4594, 0.0
  %v4597 = vmax.f32 %v4595, 0.0
  %v4600 = vcombine.high %v4596, %v4596
  %v4602 = vunpack.c.l.s4 1966171168
  %v4603 = vunpack.c.0.s8 %v4602
  %v4604 = vlaneseq
  %v4605 = vshrl.u32 %v4604, 7
  %v4606 = vsub.s32 %v4603, %v4605
  %v4607 = vrot.slane %v4596, %v4606
  %v4609 = vunpack.c.l.s4 1966171168
  %v4610 = vunpack.c.0.s8 %v4609
  %v4611 = vlaneseq
  %v4612 = vshrl.u32 %v4611, 7
  %v4613 = vsub.s32 %v4610, %v4612
  %v4614 = vrot.slane %v4600, %v4613
  %v4615 = vcombine.high %v4607, %v4607
  %v4616 = vcombine.high %v4614, %v4614
  %v4618 = vunpack.c.l.s4 1966171168
  %v4619 = vunpack.c.0.s8 %v4618
  %v4620 = vlaneseq
  %v4621 = vshrl.u32 %v4620, 7
  %v4622 = vsub.s32 %v4619, %v4621
  %v4623 = vrot.slane %v4607, %v4622
  %v4625 = vunpack.c.l.s4 1966171168
  %v4626 = vunpack.c.0.s8 %v4625
  %v4627 = vlaneseq
  %v4628 = vshrl.u32 %v4627, 7
  %v4629 = vsub.s32 %v4626, %v4628
  %v4630 = vrot.slane %v4614, %v4629
  %v4632 = vunpack.c.l.s4 1966171168
  %v4633 = vunpack.c.0.s8 %v4632
  %v4634 = vlaneseq
  %v4635 = vshrl.u32 %v4634, 7
  %v4636 = vsub.s32 %v4633, %v4635
  %v4637 = vrot.slane %v4615, %v4636
  %v4639 = vunpack.c.l.s4 1966171168
  %v4640 = vunpack.c.0.s8 %v4639
  %v4641 = vlaneseq
  %v4642 = vshrl.u32 %v4641, 7
  %v4643 = vsub.s32 %v4640, %v4642
  %v4644 = vrot.slane %v4616, %v4643
  %v4645 = vcombine.high %v4623, %v4623
  %v4646 = vcombine.high %v4630, %v4630
  %v4647 = vcombine.high %v4637, %v4637
  %v4648 = vcombine.high %v4644, %v4644
  %v4649 = vcombine.high %v4597, %v4597
  %v4651 = vunpack.c.l.s4 1966171168
  %v4652 = vunpack.c.0.s8 %v4651
  %v4653 = vlaneseq
  %v4654 = vshrl.u32 %v4653, 7
  %v4655 = vsub.s32 %v4652, %v4654
  %v4656 = vrot.slane %v4597, %v4655
  %v4658 = vunpack.c.l.s4 1966171168
  %v4659 = vunpack.c.0.s8 %v4658
  %v4660 = vlaneseq
  %v4661 = vshrl.u32 %v4660, 7
  %v4662 = vsub.s32 %v4659, %v4661
  %v4663 = vrot.slane %v4649, %v4662
  %v4664 = vcombine.high %v4656, %v4656
  %v4665 = vcombine.high %v4663, %v4663
  %v4667 = vunpack.c.l.s4 1966171168
  %v4668 = vunpack.c.0.s8 %v4667
  %v4669 = vlaneseq
  %v4670 = vshrl.u32 %v4669, 7
  %v4671 = vsub.s32 %v4668, %v4670
  %v4672 = vrot.slane %v4656, %v4671
  %v4674 = vunpack.c.l.s4 1966171168
  %v4675 = vunpack.c.0.s8 %v4674
  %v4676 = vlaneseq
  %v4677 = vshrl.u32 %v4676, 7
  %v4678 = vsub.s32 %v4675, %v4677
  %v4679 = vrot.slane %v4663, %v4678
  %v4681 = vunpack.c.l.s4 1966171168
  %v4682 = vunpack.c.0.s8 %v4681
  %v4683 = vlaneseq
  %v4684 = vshrl.u32 %v4683, 7
  %v4685 = vsub.s32 %v4682, %v4684
  %v4686 = vrot.slane %v4664, %v4685
  %v4688 = vunpack.c.l.s4 1966171168
  %v4689 = vunpack.c.0.s8 %v4688
  %v4690 = vlaneseq
  %v4691 = vshrl.u32 %v4690, 7
  %v4692 = vsub.s32 %v4689, %v4691
  %v4693 = vrot.slane %v4665, %v4692
  %v4694 = vcombine.high %v4672, %v4672
  %v4695 = vcombine.high %v4679, %v4679
  %v4696 = vcombine.high %v4686, %v4686
  %v4697 = vcombine.high %v4693, %v4693
  %v4698 = vlaneseq
  %v4699 = vshrl.u32 %v4698, 7
  %v4700 = vsub.s32 0, %v4699
  %v4701 = vrot.slane %v4623, %v4700
  %v4702 = vlaneseq
  %v4703 = vshrl.u32 %v4702, 7
  %v4704 = vsub.s32 0, %v4703
  %v4705 = vrot.slane %v4637, %v4704
  %v4706 = vlaneseq
  %v4707 = vshrl.u32 %v4706, 7
  %v4708 = vsub.s32 0, %v4707
  %v4709 = vrot.slane %v4645, %v4708
  %v4710 = vlaneseq
  %v4711 = vshrl.u32 %v4710, 7
  %v4712 = vsub.s32 0, %v4711
  %v4713 = vrot.slane %v4647, %v4712
  %v4714 = vlaneseq
  %v4715 = vshrl.u32 %v4714, 7
  %v4716 = vsub.s32 0, %v4715
  %v4717 = vrot.slane %v4630, %v4716
  %v4718 = vlaneseq
  %v4719 = vshrl.u32 %v4718, 7
  %v4720 = vsub.s32 0, %v4719
  %v4721 = vrot.slane %v4644, %v4720
  %v4722 = vlaneseq
  %v4723 = vshrl.u32 %v4722, 7
  %v4724 = vsub.s32 0, %v4723
  %v4725 = vrot.slane %v4646, %v4724
  %v4726 = vlaneseq
  %v4727 = vshrl.u32 %v4726, 7
  %v4728 = vsub.s32 0, %v4727
  %v4729 = vrot.slane %v4648, %v4728
  %v4730 = vlaneseq
  %v4731 = vshrl.u32 %v4730, 7
  %v4732 = vsub.s32 0, %v4731
  %v4733 = vrot.slane %v4672, %v4732
  %v4734 = vlaneseq
  %v4735 = vshrl.u32 %v4734, 7
  %v4736 = vsub.s32 0, %v4735
  %v4737 = vrot.slane %v4686, %v4736
  %v4738 = vlaneseq
  %v4739 = vshrl.u32 %v4738, 7
  %v4740 = vsub.s32 0, %v4739
  %v4741 = vrot.slane %v4694, %v4740
  %v4742 = vlaneseq
  %v4743 = vshrl.u32 %v4742, 7
  %v4744 = vsub.s32 0, %v4743
  %v4745 = vrot.slane %v4696, %v4744
  %v4746 = vlaneseq
  %v4747 = vshrl.u32 %v4746, 7
  %v4748 = vsub.s32 0, %v4747
  %v4749 = vrot.slane %v4679, %v4748
  %v4750 = vlaneseq
  %v4751 = vshrl.u32 %v4750, 7
  %v4752 = vsub.s32 0, %v4751
  %v4753 = vrot.slane %v4693, %v4752
  %v4754 = vlaneseq
  %v4755 = vshrl.u32 %v4754, 7
  %v4756 = vsub.s32 0, %v4755
  %v4757 = vrot.slane %v4695, %v4756
  %v4758 = vlaneseq
  %v4759 = vshrl.u32 %v4758, 7
  %v4760 = vsub.s32 0, %v4759
  %v4761 = vrot.slane %v4697, %v4760
  %v4778 = vld [vmem:[%s8] sm:$0xff]
  %v4779 = vld [vmem:[%s8 + $0x8] sm:$0xff]
  %v4780 = vld [vmem:[%s8 + $0x10] sm:$0xff]
  %v4781 = vld [vmem:[%s8 + $0x18] sm:$0xff]
  %v4782 = vld [vmem:[%s8 + $0x20] sm:$0xff]
  %v4783 = vld [vmem:[%s8 + $0x28] sm:$0xff]
  %v4784 = vld [vmem:[%s8 + $0x30] sm:$0xff]
  %v4785 = vld [vmem:[%s8 + $0x38] sm:$0xff]
  %s4786 = scalar_lea.vmem %s8, 64
  %v4787 = vld [vmem:[%s4786] ss:$8 sm:$0xf]
  %v4789 = vlaneseq
  %v4790 = vshrl.u32 %v4789, 7
  %v4791 = vsub.s32 0, %v4790
  %v4792 = vrot.slane %v4787, %v4791
  %v4793 = vlaneseq
  %v4794 = vshrl.u32 %v4793, 7
  %v4795 = vsub.s32 1, %v4794
  %v4796 = vrot.slane %v4787, %v4795
  %v4797 = vlaneseq
  %v4798 = vshrl.u32 %v4797, 7
  %v4799 = vsub.s32 2, %v4798
  %v4800 = vrot.slane %v4787, %v4799
  %v4801 = vlaneseq
  %v4802 = vshrl.u32 %v4801, 7
  %v4803 = vsub.s32 3, %v4802
  %v4804 = vrot.slane %v4787, %v4803
  %v4810 = vsel %vm2683, %v4270, 0
  %4812 = vmatprep.subr.mxu0 %v4779
  %4813 = vmatpush1.msra.mxu0 %v4778
  %4814 = vmatprep.subr.mxu0 %v4783
  %4815 = vmatpush1.msra.mxu0 %v4782
  %4816 = vmatprep.subr.mxu0 0.0
  %4817 = vmatpush1.msra.mxu0 0.0
  %4818 = vmatprep.subr.mxu0 0.0
  %4819 = vmatpush1.msra.mxu0 0.0
  %4820 = vmatprep.subr.mxu0 0.0
  %4821 = vmatpush1.msra.mxu0 0.0
  %4822 = vmatprep.subr.mxu0 0.0
  %4823 = vmatpush1.msra.mxu0 0.0
  %4824 = vmatprep.subr.mxu0 0.0
  %4825 = vmatpush1.msra.mxu0 0.0
  %4826 = vmatprep.subr.mxu0 0.0
  %4827 = vmatpush1.msra.mxu0 0.0
  %4828 = vmatprep.subr.mxu0 0.0
  %4829 = vmatpush1.msra.mxu0 0.0
  %4830 = vmatprep.subr.mxu0 0.0
  %4831 = vmatpush1.msra.mxu0 0.0
  %4832 = vmatprep.subr.mxu0 0.0
  %4833 = vmatpush1.msra.mxu0 0.0
  %4834 = vmatprep.subr.mxu0 0.0
  %4835 = vmatpush1.msra.mxu0 0.0
  %4836 = vmatprep.subr.mxu0 0.0
  %4837 = vmatpush1.msra.mxu0 0.0
  %4838 = vmatprep.subr.mxu0 0.0
  %4839 = vmatpush1.msra.mxu0 0.0
  %4840 = vmatprep.subr.mxu0 0.0
  %4841 = vmatpush1.msra.mxu0 0.0
  %4842 = vmatprep.subr.mxu0 0.0
  %4843 = vmatpush1.msra.mxu0 0.0
  %4844 = vmatprep.subr.mxu0 0.0
  %4845 = vmatpush1.msra.mxu0 0.0
  %4846 = vmatprep.subr.mxu0 0.0
  %4847 = vmatpush1.msra.mxu0 0.0
  %4848 = vmatprep.subr.mxu0 0.0
  %4849 = vmatpush1.msra.mxu0 0.0
  %4850 = vmatprep.subr.mxu0 0.0
  %4851 = vmatpush1.msra.mxu0 0.0
  %4852 = vmatprep.subr.mxu0 0.0
  %4853 = vmatpush1.msra.mxu0 0.0
  %4854 = vmatprep.subr.mxu0 0.0
  %4855 = vmatpush1.msra.mxu0 0.0
  %4856 = vmatprep.subr.mxu0 0.0
  %4857 = vmatpush1.msra.mxu0 0.0
  %4858 = vmatprep.subr.mxu0 0.0
  %4859 = vmatpush1.msra.mxu0 0.0
  %4860 = vmatprep.subr.mxu0 0.0
  %4861 = vmatpush1.msra.mxu0 0.0
  %4862 = vmatprep.subr.mxu0 0.0
  %4863 = vmatpush1.msra.mxu0 0.0
  %4864 = vmatprep.subr.mxu0 0.0
  %4865 = vmatpush1.msra.mxu0 0.0
  %4866 = vmatprep.subr.mxu0 0.0
  %4867 = vmatpush1.msra.mxu0 0.0
  %4868 = vmatprep.subr.mxu0 0.0
  %4869 = vmatpush1.msra.mxu0 0.0
  %4870 = vmatprep.subr.mxu0 0.0
  %4871 = vmatpush1.msra.mxu0 0.0
  %4872 = vmatprep.subr.mxu0 0.0
  %4873 = vmatpush1.msra.mxu0 0.0
  %4874 = vmatprep.subr.mxu0 0.0
  %4875 = vmatpush1.msra.mxu0 0.0
  %4876 = vmatprep.mubr.f32.mxu0 0.0
  %4877 = vmatmul.mubr.f32.gmra.mrb[0].mxu0 %v4810
  %v4878 = vpop.f32.mrb[0].mxu0
  %v4879 = vadd.f32 %v4792, %v4878
  %v4880 = vpop.f32.mrb[0].mxu0
  %v4881 = vadd.f32 %v4796, %v4880
  %4882 = vdwg.mxu0
  %4883 = vmatprep.subr.mxu0 %v4781
  %4884 = vmatpush1.msra.mxu0 %v4780
  %4885 = vmatprep.subr.mxu0 %v4785
  %4886 = vmatpush1.msra.mxu0 %v4784
  %4887 = vmatprep.subr.mxu0 0.0
  %4888 = vmatpush1.msra.mxu0 0.0
  %4889 = vmatprep.subr.mxu0 0.0
  %4890 = vmatpush1.msra.mxu0 0.0
  %4891 = vmatprep.subr.mxu0 0.0
  %4892 = vmatpush1.msra.mxu0 0.0
  %4893 = vmatprep.subr.mxu0 0.0
  %4894 = vmatpush1.msra.mxu0 0.0
  %4895 = vmatprep.subr.mxu0 0.0
  %4896 = vmatpush1.msra.mxu0 0.0
  %4897 = vmatprep.subr.mxu0 0.0
  %4898 = vmatpush1.msra.mxu0 0.0
  %4899 = vmatprep.subr.mxu0 0.0
  %4900 = vmatpush1.msra.mxu0 0.0
  %4901 = vmatprep.subr.mxu0 0.0
  %4902 = vmatpush1.msra.mxu0 0.0
  %4903 = vmatprep.subr.mxu0 0.0
  %4904 = vmatpush1.msra.mxu0 0.0
  %4905 = vmatprep.subr.mxu0 0.0
  %4906 = vmatpush1.msra.mxu0 0.0
  %4907 = vmatprep.subr.mxu0 0.0
  %4908 = vmatpush1.msra.mxu0 0.0
  %4909 = vmatprep.subr.mxu0 0.0
  %4910 = vmatpush1.msra.mxu0 0.0
  %4911 = vmatprep.subr.mxu0 0.0
  %4912 = vmatpush1.msra.mxu0 0.0
  %4913 = vmatprep.subr.mxu0 0.0
  %4914 = vmatpush1.msra.mxu0 0.0
  %4915 = vmatprep.subr.mxu0 0.0
  %4916 = vmatpush1.msra.mxu0 0.0
  %4917 = vmatprep.subr.mxu0 0.0
  %4918 = vmatpush1.msra.mxu0 0.0
  %4919 = vmatprep.subr.mxu0 0.0
  %4920 = vmatpush1.msra.mxu0 0.0
  %4921 = vmatprep.subr.mxu0 0.0
  %4922 = vmatpush1.msra.mxu0 0.0
  %4923 = vmatprep.subr.mxu0 0.0
  %4924 = vmatpush1.msra.mxu0 0.0
  %4925 = vmatprep.subr.mxu0 0.0
  %4926 = vmatpush1.msra.mxu0 0.0
  %4927 = vmatprep.subr.mxu0 0.0
  %4928 = vmatpush1.msra.mxu0 0.0
  %4929 = vmatprep.subr.mxu0 0.0
  %4930 = vmatpush1.msra.mxu0 0.0
  %4931 = vmatprep.subr.mxu0 0.0
  %4932 = vmatpush1.msra.mxu0 0.0
  %4933 = vmatprep.subr.mxu0 0.0
  %4934 = vmatpush1.msra.mxu0 0.0
  %4935 = vmatprep.subr.mxu0 0.0
  %4936 = vmatpush1.msra.mxu0 0.0
  %4937 = vmatprep.subr.mxu0 0.0
  %4938 = vmatpush1.msra.mxu0 0.0
  %4939 = vmatprep.subr.mxu0 0.0
  %4940 = vmatpush1.msra.mxu0 0.0
  %4941 = vmatprep.subr.mxu0 0.0
  %4942 = vmatpush1.msra.mxu0 0.0
  %4943 = vmatprep.subr.mxu0 0.0
  %4944 = vmatpush1.msra.mxu0 0.0
  %4945 = vmatprep.subr.mxu0 0.0
  %4946 = vmatpush1.msra.mxu0 0.0
  %4947 = vmatprep.mubr.f32.mxu0 0.0
  %4948 = vmatmul.mubr.f32.gmra.mrb[0].mxu0 %v4810
  %v4949 = vpop.f32.mrb[0].mxu0
  %v4950 = vadd.f32 %v4800, %v4949
  %v4951 = vpop.f32.mrb[0].mxu0
  %v4952 = vadd.f32 %v4804, %v4951
  %4953 = vdwg.mxu0
  %4955 = vrot.lane.b32.xlu0 %v4879, 96
  %v4956 = vpop.permute.xlu0 %4955
  %4958 = vrot.lane.b32.xlu0 %v4879, 64
  %v4959 = vpop.permute.xlu0 %4958
  %4961 = vrot.lane.b32.xlu0 %v4879, 32
  %v4962 = vpop.permute.xlu0 %4961
  %4965 = vrot.lane.b32.xlu0 %v4881, 96
  %v4966 = vpop.permute.xlu0 %4965
  %4968 = vrot.lane.b32.xlu0 %v4881, 64
  %v4969 = vpop.permute.xlu0 %4968
  %4971 = vrot.lane.b32.xlu0 %v4881, 32
  %v4972 = vpop.permute.xlu0 %4971
  %4975 = vrot.lane.b32.xlu0 %v4950, 96
  %v4976 = vpop.permute.xlu0 %4975
  %4978 = vrot.lane.b32.xlu0 %v4950, 64
  %v4979 = vpop.permute.xlu0 %4978
  %4981 = vrot.lane.b32.xlu0 %v4950, 32
  %v4982 = vpop.permute.xlu0 %4981
  %4985 = vrot.lane.b32.xlu0 %v4952, 96
  %v4986 = vpop.permute.xlu0 %4985
  %4988 = vrot.lane.b32.xlu0 %v4952, 64
  %v4989 = vpop.permute.xlu0 %4988
  %4991 = vrot.lane.b32.xlu0 %v4952, 32
  %v4992 = vpop.permute.xlu0 %4991
  %v4994 = vcombine.low %v4879, %v4959
  %v4996 = vunpack.c.l.s4 1983009808
  %v4997 = vunpack.c.0.s8 %v4996
  %v4998 = vlaneseq
  %v4999 = vshrl.u32 %v4998, 7
  %v5000 = vsub.s32 %v4997, %v4999
  %v5001 = vrot.slane %v4994, %v5000
  %v5002 = vcombine.low %v4956, %v4962
  %v5004 = vunpack.c.l.s4 1983009808
  %v5005 = vunpack.c.0.s8 %v5004
  %v5006 = vlaneseq
  %v5007 = vshrl.u32 %v5006, 7
  %v5008 = vsub.s32 %v5005, %v5007
  %v5009 = vrot.slane %v5002, %v5008
  %v5010 = vcombine.low %v4881, %v4969
  %v5012 = vunpack.c.l.s4 1983009808
  %v5013 = vunpack.c.0.s8 %v5012
  %v5014 = vlaneseq
  %v5015 = vshrl.u32 %v5014, 7
  %v5016 = vsub.s32 %v5013, %v5015
  %v5017 = vrot.slane %v5010, %v5016
  %v5018 = vcombine.low %v4966, %v4972
  %v5020 = vunpack.c.l.s4 1983009808
  %v5021 = vunpack.c.0.s8 %v5020
  %v5022 = vlaneseq
  %v5023 = vshrl.u32 %v5022, 7
  %v5024 = vsub.s32 %v5021, %v5023
  %v5025 = vrot.slane %v5018, %v5024
  %v5026 = vcombine.low %v5001, %v5009
  %v5028 = vunpack.c.l.s4 1934713408
  %v5029 = vunpack.c.0.s8 %v5028
  %v5030 = vlaneseq
  %v5031 = vshrl.u32 %v5030, 7
  %v5032 = vsub.s32 %v5029, %v5031
  %v5033 = vrot.slane %v5026, %v5032
  %v5034 = vcombine.low %v5017, %v5025
  %v5036 = vunpack.c.l.s4 1934713408
  %v5037 = vunpack.c.0.s8 %v5036
  %v5038 = vlaneseq
  %v5039 = vshrl.u32 %v5038, 7
  %v5040 = vsub.s32 %v5037, %v5039
  %v5041 = vrot.slane %v5034, %v5040
  %v5042 = vcombine.low %v5033, %v5041
  %v5043 = vcombine.high %v5033, %v5041
  %v5044 = vcombine.low %v4950, %v4979
  %v5046 = vunpack.c.l.s4 1983009808
  %v5047 = vunpack.c.0.s8 %v5046
  %v5048 = vlaneseq
  %v5049 = vshrl.u32 %v5048, 7
  %v5050 = vsub.s32 %v5047, %v5049
  %v5051 = vrot.slane %v5044, %v5050
  %v5052 = vcombine.low %v4976, %v4982
  %v5054 = vunpack.c.l.s4 1983009808
  %v5055 = vunpack.c.0.s8 %v5054
  %v5056 = vlaneseq
  %v5057 = vshrl.u32 %v5056, 7
  %v5058 = vsub.s32 %v5055, %v5057
  %v5059 = vrot.slane %v5052, %v5058
  %v5060 = vcombine.low %v4952, %v4989
  %v5062 = vunpack.c.l.s4 1983009808
  %v5063 = vunpack.c.0.s8 %v5062
  %v5064 = vlaneseq
  %v5065 = vshrl.u32 %v5064, 7
  %v5066 = vsub.s32 %v5063, %v5065
  %v5067 = vrot.slane %v5060, %v5066
  %v5068 = vcombine.low %v4986, %v4992
  %v5070 = vunpack.c.l.s4 1983009808
  %v5071 = vunpack.c.0.s8 %v5070
  %v5072 = vlaneseq
  %v5073 = vshrl.u32 %v5072, 7
  %v5074 = vsub.s32 %v5071, %v5073
  %v5075 = vrot.slane %v5068, %v5074
  %v5076 = vcombine.low %v5051, %v5059
  %v5078 = vunpack.c.l.s4 1934713408
  %v5079 = vunpack.c.0.s8 %v5078
  %v5080 = vlaneseq
  %v5081 = vshrl.u32 %v5080, 7
  %v5082 = vsub.s32 %v5079, %v5081
  %v5083 = vrot.slane %v5076, %v5082
  %v5084 = vcombine.low %v5067, %v5075
  %v5086 = vunpack.c.l.s4 1934713408
  %v5087 = vunpack.c.0.s8 %v5086
  %v5088 = vlaneseq
  %v5089 = vshrl.u32 %v5088, 7
  %v5090 = vsub.s32 %v5087, %v5089
  %v5091 = vrot.slane %v5084, %v5090
  %v5092 = vcombine.low %v5083, %v5091
  %v5093 = vcombine.high %v5083, %v5091
  %v5098 = vcombine.high %v5042, %v5042
  %v5100 = vunpack.c.l.s4 1983009808
  %v5101 = vunpack.c.0.s8 %v5100
  %v5102 = vlaneseq
  %v5103 = vshrl.u32 %v5102, 7
  %v5104 = vsub.s32 %v5101, %v5103
  %v5105 = vrot.slane %v5042, %v5104
  %v5107 = vunpack.c.l.s4 1983009808
  %v5108 = vunpack.c.0.s8 %v5107
  %v5109 = vlaneseq
  %v5110 = vshrl.u32 %v5109, 7
  %v5111 = vsub.s32 %v5108, %v5110
  %v5112 = vrot.slane %v5098, %v5111
  %v5113 = vcombine.high %v5105, %v5105
  %v5114 = vcombine.high %v5112, %v5112
  %v5115 = vcombine.high %v5092, %v5092
  %v5117 = vunpack.c.l.s4 1983009808
  %v5118 = vunpack.c.0.s8 %v5117
  %v5119 = vlaneseq
  %v5120 = vshrl.u32 %v5119, 7
  %v5121 = vsub.s32 %v5118, %v5120
  %v5122 = vrot.slane %v5092, %v5121
  %v5124 = vunpack.c.l.s4 1983009808
  %v5125 = vunpack.c.0.s8 %v5124
  %v5126 = vlaneseq
  %v5127 = vshrl.u32 %v5126, 7
  %v5128 = vsub.s32 %v5125, %v5127
  %v5129 = vrot.slane %v5115, %v5128
  %v5130 = vcombine.high %v5122, %v5122
  %v5131 = vcombine.high %v5129, %v5129
  %v5132 = vcombine.high %v5043, %v5043
  %v5134 = vunpack.c.l.s4 1983009808
  %v5135 = vunpack.c.0.s8 %v5134
  %v5136 = vlaneseq
  %v5137 = vshrl.u32 %v5136, 7
  %v5138 = vsub.s32 %v5135, %v5137
  %v5139 = vrot.slane %v5043, %v5138
  %v5141 = vunpack.c.l.s4 1983009808
  %v5142 = vunpack.c.0.s8 %v5141
  %v5143 = vlaneseq
  %v5144 = vshrl.u32 %v5143, 7
  %v5145 = vsub.s32 %v5142, %v5144
  %v5146 = vrot.slane %v5132, %v5145
  %v5147 = vcombine.high %v5139, %v5139
  %v5148 = vcombine.high %v5146, %v5146
  %v5149 = vcombine.high %v5093, %v5093
  %v5151 = vunpack.c.l.s4 1983009808
  %v5152 = vunpack.c.0.s8 %v5151
  %v5153 = vlaneseq
  %v5154 = vshrl.u32 %v5153, 7
  %v5155 = vsub.s32 %v5152, %v5154
  %v5156 = vrot.slane %v5093, %v5155
  %v5158 = vunpack.c.l.s4 1983009808
  %v5159 = vunpack.c.0.s8 %v5158
  %v5160 = vlaneseq
  %v5161 = vshrl.u32 %v5160, 7
  %v5162 = vsub.s32 %v5159, %v5161
  %v5163 = vrot.slane %v5149, %v5162
  %v5164 = vcombine.high %v5156, %v5156
  %v5165 = vcombine.high %v5163, %v5163
  %v5182 = vadd.f32 %v4701, %v5105
  %v5183 = vadd.f32 %v4705, %v5113
  %v5184 = vadd.f32 %v4709, %v5112
  %v5185 = vadd.f32 %v4713, %v5114
  %v5186 = vadd.f32 %v4717, %v5122
  %v5187 = vadd.f32 %v4721, %v5130
  %v5188 = vadd.f32 %v4725, %v5129
  %v5189 = vadd.f32 %v4729, %v5131
  %v5190 = vadd.f32 %v4733, %v5139
  %v5191 = vadd.f32 %v4737, %v5147
  %v5192 = vadd.f32 %v4741, %v5146
  %v5193 = vadd.f32 %v4745, %v5148
  %v5194 = vadd.f32 %v4749, %v5156
  %v5195 = vadd.f32 %v4753, %v5164
  %v5196 = vadd.f32 %v4757, %v5163
  %v5197 = vadd.f32 %v4761, %v5165
  %v5214 = vcombine.low %v5182, %v5183
  %v5215 = vcombine.low %v5184, %v5185
  %v5217 = vunpack.c.l.s4 1983009808
  %v5218 = vunpack.c.0.s8 %v5217
  %v5219 = vlaneseq
  %v5220 = vshrl.u32 %v5219, 7
  %v5221 = vsub.s32 %v5218, %v5220
  %v5222 = vrot.slane %v5214, %v5221
  %v5224 = vunpack.c.l.s4 1983009808
  %v5225 = vunpack.c.0.s8 %v5224
  %v5226 = vlaneseq
  %v5227 = vshrl.u32 %v5226, 7
  %v5228 = vsub.s32 %v5225, %v5227
  %v5229 = vrot.slane %v5215, %v5228
  %v5230 = vcombine.low %v5222, %v5229
  %v5231 = vcombine.low %v5186, %v5187
  %v5232 = vcombine.low %v5188, %v5189
  %v5234 = vunpack.c.l.s4 1983009808
  %v5235 = vunpack.c.0.s8 %v5234
  %v5236 = vlaneseq
  %v5237 = vshrl.u32 %v5236, 7
  %v5238 = vsub.s32 %v5235, %v5237
  %v5239 = vrot.slane %v5231, %v5238
  %v5241 = vunpack.c.l.s4 1983009808
  %v5242 = vunpack.c.0.s8 %v5241
  %v5243 = vlaneseq
  %v5244 = vshrl.u32 %v5243, 7
  %v5245 = vsub.s32 %v5242, %v5244
  %v5246 = vrot.slane %v5232, %v5245
  %v5247 = vcombine.low %v5239, %v5246
  %v5248 = vcombine.low %v5190, %v5191
  %v5249 = vcombine.low %v5192, %v5193
  %v5251 = vunpack.c.l.s4 1983009808
  %v5252 = vunpack.c.0.s8 %v5251
  %v5253 = vlaneseq
  %v5254 = vshrl.u32 %v5253, 7
  %v5255 = vsub.s32 %v5252, %v5254
  %v5256 = vrot.slane %v5248, %v5255
  %v5258 = vunpack.c.l.s4 1983009808
  %v5259 = vunpack.c.0.s8 %v5258
  %v5260 = vlaneseq
  %v5261 = vshrl.u32 %v5260, 7
  %v5262 = vsub.s32 %v5259, %v5261
  %v5263 = vrot.slane %v5249, %v5262
  %v5264 = vcombine.low %v5256, %v5263
  %v5265 = vcombine.low %v5194, %v5195
  %v5266 = vcombine.low %v5196, %v5197
  %v5268 = vunpack.c.l.s4 1983009808
  %v5269 = vunpack.c.0.s8 %v5268
  %v5270 = vlaneseq
  %v5271 = vshrl.u32 %v5270, 7
  %v5272 = vsub.s32 %v5269, %v5271
  %v5273 = vrot.slane %v5265, %v5272
  %v5275 = vunpack.c.l.s4 1983009808
  %v5276 = vunpack.c.0.s8 %v5275
  %v5277 = vlaneseq
  %v5278 = vshrl.u32 %v5277, 7
  %v5279 = vsub.s32 %v5276, %v5278
  %v5280 = vrot.slane %v5266, %v5279
  %v5281 = vcombine.low %v5273, %v5280
  %v5286 = vrot.slane %v5230, 7
  %v5287 = vrot.slane %v5264, 7
  %v5288 = vrot.slane %v5247, 7
  %v5289 = vrot.slane %v5281, 7
  %v5290 = vsel %vm63, %v5286, %v5288
  %v5291 = vsel %vm63, %v5287, %v5289
  %v5292 = vsel %vm63, %v5288, %v5286
  %v5293 = vsel %vm63, %v5289, %v5287
  %v5294 = vsel %vm51, 0.0, %v5292
  %v5295 = vsel %vm52, 0.0, %v5290
  %v5296 = vsel %vm51, 0.0, %v5293
  %v5297 = vsel %vm52, 0.0, %v5291
  %v5298 = vrot.slane %v5230, 1
  %v5299 = vrot.slane %v5264, 1
  %v5300 = vrot.slane %v5247, 1
  %v5301 = vrot.slane %v5281, 1
  %v5302 = vsel %vm92, %v5298, %v5300
  %v5303 = vsel %vm92, %v5299, %v5301
  %v5304 = vsel %vm92, %v5300, %v5298
  %v5305 = vsel %vm92, %v5301, %v5299
  %v5306 = vsel %vm2525, 0.0, %v5302
  %v5307 = vsel %vm2526, 0.0, %v5304
  %v5308 = vsel %vm2525, 0.0, %v5303
  %v5309 = vsel %vm2526, 0.0, %v5305
  %5310 = vrot.lane.b32.xlu0 %v5230, 32
  %v5311 = vpop.permute.xlu0 %5310
  %5312 = vrot.lane.b32.xlu0 %v5247, 32
  %v5313 = vpop.permute.xlu0 %5312
  %5314 = vrot.lane.b32.xlu0 %v5264, 32
  %v5315 = vpop.permute.xlu0 %5314
  %5316 = vrot.lane.b32.xlu0 %v5281, 32
  %v5317 = vpop.permute.xlu0 %5316
  %5326 = vrot.lane.b32.xlu0 %v5306, 64
  %v5327 = vpop.permute.xlu0 %5326
  %5328 = vrot.lane.b32.xlu0 %v5307, 64
  %v5329 = vpop.permute.xlu0 %5328
  %5330 = vrot.lane.b32.xlu0 %v5308, 64
  %v5331 = vpop.permute.xlu0 %5330
  %5332 = vrot.lane.b32.xlu0 %v5309, 64
  %v5333 = vpop.permute.xlu0 %5332
  %v5338 = vsel %vm333, %v5294, %v5311
  %v5339 = vsel %vm333, %v5295, %v5313
  %v5340 = vsel %vm333, %v5296, %v5315
  %v5341 = vsel %vm333, %v5297, %v5317
  %v5342 = vsel %vm550, %v5338, %v5327
  %v5343 = vsel %vm550, %v5339, %v5329
  %v5344 = vsel %vm550, %v5340, %v5331
  %v5345 = vsel %vm550, %v5341, %v5333
  %v5346 = vld [vmem:[%s3 + $0x268] sm:$0xff]
  %v5347 = vld [vmem:[%s3 + $0x270] sm:$0xff]
  %v5348 = vld [vmem:[%s3 + $0x278] sm:$0xff]
  %v5349 = vld [vmem:[%s3 + $0x280] sm:$0xff]
  %v5350 = vld [vmem:[%s3 + $0x288] sm:$0xff]
  %v5351 = vld [vmem:[%s3 + $0x290] sm:$0xff]
  %v5352 = vld [vmem:[%s3 + $0x298] sm:$0xff]
  %v5353 = vld [vmem:[%s3 + $0x2a0] sm:$0xff]
  %v5354 = vld [vmem:[%s3 + $0x2a8] sm:$0xff]
  %v5355 = vld [vmem:[%s3 + $0x2b0] sm:$0xff]
  %v5356 = vld [vmem:[%s3 + $0x2b8] sm:$0xff]
  %v5357 = vld [vmem:[%s3 + $0x2c0] sm:$0xff]
  %v5358 = vld [vmem:[%s2 + $0x15] sm:$0x1]
  %v5359 = vlaneseq
  %v5360 = vshrl.u32 %v5359, 7
  %v5361 = vsub.s32 0, %v5360
  %v5362 = vrot.slane %v5358, %v5361
  %v5364 = vsel %vm576, %v5342, 0
  %v5367 = vsel %vm576, %v5343, 0
  %v5370 = vsel %vm576, %v5344, 0
  %v5373 = vsel %vm576, %v5345, 0
  %5375 = vmatprep.subr.mxu0 0.0
  %5376 = vmatpush1.msra.mxu0 %v5346
  %5377 = vmatprep.subr.mxu0 0.0
  %5378 = vmatpush1.msra.mxu0 %v5347
  %5379 = vmatprep.subr.mxu0 0.0
  %5380 = vmatpush1.msra.mxu0 %v5348
  %5381 = vmatprep.subr.mxu0 0.0
  %5382 = vmatpush1.msra.mxu0 %v5349
  %5383 = vmatprep.subr.mxu0 0.0
  %5384 = vmatpush1.msra.mxu0 %v5350
  %5385 = vmatprep.subr.mxu0 0.0
  %5386 = vmatpush1.msra.mxu0 %v5351
  %5387 = vmatprep.subr.mxu0 0.0
  %5388 = vmatpush1.msra.mxu0 %v5352
  %5389 = vmatprep.subr.mxu0 0.0
  %5390 = vmatpush1.msra.mxu0 %v5353
  %5391 = vmatprep.subr.mxu0 0.0
  %5392 = vmatpush1.msra.mxu0 %v5354
  %5393 = vmatprep.subr.mxu0 0.0
  %5394 = vmatpush1.msra.mxu0 %v5355
  %5395 = vmatprep.subr.mxu0 0.0
  %5396 = vmatpush1.msra.mxu0 %v5356
  %5397 = vmatprep.subr.mxu0 0.0
  %5398 = vmatpush1.msra.mxu0 %v5357
  %5399 = vmatprep.subr.mxu0 0.0
  %5400 = vmatpush1.msra.mxu0 0.0
  %5401 = vmatprep.subr.mxu0 0.0
  %5402 = vmatpush1.msra.mxu0 0.0
  %5403 = vmatprep.subr.mxu0 0.0
  %5404 = vmatpush1.msra.mxu0 0.0
  %5405 = vmatprep.subr.mxu0 0.0
  %5406 = vmatpush1.msra.mxu0 0.0
  %5407 = vmatprep.subr.mxu0 0.0
  %5408 = vmatpush1.msra.mxu0 0.0
  %5409 = vmatprep.subr.mxu0 0.0
  %5410 = vmatpush1.msra.mxu0 0.0
  %5411 = vmatprep.subr.mxu0 0.0
  %5412 = vmatpush1.msra.mxu0 0.0
  %5413 = vmatprep.subr.mxu0 0.0
  %5414 = vmatpush1.msra.mxu0 0.0
  %5415 = vmatprep.subr.mxu0 0.0
  %5416 = vmatpush1.msra.mxu0 0.0
  %5417 = vmatprep.subr.mxu0 0.0
  %5418 = vmatpush1.msra.mxu0 0.0
  %5419 = vmatprep.subr.mxu0 0.0
  %5420 = vmatpush1.msra.mxu0 0.0
  %5421 = vmatprep.subr.mxu0 0.0
  %5422 = vmatpush1.msra.mxu0 0.0
  %5423 = vmatprep.subr.mxu0 0.0
  %5424 = vmatpush1.msra.mxu0 0.0
  %5425 = vmatprep.subr.mxu0 0.0
  %5426 = vmatpush1.msra.mxu0 0.0
  %5427 = vmatprep.subr.mxu0 0.0
  %5428 = vmatpush1.msra.mxu0 0.0
  %5429 = vmatprep.subr.mxu0 0.0
  %5430 = vmatpush1.msra.mxu0 0.0
  %5431 = vmatprep.subr.mxu0 0.0
  %5432 = vmatpush1.msra.mxu0 0.0
  %5433 = vmatprep.subr.mxu0 0.0
  %5434 = vmatpush1.msra.mxu0 0.0
  %5435 = vmatprep.subr.mxu0 0.0
  %5436 = vmatpush1.msra.mxu0 0.0
  %5437 = vmatprep.subr.mxu0 0.0
  %5438 = vmatpush1.msra.mxu0 0.0
  %5439 = vmatprep.mubr.f32.mxu0 0.0
  %5440 = vmatmul.mubr.f32.gmra.mrb[0].mxu0 %v5364
  %v5441 = vpop.f32.mrb[0].mxu0
  %v5442 = vadd.f32 %v5362, %v5441
  %v5443 = vpop.f32.mrb[0].mxu0
  %5444 = vmatprep.mubr.f32.mxu0 0.0
  %5445 = vmatmul.mubr.f32.gmra.mrb[0].mxu0 %v5367
  %v5446 = vpop.f32.mrb[0].mxu0
  %v5447 = vadd.f32 %v5362, %v5446
  %v5448 = vpop.f32.mrb[0].mxu0
  %5449 = vmatprep.mubr.f32.mxu0 0.0
  %5450 = vmatmul.mubr.f32.gmra.mrb[0].mxu0 %v5370
  %v5451 = vpop.f32.mrb[0].mxu0
  %v5452 = vadd.f32 %v5362, %v5451
  %v5453 = vpop.f32.mrb[0].mxu0
  %5454 = vmatprep.mubr.f32.mxu0 0.0
  %5455 = vmatmul.mubr.f32.gmra.mrb[0].mxu0 %v5373
  %v5456 = vpop.f32.mrb[0].mxu0
  %v5457 = vadd.f32 %v5362, %v5456
  %v5458 = vpop.f32.mrb[0].mxu0
  %5459 = vdwg.mxu0
  %v5460 = vld [vmem:[%s2 + $0x16] sm:$0x1]
  %v5461 = vld [vmem:[%s2 + $0x17] sm:$0x1]
  %v5462 = vsel %vm550, %v5442, 0.0
  %v5463 = vsel %vm550, %v5447, 0.0
  %v5464 = vadd.f32 %v5462, %v5463
  %v5465 = vsel %vm550, %v5452, 0.0
  %v5466 = vadd.f32 %v5464, %v5465
  %v5467 = vsel %vm550, %v5457, 0.0
  %v5468 = vadd.f32 %v5466, %v5467
  %v5469 = vrot.slane %v5468, 4
  %v5470 = vadd.f32 %v5468, %v5469
  %v5471 = vrot.slane %v5470, 2
  %v5472 = vadd.f32 %v5470, %v5471
  %v5473 = vrot.slane %v5472, 1
  %v5474 = vadd.f32 %v5472, %v5473
  %v5475 = vmul.f32 %v5474, %v2697
  %v5476 = vsub.f32 %v5442, %v5475
  %v5477 = vsub.f32 %v5447, %v5475
  %v5478 = vsub.f32 %v5452, %v5475
  %v5479 = vsub.f32 %v5457, %v5475
  %v5480 = vmul.f32 %v5476, %v5476
  %v5481 = vmul.f32 %v5477, %v5477
  %v5482 = vmul.f32 %v5478, %v5478
  %v5483 = vmul.f32 %v5479, %v5479
  %v5484 = vsel %vm550, %v5480, 0.0
  %v5485 = vsel %vm550, %v5481, 0.0
  %v5486 = vadd.f32 %v5484, %v5485
  %v5487 = vsel %vm550, %v5482, 0.0
  %v5488 = vadd.f32 %v5486, %v5487
  %v5489 = vsel %vm550, %v5483, 0.0
  %v5490 = vadd.f32 %v5488, %v5489
  %v5491 = vrot.slane %v5490, 4
  %v5492 = vadd.f32 %v5490, %v5491
  %v5493 = vrot.slane %v5492, 2
  %v5494 = vadd.f32 %v5492, %v5493
  %v5495 = vrot.slane %v5494, 1
  %v5496 = vadd.f32 %v5494, %v5495
  %v5497 = vmul.f32 %v5496, %v2697
  %v5498 = vadd.f32 %v5497, 1e-05
  %v5499 = vrsqrt.pop %v5498
  %v5500 = vmul.f32 %v5499, %v5460
  %v5501 = vlaneseq
  %v5502 = vshrl.u32 %v5501, 7
  %v5503 = vsub.s32 0, %v5502
  %v5504 = vrot.slane %v5500, %v5503
  %v5505 = vmul.f32 %v5476, %v5504
  %v5506 = vmul.f32 %v5477, %v5504
  %v5507 = vmul.f32 %v5478, %v5504
  %v5508 = vmul.f32 %v5479, %v5504
  %v5509 = vlaneseq
  %v5510 = vshrl.u32 %v5509, 7
  %v5511 = vsub.s32 0, %v5510
  %v5512 = vrot.slane %v5461, %v5511
  %v5513 = vadd.f32 %v5505, %v5512
  %v5514 = vadd.f32 %v5506, %v5512
  %v5515 = vadd.f32 %v5507, %v5512
  %v5516 = vadd.f32 %v5508, %v5512
  %v5517 = vmax.f32 %v5513, 0.0
  %v5518 = vmax.f32 %v5514, 0.0
  %v5519 = vmax.f32 %v5515, 0.0
  %v5520 = vmax.f32 %v5516, 0.0
  %v5525 = vcombine.high %v5517, %v5517
  %v5527 = vunpack.c.l.s4 1966171168
  %v5528 = vunpack.c.0.s8 %v5527
  %v5529 = vlaneseq
  %v5530 = vshrl.u32 %v5529, 7
  %v5531 = vsub.s32 %v5528, %v5530
  %v5532 = vrot.slane %v5517, %v5531
  %v5534 = vunpack.c.l.s4 1966171168
  %v5535 = vunpack.c.0.s8 %v5534
  %v5536 = vlaneseq
  %v5537 = vshrl.u32 %v5536, 7
  %v5538 = vsub.s32 %v5535, %v5537
  %v5539 = vrot.slane %v5525, %v5538
  %v5540 = vcombine.high %v5532, %v5532
  %v5541 = vcombine.high %v5539, %v5539
  %v5543 = vunpack.c.l.s4 1966171168
  %v5544 = vunpack.c.0.s8 %v5543
  %v5545 = vlaneseq
  %v5546 = vshrl.u32 %v5545, 7
  %v5547 = vsub.s32 %v5544, %v5546
  %v5548 = vrot.slane %v5532, %v5547
  %v5550 = vunpack.c.l.s4 1966171168
  %v5551 = vunpack.c.0.s8 %v5550
  %v5552 = vlaneseq
  %v5553 = vshrl.u32 %v5552, 7
  %v5554 = vsub.s32 %v5551, %v5553
  %v5555 = vrot.slane %v5539, %v5554
  %v5557 = vunpack.c.l.s4 1966171168
  %v5558 = vunpack.c.0.s8 %v5557
  %v5559 = vlaneseq
  %v5560 = vshrl.u32 %v5559, 7
  %v5561 = vsub.s32 %v5558, %v5560
  %v5562 = vrot.slane %v5540, %v5561
  %v5564 = vunpack.c.l.s4 1966171168
  %v5565 = vunpack.c.0.s8 %v5564
  %v5566 = vlaneseq
  %v5567 = vshrl.u32 %v5566, 7
  %v5568 = vsub.s32 %v5565, %v5567
  %v5569 = vrot.slane %v5541, %v5568
  %v5570 = vcombine.high %v5548, %v5548
  %v5571 = vcombine.high %v5555, %v5555
  %v5572 = vcombine.high %v5562, %v5562
  %v5573 = vcombine.high %v5569, %v5569
  %v5574 = vcombine.high %v5518, %v5518
  %v5576 = vunpack.c.l.s4 1966171168
  %v5577 = vunpack.c.0.s8 %v5576
  %v5578 = vlaneseq
  %v5579 = vshrl.u32 %v5578, 7
  %v5580 = vsub.s32 %v5577, %v5579
  %v5581 = vrot.slane %v5518, %v5580
  %v5583 = vunpack.c.l.s4 1966171168
  %v5584 = vunpack.c.0.s8 %v5583
  %v5585 = vlaneseq
  %v5586 = vshrl.u32 %v5585, 7
  %v5587 = vsub.s32 %v5584, %v5586
  %v5588 = vrot.slane %v5574, %v5587
  %v5589 = vcombine.high %v5581, %v5581
  %v5590 = vcombine.high %v5588, %v5588
  %v5592 = vunpack.c.l.s4 1966171168
  %v5593 = vunpack.c.0.s8 %v5592
  %v5594 = vlaneseq
  %v5595 = vshrl.u32 %v5594, 7
  %v5596 = vsub.s32 %v5593, %v5595
  %v5597 = vrot.slane %v5581, %v5596
  %v5599 = vunpack.c.l.s4 1966171168
  %v5600 = vunpack.c.0.s8 %v5599
  %v5601 = vlaneseq
  %v5602 = vshrl.u32 %v5601, 7
  %v5603 = vsub.s32 %v5600, %v5602
  %v5604 = vrot.slane %v5588, %v5603
  %v5606 = vunpack.c.l.s4 1966171168
  %v5607 = vunpack.c.0.s8 %v5606
  %v5608 = vlaneseq
  %v5609 = vshrl.u32 %v5608, 7
  %v5610 = vsub.s32 %v5607, %v5609
  %v5611 = vrot.slane %v5589, %v5610
  %v5613 = vunpack.c.l.s4 1966171168
  %v5614 = vunpack.c.0.s8 %v5613
  %v5615 = vlaneseq
  %v5616 = vshrl.u32 %v5615, 7
  %v5617 = vsub.s32 %v5614, %v5616
  %v5618 = vrot.slane %v5590, %v5617
  %v5619 = vcombine.high %v5597, %v5597
  %v5620 = vcombine.high %v5604, %v5604
  %v5621 = vcombine.high %v5611, %v5611
  %v5622 = vcombine.high %v5618, %v5618
  %v5623 = vcombine.high %v5519, %v5519
  %v5625 = vunpack.c.l.s4 1966171168
  %v5626 = vunpack.c.0.s8 %v5625
  %v5627 = vlaneseq
  %v5628 = vshrl.u32 %v5627, 7
  %v5629 = vsub.s32 %v5626, %v5628
  %v5630 = vrot.slane %v5519, %v5629
  %v5632 = vunpack.c.l.s4 1966171168
  %v5633 = vunpack.c.0.s8 %v5632
  %v5634 = vlaneseq
  %v5635 = vshrl.u32 %v5634, 7
  %v5636 = vsub.s32 %v5633, %v5635
  %v5637 = vrot.slane %v5623, %v5636
  %v5638 = vcombine.high %v5630, %v5630
  %v5639 = vcombine.high %v5637, %v5637
  %v5641 = vunpack.c.l.s4 1966171168
  %v5642 = vunpack.c.0.s8 %v5641
  %v5643 = vlaneseq
  %v5644 = vshrl.u32 %v5643, 7
  %v5645 = vsub.s32 %v5642, %v5644
  %v5646 = vrot.slane %v5630, %v5645
  %v5648 = vunpack.c.l.s4 1966171168
  %v5649 = vunpack.c.0.s8 %v5648
  %v5650 = vlaneseq
  %v5651 = vshrl.u32 %v5650, 7
  %v5652 = vsub.s32 %v5649, %v5651
  %v5653 = vrot.slane %v5637, %v5652
  %v5655 = vunpack.c.l.s4 1966171168
  %v5656 = vunpack.c.0.s8 %v5655
  %v5657 = vlaneseq
  %v5658 = vshrl.u32 %v5657, 7
  %v5659 = vsub.s32 %v5656, %v5658
  %v5660 = vrot.slane %v5638, %v5659
  %v5662 = vunpack.c.l.s4 1966171168
  %v5663 = vunpack.c.0.s8 %v5662
  %v5664 = vlaneseq
  %v5665 = vshrl.u32 %v5664, 7
  %v5666 = vsub.s32 %v5663, %v5665
  %v5667 = vrot.slane %v5639, %v5666
  %v5668 = vcombine.high %v5646, %v5646
  %v5669 = vcombine.high %v5653, %v5653
  %v5670 = vcombine.high %v5660, %v5660
  %v5671 = vcombine.high %v5667, %v5667
  %v5672 = vcombine.high %v5520, %v5520
  %v5674 = vunpack.c.l.s4 1966171168
  %v5675 = vunpack.c.0.s8 %v5674
  %v5676 = vlaneseq
  %v5677 = vshrl.u32 %v5676, 7
  %v5678 = vsub.s32 %v5675, %v5677
  %v5679 = vrot.slane %v5520, %v5678
  %v5681 = vunpack.c.l.s4 1966171168
  %v5682 = vunpack.c.0.s8 %v5681
  %v5683 = vlaneseq
  %v5684 = vshrl.u32 %v5683, 7
  %v5685 = vsub.s32 %v5682, %v5684
  %v5686 = vrot.slane %v5672, %v5685
  %v5687 = vcombine.high %v5679, %v5679
  %v5688 = vcombine.high %v5686, %v5686
  %v5690 = vunpack.c.l.s4 1966171168
  %v5691 = vunpack.c.0.s8 %v5690
  %v5692 = vlaneseq
  %v5693 = vshrl.u32 %v5692, 7
  %v5694 = vsub.s32 %v5691, %v5693
  %v5695 = vrot.slane %v5679, %v5694
  %v5697 = vunpack.c.l.s4 1966171168
  %v5698 = vunpack.c.0.s8 %v5697
  %v5699 = vlaneseq
  %v5700 = vshrl.u32 %v5699, 7
  %v5701 = vsub.s32 %v5698, %v5700
  %v5702 = vrot.slane %v5686, %v5701
  %v5704 = vunpack.c.l.s4 1966171168
  %v5705 = vunpack.c.0.s8 %v5704
  %v5706 = vlaneseq
  %v5707 = vshrl.u32 %v5706, 7
  %v5708 = vsub.s32 %v5705, %v5707
  %v5709 = vrot.slane %v5687, %v5708
  %v5711 = vunpack.c.l.s4 1966171168
  %v5712 = vunpack.c.0.s8 %v5711
  %v5713 = vlaneseq
  %v5714 = vshrl.u32 %v5713, 7
  %v5715 = vsub.s32 %v5712, %v5714
  %v5716 = vrot.slane %v5688, %v5715
  %v5717 = vcombine.high %v5695, %v5695
  %v5718 = vcombine.high %v5702, %v5702
  %v5719 = vcombine.high %v5709, %v5709
  %v5720 = vcombine.high %v5716, %v5716
  %v5721 = vlaneseq
  %v5722 = vshrl.u32 %v5721, 7
  %v5723 = vsub.s32 0, %v5722
  %v5724 = vrot.slane %v5548, %v5723
  %v5725 = vlaneseq
  %v5726 = vshrl.u32 %v5725, 7
  %v5727 = vsub.s32 0, %v5726
  %v5728 = vrot.slane %v5562, %v5727
  %v5729 = vlaneseq
  %v5730 = vshrl.u32 %v5729, 7
  %v5731 = vsub.s32 0, %v5730
  %v5732 = vrot.slane %v5570, %v5731
  %v5733 = vlaneseq
  %v5734 = vshrl.u32 %v5733, 7
  %v5735 = vsub.s32 0, %v5734
  %v5736 = vrot.slane %v5572, %v5735
  %v5737 = vlaneseq
  %v5738 = vshrl.u32 %v5737, 7
  %v5739 = vsub.s32 0, %v5738
  %v5740 = vrot.slane %v5555, %v5739
  %v5741 = vlaneseq
  %v5742 = vshrl.u32 %v5741, 7
  %v5743 = vsub.s32 0, %v5742
  %v5744 = vrot.slane %v5569, %v5743
  %v5745 = vlaneseq
  %v5746 = vshrl.u32 %v5745, 7
  %v5747 = vsub.s32 0, %v5746
  %v5748 = vrot.slane %v5571, %v5747
  %v5749 = vlaneseq
  %v5750 = vshrl.u32 %v5749, 7
  %v5751 = vsub.s32 0, %v5750
  %v5752 = vrot.slane %v5573, %v5751
  %v5753 = vlaneseq
  %v5754 = vshrl.u32 %v5753, 7
  %v5755 = vsub.s32 0, %v5754
  %v5756 = vrot.slane %v5597, %v5755
  %v5757 = vlaneseq
  %v5758 = vshrl.u32 %v5757, 7
  %v5759 = vsub.s32 0, %v5758
  %v5760 = vrot.slane %v5611, %v5759
  %v5761 = vlaneseq
  %v5762 = vshrl.u32 %v5761, 7
  %v5763 = vsub.s32 0, %v5762
  %v5764 = vrot.slane %v5619, %v5763
  %v5765 = vlaneseq
  %v5766 = vshrl.u32 %v5765, 7
  %v5767 = vsub.s32 0, %v5766
  %v5768 = vrot.slane %v5621, %v5767
  %v5769 = vlaneseq
  %v5770 = vshrl.u32 %v5769, 7
  %v5771 = vsub.s32 0, %v5770
  %v5772 = vrot.slane %v5604, %v5771
  %v5773 = vlaneseq
  %v5774 = vshrl.u32 %v5773, 7
  %v5775 = vsub.s32 0, %v5774
  %v5776 = vrot.slane %v5618, %v5775
  %v5777 = vlaneseq
  %v5778 = vshrl.u32 %v5777, 7
  %v5779 = vsub.s32 0, %v5778
  %v5780 = vrot.slane %v5620, %v5779
  %v5781 = vlaneseq
  %v5782 = vshrl.u32 %v5781, 7
  %v5783 = vsub.s32 0, %v5782
  %v5784 = vrot.slane %v5622, %v5783
  %v5785 = vlaneseq
  %v5786 = vshrl.u32 %v5785, 7
  %v5787 = vsub.s32 0, %v5786
  %v5788 = vrot.slane %v5646, %v5787
  %v5789 = vlaneseq
  %v5790 = vshrl.u32 %v5789, 7
  %v5791 = vsub.s32 0, %v5790
  %v5792 = vrot.slane %v5660, %v5791
  %v5793 = vlaneseq
  %v5794 = vshrl.u32 %v5793, 7
  %v5795 = vsub.s32 0, %v5794
  %v5796 = vrot.slane %v5668, %v5795
  %v5797 = vlaneseq
  %v5798 = vshrl.u32 %v5797, 7
  %v5799 = vsub.s32 0, %v5798
  %v5800 = vrot.slane %v5670, %v5799
  %v5801 = vlaneseq
  %v5802 = vshrl.u32 %v5801, 7
  %v5803 = vsub.s32 0, %v5802
  %v5804 = vrot.slane %v5653, %v5803
  %v5805 = vlaneseq
  %v5806 = vshrl.u32 %v5805, 7
  %v5807 = vsub.s32 0, %v5806
  %v5808 = vrot.slane %v5667, %v5807
  %v5809 = vlaneseq
  %v5810 = vshrl.u32 %v5809, 7
  %v5811 = vsub.s32 0, %v5810
  %v5812 = vrot.slane %v5669, %v5811
  %v5813 = vlaneseq
  %v5814 = vshrl.u32 %v5813, 7
  %v5815 = vsub.s32 0, %v5814
  %v5816 = vrot.slane %v5671, %v5815
  %v5817 = vlaneseq
  %v5818 = vshrl.u32 %v5817, 7
  %v5819 = vsub.s32 0, %v5818
  %v5820 = vrot.slane %v5695, %v5819
  %v5821 = vlaneseq
  %v5822 = vshrl.u32 %v5821, 7
  %v5823 = vsub.s32 0, %v5822
  %v5824 = vrot.slane %v5709, %v5823
  %v5825 = vlaneseq
  %v5826 = vshrl.u32 %v5825, 7
  %v5827 = vsub.s32 0, %v5826
  %v5828 = vrot.slane %v5717, %v5827
  %v5829 = vlaneseq
  %v5830 = vshrl.u32 %v5829, 7
  %v5831 = vsub.s32 0, %v5830
  %v5832 = vrot.slane %v5719, %v5831
  %v5833 = vlaneseq
  %v5834 = vshrl.u32 %v5833, 7
  %v5835 = vsub.s32 0, %v5834
  %v5836 = vrot.slane %v5702, %v5835
  %v5837 = vlaneseq
  %v5838 = vshrl.u32 %v5837, 7
  %v5839 = vsub.s32 0, %v5838
  %v5840 = vrot.slane %v5716, %v5839
  %v5841 = vlaneseq
  %v5842 = vshrl.u32 %v5841, 7
  %v5843 = vsub.s32 0, %v5842
  %v5844 = vrot.slane %v5718, %v5843
  %v5845 = vlaneseq
  %v5846 = vshrl.u32 %v5845, 7
  %v5847 = vsub.s32 0, %v5846
  %v5848 = vrot.slane %v5720, %v5847
  %v5881 = vld [vmem:[%s9] sm:$0xff]
  %v5882 = vld [vmem:[%s9 + $0x8] sm:$0xff]
  %v5883 = vld [vmem:[%s9 + $0x10] sm:$0xff]
  %v5884 = vld [vmem:[%s9 + $0x18] sm:$0xff]
  %v5885 = vld [vmem:[%s9 + $0x20] sm:$0xff]
  %v5886 = vld [vmem:[%s9 + $0x28] sm:$0xff]
  %v5887 = vld [vmem:[%s9 + $0x30] sm:$0xff]
  %v5888 = vld [vmem:[%s9 + $0x38] sm:$0xff]
  %v5889 = vld [vmem:[%s9 + $0x40] sm:$0xff]
  %v5890 = vld [vmem:[%s9 + $0x48] sm:$0xff]
  %v5891 = vld [vmem:[%s9 + $0x50] sm:$0xff]
  %v5892 = vld [vmem:[%s9 + $0x58] sm:$0xff]
  %v5893 = vld [vmem:[%s9 + $0x60] sm:$0xff]
  %v5894 = vld [vmem:[%s9 + $0x68] sm:$0xff]
  %v5895 = vld [vmem:[%s9 + $0x70] sm:$0xff]
  %v5896 = vld [vmem:[%s9 + $0x78] sm:$0xff]
  %v5897 = vld [vmem:[%s9 + $0x80] sm:$0xff]
  %v5898 = vld [vmem:[%s9 + $0x88] sm:$0xff]
  %v5899 = vld [vmem:[%s9 + $0x90] sm:$0xff]
  %v5900 = vld [vmem:[%s9 + $0x98] sm:$0xff]
  %v5901 = vld [vmem:[%s9 + $0xa0] sm:$0xff]
  %v5902 = vld [vmem:[%s9 + $0xa8] sm:$0xff]
  %v5903 = vld [vmem:[%s9 + $0xb0] sm:$0xff]
  %v5904 = vld [vmem:[%s9 + $0xb8] sm:$0xff]
  %v5905 = vld [vmem:[%s9 + $0xc0] sm:$0xff]
  %v5906 = vld [vmem:[%s9 + $0xc8] sm:$0xff]
  %v5907 = vld [vmem:[%s9 + $0xd0] sm:$0xff]
  %v5908 = vld [vmem:[%s9 + $0xd8] sm:$0xff]
  %v5909 = vld [vmem:[%s9 + $0xe0] sm:$0xff]
  %v5910 = vld [vmem:[%s9 + $0xe8] sm:$0xff]
  %v5911 = vld [vmem:[%s9 + $0xf0] sm:$0xff]
  %v5912 = vld [vmem:[%s9 + $0xf8] sm:$0xff]
  %v5913 = vld [vmem:[%s9 + $0x100] sm:$0xff]
  %v5914 = vld [vmem:[%s9 + $0x108] sm:$0xff]
  %v5915 = vld [vmem:[%s9 + $0x110] sm:$0xff]
  %v5916 = vld [vmem:[%s9 + $0x118] sm:$0xff]
  %v5917 = vld [vmem:[%s9 + $0x120] sm:$0xff]
  %v5918 = vld [vmem:[%s9 + $0x128] sm:$0xff]
  %v5919 = vld [vmem:[%s9 + $0x130] sm:$0xff]
  %v5920 = vld [vmem:[%s9 + $0x138] sm:$0xff]
  %v5921 = vld [vmem:[%s9 + $0x140] sm:$0xff]
  %v5922 = vld [vmem:[%s9 + $0x148] sm:$0xff]
  %v5923 = vld [vmem:[%s9 + $0x150] sm:$0xff]
  %v5924 = vld [vmem:[%s9 + $0x158] sm:$0xff]
  %v5925 = vld [vmem:[%s9 + $0x160] sm:$0xff]
  %v5926 = vld [vmem:[%s9 + $0x168] sm:$0xff]
  %v5927 = vld [vmem:[%s9 + $0x170] sm:$0xff]
  %v5928 = vld [vmem:[%s9 + $0x178] sm:$0xff]
  %v5929 = vld [vmem:[%s9 + $0x180] sm:$0xff]
  %v5930 = vld [vmem:[%s9 + $0x188] sm:$0xff]
  %v5931 = vld [vmem:[%s9 + $0x190] sm:$0xff]
  %v5932 = vld [vmem:[%s9 + $0x198] sm:$0xff]
  %v5933 = vld [vmem:[%s9 + $0x1a0] sm:$0xff]
  %v5934 = vld [vmem:[%s9 + $0x1a8] sm:$0xff]
  %v5935 = vld [vmem:[%s9 + $0x1b0] sm:$0xff]
  %v5936 = vld [vmem:[%s9 + $0x1b8] sm:$0xff]
  %v5937 = vld [vmem:[%s9 + $0x1c0] sm:$0xff]
  %v5938 = vld [vmem:[%s9 + $0x1c8] sm:$0xff]
  %v5939 = vld [vmem:[%s9 + $0x1d0] sm:$0xff]
  %v5940 = vld [vmem:[%s9 + $0x1d8] sm:$0xff]
  %v5941 = vld [vmem:[%s9 + $0x1e0] sm:$0xff]
  %v5942 = vld [vmem:[%s9 + $0x1e8] sm:$0xff]
  %v5943 = vld [vmem:[%s9 + $0x1f0] sm:$0xff]
  %v5944 = vld [vmem:[%s9 + $0x1f8] sm:$0xff]
  %s5945 = scalar_lea.vmem %s9, 512
  %v5946 = vld [vmem:[%s5945] ss:$8 sm:$0xf]
  %v5947 = vld [vmem:[%s5945] ss:$8 sm:$0xf0]
  %v5948 = vor.u32 %v5946, %v5947
  %s5949 = scalar_lea.vmem %s9, 576
  %v5950 = vld [vmem:[%s5949] ss:$8 sm:$0xf]
  %v5951 = vld [vmem:[%s5949] ss:$8 sm:$0xf0]
  %v5952 = vor.u32 %v5950, %v5951
  %v5955 = vlaneseq
  %v5956 = vshrl.u32 %v5955, 7
  %v5957 = vsub.s32 0, %v5956
  %v5958 = vrot.slane %v5948, %v5957
  %v5959 = vlaneseq
  %v5960 = vshrl.u32 %v5959, 7
  %v5961 = vsub.s32 1, %v5960
  %v5962 = vrot.slane %v5948, %v5961
  %v5963 = vlaneseq
  %v5964 = vshrl.u32 %v5963, 7
  %v5965 = vsub.s32 2, %v5964
  %v5966 = vrot.slane %v5948, %v5965
  %v5967 = vlaneseq
  %v5968 = vshrl.u32 %v5967, 7
  %v5969 = vsub.s32 3, %v5968
  %v5970 = vrot.slane %v5948, %v5969
  %v5971 = vlaneseq
  %v5972 = vshrl.u32 %v5971, 7
  %v5973 = vsub.s32 4, %v5972
  %v5974 = vrot.slane %v5948, %v5973
  %v5975 = vlaneseq
  %v5976 = vshrl.u32 %v5975, 7
  %v5977 = vsub.s32 5, %v5976
  %v5978 = vrot.slane %v5948, %v5977
  %v5979 = vlaneseq
  %v5980 = vshrl.u32 %v5979, 7
  %v5981 = vsub.s32 6, %v5980
  %v5982 = vrot.slane %v5948, %v5981
  %v5983 = vlaneseq
  %v5984 = vshrl.u32 %v5983, 7
  %v5985 = vsub.s32 7, %v5984
  %v5986 = vrot.slane %v5948, %v5985
  %v5987 = vlaneseq
  %v5988 = vshrl.u32 %v5987, 7
  %v5989 = vsub.s32 0, %v5988
  %v5990 = vrot.slane %v5952, %v5989
  %v5991 = vlaneseq
  %v5992 = vshrl.u32 %v5991, 7
  %v5993 = vsub.s32 1, %v5992
  %v5994 = vrot.slane %v5952, %v5993
  %v5995 = vlaneseq
  %v5996 = vshrl.u32 %v5995, 7
  %v5997 = vsub.s32 2, %v5996
  %v5998 = vrot.slane %v5952, %v5997
  %v5999 = vlaneseq
  %v6000 = vshrl.u32 %v5999, 7
  %v6001 = vsub.s32 3, %v6000
  %v6002 = vrot.slane %v5952, %v6001
  %v6003 = vlaneseq
  %v6004 = vshrl.u32 %v6003, 7
  %v6005 = vsub.s32 4, %v6004
  %v6006 = vrot.slane %v5952, %v6005
  %v6007 = vlaneseq
  %v6008 = vshrl.u32 %v6007, 7
  %v6009 = vsub.s32 5, %v6008
  %v6010 = vrot.slane %v5952, %v6009
  %v6011 = vlaneseq
  %v6012 = vshrl.u32 %v6011, 7
  %v6013 = vsub.s32 6, %v6012
  %v6014 = vrot.slane %v5952, %v6013
  %v6015 = vlaneseq
  %v6016 = vshrl.u32 %v6015, 7
  %v6017 = vsub.s32 7, %v6016
  %v6018 = vrot.slane %v5952, %v6017
  %v6036 = vsel %vm333, %v4283, 0
  %6038 = vmatprep.subr.mxu0 %v5882
  %6039 = vmatpush1.msra.mxu0 %v5881
  %6040 = vmatprep.subr.mxu0 %v5898
  %6041 = vmatpush1.msra.mxu0 %v5897
  %6042 = vmatprep.subr.mxu0 %v5914
  %6043 = vmatpush1.msra.mxu0 %v5913
  %6044 = vmatprep.subr.mxu0 %v5930
  %6045 = vmatpush1.msra.mxu0 %v5929
  %6046 = vmatprep.subr.mxu0 0.0
  %6047 = vmatpush1.msra.mxu0 0.0
  %6048 = vmatprep.subr.mxu0 0.0
  %6049 = vmatpush1.msra.mxu0 0.0
  %6050 = vmatprep.subr.mxu0 0.0
  %6051 = vmatpush1.msra.mxu0 0.0
  %6052 = vmatprep.subr.mxu0 0.0
  %6053 = vmatpush1.msra.mxu0 0.0
  %6054 = vmatprep.subr.mxu0 0.0
  %6055 = vmatpush1.msra.mxu0 0.0
  %6056 = vmatprep.subr.mxu0 0.0
  %6057 = vmatpush1.msra.mxu0 0.0
  %6058 = vmatprep.subr.mxu0 0.0
  %6059 = vmatpush1.msra.mxu0 0.0
  %6060 = vmatprep.subr.mxu0 0.0
  %6061 = vmatpush1.msra.mxu0 0.0
  %6062 = vmatprep.subr.mxu0 0.0
  %6063 = vmatpush1.msra.mxu0 0.0
  %6064 = vmatprep.subr.mxu0 0.0
  %6065 = vmatpush1.msra.mxu0 0.0
  %6066 = vmatprep.subr.mxu0 0.0
  %6067 = vmatpush1.msra.mxu0 0.0
  %6068 = vmatprep.subr.mxu0 0.0
  %6069 = vmatpush1.msra.mxu0 0.0
  %6070 = vmatprep.subr.mxu0 0.0
  %6071 = vmatpush1.msra.mxu0 0.0
  %6072 = vmatprep.subr.mxu0 0.0
  %6073 = vmatpush1.msra.mxu0 0.0
  %6074 = vmatprep.subr.mxu0 0.0
  %6075 = vmatpush1.msra.mxu0 0.0
  %6076 = vmatprep.subr.mxu0 0.0
  %6077 = vmatpush1.msra.mxu0 0.0
  %6078 = vmatprep.subr.mxu0 0.0
  %6079 = vmatpush1.msra.mxu0 0.0
  %6080 = vmatprep.subr.mxu0 0.0
  %6081 = vmatpush1.msra.mxu0 0.0
  %6082 = vmatprep.subr.mxu0 0.0
  %6083 = vmatpush1.msra.mxu0 0.0
  %6084 = vmatprep.subr.mxu0 0.0
  %6085 = vmatpush1.msra.mxu0 0.0
  %6086 = vmatprep.subr.mxu0 0.0
  %6087 = vmatpush1.msra.mxu0 0.0
  %6088 = vmatprep.subr.mxu0 0.0
  %6089 = vmatpush1.msra.mxu0 0.0
  %6090 = vmatprep.subr.mxu0 0.0
  %6091 = vmatpush1.msra.mxu0 0.0
  %6092 = vmatprep.subr.mxu0 0.0
  %6093 = vmatpush1.msra.mxu0 0.0
  %6094 = vmatprep.subr.mxu0 0.0
  %6095 = vmatpush1.msra.mxu0 0.0
  %6096 = vmatprep.subr.mxu0 0.0
  %6097 = vmatpush1.msra.mxu0 0.0
  %6098 = vmatprep.subr.mxu0 0.0
  %6099 = vmatpush1.msra.mxu0 0.0
  %6100 = vmatprep.subr.mxu0 0.0
  %6101 = vmatpush1.msra.mxu0 0.0
  %6102 = vmatprep.mubr.f32.mxu0 0.0
  %6103 = vmatmul.mubr.f32.gmra.mrb[0].mxu0 %v6036
  %v6104 = vpop.f32.mrb[0].mxu0
  %v6105 = vadd.f32 %v5958, %v6104
  %v6106 = vpop.f32.mrb[0].mxu0
  %v6107 = vadd.f32 %v5962, %v6106
  %6108 = vdwg.mxu0
  %6109 = vmatprep.subr.mxu0 %v5884
  %6110 = vmatpush1.msra.mxu0 %v5883
  %6111 = vmatprep.subr.mxu0 %v5900
  %6112 = vmatpush1.msra.mxu0 %v5899
  %6113 = vmatprep.subr.mxu0 %v5916
  %6114 = vmatpush1.msra.mxu0 %v5915
  %6115 = vmatprep.subr.mxu0 %v5932
  %6116 = vmatpush1.msra.mxu0 %v5931
  %6117 = vmatprep.subr.mxu0 0.0
  %6118 = vmatpush1.msra.mxu0 0.0
  %6119 = vmatprep.subr.mxu0 0.0
  %6120 = vmatpush1.msra.mxu0 0.0
  %6121 = vmatprep.subr.mxu0 0.0
  %6122 = vmatpush1.msra.mxu0 0.0
  %6123 = vmatprep.subr.mxu0 0.0
  %6124 = vmatpush1.msra.mxu0 0.0
  %6125 = vmatprep.subr.mxu0 0.0
  %6126 = vmatpush1.msra.mxu0 0.0
  %6127 = vmatprep.subr.mxu0 0.0
  %6128 = vmatpush1.msra.mxu0 0.0
  %6129 = vmatprep.subr.mxu0 0.0
  %6130 = vmatpush1.msra.mxu0 0.0
  %6131 = vmatprep.subr.mxu0 0.0
  %6132 = vmatpush1.msra.mxu0 0.0
  %6133 = vmatprep.subr.mxu0 0.0
  %6134 = vmatpush1.msra.mxu0 0.0
  %6135 = vmatprep.subr.mxu0 0.0
  %6136 = vmatpush1.msra.mxu0 0.0
  %6137 = vmatprep.subr.mxu0 0.0
  %6138 = vmatpush1.msra.mxu0 0.0
  %6139 = vmatprep.subr.mxu0 0.0
  %6140 = vmatpush1.msra.mxu0 0.0
  %6141 = vmatprep.subr.mxu0 0.0
  %6142 = vmatpush1.msra.mxu0 0.0
  %6143 = vmatprep.subr.mxu0 0.0
  %6144 = vmatpush1.msra.mxu0 0.0
  %6145 = vmatprep.subr.mxu0 0.0
  %6146 = vmatpush1.msra.mxu0 0.0
  %6147 = vmatprep.subr.mxu0 0.0
  %6148 = vmatpush1.msra.mxu0 0.0
  %6149 = vmatprep.subr.mxu0 0.0
  %6150 = vmatpush1.msra.mxu0 0.0
  %6151 = vmatprep.subr.mxu0 0.0
  %6152 = vmatpush1.msra.mxu0 0.0
  %6153 = vmatprep.subr.mxu0 0.0
  %6154 = vmatpush1.msra.mxu0 0.0
  %6155 = vmatprep.subr.mxu0 0.0
  %6156 = vmatpush1.msra.mxu0 0.0
  %6157 = vmatprep.subr.mxu0 0.0
  %6158 = vmatpush1.msra.mxu0 0.0
  %6159 = vmatprep.subr.mxu0 0.0
  %6160 = vmatpush1.msra.mxu0 0.0
  %6161 = vmatprep.subr.mxu0 0.0
  %6162 = vmatpush1.msra.mxu0 0.0
  %6163 = vmatprep.subr.mxu0 0.0
  %6164 = vmatpush1.msra.mxu0 0.0
  %6165 = vmatprep.subr.mxu0 0.0
  %6166 = vmatpush1.msra.mxu0 0.0
  %6167 = vmatprep.subr.mxu0 0.0
  %6168 = vmatpush1.msra.mxu0 0.0
  %6169 = vmatprep.subr.mxu0 0.0
  %6170 = vmatpush1.msra.mxu0 0.0
  %6171 = vmatprep.subr.mxu0 0.0
  %6172 = vmatpush1.msra.mxu0 0.0
  %6173 = vmatprep.mubr.f32.mxu0 0.0
  %6174 = vmatmul.mubr.f32.gmra.mrb[0].mxu0 %v6036
  %v6175 = vpop.f32.mrb[0].mxu0
  %v6176 = vadd.f32 %v5966, %v6175
  %v6177 = vpop.f32.mrb[0].mxu0
  %v6178 = vadd.f32 %v5970, %v6177
  %6179 = vdwg.mxu0
  %6180 = vmatprep.subr.mxu0 %v5886
  %6181 = vmatpush1.msra.mxu0 %v5885
  %6182 = vmatprep.subr.mxu0 %v5902
  %6183 = vmatpush1.msra.mxu0 %v5901
  %6184 = vmatprep.subr.mxu0 %v5918
  %6185 = vmatpush1.msra.mxu0 %v5917
  %6186 = vmatprep.subr.mxu0 %v5934
  %6187 = vmatpush1.msra.mxu0 %v5933
  %6188 = vmatprep.subr.mxu0 0.0
  %6189 = vmatpush1.msra.mxu0 0.0
  %6190 = vmatprep.subr.mxu0 0.0
  %6191 = vmatpush1.msra.mxu0 0.0
  %6192 = vmatprep.subr.mxu0 0.0
  %6193 = vmatpush1.msra.mxu0 0.0
  %6194 = vmatprep.subr.mxu0 0.0
  %6195 = vmatpush1.msra.mxu0 0.0
  %6196 = vmatprep.subr.mxu0 0.0
  %6197 = vmatpush1.msra.mxu0 0.0
  %6198 = vmatprep.subr.mxu0 0.0
  %6199 = vmatpush1.msra.mxu0 0.0
  %6200 = vmatprep.subr.mxu0 0.0
  %6201 = vmatpush1.msra.mxu0 0.0
  %6202 = vmatprep.subr.mxu0 0.0
  %6203 = vmatpush1.msra.mxu0 0.0
  %6204 = vmatprep.subr.mxu0 0.0
  %6205 = vmatpush1.msra.mxu0 0.0
  %6206 = vmatprep.subr.mxu0 0.0
  %6207 = vmatpush1.msra.mxu0 0.0
  %6208 = vmatprep.subr.mxu0 0.0
  %6209 = vmatpush1.msra.mxu0 0.0
  %6210 = vmatprep.subr.mxu0 0.0
  %6211 = vmatpush1.msra.mxu0 0.0
  %6212 = vmatprep.subr.mxu0 0.0
  %6213 = vmatpush1.msra.mxu0 0.0
  %6214 = vmatprep.subr.mxu0 0.0
  %6215 = vmatpush1.msra.mxu0 0.0
  %6216 = vmatprep.subr.mxu0 0.0
  %6217 = vmatpush1.msra.mxu0 0.0
  %6218 = vmatprep.subr.mxu0 0.0
  %6219 = vmatpush1.msra.mxu0 0.0
  %6220 = vmatprep.subr.mxu0 0.0
  %6221 = vmatpush1.msra.mxu0 0.0
  %6222 = vmatprep.subr.mxu0 0.0
  %6223 = vmatpush1.msra.mxu0 0.0
  %6224 = vmatprep.subr.mxu0 0.0
  %6225 = vmatpush1.msra.mxu0 0.0
  %6226 = vmatprep.subr.mxu0 0.0
  %6227 = vmatpush1.msra.mxu0 0.0
  %6228 = vmatprep.subr.mxu0 0.0
  %6229 = vmatpush1.msra.mxu0 0.0
  %6230 = vmatprep.subr.mxu0 0.0
  %6231 = vmatpush1.msra.mxu0 0.0
  %6232 = vmatprep.subr.mxu0 0.0
  %6233 = vmatpush1.msra.mxu0 0.0
  %6234 = vmatprep.subr.mxu0 0.0
  %6235 = vmatpush1.msra.mxu0 0.0
  %6236 = vmatprep.subr.mxu0 0.0
  %6237 = vmatpush1.msra.mxu0 0.0
  %6238 = vmatprep.subr.mxu0 0.0
  %6239 = vmatpush1.msra.mxu0 0.0
  %6240 = vmatprep.subr.mxu0 0.0
  %6241 = vmatpush1.msra.mxu0 0.0
  %6242 = vmatprep.subr.mxu0 0.0
  %6243 = vmatpush1.msra.mxu0 0.0
  %6244 = vmatprep.mubr.f32.mxu0 0.0
  %6245 = vmatmul.mubr.f32.gmra.mrb[0].mxu0 %v6036
  %v6246 = vpop.f32.mrb[0].mxu0
  %v6247 = vadd.f32 %v5974, %v6246
  %v6248 = vpop.f32.mrb[0].mxu0
  %v6249 = vadd.f32 %v5978, %v6248
  %6250 = vdwg.mxu0
  %6251 = vmatprep.subr.mxu0 %v5888
  %6252 = vmatpush1.msra.mxu0 %v5887
  %6253 = vmatprep.subr.mxu0 %v5904
  %6254 = vmatpush1.msra.mxu0 %v5903
  %6255 = vmatprep.subr.mxu0 %v5920
  %6256 = vmatpush1.msra.mxu0 %v5919
  %6257 = vmatprep.subr.mxu0 %v5936
  %6258 = vmatpush1.msra.mxu0 %v5935
  %6259 = vmatprep.subr.mxu0 0.0
  %6260 = vmatpush1.msra.mxu0 0.0
  %6261 = vmatprep.subr.mxu0 0.0
  %6262 = vmatpush1.msra.mxu0 0.0
  %6263 = vmatprep.subr.mxu0 0.0
  %6264 = vmatpush1.msra.mxu0 0.0
  %6265 = vmatprep.subr.mxu0 0.0
  %6266 = vmatpush1.msra.mxu0 0.0
  %6267 = vmatprep.subr.mxu0 0.0
  %6268 = vmatpush1.msra.mxu0 0.0
  %6269 = vmatprep.subr.mxu0 0.0
  %6270 = vmatpush1.msra.mxu0 0.0
  %6271 = vmatprep.subr.mxu0 0.0
  %6272 = vmatpush1.msra.mxu0 0.0
  %6273 = vmatprep.subr.mxu0 0.0
  %6274 = vmatpush1.msra.mxu0 0.0
  %6275 = vmatprep.subr.mxu0 0.0
  %6276 = vmatpush1.msra.mxu0 0.0
  %6277 = vmatprep.subr.mxu0 0.0
  %6278 = vmatpush1.msra.mxu0 0.0
  %6279 = vmatprep.subr.mxu0 0.0
  %6280 = vmatpush1.msra.mxu0 0.0
  %6281 = vmatprep.subr.mxu0 0.0
  %6282 = vmatpush1.msra.mxu0 0.0
  %6283 = vmatprep.subr.mxu0 0.0
  %6284 = vmatpush1.msra.mxu0 0.0
  %6285 = vmatprep.subr.mxu0 0.0
  %6286 = vmatpush1.msra.mxu0 0.0
  %6287 = vmatprep.subr.mxu0 0.0
  %6288 = vmatpush1.msra.mxu0 0.0
  %6289 = vmatprep.subr.mxu0 0.0
  %6290 = vmatpush1.msra.mxu0 0.0
  %6291 = vmatprep.subr.mxu0 0.0
  %6292 = vmatpush1.msra.mxu0 0.0
  %6293 = vmatprep.subr.mxu0 0.0
  %6294 = vmatpush1.msra.mxu0 0.0
  %6295 = vmatprep.subr.mxu0 0.0
  %6296 = vmatpush1.msra.mxu0 0.0
  %6297 = vmatprep.subr.mxu0 0.0
  %6298 = vmatpush1.msra.mxu0 0.0
  %6299 = vmatprep.subr.mxu0 0.0
  %6300 = vmatpush1.msra.mxu0 0.0
  %6301 = vmatprep.subr.mxu0 0.0
  %6302 = vmatpush1.msra.mxu0 0.0
  %6303 = vmatprep.subr.mxu0 0.0
  %6304 = vmatpush1.msra.mxu0 0.0
  %6305 = vmatprep.subr.mxu0 0.0
  %6306 = vmatpush1.msra.mxu0 0.0
  %6307 = vmatprep.subr.mxu0 0.0
  %6308 = vmatpush1.msra.mxu0 0.0
  %6309 = vmatprep.subr.mxu0 0.0
  %6310 = vmatpush1.msra.mxu0 0.0
  %6311 = vmatprep.subr.mxu0 0.0
  %6312 = vmatpush1.msra.mxu0 0.0
  %6313 = vmatprep.subr.mxu0 0.0
  %6314 = vmatpush1.msra.mxu0 0.0
  %6315 = vmatprep.mubr.f32.mxu0 0.0
  %6316 = vmatmul.mubr.f32.gmra.mrb[0].mxu0 %v6036
  %v6317 = vpop.f32.mrb[0].mxu0
  %v6318 = vadd.f32 %v5982, %v6317
  %v6319 = vpop.f32.mrb[0].mxu0
  %v6320 = vadd.f32 %v5986, %v6319
  %6321 = vdwg.mxu0
  %6322 = vmatprep.subr.mxu0 %v5890
  %6323 = vmatpush1.msra.mxu0 %v5889
  %6324 = vmatprep.subr.mxu0 %v5906
  %6325 = vmatpush1.msra.mxu0 %v5905
  %6326 = vmatprep.subr.mxu0 %v5922
  %6327 = vmatpush1.msra.mxu0 %v5921
  %6328 = vmatprep.subr.mxu0 %v5938
  %6329 = vmatpush1.msra.mxu0 %v5937
  %6330 = vmatprep.subr.mxu0 0.0
  %6331 = vmatpush1.msra.mxu0 0.0
  %6332 = vmatprep.subr.mxu0 0.0
  %6333 = vmatpush1.msra.mxu0 0.0
  %6334 = vmatprep.subr.mxu0 0.0
  %6335 = vmatpush1.msra.mxu0 0.0
  %6336 = vmatprep.subr.mxu0 0.0
  %6337 = vmatpush1.msra.mxu0 0.0
  %6338 = vmatprep.subr.mxu0 0.0
  %6339 = vmatpush1.msra.mxu0 0.0
  %6340 = vmatprep.subr.mxu0 0.0
  %6341 = vmatpush1.msra.mxu0 0.0
  %6342 = vmatprep.subr.mxu0 0.0
  %6343 = vmatpush1.msra.mxu0 0.0
  %6344 = vmatprep.subr.mxu0 0.0
  %6345 = vmatpush1.msra.mxu0 0.0
  %6346 = vmatprep.subr.mxu0 0.0
  %6347 = vmatpush1.msra.mxu0 0.0
  %6348 = vmatprep.subr.mxu0 0.0
  %6349 = vmatpush1.msra.mxu0 0.0
  %6350 = vmatprep.subr.mxu0 0.0
  %6351 = vmatpush1.msra.mxu0 0.0
  %6352 = vmatprep.subr.mxu0 0.0
  %6353 = vmatpush1.msra.mxu0 0.0
  %6354 = vmatprep.subr.mxu0 0.0
  %6355 = vmatpush1.msra.mxu0 0.0
  %6356 = vmatprep.subr.mxu0 0.0
  %6357 = vmatpush1.msra.mxu0 0.0
  %6358 = vmatprep.subr.mxu0 0.0
  %6359 = vmatpush1.msra.mxu0 0.0
  %6360 = vmatprep.subr.mxu0 0.0
  %6361 = vmatpush1.msra.mxu0 0.0
  %6362 = vmatprep.subr.mxu0 0.0
  %6363 = vmatpush1.msra.mxu0 0.0
  %6364 = vmatprep.subr.mxu0 0.0
  %6365 = vmatpush1.msra.mxu0 0.0
  %6366 = vmatprep.subr.mxu0 0.0
  %6367 = vmatpush1.msra.mxu0 0.0
  %6368 = vmatprep.subr.mxu0 0.0
  %6369 = vmatpush1.msra.mxu0 0.0
  %6370 = vmatprep.subr.mxu0 0.0
  %6371 = vmatpush1.msra.mxu0 0.0
  %6372 = vmatprep.subr.mxu0 0.0
  %6373 = vmatpush1.msra.mxu0 0.0
  %6374 = vmatprep.subr.mxu0 0.0
  %6375 = vmatpush1.msra.mxu0 0.0
  %6376 = vmatprep.subr.mxu0 0.0
  %6377 = vmatpush1.msra.mxu0 0.0
  %6378 = vmatprep.subr.mxu0 0.0
  %6379 = vmatpush1.msra.mxu0 0.0
  %6380 = vmatprep.subr.mxu0 0.0
  %6381 = vmatpush1.msra.mxu0 0.0
  %6382 = vmatprep.subr.mxu0 0.0
  %6383 = vmatpush1.msra.mxu0 0.0
  %6384 = vmatprep.subr.mxu0 0.0
  %6385 = vmatpush1.msra.mxu0 0.0
  %6386 = vmatprep.mubr.f32.mxu0 0.0
  %6387 = vmatmul.mubr.f32.gmra.mrb[0].mxu0 %v6036
  %v6388 = vpop.f32.mrb[0].mxu0
  %v6389 = vadd.f32 %v5990, %v6388
  %v6390 = vpop.f32.mrb[0].mxu0
  %v6391 = vadd.f32 %v5994, %v6390
  %6392 = vdwg.mxu0
  %6393 = vmatprep.subr.mxu0 %v5892
  %6394 = vmatpush1.msra.mxu0 %v5891
  %6395 = vmatprep.subr.mxu0 %v5908
  %6396 = vmatpush1.msra.mxu0 %v5907
  %6397 = vmatprep.subr.mxu0 %v5924
  %6398 = vmatpush1.msra.mxu0 %v5923
  %6399 = vmatprep.subr.mxu0 %v5940
  %6400 = vmatpush1.msra.mxu0 %v5939
  %6401 = vmatprep.subr.mxu0 0.0
  %6402 = vmatpush1.msra.mxu0 0.0
  %6403 = vmatprep.subr.mxu0 0.0
  %6404 = vmatpush1.msra.mxu0 0.0
  %6405 = vmatprep.subr.mxu0 0.0
  %6406 = vmatpush1.msra.mxu0 0.0
  %6407 = vmatprep.subr.mxu0 0.0
  %6408 = vmatpush1.msra.mxu0 0.0
  %6409 = vmatprep.subr.mxu0 0.0
  %6410 = vmatpush1.msra.mxu0 0.0
  %6411 = vmatprep.subr.mxu0 0.0
  %6412 = vmatpush1.msra.mxu0 0.0
  %6413 = vmatprep.subr.mxu0 0.0
  %6414 = vmatpush1.msra.mxu0 0.0
  %6415 = vmatprep.subr.mxu0 0.0
  %6416 = vmatpush1.msra.mxu0 0.0
  %6417 = vmatprep.subr.mxu0 0.0
  %6418 = vmatpush1.msra.mxu0 0.0
  %6419 = vmatprep.subr.mxu0 0.0
  %6420 = vmatpush1.msra.mxu0 0.0
  %6421 = vmatprep.subr.mxu0 0.0
  %6422 = vmatpush1.msra.mxu0 0.0
  %6423 = vmatprep.subr.mxu0 0.0
  %6424 = vmatpush1.msra.mxu0 0.0
  %6425 = vmatprep.subr.mxu0 0.0
  %6426 = vmatpush1.msra.mxu0 0.0
  %6427 = vmatprep.subr.mxu0 0.0
  %6428 = vmatpush1.msra.mxu0 0.0
  %6429 = vmatprep.subr.mxu0 0.0
  %6430 = vmatpush1.msra.mxu0 0.0
  %6431 = vmatprep.subr.mxu0 0.0
  %6432 = vmatpush1.msra.mxu0 0.0
  %6433 = vmatprep.subr.mxu0 0.0
  %6434 = vmatpush1.msra.mxu0 0.0
  %6435 = vmatprep.subr.mxu0 0.0
  %6436 = vmatpush1.msra.mxu0 0.0
  %6437 = vmatprep.subr.mxu0 0.0
  %6438 = vmatpush1.msra.mxu0 0.0
  %6439 = vmatprep.subr.mxu0 0.0
  %6440 = vmatpush1.msra.mxu0 0.0
  %6441 = vmatprep.subr.mxu0 0.0
  %6442 = vmatpush1.msra.mxu0 0.0
  %6443 = vmatprep.subr.mxu0 0.0
  %6444 = vmatpush1.msra.mxu0 0.0
  %6445 = vmatprep.subr.mxu0 0.0
  %6446 = vmatpush1.msra.mxu0 0.0
  %6447 = vmatprep.subr.mxu0 0.0
  %6448 = vmatpush1.msra.mxu0 0.0
  %6449 = vmatprep.subr.mxu0 0.0
  %6450 = vmatpush1.msra.mxu0 0.0
  %6451 = vmatprep.subr.mxu0 0.0
  %6452 = vmatpush1.msra.mxu0 0.0
  %6453 = vmatprep.subr.mxu0 0.0
  %6454 = vmatpush1.msra.mxu0 0.0
  %6455 = vmatprep.subr.mxu0 0.0
  %6456 = vmatpush1.msra.mxu0 0.0
  %6457 = vmatprep.mubr.f32.mxu0 0.0
  %6458 = vmatmul.mubr.f32.gmra.mrb[0].mxu0 %v6036
  %v6459 = vpop.f32.mrb[0].mxu0
  %v6460 = vadd.f32 %v5998, %v6459
  %v6461 = vpop.f32.mrb[0].mxu0
  %v6462 = vadd.f32 %v6002, %v6461
  %6463 = vdwg.mxu0
  %6464 = vmatprep.subr.mxu0 %v5894
  %6465 = vmatpush1.msra.mxu0 %v5893
  %6466 = vmatprep.subr.mxu0 %v5910
  %6467 = vmatpush1.msra.mxu0 %v5909
  %6468 = vmatprep.subr.mxu0 %v5926
  %6469 = vmatpush1.msra.mxu0 %v5925
  %6470 = vmatprep.subr.mxu0 %v5942
  %6471 = vmatpush1.msra.mxu0 %v5941
  %6472 = vmatprep.subr.mxu0 0.0
  %6473 = vmatpush1.msra.mxu0 0.0
  %6474 = vmatprep.subr.mxu0 0.0
  %6475 = vmatpush1.msra.mxu0 0.0
  %6476 = vmatprep.subr.mxu0 0.0
  %6477 = vmatpush1.msra.mxu0 0.0
  %6478 = vmatprep.subr.mxu0 0.0
  %6479 = vmatpush1.msra.mxu0 0.0
  %6480 = vmatprep.subr.mxu0 0.0
  %6481 = vmatpush1.msra.mxu0 0.0
  %6482 = vmatprep.subr.mxu0 0.0
  %6483 = vmatpush1.msra.mxu0 0.0
  %6484 = vmatprep.subr.mxu0 0.0
  %6485 = vmatpush1.msra.mxu0 0.0
  %6486 = vmatprep.subr.mxu0 0.0
  %6487 = vmatpush1.msra.mxu0 0.0
  %6488 = vmatprep.subr.mxu0 0.0
  %6489 = vmatpush1.msra.mxu0 0.0
  %6490 = vmatprep.subr.mxu0 0.0
  %6491 = vmatpush1.msra.mxu0 0.0
  %6492 = vmatprep.subr.mxu0 0.0
  %6493 = vmatpush1.msra.mxu0 0.0
  %6494 = vmatprep.subr.mxu0 0.0
  %6495 = vmatpush1.msra.mxu0 0.0
  %6496 = vmatprep.subr.mxu0 0.0
  %6497 = vmatpush1.msra.mxu0 0.0
  %6498 = vmatprep.subr.mxu0 0.0
  %6499 = vmatpush1.msra.mxu0 0.0
  %6500 = vmatprep.subr.mxu0 0.0
  %6501 = vmatpush1.msra.mxu0 0.0
  %6502 = vmatprep.subr.mxu0 0.0
  %6503 = vmatpush1.msra.mxu0 0.0
  %6504 = vmatprep.subr.mxu0 0.0
  %6505 = vmatpush1.msra.mxu0 0.0
  %6506 = vmatprep.subr.mxu0 0.0
  %6507 = vmatpush1.msra.mxu0 0.0
  %6508 = vmatprep.subr.mxu0 0.0
  %6509 = vmatpush1.msra.mxu0 0.0
  %6510 = vmatprep.subr.mxu0 0.0
  %6511 = vmatpush1.msra.mxu0 0.0
  %6512 = vmatprep.subr.mxu0 0.0
  %6513 = vmatpush1.msra.mxu0 0.0
  %6514 = vmatprep.subr.mxu0 0.0
  %6515 = vmatpush1.msra.mxu0 0.0
  %6516 = vmatprep.subr.mxu0 0.0
  %6517 = vmatpush1.msra.mxu0 0.0
  %6518 = vmatprep.subr.mxu0 0.0
  %6519 = vmatpush1.msra.mxu0 0.0
  %6520 = vmatprep.subr.mxu0 0.0
  %6521 = vmatpush1.msra.mxu0 0.0
  %6522 = vmatprep.subr.mxu0 0.0
  %6523 = vmatpush1.msra.mxu0 0.0
  %6524 = vmatprep.subr.mxu0 0.0
  %6525 = vmatpush1.msra.mxu0 0.0
  %6526 = vmatprep.subr.mxu0 0.0
  %6527 = vmatpush1.msra.mxu0 0.0
  %6528 = vmatprep.mubr.f32.mxu0 0.0
  %6529 = vmatmul.mubr.f32.gmra.mrb[0].mxu0 %v6036
  %v6530 = vpop.f32.mrb[0].mxu0
  %v6531 = vadd.f32 %v6006, %v6530
  %v6532 = vpop.f32.mrb[0].mxu0
  %v6533 = vadd.f32 %v6010, %v6532
  %6534 = vdwg.mxu0
  %6535 = vmatprep.subr.mxu0 %v5896
  %6536 = vmatpush1.msra.mxu0 %v5895
  %6537 = vmatprep.subr.mxu0 %v5912
  %6538 = vmatpush1.msra.mxu0 %v5911
  %6539 = vmatprep.subr.mxu0 %v5928
  %6540 = vmatpush1.msra.mxu0 %v5927
  %6541 = vmatprep.subr.mxu0 %v5944
  %6542 = vmatpush1.msra.mxu0 %v5943
  %6543 = vmatprep.subr.mxu0 0.0
  %6544 = vmatpush1.msra.mxu0 0.0
  %6545 = vmatprep.subr.mxu0 0.0
  %6546 = vmatpush1.msra.mxu0 0.0
  %6547 = vmatprep.subr.mxu0 0.0
  %6548 = vmatpush1.msra.mxu0 0.0
  %6549 = vmatprep.subr.mxu0 0.0
  %6550 = vmatpush1.msra.mxu0 0.0
  %6551 = vmatprep.subr.mxu0 0.0
  %6552 = vmatpush1.msra.mxu0 0.0
  %6553 = vmatprep.subr.mxu0 0.0
  %6554 = vmatpush1.msra.mxu0 0.0
  %6555 = vmatprep.subr.mxu0 0.0
  %6556 = vmatpush1.msra.mxu0 0.0
  %6557 = vmatprep.subr.mxu0 0.0
  %6558 = vmatpush1.msra.mxu0 0.0
  %6559 = vmatprep.subr.mxu0 0.0
  %6560 = vmatpush1.msra.mxu0 0.0
  %6561 = vmatprep.subr.mxu0 0.0
  %6562 = vmatpush1.msra.mxu0 0.0
  %6563 = vmatprep.subr.mxu0 0.0
  %6564 = vmatpush1.msra.mxu0 0.0
  %6565 = vmatprep.subr.mxu0 0.0
  %6566 = vmatpush1.msra.mxu0 0.0
  %6567 = vmatprep.subr.mxu0 0.0
  %6568 = vmatpush1.msra.mxu0 0.0
  %6569 = vmatprep.subr.mxu0 0.0
  %6570 = vmatpush1.msra.mxu0 0.0
  %6571 = vmatprep.subr.mxu0 0.0
  %6572 = vmatpush1.msra.mxu0 0.0
  %6573 = vmatprep.subr.mxu0 0.0
  %6574 = vmatpush1.msra.mxu0 0.0
  %6575 = vmatprep.subr.mxu0 0.0
  %6576 = vmatpush1.msra.mxu0 0.0
  %6577 = vmatprep.subr.mxu0 0.0
  %6578 = vmatpush1.msra.mxu0 0.0
  %6579 = vmatprep.subr.mxu0 0.0
  %6580 = vmatpush1.msra.mxu0 0.0
  %6581 = vmatprep.subr.mxu0 0.0
  %6582 = vmatpush1.msra.mxu0 0.0
  %6583 = vmatprep.subr.mxu0 0.0
  %6584 = vmatpush1.msra.mxu0 0.0
  %6585 = vmatprep.subr.mxu0 0.0
  %6586 = vmatpush1.msra.mxu0 0.0
  %6587 = vmatprep.subr.mxu0 0.0
  %6588 = vmatpush1.msra.mxu0 0.0
  %6589 = vmatprep.subr.mxu0 0.0
  %6590 = vmatpush1.msra.mxu0 0.0
  %6591 = vmatprep.subr.mxu0 0.0
  %6592 = vmatpush1.msra.mxu0 0.0
  %6593 = vmatprep.subr.mxu0 0.0
  %6594 = vmatpush1.msra.mxu0 0.0
  %6595 = vmatprep.subr.mxu0 0.0
  %6596 = vmatpush1.msra.mxu0 0.0
  %6597 = vmatprep.subr.mxu0 0.0
  %6598 = vmatpush1.msra.mxu0 0.0
  %6599 = vmatprep.mubr.f32.mxu0 0.0
  %6600 = vmatmul.mubr.f32.gmra.mrb[0].mxu0 %v6036
  %v6601 = vpop.f32.mrb[0].mxu0
  %v6602 = vadd.f32 %v6014, %v6601
  %v6603 = vpop.f32.mrb[0].mxu0
  %v6604 = vadd.f32 %v6018, %v6603
  %6605 = vdwg.mxu0
  %6607 = vrot.lane.b32.xlu0 %v6105, 64
  %v6608 = vpop.permute.xlu0 %6607
  %6611 = vrot.lane.b32.xlu0 %v6107, 64
  %v6612 = vpop.permute.xlu0 %6611
  %6615 = vrot.lane.b32.xlu0 %v6176, 64
  %v6616 = vpop.permute.xlu0 %6615
  %6619 = vrot.lane.b32.xlu0 %v6178, 64
  %v6620 = vpop.permute.xlu0 %6619
  %6623 = vrot.lane.b32.xlu0 %v6247, 64
  %v6624 = vpop.permute.xlu0 %6623
  %6627 = vrot.lane.b32.xlu0 %v6249, 64
  %v6628 = vpop.permute.xlu0 %6627
  %6631 = vrot.lane.b32.xlu0 %v6318, 64
  %v6632 = vpop.permute.xlu0 %6631
  %6635 = vrot.lane.b32.xlu0 %v6320, 64
  %v6636 = vpop.permute.xlu0 %6635
  %6639 = vrot.lane.b32.xlu0 %v6389, 64
  %v6640 = vpop.permute.xlu0 %6639
  %6643 = vrot.lane.b32.xlu0 %v6391, 64
  %v6644 = vpop.permute.xlu0 %6643
  %6647 = vrot.lane.b32.xlu0 %v6460, 64
  %v6648 = vpop.permute.xlu0 %6647
  %6651 = vrot.lane.b32.xlu0 %v6462, 64
  %v6652 = vpop.permute.xlu0 %6651
  %6655 = vrot.lane.b32.xlu0 %v6531, 64
  %v6656 = vpop.permute.xlu0 %6655
  %6659 = vrot.lane.b32.xlu0 %v6533, 64
  %v6660 = vpop.permute.xlu0 %6659
  %6663 = vrot.lane.b32.xlu0 %v6602, 64
  %v6664 = vpop.permute.xlu0 %6663
  %6667 = vrot.lane.b32.xlu0 %v6604, 64
  %v6668 = vpop.permute.xlu0 %6667
  %v6670 = vcombine.low %v6105, %v6107
  %v6672 = vunpack.c.l.s4 1983009808
  %v6673 = vunpack.c.0.s8 %v6672
  %v6674 = vlaneseq
  %v6675 = vshrl.u32 %v6674, 7
  %v6676 = vsub.s32 %v6673, %v6675
  %v6677 = vrot.slane %v6670, %v6676
  %v6678 = vcombine.low %v6608, %v6612
  %v6680 = vunpack.c.l.s4 1983009808
  %v6681 = vunpack.c.0.s8 %v6680
  %v6682 = vlaneseq
  %v6683 = vshrl.u32 %v6682, 7
  %v6684 = vsub.s32 %v6681, %v6683
  %v6685 = vrot.slane %v6678, %v6684
  %v6686 = vcombine.low %v6176, %v6178
  %v6688 = vunpack.c.l.s4 1983009808
  %v6689 = vunpack.c.0.s8 %v6688
  %v6690 = vlaneseq
  %v6691 = vshrl.u32 %v6690, 7
  %v6692 = vsub.s32 %v6689, %v6691
  %v6693 = vrot.slane %v6686, %v6692
  %v6694 = vcombine.low %v6616, %v6620
  %v6696 = vunpack.c.l.s4 1983009808
  %v6697 = vunpack.c.0.s8 %v6696
  %v6698 = vlaneseq
  %v6699 = vshrl.u32 %v6698, 7
  %v6700 = vsub.s32 %v6697, %v6699
  %v6701 = vrot.slane %v6694, %v6700
  %v6702 = vcombine.low %v6677, %v6685
  %v6704 = vunpack.c.l.s4 1934713408
  %v6705 = vunpack.c.0.s8 %v6704
  %v6706 = vlaneseq
  %v6707 = vshrl.u32 %v6706, 7
  %v6708 = vsub.s32 %v6705, %v6707
  %v6709 = vrot.slane %v6702, %v6708
  %v6710 = vcombine.low %v6693, %v6701
  %v6712 = vunpack.c.l.s4 1934713408
  %v6713 = vunpack.c.0.s8 %v6712
  %v6714 = vlaneseq
  %v6715 = vshrl.u32 %v6714, 7
  %v6716 = vsub.s32 %v6713, %v6715
  %v6717 = vrot.slane %v6710, %v6716
  %v6718 = vcombine.low %v6709, %v6717
  %v6719 = vcombine.high %v6709, %v6717
  %v6720 = vcombine.low %v6247, %v6249
  %v6722 = vunpack.c.l.s4 1983009808
  %v6723 = vunpack.c.0.s8 %v6722
  %v6724 = vlaneseq
  %v6725 = vshrl.u32 %v6724, 7
  %v6726 = vsub.s32 %v6723, %v6725
  %v6727 = vrot.slane %v6720, %v6726
  %v6728 = vcombine.low %v6624, %v6628
  %v6730 = vunpack.c.l.s4 1983009808
  %v6731 = vunpack.c.0.s8 %v6730
  %v6732 = vlaneseq
  %v6733 = vshrl.u32 %v6732, 7
  %v6734 = vsub.s32 %v6731, %v6733
  %v6735 = vrot.slane %v6728, %v6734
  %v6736 = vcombine.low %v6318, %v6320
  %v6738 = vunpack.c.l.s4 1983009808
  %v6739 = vunpack.c.0.s8 %v6738
  %v6740 = vlaneseq
  %v6741 = vshrl.u32 %v6740, 7
  %v6742 = vsub.s32 %v6739, %v6741
  %v6743 = vrot.slane %v6736, %v6742
  %v6744 = vcombine.low %v6632, %v6636
  %v6746 = vunpack.c.l.s4 1983009808
  %v6747 = vunpack.c.0.s8 %v6746
  %v6748 = vlaneseq
  %v6749 = vshrl.u32 %v6748, 7
  %v6750 = vsub.s32 %v6747, %v6749
  %v6751 = vrot.slane %v6744, %v6750
  %v6752 = vcombine.low %v6727, %v6735
  %v6754 = vunpack.c.l.s4 1934713408
  %v6755 = vunpack.c.0.s8 %v6754
  %v6756 = vlaneseq
  %v6757 = vshrl.u32 %v6756, 7
  %v6758 = vsub.s32 %v6755, %v6757
  %v6759 = vrot.slane %v6752, %v6758
  %v6760 = vcombine.low %v6743, %v6751
  %v6762 = vunpack.c.l.s4 1934713408
  %v6763 = vunpack.c.0.s8 %v6762
  %v6764 = vlaneseq
  %v6765 = vshrl.u32 %v6764, 7
  %v6766 = vsub.s32 %v6763, %v6765
  %v6767 = vrot.slane %v6760, %v6766
  %v6768 = vcombine.low %v6759, %v6767
  %v6769 = vcombine.high %v6759, %v6767
  %v6770 = vcombine.low %v6389, %v6391
  %v6772 = vunpack.c.l.s4 1983009808
  %v6773 = vunpack.c.0.s8 %v6772
  %v6774 = vlaneseq
  %v6775 = vshrl.u32 %v6774, 7
  %v6776 = vsub.s32 %v6773, %v6775
  %v6777 = vrot.slane %v6770, %v6776
  %v6778 = vcombine.low %v6640, %v6644
  %v6780 = vunpack.c.l.s4 1983009808
  %v6781 = vunpack.c.0.s8 %v6780
  %v6782 = vlaneseq
  %v6783 = vshrl.u32 %v6782, 7
  %v6784 = vsub.s32 %v6781, %v6783
  %v6785 = vrot.slane %v6778, %v6784
  %v6786 = vcombine.low %v6460, %v6462
  %v6788 = vunpack.c.l.s4 1983009808
  %v6789 = vunpack.c.0.s8 %v6788
  %v6790 = vlaneseq
  %v6791 = vshrl.u32 %v6790, 7
  %v6792 = vsub.s32 %v6789, %v6791
  %v6793 = vrot.slane %v6786, %v6792
  %v6794 = vcombine.low %v6648, %v6652
  %v6796 = vunpack.c.l.s4 1983009808
  %v6797 = vunpack.c.0.s8 %v6796
  %v6798 = vlaneseq
  %v6799 = vshrl.u32 %v6798, 7
  %v6800 = vsub.s32 %v6797, %v6799
  %v6801 = vrot.slane %v6794, %v6800
  %v6802 = vcombine.low %v6777, %v6785
  %v6804 = vunpack.c.l.s4 1934713408
  %v6805 = vunpack.c.0.s8 %v6804
  %v6806 = vlaneseq
  %v6807 = vshrl.u32 %v6806, 7
  %v6808 = vsub.s32 %v6805, %v6807
  %v6809 = vrot.slane %v6802, %v6808
  %v6810 = vcombine.low %v6793, %v6801
  %v6812 = vunpack.c.l.s4 1934713408
  %v6813 = vunpack.c.0.s8 %v6812
  %v6814 = vlaneseq
  %v6815 = vshrl.u32 %v6814, 7
  %v6816 = vsub.s32 %v6813, %v6815
  %v6817 = vrot.slane %v6810, %v6816
  %v6818 = vcombine.low %v6809, %v6817
  %v6819 = vcombine.high %v6809, %v6817
  %v6820 = vcombine.low %v6531, %v6533
  %v6822 = vunpack.c.l.s4 1983009808
  %v6823 = vunpack.c.0.s8 %v6822
  %v6824 = vlaneseq
  %v6825 = vshrl.u32 %v6824, 7
  %v6826 = vsub.s32 %v6823, %v6825
  %v6827 = vrot.slane %v6820, %v6826
  %v6828 = vcombine.low %v6656, %v6660
  %v6830 = vunpack.c.l.s4 1983009808
  %v6831 = vunpack.c.0.s8 %v6830
  %v6832 = vlaneseq
  %v6833 = vshrl.u32 %v6832, 7
  %v6834 = vsub.s32 %v6831, %v6833
  %v6835 = vrot.slane %v6828, %v6834
  %v6836 = vcombine.low %v6602, %v6604
  %v6838 = vunpack.c.l.s4 1983009808
  %v6839 = vunpack.c.0.s8 %v6838
  %v6840 = vlaneseq
  %v6841 = vshrl.u32 %v6840, 7
  %v6842 = vsub.s32 %v6839, %v6841
  %v6843 = vrot.slane %v6836, %v6842
  %v6844 = vcombine.low %v6664, %v6668
  %v6846 = vunpack.c.l.s4 1983009808
  %v6847 = vunpack.c.0.s8 %v6846
  %v6848 = vlaneseq
  %v6849 = vshrl.u32 %v6848, 7
  %v6850 = vsub.s32 %v6847, %v6849
  %v6851 = vrot.slane %v6844, %v6850
  %v6852 = vcombine.low %v6827, %v6835
  %v6854 = vunpack.c.l.s4 1934713408
  %v6855 = vunpack.c.0.s8 %v6854
  %v6856 = vlaneseq
  %v6857 = vshrl.u32 %v6856, 7
  %v6858 = vsub.s32 %v6855, %v6857
  %v6859 = vrot.slane %v6852, %v6858
  %v6860 = vcombine.low %v6843, %v6851
  %v6862 = vunpack.c.l.s4 1934713408
  %v6863 = vunpack.c.0.s8 %v6862
  %v6864 = vlaneseq
  %v6865 = vshrl.u32 %v6864, 7
  %v6866 = vsub.s32 %v6863, %v6865
  %v6867 = vrot.slane %v6860, %v6866
  %v6868 = vcombine.low %v6859, %v6867
  %v6869 = vcombine.high %v6859, %v6867
  %v6878 = vcombine.high %v6718, %v6718
  %v6880 = vunpack.c.l.s4 1983009808
  %v6881 = vunpack.c.0.s8 %v6880
  %v6882 = vlaneseq
  %v6883 = vshrl.u32 %v6882, 7
  %v6884 = vsub.s32 %v6881, %v6883
  %v6885 = vrot.slane %v6718, %v6884
  %v6887 = vunpack.c.l.s4 1983009808
  %v6888 = vunpack.c.0.s8 %v6887
  %v6889 = vlaneseq
  %v6890 = vshrl.u32 %v6889, 7
  %v6891 = vsub.s32 %v6888, %v6890
  %v6892 = vrot.slane %v6878, %v6891
  %v6893 = vcombine.high %v6885, %v6885
  %v6894 = vcombine.high %v6892, %v6892
  %v6895 = vcombine.high %v6768, %v6768
  %v6897 = vunpack.c.l.s4 1983009808
  %v6898 = vunpack.c.0.s8 %v6897
  %v6899 = vlaneseq
  %v6900 = vshrl.u32 %v6899, 7
  %v6901 = vsub.s32 %v6898, %v6900
  %v6902 = vrot.slane %v6768, %v6901
  %v6904 = vunpack.c.l.s4 1983009808
  %v6905 = vunpack.c.0.s8 %v6904
  %v6906 = vlaneseq
  %v6907 = vshrl.u32 %v6906, 7
  %v6908 = vsub.s32 %v6905, %v6907
  %v6909 = vrot.slane %v6895, %v6908
  %v6910 = vcombine.high %v6902, %v6902
  %v6911 = vcombine.high %v6909, %v6909
  %v6912 = vcombine.high %v6818, %v6818
  %v6914 = vunpack.c.l.s4 1983009808
  %v6915 = vunpack.c.0.s8 %v6914
  %v6916 = vlaneseq
  %v6917 = vshrl.u32 %v6916, 7
  %v6918 = vsub.s32 %v6915, %v6917
  %v6919 = vrot.slane %v6818, %v6918
  %v6921 = vunpack.c.l.s4 1983009808
  %v6922 = vunpack.c.0.s8 %v6921
  %v6923 = vlaneseq
  %v6924 = vshrl.u32 %v6923, 7
  %v6925 = vsub.s32 %v6922, %v6924
  %v6926 = vrot.slane %v6912, %v6925
  %v6927 = vcombine.high %v6919, %v6919
  %v6928 = vcombine.high %v6926, %v6926
  %v6929 = vcombine.high %v6868, %v6868
  %v6931 = vunpack.c.l.s4 1983009808
  %v6932 = vunpack.c.0.s8 %v6931
  %v6933 = vlaneseq
  %v6934 = vshrl.u32 %v6933, 7
  %v6935 = vsub.s32 %v6932, %v6934
  %v6936 = vrot.slane %v6868, %v6935
  %v6938 = vunpack.c.l.s4 1983009808
  %v6939 = vunpack.c.0.s8 %v6938
  %v6940 = vlaneseq
  %v6941 = vshrl.u32 %v6940, 7
  %v6942 = vsub.s32 %v6939, %v6941
  %v6943 = vrot.slane %v6929, %v6942
  %v6944 = vcombine.high %v6936, %v6936
  %v6945 = vcombine.high %v6943, %v6943
  %v6946 = vcombine.high %v6719, %v6719
  %v6948 = vunpack.c.l.s4 1983009808
  %v6949 = vunpack.c.0.s8 %v6948
  %v6950 = vlaneseq
  %v6951 = vshrl.u32 %v6950, 7
  %v6952 = vsub.s32 %v6949, %v6951
  %v6953 = vrot.slane %v6719, %v6952
  %v6955 = vunpack.c.l.s4 1983009808
  %v6956 = vunpack.c.0.s8 %v6955
  %v6957 = vlaneseq
  %v6958 = vshrl.u32 %v6957, 7
  %v6959 = vsub.s32 %v6956, %v6958
  %v6960 = vrot.slane %v6946, %v6959
  %v6961 = vcombine.high %v6953, %v6953
  %v6962 = vcombine.high %v6960, %v6960
  %v6963 = vcombine.high %v6769, %v6769
  %v6965 = vunpack.c.l.s4 1983009808
  %v6966 = vunpack.c.0.s8 %v6965
  %v6967 = vlaneseq
  %v6968 = vshrl.u32 %v6967, 7
  %v6969 = vsub.s32 %v6966, %v6968
  %v6970 = vrot.slane %v6769, %v6969
  %v6972 = vunpack.c.l.s4 1983009808
  %v6973 = vunpack.c.0.s8 %v6972
  %v6974 = vlaneseq
  %v6975 = vshrl.u32 %v6974, 7
  %v6976 = vsub.s32 %v6973, %v6975
  %v6977 = vrot.slane %v6963, %v6976
  %v6978 = vcombine.high %v6970, %v6970
  %v6979 = vcombine.high %v6977, %v6977
  %v6980 = vcombine.high %v6819, %v6819
  %v6982 = vunpack.c.l.s4 1983009808
  %v6983 = vunpack.c.0.s8 %v6982
  %v6984 = vlaneseq
  %v6985 = vshrl.u32 %v6984, 7
  %v6986 = vsub.s32 %v6983, %v6985
  %v6987 = vrot.slane %v6819, %v6986
  %v6989 = vunpack.c.l.s4 1983009808
  %v6990 = vunpack.c.0.s8 %v6989
  %v6991 = vlaneseq
  %v6992 = vshrl.u32 %v6991, 7
  %v6993 = vsub.s32 %v6990, %v6992
  %v6994 = vrot.slane %v6980, %v6993
  %v6995 = vcombine.high %v6987, %v6987
  %v6996 = vcombine.high %v6994, %v6994
  %v6997 = vcombine.high %v6869, %v6869
  %v6999 = vunpack.c.l.s4 1983009808
  %v7000 = vunpack.c.0.s8 %v6999
  %v7001 = vlaneseq
  %v7002 = vshrl.u32 %v7001, 7
  %v7003 = vsub.s32 %v7000, %v7002
  %v7004 = vrot.slane %v6869, %v7003
  %v7006 = vunpack.c.l.s4 1983009808
  %v7007 = vunpack.c.0.s8 %v7006
  %v7008 = vlaneseq
  %v7009 = vshrl.u32 %v7008, 7
  %v7010 = vsub.s32 %v7007, %v7009
  %v7011 = vrot.slane %v6997, %v7010
  %v7012 = vcombine.high %v7004, %v7004
  %v7013 = vcombine.high %v7011, %v7011
  %v7046 = vadd.f32 %v5724, %v6885
  %v7047 = vadd.f32 %v5728, %v6893
  %v7048 = vadd.f32 %v5732, %v6892
  %v7049 = vadd.f32 %v5736, %v6894
  %v7050 = vadd.f32 %v5740, %v6902
  %v7051 = vadd.f32 %v5744, %v6910
  %v7052 = vadd.f32 %v5748, %v6909
  %v7053 = vadd.f32 %v5752, %v6911
  %v7054 = vadd.f32 %v5756, %v6919
  %v7055 = vadd.f32 %v5760, %v6927
  %v7056 = vadd.f32 %v5764, %v6926
  %v7057 = vadd.f32 %v5768, %v6928
  %v7058 = vadd.f32 %v5772, %v6936
  %v7059 = vadd.f32 %v5776, %v6944
  %v7060 = vadd.f32 %v5780, %v6943
  %v7061 = vadd.f32 %v5784, %v6945
  %v7062 = vadd.f32 %v5788, %v6953
  %v7063 = vadd.f32 %v5792, %v6961
  %v7064 = vadd.f32 %v5796, %v6960
  %v7065 = vadd.f32 %v5800, %v6962
  %v7066 = vadd.f32 %v5804, %v6970
  %v7067 = vadd.f32 %v5808, %v6978
  %v7068 = vadd.f32 %v5812, %v6977
  %v7069 = vadd.f32 %v5816, %v6979
  %v7070 = vadd.f32 %v5820, %v6987
  %v7071 = vadd.f32 %v5824, %v6995
  %v7072 = vadd.f32 %v5828, %v6994
  %v7073 = vadd.f32 %v5832, %v6996
  %v7074 = vadd.f32 %v5836, %v7004
  %v7075 = vadd.f32 %v5840, %v7012
  %v7076 = vadd.f32 %v5844, %v7011
  %v7077 = vadd.f32 %v5848, %v7013
  %v7110 = vcombine.low %v7046, %v7047
  %v7111 = vcombine.low %v7048, %v7049
  %v7113 = vunpack.c.l.s4 1983009808
  %v7114 = vunpack.c.0.s8 %v7113
  %v7115 = vlaneseq
  %v7116 = vshrl.u32 %v7115, 7
  %v7117 = vsub.s32 %v7114, %v7116
  %v7118 = vrot.slane %v7110, %v7117
  %v7120 = vunpack.c.l.s4 1983009808
  %v7121 = vunpack.c.0.s8 %v7120
  %v7122 = vlaneseq
  %v7123 = vshrl.u32 %v7122, 7
  %v7124 = vsub.s32 %v7121, %v7123
  %v7125 = vrot.slane %v7111, %v7124
  %v7126 = vcombine.low %v7118, %v7125
  %v7127 = vcombine.low %v7050, %v7051
  %v7128 = vcombine.low %v7052, %v7053
  %v7130 = vunpack.c.l.s4 1983009808
  %v7131 = vunpack.c.0.s8 %v7130
  %v7132 = vlaneseq
  %v7133 = vshrl.u32 %v7132, 7
  %v7134 = vsub.s32 %v7131, %v7133
  %v7135 = vrot.slane %v7127, %v7134
  %v7137 = vunpack.c.l.s4 1983009808
  %v7138 = vunpack.c.0.s8 %v7137
  %v7139 = vlaneseq
  %v7140 = vshrl.u32 %v7139, 7
  %v7141 = vsub.s32 %v7138, %v7140
  %v7142 = vrot.slane %v7128, %v7141
  %v7143 = vcombine.low %v7135, %v7142
  %v7144 = vcombine.low %v7054, %v7055
  %v7145 = vcombine.low %v7056, %v7057
  %v7147 = vunpack.c.l.s4 1983009808
  %v7148 = vunpack.c.0.s8 %v7147
  %v7149 = vlaneseq
  %v7150 = vshrl.u32 %v7149, 7
  %v7151 = vsub.s32 %v7148, %v7150
  %v7152 = vrot.slane %v7144, %v7151
  %v7154 = vunpack.c.l.s4 1983009808
  %v7155 = vunpack.c.0.s8 %v7154
  %v7156 = vlaneseq
  %v7157 = vshrl.u32 %v7156, 7
  %v7158 = vsub.s32 %v7155, %v7157
  %v7159 = vrot.slane %v7145, %v7158
  %v7160 = vcombine.low %v7152, %v7159
  %v7161 = vcombine.low %v7058, %v7059
  %v7162 = vcombine.low %v7060, %v7061
  %v7164 = vunpack.c.l.s4 1983009808
  %v7165 = vunpack.c.0.s8 %v7164
  %v7166 = vlaneseq
  %v7167 = vshrl.u32 %v7166, 7
  %v7168 = vsub.s32 %v7165, %v7167
  %v7169 = vrot.slane %v7161, %v7168
  %v7171 = vunpack.c.l.s4 1983009808
  %v7172 = vunpack.c.0.s8 %v7171
  %v7173 = vlaneseq
  %v7174 = vshrl.u32 %v7173, 7
  %v7175 = vsub.s32 %v7172, %v7174
  %v7176 = vrot.slane %v7162, %v7175
  %v7177 = vcombine.low %v7169, %v7176
  %v7178 = vcombine.low %v7062, %v7063
  %v7179 = vcombine.low %v7064, %v7065
  %v7181 = vunpack.c.l.s4 1983009808
  %v7182 = vunpack.c.0.s8 %v7181
  %v7183 = vlaneseq
  %v7184 = vshrl.u32 %v7183, 7
  %v7185 = vsub.s32 %v7182, %v7184
  %v7186 = vrot.slane %v7178, %v7185
  %v7188 = vunpack.c.l.s4 1983009808
  %v7189 = vunpack.c.0.s8 %v7188
  %v7190 = vlaneseq
  %v7191 = vshrl.u32 %v7190, 7
  %v7192 = vsub.s32 %v7189, %v7191
  %v7193 = vrot.slane %v7179, %v7192
  %v7194 = vcombine.low %v7186, %v7193
  %v7195 = vcombine.low %v7066, %v7067
  %v7196 = vcombine.low %v7068, %v7069
  %v7198 = vunpack.c.l.s4 1983009808
  %v7199 = vunpack.c.0.s8 %v7198
  %v7200 = vlaneseq
  %v7201 = vshrl.u32 %v7200, 7
  %v7202 = vsub.s32 %v7199, %v7201
  %v7203 = vrot.slane %v7195, %v7202
  %v7205 = vunpack.c.l.s4 1983009808
  %v7206 = vunpack.c.0.s8 %v7205
  %v7207 = vlaneseq
  %v7208 = vshrl.u32 %v7207, 7
  %v7209 = vsub.s32 %v7206, %v7208
  %v7210 = vrot.slane %v7196, %v7209
  %v7211 = vcombine.low %v7203, %v7210
  %v7212 = vcombine.low %v7070, %v7071
  %v7213 = vcombine.low %v7072, %v7073
  %v7215 = vunpack.c.l.s4 1983009808
  %v7216 = vunpack.c.0.s8 %v7215
  %v7217 = vlaneseq
  %v7218 = vshrl.u32 %v7217, 7
  %v7219 = vsub.s32 %v7216, %v7218
  %v7220 = vrot.slane %v7212, %v7219
  %v7222 = vunpack.c.l.s4 1983009808
  %v7223 = vunpack.c.0.s8 %v7222
  %v7224 = vlaneseq
  %v7225 = vshrl.u32 %v7224, 7
  %v7226 = vsub.s32 %v7223, %v7225
  %v7227 = vrot.slane %v7213, %v7226
  %v7228 = vcombine.low %v7220, %v7227
  %v7229 = vcombine.low %v7074, %v7075
  %v7230 = vcombine.low %v7076, %v7077
  %v7232 = vunpack.c.l.s4 1983009808
  %v7233 = vunpack.c.0.s8 %v7232
  %v7234 = vlaneseq
  %v7235 = vshrl.u32 %v7234, 7
  %v7236 = vsub.s32 %v7233, %v7235
  %v7237 = vrot.slane %v7229, %v7236
  %v7239 = vunpack.c.l.s4 1983009808
  %v7240 = vunpack.c.0.s8 %v7239
  %v7241 = vlaneseq
  %v7242 = vshrl.u32 %v7241, 7
  %v7243 = vsub.s32 %v7240, %v7242
  %v7244 = vrot.slane %v7230, %v7243
  %v7245 = vcombine.low %v7237, %v7244
  %v7254 = vrot.slane %v7126, 7
  %v7255 = vrot.slane %v7194, 7
  %v7256 = vrot.slane %v7143, 7
  %v7257 = vrot.slane %v7211, 7
  %v7258 = vrot.slane %v7160, 7
  %v7259 = vrot.slane %v7228, 7
  %v7260 = vrot.slane %v7177, 7
  %v7261 = vrot.slane %v7245, 7
  %v7262 = vsel %vm63, %v7258, %v7260
  %v7263 = vsel %vm63, %v7259, %v7261
  %v7264 = vsel %vm63, %v7256, %v7258
  %v7265 = vsel %vm63, %v7257, %v7259
  %v7266 = vsel %vm63, %v7254, %v7256
  %v7267 = vsel %vm63, %v7255, %v7257
  %v7268 = vsel %vm63, %v7260, %v7254
  %v7269 = vsel %vm63, %v7261, %v7255
  %v7270 = vsel %vm51, 0.0, %v7268
  %v7271 = vsel %vm52, 0.0, %v7266
  %v7272 = vsel %vm53, 0.0, %v7264
  %v7273 = vsel %vm54, 0.0, %v7262
  %v7274 = vsel %vm51, 0.0, %v7269
  %v7275 = vsel %vm52, 0.0, %v7267
  %v7276 = vsel %vm53, 0.0, %v7265
  %v7277 = vsel %vm54, 0.0, %v7263
  %v7278 = vrot.slane %v7126, 1
  %v7279 = vrot.slane %v7194, 1
  %v7280 = vrot.slane %v7143, 1
  %v7281 = vrot.slane %v7211, 1
  %v7282 = vrot.slane %v7160, 1
  %v7283 = vrot.slane %v7228, 1
  %v7284 = vrot.slane %v7177, 1
  %v7285 = vrot.slane %v7245, 1
  %v7286 = vsel %vm92, %v7282, %v7284
  %v7287 = vsel %vm92, %v7283, %v7285
  %v7288 = vsel %vm92, %v7280, %v7282
  %v7289 = vsel %vm92, %v7281, %v7283
  %v7290 = vsel %vm92, %v7278, %v7280
  %v7291 = vsel %vm92, %v7279, %v7281
  %v7292 = vsel %vm92, %v7284, %v7278
  %v7293 = vsel %vm92, %v7285, %v7279
  %v7294 = vsel %vm80, 0.0, %v7290
  %v7295 = vsel %vm81, 0.0, %v7288
  %v7296 = vsel %vm82, 0.0, %v7286
  %v7297 = vsel %vm83, 0.0, %v7292
  %v7298 = vsel %vm80, 0.0, %v7291
  %v7299 = vsel %vm81, 0.0, %v7289
  %v7300 = vsel %vm82, 0.0, %v7287
  %v7301 = vsel %vm83, 0.0, %v7293
  %7302 = vrot.lane.b32.xlu0 %v7126, 64
  %v7303 = vpop.permute.xlu0 %7302
  %7304 = vrot.lane.b32.xlu0 %v7143, 64
  %v7305 = vpop.permute.xlu0 %7304
  %7306 = vrot.lane.b32.xlu0 %v7160, 64
  %v7307 = vpop.permute.xlu0 %7306
  %7308 = vrot.lane.b32.xlu0 %v7177, 64
  %v7309 = vpop.permute.xlu0 %7308
  %7310 = vrot.lane.b32.xlu0 %v7194, 64
  %v7311 = vpop.permute.xlu0 %7310
  %7312 = vrot.lane.b32.xlu0 %v7211, 64
  %v7313 = vpop.permute.xlu0 %7312
  %7314 = vrot.lane.b32.xlu0 %v7228, 64
  %v7315 = vpop.permute.xlu0 %7314
  %7316 = vrot.lane.b32.xlu0 %v7245, 64
  %v7317 = vpop.permute.xlu0 %7316
  %v7326 = vsel %vm550, %v7270, %v7303
  %v7327 = vsel %vm550, %v7271, %v7305
  %v7328 = vsel %vm550, %v7272, %v7307
  %v7329 = vsel %vm550, %v7273, %v7309
  %v7330 = vsel %vm550, %v7274, %v7311
  %v7331 = vsel %vm550, %v7275, %v7313
  %v7332 = vsel %vm550, %v7276, %v7315
  %v7333 = vsel %vm550, %v7277, %v7317
  %v7334 = vld [vmem:[%s10] sm:$0x3]
  %v7336 = vlaneseq
  %v7337 = vshrl.u32 %v7336, 7
  %v7338 = vsub.s32 0, %v7337
  %v7339 = vrot.slane %v7334, %v7338
  %v7340 = vlaneseq
  %v7341 = vshrl.u32 %v7340, 7
  %v7342 = vsub.s32 1, %v7341
  %v7343 = vrot.slane %v7334, %v7342
  %v7346 = vmul.f32 %v7326, %v7339
  %v7347 = vmul.f32 %v7294, %v7343
  %v7348 = vmul.f32 %v7327, %v7339
  %v7349 = vmul.f32 %v7295, %v7343
  %v7350 = vmul.f32 %v7328, %v7339
  %v7351 = vmul.f32 %v7296, %v7343
  %v7352 = vmul.f32 %v7329, %v7339
  %v7353 = vmul.f32 %v7297, %v7343
  %v7354 = vmul.f32 %v7330, %v7339
  %v7355 = vmul.f32 %v7298, %v7343
  %v7356 = vmul.f32 %v7331, %v7339
  %v7357 = vmul.f32 %v7299, %v7343
  %v7358 = vmul.f32 %v7332, %v7339
  %v7359 = vmul.f32 %v7300, %v7343
  %v7360 = vmul.f32 %v7333, %v7339
  %v7361 = vmul.f32 %v7301, %v7343
  %v7362 = vsel %vm550, %v7347, 0.0
  %v7363 = vadd.f32 %v7346, %v7362
  %7364 = vadd.xlane.f32.xlu0 %v7363
  %v7365 = vpop.xlane.xlu0 %7364
  %v7366 = vsel %vm550, %v7349, 0.0
  %v7367 = vadd.f32 %v7348, %v7366
  %7368 = vadd.xlane.f32.xlu0 %v7367
  %v7369 = vpop.xlane.xlu0 %7368
  %v7370 = vsel %vm550, %v7351, 0.0
  %v7371 = vadd.f32 %v7350, %v7370
  %7372 = vadd.xlane.f32.xlu0 %v7371
  %v7373 = vpop.xlane.xlu0 %7372
  %v7374 = vsel %vm550, %v7353, 0.0
  %v7375 = vadd.f32 %v7352, %v7374
  %7376 = vadd.xlane.f32.xlu0 %v7375
  %v7377 = vpop.xlane.xlu0 %7376
  %v7378 = vsel %vm550, %v7355, 0.0
  %v7379 = vadd.f32 %v7354, %v7378
  %7380 = vadd.xlane.f32.xlu0 %v7379
  %v7381 = vpop.xlane.xlu0 %7380
  %v7382 = vsel %vm550, %v7357, 0.0
  %v7383 = vadd.f32 %v7356, %v7382
  %7384 = vadd.xlane.f32.xlu0 %v7383
  %v7385 = vpop.xlane.xlu0 %7384
  %v7386 = vsel %vm550, %v7359, 0.0
  %v7387 = vadd.f32 %v7358, %v7386
  %7388 = vadd.xlane.f32.xlu0 %v7387
  %v7389 = vpop.xlane.xlu0 %7388
  %v7390 = vsel %vm550, %v7361, 0.0
  %v7391 = vadd.f32 %v7360, %v7390
  %7392 = vadd.xlane.f32.xlu0 %v7391
  %v7393 = vpop.xlane.xlu0 %7392
  %v7394 = vld [vmem:[%s2 + $0x18] sm:$0x1]
  %s7396 = vtos %v7394
  %v7397 = vstv %s7396
  %v7399 = vadd.f32 %v7365, %v7397
  %v7400 = vadd.f32 %v7369, %v7397
  %v7401 = vadd.f32 %v7373, %v7397
  %v7402 = vadd.f32 %v7377, %v7397
  %v7403 = vadd.f32 %v7381, %v7397
  %v7404 = vadd.f32 %v7385, %v7397
  %v7405 = vadd.f32 %v7389, %v7397
  %v7406 = vadd.f32 %v7393, %v7397
  %v7415 = vlaneseq
  %v7416 = vand.u32 %v7415, 127
  %v7417 = vlaneseq
  %v7418 = vshrl.u32 %v7417, 7
  %v7419 = vsub.s32 %v7416, %v7418
  %v7420 = vrot.slane %v7399, %v7419
  %v7421 = vadd.s32 %v7416, 4294967288
  %v7422 = vlaneseq
  %v7423 = vshrl.u32 %v7422, 7
  %v7424 = vsub.s32 %v7421, %v7423
  %v7425 = vrot.slane %v7400, %v7424
  %vm7426 = vcmask 130112
  %v7427 = vsel %vm7426, %v7425, %v7420
  %v7428 = vadd.s32 %v7416, 4294967280
  %v7429 = vlaneseq
  %v7430 = vshrl.u32 %v7429, 7
  %v7431 = vsub.s32 %v7428, %v7430
  %v7432 = vrot.slane %v7401, %v7431
  %vm7433 = vcmask 195712
  %v7434 = vsel %vm7433, %v7432, %v7427
  %v7435 = vadd.s32 %v7416, 4294967272
  %v7436 = vlaneseq
  %v7437 = vshrl.u32 %v7436, 7
  %v7438 = vsub.s32 %v7435, %v7437
  %v7439 = vrot.slane %v7402, %v7438
  %vm7440 = vcmask 261312
  %v7441 = vsel %vm7440, %v7439, %v7434
  %v7442 = vlaneseq
  %v7443 = vshrl.u32 %v7442, 7
  %v7444 = vsub.s32 %v7416, %v7443
  %v7445 = vrot.slane %v7403, %v7444
  %v7446 = vlaneseq
  %v7447 = vshrl.u32 %v7446, 7
  %v7448 = vsub.s32 %v7421, %v7447
  %v7449 = vrot.slane %v7404, %v7448
  %v7450 = vsel %vm7426, %v7449, %v7445
  %v7451 = vlaneseq
  %v7452 = vshrl.u32 %v7451, 7
  %v7453 = vsub.s32 %v7428, %v7452
  %v7454 = vrot.slane %v7405, %v7453
  %v7455 = vsel %vm7433, %v7454, %v7450
  %v7456 = vlaneseq
  %v7457 = vshrl.u32 %v7456, 7
  %v7458 = vsub.s32 %v7435, %v7457
  %v7459 = vrot.slane %v7406, %v7458
  %v7460 = vsel %vm7440, %v7459, %v7455
  %v7461 = vsel %vm2474, %v7460, %v7441
  %7464 = vrot.lane.b32.xlu0 %v4245, 32
  %v7465 = vpop.permute.xlu0 %7464
  %7468 = vrot.lane.b32.xlu0 %v3425, 40
  %v7469 = vpop.permute.xlu0 %7468
  %7472 = vrot.lane.b32.xlu0 %v2007, 56
  %v7473 = vpop.permute.xlu0 %7472
  %7475 = vrot.lane.b32.xlu0 %v4245, 80
  %v7476 = vpop.permute.xlu0 %7475
  %7478 = vrot.lane.b32.xlu0 %v3425, 80
  %v7479 = vpop.permute.xlu0 %7478
  %7481 = vrot.lane.b32.xlu0 %v2007, 80
  %v7482 = vpop.permute.xlu0 %7481
  %7484 = vrot.lane.b32.xlu0 %v4257, 16
  %v7485 = vpop.permute.xlu0 %7484
  %7487 = vrot.lane.b32.xlu0 %v4270, 24
  %v7488 = vpop.permute.xlu0 %7487
  %7490 = vrot.lane.b32.xlu0 %v4283, 40
  %v7491 = vpop.permute.xlu0 %7490
  %v7493 = vsel %vm333, %v7461, %v7465
  %vm7494 = vcmask 326656
  %v7495 = vsel %vm7494, %v7493, %v7469
  %vm7496 = vcmask 457728
  %v7497 = vsel %vm7496, %v7495, %v7473
  %vm7498 = vcmask 719872
  %v7499 = vsel %vm7498, %v7497, %v7476
  %v7500 = vsel %vm576, %v7499, %v7479
  %v7501 = vsel %vm4155, %v7500, %v7482
  %v7502 = vsel %vm2683, %v7482, %v7485
  %v7503 = vsel %vm3882, %v7502, %v7488
  %v7504 = vsel %vm7494, %v7503, %v7491
  %v7507 = vcombine.low %v7501, %v7504
  %v7509 = vunpack.c.l.s4 1983009808
  %v7510 = vunpack.c.0.s8 %v7509
  %v7511 = vlaneseq
  %v7512 = vshrl.u32 %v7511, 7
  %v7513 = vsub.s32 %v7510, %v7512
  %v7514 = vrot.slane %v7507, %v7513
  %vm7516 = vcmask 1041408
  %vm7517 = vcmask 584706
  %vm7518 = vmor %vm7517, %vm7516
  %7519 = vst.msk [vmem:[%s11] sm:$0xf] %vm7518, %v7514
  // Predicated region
  $region46: #{ladder_vae_forward.1} parent=0 // pred_check
    _
  $region47: #{ladder_vae_forward.1} parent=0 // pred_check_branch
    %7521 = sbr.rel (0) target = $region49
  $region48: #{ladder_vae_forward.1} parent=0 // pred_region
    _
  $region49: #{ladder_vae_forward.1} parent=0 // pred_fallthru
    _
  // Predicated region
  $region50: #{ladder_vae_forward.1} parent=0 // pred_check
    _
  $region51: #{ladder_vae_forward.1} parent=0 // pred_check_branch
    %7523 = sbr.rel (0) target = $region53
  $region52: #{ladder_vae_forward.1} parent=0 // pred_region
    _
  $region53: #{ladder_vae_forward.1} parent=0 // pred_fallthru
    _

</llo_original>
